<compile_context>
chip_gen: v6e
topology: v6e:2x2x1
jax: 0.10.0
libtpu: 0.0.40
codegen_flags: <defaults>
</compile_context>

<pallas_src>
import functools
import math

import jax
import jax.numpy as jnp
from jax.experimental import pallas as pl
from jax.experimental.pallas import tpu as pltpu

# MXU operand dtype (f32 accumulation always requested via
# preferred_element_type).  Element-wise math stays f32 everywhere.
_DOT_DTYPE = jnp.bfloat16


# ----------------------------- in-kernel helpers ---------------------------

def _mxu_dot(a, b):
    return jnp.dot(a.astype(_DOT_DTYPE), b.astype(_DOT_DTYPE),
                   preferred_element_type=jnp.float32)


def _layernorm(x, g, b, eps=1e-5):
    mean = jnp.mean(x, axis=-1, keepdims=True)
    var = jnp.mean((x - mean) ** 2, axis=-1, keepdims=True)
    return (x - mean) * jax.lax.rsqrt(var + eps) * g + b


def _gelu(x):  # exact (erf) GELU, matching torch.nn.GELU default
    return 0.5 * x * (1.0 + jax.lax.erf(x * (1.0 / math.sqrt(2.0))))


def _pick_batch_tile(n):
    """Whole batch if small; otherwise a sublane-aligned tile dividing N."""
    if n <= 8:
        return n
    for bt in (128, 64, 32, 16, 8):
        if n % bt == 0:
            return bt
    return n


# ------------------- fused ViT encoder (one pallas_call) -------------------

def _fused_vit_kernel(patches_ref, mapper_w_ref, mapper_b_ref, prefix_ref,
                      ln1g_ref, ln1b_ref, wqkv_ref, bqkv_ref,
                      ln2g_ref, ln2b_ref, w1_ref, b1_ref, w2_ref, b2_ref,
                      feat_ref, x_scratch, *, n_heads, d_head, bt, seq_len):
    dim = n_heads * d_head
    T = seq_len
    l = pl.program_id(1)            # transformer-block index ("arbitrary")

    # ---- block-0 prologue: patch mapper + CLS token + positional embedding
    @pl.when(l == 0)
    def _():
        p = patches_ref[...]                                  # [bt, P2, in_d]
        p2 = p.shape[1]
        tok = _mxu_dot(p.reshape(bt * p2, p.shape[2]), mapper_w_ref[...])
        tok = (tok + mapper_b_ref[...]).reshape(bt, p2, dim)
        prefix = prefix_ref[...]          # [T, dim]; row 0 = cls + pos[0]
        cls = jnp.broadcast_to(prefix[0:1, :][None], (bt, 1, dim))
        x_scratch[...] = jnp.concatenate(
            [cls, tok + prefix[1:, :][None]], axis=1)

    x = x_scratch[...]                                        # [bt, T, dim]

    # ---- LN1 + packed (block-diagonal per-head) QKV over batch*tokens ----
    xn = _layernorm(x.reshape(bt * T, dim), ln1g_ref[...], ln1b_ref[...])
    qkv = _mxu_dot(xn, wqkv_ref[...]) + bqkv_ref[...]         # [bt*T, 3*dim]

    # ---- multi-head attention, batched over the batch-tile dimension ----
    scale = 1.0 / math.sqrt(d_head)
    head_outs = []
    for h in range(n_heads):
        qh = qkv[:, h * d_head:(h + 1) * d_head].reshape(bt, T, d_head)
        kh = qkv[:, dim + h * d_head:
                 dim + (h + 1) * d_head].reshape(bt, T, d_head)
        vh = qkv[:, 2 * dim + h * d_head:
                 2 * dim + (h + 1) * d_head].reshape(bt, T, d_head)
        s = jnp.einsum("bqd,bkd->bqk", qh.astype(_DOT_DTYPE),
                       kh.astype(_DOT_DTYPE),
                       preferred_element_type=jnp.float32) * scale
        s = s - jnp.max(s, axis=-1, keepdims=True)
        pr = jnp.exp(s)
        pr = pr / jnp.sum(pr, axis=-1, keepdims=True)         # exact divide
        head_outs.append(
            jnp.einsum("bqk,bkd->bqd", pr.astype(_DOT_DTYPE),
                       vh.astype(_DOT_DTYPE),
                       preferred_element_type=jnp.float32))
    x1 = x + jnp.concatenate(head_outs, axis=-1)              # residual 1

    # ---- LN2 + GELU MLP + residual 2 over batch*tokens ----
    yn = _layernorm(x1.reshape(bt * T, dim), ln2g_ref[...], ln2b_ref[...])
    h1 = _gelu(_mxu_dot(yn, w1_ref[...]) + b1_ref[...])
    h2 = _mxu_dot(h1, w2_ref[...]) + b2_ref[...]
    xo = x1 + h2.reshape(bt, T, dim)

    x_scratch[...] = xo                              # carry to block l+1
    feat_ref[...] = xo[:, 0, :]                      # CLS features (resident
    #                                                  output, written back
    #                                                  after the last block)


def vit_encoder(patches, prefix, params, *, n_heads, d_head):
    """patches:[N,P2,in_d], prefix:[T,D] -> CLS features [N,D]."""
    N, P2, input_d = patches.shape
    dim = n_heads * d_head
    T = P2 + 1
    blk = params["blocks"]
    L = blk["w_qkv"].shape[0]
    bt = _pick_batch_tile(N)
    grid = (N // bt, L)

    wmap = lambda b, l: (l, 0, 0)       # stacked per-block weights
    cmap = lambda b, l: (0, 0)          # shared (mapper / prefix) params

    return pl.pallas_call(
        functools.partial(_fused_vit_kernel, n_heads=n_heads, d_head=d_head,
                          bt=bt, seq_len=T),
        grid=grid,
        in_specs=[
            pl.BlockSpec((bt, P2, input_d), lambda b, l: (b, 0, 0)),
            pl.BlockSpec((input_d, dim), cmap),
            pl.BlockSpec((1, dim), cmap),
            pl.BlockSpec((T, dim), cmap),
            pl.BlockSpec((None, 1, dim), wmap),          # LN1 gamma
            pl.BlockSpec((None, 1, dim), wmap),          # LN1 beta
            pl.BlockSpec((None, dim, 3 * dim), wmap),    # packed QKV W
            pl.BlockSpec((None, 1, 3 * dim), wmap),      # packed QKV b
            pl.BlockSpec((None, 1, dim), wmap),          # LN2 gamma
            pl.BlockSpec((None, 1, dim), wmap),          # LN2 beta
            pl.BlockSpec((None, dim, 4 * dim), wmap),    # MLP W1
            pl.BlockSpec((None, 1, 4 * dim), wmap),      # MLP b1
            pl.BlockSpec((None, 4 * dim, dim), wmap),    # MLP W2
            pl.BlockSpec((None, 1, dim), wmap),          # MLP b2
        ],
        out_specs=pl.BlockSpec((bt, dim), lambda b, l: (b, 0)),
        out_shape=jax.ShapeDtypeStruct((N, dim), jnp.float32),
        scratch_shapes=[pltpu.VMEM((bt, T, dim), jnp.float32)],
        compiler_params=pltpu.CompilerParams(
            dimension_semantics=("parallel", "arbitrary")),
    )(patches, params["mapper_w"], params["mapper_b"], prefix,
      blk["ln1_g"], blk["ln1_b"], blk["w_qkv"], blk["b_qkv"],
      blk["ln2_g"], blk["ln2_b"], blk["mlp_w1"], blk["mlp_b1"],
      blk["mlp_w2"], blk["mlp_b2"])


# -------------- fused CausalVAE + fusion head (one pallas_call) -------------

def _vae_fusion_kernel(flat_ref, eps_ref, vit_ref,
                       fc1w_ref, fc1b_ref, mlw_ref, mlb_ref,
                       fc3w_ref, fc3b_ref, fc4w_ref, fc4b_ref,
                       wf1v_ref, wf1z_ref, bf1_ref, wf2_ref, bf2_ref,
                       packed_ref, recon_ref, *, z_dim):
    x = flat_ref[...]                                          # [tm, Din]
    # encoder
    h = jnp.maximum(_mxu_dot(x, fc1w_ref[...]) + fc1b_ref[...], 0.0)
    ml = _mxu_dot(h, mlw_ref[...]) + mlb_ref[...]              # [tm, 2Z]
    mu = ml[:, :z_dim]
    lv = ml[:, z_dim:]
    # reparameterize
    z = mu + eps_ref[...] * jnp.exp(0.5 * lv)
    # decoder
    hd = jnp.maximum(_mxu_dot(z, fc3w_ref[...]) + fc3b_ref[...], 0.0)
    recon = jax.nn.sigmoid(_mxu_dot(hd, fc4w_ref[...]) + fc4b_ref[...])
    # fusion head: concat([vit, z]) @ W1 == vit @ W1[:Dv] + z @ W1[Dv:]
    f1 = jnp.maximum(_mxu_dot(vit_ref[...], wf1v_ref[...])
                     + _mxu_dot(z, wf1z_ref[...]) + bf1_ref[...], 0.0)
    logits = _mxu_dot(f1, wf2_ref[...]) + bf2_ref[...]

    # one lane-contiguous slab: [mu | logvar | logits]
    packed_ref[...] = jnp.concatenate([ml, logits], axis=-1)
    recon_ref[...] = recon


def vae_fusion(flat, eps, vit_feat, p):
    N, Din = flat.shape
    Z = eps.shape[1]
    Dv = vit_feat.shape[1]
    Hv = p["fc1_w"].shape[1]
    F = p["fus_w1v"].shape[1]
    Ncls = p["fus_w2"].shape[1]

    tm = _pick_batch_tile(N)
    grid = (N // tm,)
    rmap = lambda i: (i, 0)
    cmap = lambda i: (0, 0)

    packed, recon = pl.pallas_call(
        functools.partial(_vae_fusion_kernel, z_dim=Z),
        grid=grid,
        in_specs=[
            pl.BlockSpec((tm, Din), rmap),
            pl.BlockSpec((tm, Z), rmap),
            pl.BlockSpec((tm, Dv), rmap),
            pl.BlockSpec((Din, Hv), cmap), pl.BlockSpec((1, Hv), cmap),
            pl.BlockSpec((Hv, 2 * Z), cmap), pl.BlockSpec((1, 2 * Z), cmap),
            pl.BlockSpec((Z, Hv), cmap), pl.BlockSpec((1, Hv), cmap),
            pl.BlockSpec((Hv, Din), cmap), pl.BlockSpec((1, Din), cmap),
            pl.BlockSpec((Dv, F), cmap), pl.BlockSpec((Z, F), cmap),
            pl.BlockSpec((1, F), cmap),
            pl.BlockSpec((F, Ncls), cmap), pl.BlockSpec((1, Ncls), cmap),
        ],
        out_specs=(
            pl.BlockSpec((tm, 2 * Z + Ncls), rmap),
            pl.BlockSpec((tm, Din), rmap),
        ),
        out_shape=(
            jax.ShapeDtypeStruct((N, 2 * Z + Ncls), jnp.float32),
            jax.ShapeDtypeStruct((N, Din), jnp.float32),
        ),
        compiler_params=pltpu.CompilerParams(
            dimension_semantics=("parallel",)),
    )(flat, eps, vit_feat,
      p["fc1_w"], p["fc1_b"], p["mulv_w"], p["mulv_b"],
      p["fc3_w"], p["fc3_b"], p["fc4_w"], p["fc4_b"],
      p["fus_w1v"], p["fus_w1z"], p["fus_b1"], p["fus_w2"], p["fus_b2"])
    return packed, recon


# ------------------------------ model setup --------------------------------

def positional_embeddings(seq_len, d):
    i = jnp.arange(seq_len, dtype=jnp.float32)[:, None]
    j = jnp.arange(d, dtype=jnp.float32)[None, :]
    even = jnp.sin(i / jnp.power(10000.0, j / d))
    odd = jnp.cos(i / jnp.power(10000.0, (j - 1.0) / d))
    return jnp.where(jnp.arange(d)[None, :] % 2 == 0, even, odd)


def init_params(key, *, chw, n_patches, n_blocks, hidden_d, n_heads,
                vae_input_dim, vae_z_dim, vae_hidden_dim,
                num_classes, fusion_hidden):
    C, H, W = chw
    ps = H // n_patches
    input_d = C * ps * ps
    d_head = hidden_d // n_heads
    mlp_d = 4 * hidden_d

    def nrm(k, shape, scale=0.02):
        return scale * jax.random.normal(k, shape, dtype=jnp.float32)

    def w16(a):              # MXU weights stored bf16 (halves DMA bytes)
        return a.astype(_DOT_DTYPE)

    def row(b):              # biases / LN params as lane-major (1, D) f32
        return b.reshape(1, -1).astype(jnp.float32)

    def block_diag(mats):    # per-head [dh, dh] weights -> [D, D] block diag
        dh = mats[0].shape[0]
        out = jnp.zeros((len(mats) * dh, len(mats) * dh), jnp.float32)
        for h, m in enumerate(mats):
            out = out.at[h * dh:(h + 1) * dh, h * dh:(h + 1) * dh].set(m)
        return out

    keys = iter(jax.random.split(key, 4096))
    p = {
        "mapper_w": w16(nrm(next(keys), (input_d, hidden_d))),
        "mapper_b": row(jnp.zeros((hidden_d,))),
        "cls": jax.random.uniform(next(keys), (hidden_d,), dtype=jnp.float32),
        "pos": positional_embeddings(n_patches * n_patches + 1, hidden_d),
        # VAE encoder / decoder (mu & logvar share one packed matmul)
        "fc1_w": w16(nrm(next(keys), (vae_input_dim, vae_hidden_dim))),
        "fc1_b": row(jnp.zeros((vae_hidden_dim,))),
        "mulv_w": w16(jnp.concatenate(
            [nrm(next(keys), (vae_hidden_dim, vae_z_dim)),
             nrm(next(keys), (vae_hidden_dim, vae_z_dim))], axis=1)),
        "mulv_b": row(jnp.zeros((2 * vae_z_dim,))),
        "fc3_w": w16(nrm(next(keys), (vae_z_dim, vae_hidden_dim))),
        "fc3_b": row(jnp.zeros((vae_hidden_dim,))),
        "fc4_w": w16(nrm(next(keys), (vae_hidden_dim, vae_input_dim))),
        "fc4_b": row(jnp.zeros((vae_input_dim,))),
    }
    # fusion MLP: W1 split by input rows (ViT part / z part)
    fus_w1 = nrm(next(keys), (hidden_d + vae_z_dim, fusion_hidden))
    p["fus_w1v"] = w16(fus_w1[:hidden_d])
    p["fus_w1z"] = w16(fus_w1[hidden_d:])
    p["fus_b1"] = row(jnp.zeros((fusion_hidden,)))
    p["fus_w2"] = w16(nrm(next(keys), (fusion_hidden, num_classes)))
    p["fus_b2"] = row(jnp.zeros((num_classes,)))

    # per-block parameters stacked along a leading [n_blocks] axis so the
    # fused ViT kernel can index them with the trailing ("arbitrary") grid dim
    names = ("ln1_g", "ln1_b", "w_qkv", "b_qkv", "ln2_g", "ln2_b",
             "mlp_w1", "mlp_b1", "mlp_w2", "mlp_b2")
    acc = {n: [] for n in names}
    for _ in range(n_blocks):
        q_w = [nrm(next(keys), (d_head, d_head)) for _ in range(n_heads)]
        k_w = [nrm(next(keys), (d_head, d_head)) for _ in range(n_heads)]
        v_w = [nrm(next(keys), (d_head, d_head)) for _ in range(n_heads)]
        # packed QKV weight: block-diagonal per head preserves the tutorial
        # per-head-slice semantics exactly; columns = [Q_all | K_all | V_all].
        w_qkv = jnp.concatenate(
            [block_diag(q_w), block_diag(k_w), block_diag(v_w)], axis=1)
        acc["ln1_g"].append(row(jnp.ones((hidden_d,))))
        acc["ln1_b"].append(row(jnp.zeros((hidden_d,))))
        acc["ln2_g"].append(row(jnp.ones((hidden_d,))))
        acc["ln2_b"].append(row(jnp.zeros((hidden_d,))))
        acc["w_qkv"].append(w16(w_qkv))
        acc["b_qkv"].append(row(jnp.zeros((3 * hidden_d,))))
        acc["mlp_w1"].append(w16(nrm(next(keys), (hidden_d, mlp_d))))
        acc["mlp_b1"].append(row(jnp.zeros((mlp_d,))))
        acc["mlp_w2"].append(w16(nrm(next(keys), (mlp_d, hidden_d))))
        acc["mlp_b2"].append(row(jnp.zeros((hidden_d,))))
    p["blocks"] = {n: jnp.stack(v, axis=0) for n, v in acc.items()}
    return p


# ------------------------------ forward pass --------------------------------

def hybrid_forward(params, images, eps, *, n_patches, hidden_d, n_heads,
                   return_all=False):
    N, C, H, W = images.shape
    ps = H // n_patches
    P2 = n_patches * n_patches
    d_head = hidden_d // n_heads

    # ---- ViT.get_features (single fused kernel) ----
    # patchify: [N, P2, C*ps*ps] with features contiguous on the last axis.
    patches = images.reshape(N, C, n_patches, ps, n_patches, ps)
    patches = patches.transpose(0, 2, 4, 1, 3, 5).reshape(N, P2, C * ps * ps)
    # prefix row 0 = cls + pos[0]; rows 1: = pos[1:]  (tiny, computed once)
    prefix = params["pos"].at[0].add(params["cls"])

    vit_features = vit_encoder(patches, prefix, params,
                               n_heads=n_heads, d_head=d_head)   # [N, D]

    # ---- CausalVAE + fusion head (single fused kernel) ----
    flat = images.reshape(N, -1)
    packed, x_recon = vae_fusion(flat, eps, vit_features, params)
    Z = eps.shape[1]
    z_mu = packed[:, :Z]
    z_logvar = packed[:, Z:2 * Z]
    logits = packed[:, 2 * Z:]

    if return_all:
        return logits, x_recon, z_mu, z_logvar
    return logits


# --------------------------------- main -------------------------------------

if __name__ == "__main__":
    # Small config consistent with the module defaults
    # (hidden_d=8, vae_z_dim=50, vae_hidden_dim=400, num_classes=2,
    #  fusion hidden = `batch_size` ctor arg = 128).
    N, C, H, W = 2, 4, 16, 16
    n_patches, n_blocks, hidden_d, n_heads = 4, 2, 8, 2
    vae_input_dim = C * H * W              # 1024
    vae_z_dim, vae_hidden_dim = 50, 400
    num_classes, fusion_hidden = 2, 128

    root = jax.random.PRNGKey(0)
    k_img, k_param, k_eps = jax.random.split(root, 3)

    images = jax.random.uniform(k_img, (N, C, H, W), dtype=jnp.float32)
    params = init_params(
        k_param, chw=(C, H, W), n_patches=n_patches, n_blocks=n_blocks,
        hidden_d=hidden_d, n_heads=n_heads, vae_input_dim=vae_input_dim,
        vae_z_dim=vae_z_dim, vae_hidden_dim=vae_hidden_dim,
        num_classes=num_classes, fusion_hidden=fusion_hidden)
    # deterministic reparameterization noise (stand-in for torch.randn_like)
    eps = jax.random.normal(k_eps, (N, vae_z_dim), dtype=jnp.float32)

    fwd = jax.jit(functools.partial(
        hybrid_forward, n_patches=n_patches, hidden_d=hidden_d,
        n_heads=n_heads, return_all=True))
    logits, x_recon, z_mu, z_logvar = fwd(params, images, eps)
    jax.block_until_ready((logits, x_recon, z_mu, z_logvar))

    assert logits.shape == (N, num_classes)
    assert x_recon.shape == (N, vae_input_dim)
    assert z_mu.shape == (N, vae_z_dim) and z_logvar.shape == (N, vae_z_dim)
    print("KERNEL_OK")
</pallas_src>

<mosaic_0001>
module attributes {stable_mosaic.version = 11 : i64} {
  func.func @_vae_fusion_kernel(%arg0: i32, %arg1: memref<2x1024xf32, #tpu.memory_space<vmem>>, %arg2: memref<2x50xf32, #tpu.memory_space<vmem>>, %arg3: memref<2x8xf32, #tpu.memory_space<vmem>>, %arg4: memref<1024x400xbf16, #tpu.memory_space<vmem>>, %arg5: memref<1x400xf32, #tpu.memory_space<vmem>>, %arg6: memref<400x100xbf16, #tpu.memory_space<vmem>>, %arg7: memref<1x100xf32, #tpu.memory_space<vmem>>, %arg8: memref<50x400xbf16, #tpu.memory_space<vmem>>, %arg9: memref<1x400xf32, #tpu.memory_space<vmem>>, %arg10: memref<400x1024xbf16, #tpu.memory_space<vmem>>, %arg11: memref<1x1024xf32, #tpu.memory_space<vmem>>, %arg12: memref<8x128xbf16, #tpu.memory_space<vmem>>, %arg13: memref<50x128xbf16, #tpu.memory_space<vmem>>, %arg14: memref<1x128xf32, #tpu.memory_space<vmem>>, %arg15: memref<128x2xbf16, #tpu.memory_space<vmem>>, %arg16: memref<1x2xf32, #tpu.memory_space<vmem>>, %arg17: memref<2x102xf32, #tpu.memory_space<vmem>>, %arg18: memref<2x1024xf32, #tpu.memory_space<vmem>>) attributes {dimension_semantics = [#tpu.dimension_semantics<parallel>], iteration_bounds = array<i64: 1>, scalar_prefetch = 0 : i64, scratch_operands = 0 : i64, tpu.core_type = #tpu.core_type<tc>, window_params = [{transform_indices = @transform_0, window_bounds = array<i64: 2, 1024>}, {transform_indices = @transform_1, window_bounds = array<i64: 2, 50>}, {transform_indices = @transform_2, window_bounds = array<i64: 2, 8>}, {pipeline_mode = #tpu.pipeline_mode<synchronous>, transform_indices = @transform_3, window_bounds = array<i64: 1024, 400>}, {pipeline_mode = #tpu.pipeline_mode<synchronous>, transform_indices = @transform_4, window_bounds = array<i64: 1, 400>}, {pipeline_mode = #tpu.pipeline_mode<synchronous>, transform_indices = @transform_5, window_bounds = array<i64: 400, 100>}, {pipeline_mode = #tpu.pipeline_mode<synchronous>, transform_indices = @transform_6, window_bounds = array<i64: 1, 100>}, {pipeline_mode = #tpu.pipeline_mode<synchronous>, transform_indices = @transform_7, window_bounds = array<i64: 50, 400>}, {pipeline_mode = #tpu.pipeline_mode<synchronous>, transform_indices = @transform_8, window_bounds = array<i64: 1, 400>}, {pipeline_mode = #tpu.pipeline_mode<synchronous>, transform_indices = @transform_9, window_bounds = array<i64: 400, 1024>}, {pipeline_mode = #tpu.pipeline_mode<synchronous>, transform_indices = @transform_10, window_bounds = array<i64: 1, 1024>}, {pipeline_mode = #tpu.pipeline_mode<synchronous>, transform_indices = @transform_11, window_bounds = array<i64: 8, 128>}, {pipeline_mode = #tpu.pipeline_mode<synchronous>, transform_indices = @transform_12, window_bounds = array<i64: 50, 128>}, {pipeline_mode = #tpu.pipeline_mode<synchronous>, transform_indices = @transform_13, window_bounds = array<i64: 1, 128>}, {pipeline_mode = #tpu.pipeline_mode<synchronous>, transform_indices = @transform_14, window_bounds = array<i64: 128, 2>}, {pipeline_mode = #tpu.pipeline_mode<synchronous>, transform_indices = @transform_15, window_bounds = array<i64: 1, 2>}, {transform_indices = @transform_16, window_bounds = array<i64: 2, 102>}, {transform_indices = @transform_17, window_bounds = array<i64: 2, 1024>}]} {
    %c0 = arith.constant 0 : index
    %c0_0 = arith.constant 0 : index
    %0 = vector.load %arg1[%c0, %c0_0] : memref<2x1024xf32, #tpu.memory_space<vmem>>, vector<2x1024xf32>
    %c0_1 = arith.constant 0 : index
    %c0_2 = arith.constant 0 : index
    %1 = vector.load %arg4[%c0_1, %c0_2] : memref<1024x400xbf16, #tpu.memory_space<vmem>>, vector<1024x400xbf16>
    %2 = arith.truncf %0 : vector<2x1024xf32> to vector<2x1024xbf16>
    %cst = arith.constant dense<0.000000e+00> : vector<2x400xf32>
    %3 = tpu.matmul %2, %1, %cst {dimension_numbers = #tpu.dot_dimension_numbers<[1], [0], [0], [1], [0, 0, 1, 1], [], []>} : vector<2x1024xbf16>, vector<1024x400xbf16>, vector<2x400xf32> -> vector<2x400xf32>
    %c0_3 = arith.constant 0 : index
    %c0_4 = arith.constant 0 : index
    %4 = vector.load %arg5[%c0_3, %c0_4] : memref<1x400xf32, #tpu.memory_space<vmem>>, vector<1x400xf32>
    %5 = vector.broadcast %4 : vector<1x400xf32> to vector<2x400xf32>
    %6 = arith.addf %3, %5 : vector<2x400xf32>
    %cst_5 = arith.constant 0.000000e+00 : f32
    %7 = vector.broadcast %cst_5 : f32 to vector<2x400xf32>
    %8 = arith.maximumf %6, %7 : vector<2x400xf32>
    %c0_6 = arith.constant 0 : index
    %c0_7 = arith.constant 0 : index
    %9 = vector.load %arg6[%c0_6, %c0_7] : memref<400x100xbf16, #tpu.memory_space<vmem>>, vector<400x100xbf16>
    %10 = arith.truncf %8 : vector<2x400xf32> to vector<2x400xbf16>
    %cst_8 = arith.constant dense<0.000000e+00> : vector<2x100xf32>
    %11 = tpu.matmul %10, %9, %cst_8 {dimension_numbers = #tpu.dot_dimension_numbers<[1], [0], [0], [1], [0, 0, 1, 1], [], []>} : vector<2x400xbf16>, vector<400x100xbf16>, vector<2x100xf32> -> vector<2x100xf32>
    %c0_9 = arith.constant 0 : index
    %c0_10 = arith.constant 0 : index
    %12 = vector.load %arg7[%c0_9, %c0_10] : memref<1x100xf32, #tpu.memory_space<vmem>>, vector<1x100xf32>
    %13 = vector.broadcast %12 : vector<1x100xf32> to vector<2x100xf32>
    %14 = arith.addf %11, %13 : vector<2x100xf32>
    %15 = vector.extract_strided_slice %14 {offsets = [0, 0], sizes = [2, 50], strides = [1, 1]} : vector<2x100xf32> to vector<2x50xf32>
    %16 = vector.extract_strided_slice %14 {offsets = [0, 50], sizes = [2, 50], strides = [1, 1]} : vector<2x100xf32> to vector<2x50xf32>
    %c0_11 = arith.constant 0 : index
    %c0_12 = arith.constant 0 : index
    %17 = vector.load %arg2[%c0_11, %c0_12] : memref<2x50xf32, #tpu.memory_space<vmem>>, vector<2x50xf32>
    %cst_13 = arith.constant 5.000000e-01 : f32
    %18 = vector.broadcast %cst_13 : f32 to vector<2x50xf32>
    %19 = arith.mulf %18, %16 : vector<2x50xf32>
    %20 = math.exp %19 : vector<2x50xf32>
    %21 = arith.mulf %17, %20 : vector<2x50xf32>
    %22 = arith.addf %15, %21 : vector<2x50xf32>
    %c0_14 = arith.constant 0 : index
    %c0_15 = arith.constant 0 : index
    %23 = vector.load %arg8[%c0_14, %c0_15] : memref<50x400xbf16, #tpu.memory_space<vmem>>, vector<50x400xbf16>
    %24 = arith.truncf %22 : vector<2x50xf32> to vector<2x50xbf16>
    %cst_16 = arith.constant dense<0.000000e+00> : vector<2x400xf32>
    %25 = tpu.matmul %24, %23, %cst_16 {dimension_numbers = #tpu.dot_dimension_numbers<[1], [0], [0], [1], [0, 0, 1, 1], [], []>} : vector<2x50xbf16>, vector<50x400xbf16>, vector<2x400xf32> -> vector<2x400xf32>
    %c0_17 = arith.constant 0 : index
    %c0_18 = arith.constant 0 : index
    %26 = vector.load %arg9[%c0_17, %c0_18] : memref<1x400xf32, #tpu.memory_space<vmem>>, vector<1x400xf32>
    %27 = vector.broadcast %26 : vector<1x400xf32> to vector<2x400xf32>
    %28 = arith.addf %25, %27 : vector<2x400xf32>
    %cst_19 = arith.constant 0.000000e+00 : f32
    %29 = vector.broadcast %cst_19 : f32 to vector<2x400xf32>
    %30 = arith.maximumf %28, %29 : vector<2x400xf32>
    %c0_20 = arith.constant 0 : index
    %c0_21 = arith.constant 0 : index
    %31 = vector.load %arg10[%c0_20, %c0_21] : memref<400x1024xbf16, #tpu.memory_space<vmem>>, vector<400x1024xbf16>
    %32 = arith.truncf %30 : vector<2x400xf32> to vector<2x400xbf16>
    %cst_22 = arith.constant dense<0.000000e+00> : vector<2x1024xf32>
    %33 = tpu.matmul %32, %31, %cst_22 {dimension_numbers = #tpu.dot_dimension_numbers<[1], [0], [0], [1], [0, 0, 1, 1], [], []>} : vector<2x400xbf16>, vector<400x1024xbf16>, vector<2x1024xf32> -> vector<2x1024xf32>
    %c0_23 = arith.constant 0 : index
    %c0_24 = arith.constant 0 : index
    %34 = vector.load %arg11[%c0_23, %c0_24] : memref<1x1024xf32, #tpu.memory_space<vmem>>, vector<1x1024xf32>
    %35 = vector.broadcast %34 : vector<1x1024xf32> to vector<2x1024xf32>
    %36 = arith.addf %33, %35 : vector<2x1024xf32>
    %37 = arith.negf %36 : vector<2x1024xf32>
    %38 = math.exp %37 : vector<2x1024xf32>
    %cst_25 = arith.constant 1.000000e+00 : f32
    %39 = vector.broadcast %cst_25 : f32 to vector<2x1024xf32>
    %40 = arith.addf %39, %38 : vector<2x1024xf32>
    %41 = arith.divf %39, %40 : vector<2x1024xf32>
    %c0_26 = arith.constant 0 : index
    %c0_27 = arith.constant 0 : index
    %42 = vector.load %arg3[%c0_26, %c0_27] : memref<2x8xf32, #tpu.memory_space<vmem>>, vector<2x8xf32>
    %c0_28 = arith.constant 0 : index
    %c0_29 = arith.constant 0 : index
    %43 = vector.load %arg12[%c0_28, %c0_29] : memref<8x128xbf16, #tpu.memory_space<vmem>>, vector<8x128xbf16>
    %44 = arith.truncf %42 : vector<2x8xf32> to vector<2x8xbf16>
    %cst_30 = arith.constant dense<0.000000e+00> : vector<2x128xf32>
    %45 = tpu.matmul %44, %43, %cst_30 {dimension_numbers = #tpu.dot_dimension_numbers<[1], [0], [0], [1], [0, 0, 1, 1], [], []>} : vector<2x8xbf16>, vector<8x128xbf16>, vector<2x128xf32> -> vector<2x128xf32>
    %c0_31 = arith.constant 0 : index
    %c0_32 = arith.constant 0 : index
    %46 = vector.load %arg13[%c0_31, %c0_32] : memref<50x128xbf16, #tpu.memory_space<vmem>>, vector<50x128xbf16>
    %47 = arith.truncf %22 : vector<2x50xf32> to vector<2x50xbf16>
    %cst_33 = arith.constant dense<0.000000e+00> : vector<2x128xf32>
    %48 = tpu.matmul %47, %46, %cst_33 {dimension_numbers = #tpu.dot_dimension_numbers<[1], [0], [0], [1], [0, 0, 1, 1], [], []>} : vector<2x50xbf16>, vector<50x128xbf16>, vector<2x128xf32> -> vector<2x128xf32>
    %49 = arith.addf %45, %48 : vector<2x128xf32>
    %c0_34 = arith.constant 0 : index
    %c0_35 = arith.constant 0 : index
    %50 = vector.load %arg14[%c0_34, %c0_35] : memref<1x128xf32, #tpu.memory_space<vmem>>, vector<1x128xf32>
    %51 = vector.broadcast %50 : vector<1x128xf32> to vector<2x128xf32>
    %52 = arith.addf %49, %51 : vector<2x128xf32>
    %cst_36 = arith.constant 0.000000e+00 : f32
    %53 = vector.broadcast %cst_36 : f32 to vector<2x128xf32>
    %54 = arith.maximumf %52, %53 : vector<2x128xf32>
    %c0_37 = arith.constant 0 : index
    %c0_38 = arith.constant 0 : index
    %55 = vector.load %arg15[%c0_37, %c0_38] : memref<128x2xbf16, #tpu.memory_space<vmem>>, vector<128x2xbf16>
    %56 = arith.truncf %54 : vector<2x128xf32> to vector<2x128xbf16>
    %cst_39 = arith.constant dense<0.000000e+00> : vector<2x2xf32>
    %57 = tpu.matmul %56, %55, %cst_39 {dimension_numbers = #tpu.dot_dimension_numbers<[1], [0], [0], [1], [0, 0, 1, 1], [], []>} : vector<2x128xbf16>, vector<128x2xbf16>, vector<2x2xf32> -> vector<2x2xf32>
    %c0_40 = arith.constant 0 : index
    %c0_41 = arith.constant 0 : index
    %58 = vector.load %arg16[%c0_40, %c0_41] : memref<1x2xf32, #tpu.memory_space<vmem>>, vector<1x2xf32>
    %59 = vector.broadcast %58 : vector<1x2xf32> to vector<2x2xf32>
    %60 = arith.addf %57, %59 : vector<2x2xf32>
    %61 = tpu.concatenate %14, %60 in 1 : vector<2x100xf32>, vector<2x2xf32> -> vector<2x102xf32>
    %c0_42 = arith.constant 0 : index
    %c0_43 = arith.constant 0 : index
    %62 = vector.load %arg17[%c0_42, %c0_43] : memref<2x102xf32, #tpu.memory_space<vmem>>, vector<2x102xf32>
    tpu.vector_store %arg17[%c0_42, %c0_43], %61 {strides = array<i32>} : memref<2x102xf32, #tpu.memory_space<vmem>>, vector<2x102xf32>,
    %c0_44 = arith.constant 0 : index
    %c0_45 = arith.constant 0 : index
    %63 = vector.load %arg18[%c0_44, %c0_45] : memref<2x1024xf32, #tpu.memory_space<vmem>>, vector<2x1024xf32>
    tpu.vector_store %arg18[%c0_44, %c0_45], %41 {strides = array<i32>} : memref<2x1024xf32, #tpu.memory_space<vmem>>, vector<2x1024xf32>,
    return
  }
  func.func @transform_0(%arg0: i32) -> (i32, i32) {
    %c0_i32 = arith.constant 0 : i32
    %c0_i32_0 = arith.constant 0 : i32
    return %arg0, %c0_i32 : i32, i32
  }
  func.func @transform_1(%arg0: i32) -> (i32, i32) {
    %c0_i32 = arith.constant 0 : i32
    %c0_i32_0 = arith.constant 0 : i32
    return %arg0, %c0_i32 : i32, i32
  }
  func.func @transform_2(%arg0: i32) -> (i32, i32) {
    %c0_i32 = arith.constant 0 : i32
    %c0_i32_0 = arith.constant 0 : i32
    return %arg0, %c0_i32 : i32, i32
  }
  func.func @transform_3(%arg0: i32) -> (i32, i32) {
    %c0_i32 = arith.constant 0 : i32
    %c0_i32_0 = arith.constant 0 : i32
    %c0_i32_1 = arith.constant 0 : i32
    return %c0_i32, %c0_i32_0 : i32, i32
  }
  func.func @transform_4(%arg0: i32) -> (i32, i32) {
    %c0_i32 = arith.constant 0 : i32
    %c0_i32_0 = arith.constant 0 : i32
    %c0_i32_1 = arith.constant 0 : i32
    return %c0_i32, %c0_i32_0 : i32, i32
  }
  func.func @transform_5(%arg0: i32) -> (i32, i32) {
    %c0_i32 = arith.constant 0 : i32
    %c0_i32_0 = arith.constant 0 : i32
    %c0_i32_1 = arith.constant 0 : i32
    return %c0_i32, %c0_i32_0 : i32, i32
  }
  func.func @transform_6(%arg0: i32) -> (i32, i32) {
    %c0_i32 = arith.constant 0 : i32
    %c0_i32_0 = arith.constant 0 : i32
    %c0_i32_1 = arith.constant 0 : i32
    return %c0_i32, %c0_i32_0 : i32, i32
  }
  func.func @transform_7(%arg0: i32) -> (i32, i32) {
    %c0_i32 = arith.constant 0 : i32
    %c0_i32_0 = arith.constant 0 : i32
    %c0_i32_1 = arith.constant 0 : i32
    return %c0_i32, %c0_i32_0 : i32, i32
  }
  func.func @transform_8(%arg0: i32) -> (i32, i32) {
    %c0_i32 = arith.constant 0 : i32
    %c0_i32_0 = arith.constant 0 : i32
    %c0_i32_1 = arith.constant 0 : i32
    return %c0_i32, %c0_i32_0 : i32, i32
  }
  func.func @transform_9(%arg0: i32) -> (i32, i32) {
    %c0_i32 = arith.constant 0 : i32
    %c0_i32_0 = arith.constant 0 : i32
    %c0_i32_1 = arith.constant 0 : i32
    return %c0_i32, %c0_i32_0 : i32, i32
  }
  func.func @transform_10(%arg0: i32) -> (i32, i32) {
    %c0_i32 = arith.constant 0 : i32
    %c0_i32_0 = arith.constant 0 : i32
    %c0_i32_1 = arith.constant 0 : i32
    return %c0_i32, %c0_i32_0 : i32, i32
  }
  func.func @transform_11(%arg0: i32) -> (i32, i32) {
    %c0_i32 = arith.constant 0 : i32
    %c0_i32_0 = arith.constant 0 : i32
    %c0_i32_1 = arith.constant 0 : i32
    return %c0_i32, %c0_i32_0 : i32, i32
  }
  func.func @transform_12(%arg0: i32) -> (i32, i32) {
    %c0_i32 = arith.constant 0 : i32
    %c0_i32_0 = arith.constant 0 : i32
    %c0_i32_1 = arith.constant 0 : i32
    return %c0_i32, %c0_i32_0 : i32, i32
  }
  func.func @transform_13(%arg0: i32) -> (i32, i32) {
    %c0_i32 = arith.constant 0 : i32
    %c0_i32_0 = arith.constant 0 : i32
    %c0_i32_1 = arith.constant 0 : i32
    return %c0_i32, %c0_i32_0 : i32, i32
  }
  func.func @transform_14(%arg0: i32) -> (i32, i32) {
    %c0_i32 = arith.constant 0 : i32
    %c0_i32_0 = arith.constant 0 : i32
    %c0_i32_1 = arith.constant 0 : i32
    return %c0_i32, %c0_i32_0 : i32, i32
  }
  func.func @transform_15(%arg0: i32) -> (i32, i32) {
    %c0_i32 = arith.constant 0 : i32
    %c0_i32_0 = arith.constant 0 : i32
    %c0_i32_1 = arith.constant 0 : i32
    return %c0_i32, %c0_i32_0 : i32, i32
  }
  func.func @transform_16(%arg0: i32) -> (i32, i32) {
    %c0_i32 = arith.constant 0 : i32
    %c0_i32_0 = arith.constant 0 : i32
    return %arg0, %c0_i32 : i32, i32
  }
  func.func @transform_17(%arg0: i32) -> (i32, i32) {
    %c0_i32 = arith.constant 0 : i32
    %c0_i32_0 = arith.constant 0 : i32
    return %arg0, %c0_i32 : i32, i32
  }
}

module attributes {stable_mosaic.version = 11 : i64} {
  func.func @_fused_vit_kernel(%arg0: i32, %arg1: i32, %arg2: memref<2x16x64xf32, #tpu.memory_space<vmem>>, %arg3: memref<64x8xbf16, #tpu.memory_space<vmem>>, %arg4: memref<1x8xf32, #tpu.memory_space<vmem>>, %arg5: memref<17x8xf32, #tpu.memory_space<vmem>>, %arg6: memref<1x1x8xf32, #tpu.memory_space<vmem>>, %arg7: memref<1x1x8xf32, #tpu.memory_space<vmem>>, %arg8: memref<1x8x24xbf16, #tpu.memory_space<vmem>>, %arg9: memref<1x1x24xf32, #tpu.memory_space<vmem>>, %arg10: memref<1x1x8xf32, #tpu.memory_space<vmem>>, %arg11: memref<1x1x8xf32, #tpu.memory_space<vmem>>, %arg12: memref<1x8x32xbf16, #tpu.memory_space<vmem>>, %arg13: memref<1x1x32xf32, #tpu.memory_space<vmem>>, %arg14: memref<1x32x8xbf16, #tpu.memory_space<vmem>>, %arg15: memref<1x1x8xf32, #tpu.memory_space<vmem>>, %arg16: memref<2x8xf32, #tpu.memory_space<vmem>>, %arg17: memref<2x17x8xf32, #tpu.memory_space<vmem>>) attributes {dimension_semantics = [#tpu.dimension_semantics<parallel>, #tpu.dimension_semantics<arbitrary>], iteration_bounds = array<i64: 1, 2>, scalar_prefetch = 0 : i64, scratch_operands = 1 : i64, tpu.core_type = #tpu.core_type<tc>, window_params = [{transform_indices = @transform_0, window_bounds = array<i64: 2, 16, 64>}, {pipeline_mode = #tpu.pipeline_mode<synchronous>, transform_indices = @transform_1, window_bounds = array<i64: 64, 8>}, {pipeline_mode = #tpu.pipeline_mode<synchronous>, transform_indices = @transform_2, window_bounds = array<i64: 1, 8>}, {pipeline_mode = #tpu.pipeline_mode<synchronous>, transform_indices = @transform_3, window_bounds = array<i64: 17, 8>}, {transform_indices = @transform_4, window_bounds = array<i64: 1, 1, 8>}, {transform_indices = @transform_5, window_bounds = array<i64: 1, 1, 8>}, {transform_indices = @transform_6, window_bounds = array<i64: 1, 8, 24>}, {transform_indices = @transform_7, window_bounds = array<i64: 1, 1, 24>}, {transform_indices = @transform_8, window_bounds = array<i64: 1, 1, 8>}, {transform_indices = @transform_9, window_bounds = array<i64: 1, 1, 8>}, {transform_indices = @transform_10, window_bounds = array<i64: 1, 8, 32>}, {transform_indices = @transform_11, window_bounds = array<i64: 1, 1, 32>}, {transform_indices = @transform_12, window_bounds = array<i64: 1, 32, 8>}, {transform_indices = @transform_13, window_bounds = array<i64: 1, 1, 8>}, {transform_indices = @transform_14, window_bounds = array<i64: 2, 8>}]} {
    %c0_i32 = arith.constant 0 : i32
    %0 = arith.cmpi eq, %arg1, %c0_i32 : i32
    %1 = arith.extui %0 : i1 to i32
    %c0_i32_0 = arith.constant 0 : i32
    %2 = arith.cmpi ne, %1, %c0_i32_0 : i32
    scf.if %2 {
      %c0_63 = arith.constant 0 : index
      %c0_64 = arith.constant 0 : index
      %c0_65 = arith.constant 0 : index
      %144 = vector.load %arg2[%c0_63, %c0_64, %c0_65] : memref<2x16x64xf32, #tpu.memory_space<vmem>>, vector<2x16x64xf32>
      %145 = vector.shape_cast %144 : vector<2x16x64xf32> to vector<32x64xf32>
      %c0_66 = arith.constant 0 : index
      %c0_67 = arith.constant 0 : index
      %146 = vector.load %arg3[%c0_66, %c0_67] : memref<64x8xbf16, #tpu.memory_space<vmem>>, vector<64x8xbf16>
      %147 = arith.truncf %145 : vector<32x64xf32> to vector<32x64xbf16>
      %cst_68 = arith.constant dense<0.000000e+00> : vector<32x8xf32>
      %148 = tpu.matmul %147, %146, %cst_68 {dimension_numbers = #tpu.dot_dimension_numbers<[1], [0], [0], [1], [0, 0, 1, 1], [], []>} : vector<32x64xbf16>, vector<64x8xbf16>, vector<32x8xf32> -> vector<32x8xf32>
      %c0_69 = arith.constant 0 : index
      %c0_70 = arith.constant 0 : index
      %149 = vector.load %arg4[%c0_69, %c0_70] : memref<1x8xf32, #tpu.memory_space<vmem>>, vector<1x8xf32>
      %150 = vector.broadcast %149 : vector<1x8xf32> to vector<32x8xf32>
      %151 = arith.addf %148, %150 : vector<32x8xf32>
      %152 = vector.shape_cast %151 : vector<32x8xf32> to vector<2x16x8xf32>
      %c0_71 = arith.constant 0 : index
      %c0_72 = arith.constant 0 : index
      %153 = vector.load %arg5[%c0_71, %c0_72] : memref<17x8xf32, #tpu.memory_space<vmem>>, vector<17x8xf32>
      %154 = vector.extract_strided_slice %153 {offsets = [0, 0], sizes = [1, 8], strides = [1, 1]} : vector<17x8xf32> to vector<1x8xf32>
      %155 = vector.shape_cast %154 : vector<1x8xf32> to vector<1x1x8xf32>
      %156 = vector.shape_cast %155 : vector<1x1x8xf32> to vector<1x1x8xf32>
      %157 = vector.broadcast %156 : vector<1x1x8xf32> to vector<2x1x8xf32>
      %158 = vector.extract_strided_slice %153 {offsets = [1, 0], sizes = [16, 8], strides = [1, 1]} : vector<17x8xf32> to vector<16x8xf32>
      %159 = vector.shape_cast %158 : vector<16x8xf32> to vector<1x16x8xf32>
      %160 = vector.broadcast %159 : vector<1x16x8xf32> to vector<2x16x8xf32>
      %161 = arith.addf %152, %160 : vector<2x16x8xf32>
      %162 = tpu.concatenate %157, %161 in 1 : vector<2x1x8xf32>, vector<2x16x8xf32> -> vector<2x17x8xf32>
      %c0_73 = arith.constant 0 : index
      %c0_74 = arith.constant 0 : index
      %c0_75 = arith.constant 0 : index
      %163 = vector.load %arg17[%c0_73, %c0_74, %c0_75] : memref<2x17x8xf32, #tpu.memory_space<vmem>>, vector<2x17x8xf32>
      tpu.vector_store %arg17[%c0_73, %c0_74, %c0_75], %162 {strides = array<i32>} : memref<2x17x8xf32, #tpu.memory_space<vmem>>, vector<2x17x8xf32>,
    } else {
    }
    %c0 = arith.constant 0 : index
    %c0_1 = arith.constant 0 : index
    %c0_2 = arith.constant 0 : index
    %3 = vector.load %arg17[%c0, %c0_1, %c0_2] : memref<2x17x8xf32, #tpu.memory_space<vmem>>, vector<2x17x8xf32>
    %4 = vector.shape_cast %3 : vector<2x17x8xf32> to vector<34x8xf32>
    %c0_3 = arith.constant 0 : index
    %c0_4 = arith.constant 0 : index
    %c0_5 = arith.constant 0 : index
    %5 = vector.load %arg6[%c0_3, %c0_4, %c0_5] : memref<1x1x8xf32, #tpu.memory_space<vmem>>, vector<1x1x8xf32>
    %6 = vector.shape_cast %5 : vector<1x1x8xf32> to vector<1x8xf32>
    %c0_6 = arith.constant 0 : index
    %c0_7 = arith.constant 0 : index
    %c0_8 = arith.constant 0 : index
    %7 = vector.load %arg7[%c0_6, %c0_7, %c0_8] : memref<1x1x8xf32, #tpu.memory_space<vmem>>, vector<1x1x8xf32>
    %8 = vector.shape_cast %7 : vector<1x1x8xf32> to vector<1x8xf32>
    %cst = arith.constant dense<0.000000e+00> : vector<34xf32>
    %9 = vector.multi_reduction <add>, %4, %cst [1] : vector<34x8xf32> to vector<34xf32>
    %10 = vector.shape_cast %9 : vector<34xf32> to vector<34x1xf32>
    %cst_9 = arith.constant 8.000000e+00 : f32
    %11 = vector.broadcast %cst_9 : f32 to vector<34x1xf32>
    %12 = arith.divf %10, %11 : vector<34x1xf32>
    %13 = vector.broadcast %12 : vector<34x1xf32> to vector<34x8xf32>
    %14 = arith.subf %4, %13 : vector<34x8xf32>
    %15 = arith.mulf %14, %14 : vector<34x8xf32>
    %cst_10 = arith.constant dense<0.000000e+00> : vector<34xf32>
    %16 = vector.multi_reduction <add>, %15, %cst_10 [1] : vector<34x8xf32> to vector<34xf32>
    %17 = vector.shape_cast %16 : vector<34xf32> to vector<34x1xf32>
    %cst_11 = arith.constant 8.000000e+00 : f32
    %18 = vector.broadcast %cst_11 : f32 to vector<34x1xf32>
    %19 = arith.divf %17, %18 : vector<34x1xf32>
    %20 = vector.broadcast %12 : vector<34x1xf32> to vector<34x8xf32>
    %21 = arith.subf %4, %20 : vector<34x8xf32>
    %cst_12 = arith.constant 9.99999974E-6 : f32
    %22 = vector.broadcast %cst_12 : f32 to vector<34x1xf32>
    %23 = arith.addf %19, %22 : vector<34x1xf32>
    %24 = math.rsqrt %23 : vector<34x1xf32>
    %25 = vector.broadcast %24 : vector<34x1xf32> to vector<34x8xf32>
    %26 = arith.mulf %21, %25 : vector<34x8xf32>
    %27 = vector.broadcast %6 : vector<1x8xf32> to vector<34x8xf32>
    %28 = arith.mulf %26, %27 : vector<34x8xf32>
    %29 = vector.broadcast %8 : vector<1x8xf32> to vector<34x8xf32>
    %30 = arith.addf %28, %29 : vector<34x8xf32>
    %c0_13 = arith.constant 0 : index
    %c0_14 = arith.constant 0 : index
    %c0_15 = arith.constant 0 : index
    %31 = vector.load %arg8[%c0_13, %c0_14, %c0_15] : memref<1x8x24xbf16, #tpu.memory_space<vmem>>, vector<1x8x24xbf16>
    %32 = vector.shape_cast %31 : vector<1x8x24xbf16> to vector<8x24xbf16>
    %33 = arith.truncf %30 : vector<34x8xf32> to vector<34x8xbf16>
    %cst_16 = arith.constant dense<0.000000e+00> : vector<34x24xf32>
    %34 = tpu.matmul %33, %32, %cst_16 {dimension_numbers = #tpu.dot_dimension_numbers<[1], [0], [0], [1], [0, 0, 1, 1], [], []>} : vector<34x8xbf16>, vector<8x24xbf16>, vector<34x24xf32> -> vector<34x24xf32>
    %c0_17 = arith.constant 0 : index
    %c0_18 = arith.constant 0 : index
    %c0_19 = arith.constant 0 : index
    %35 = vector.load %arg9[%c0_17, %c0_18, %c0_19] : memref<1x1x24xf32, #tpu.memory_space<vmem>>, vector<1x1x24xf32>
    %36 = vector.shape_cast %35 : vector<1x1x24xf32> to vector<1x24xf32>
    %37 = vector.broadcast %36 : vector<1x24xf32> to vector<34x24xf32>
    %38 = arith.addf %34, %37 : vector<34x24xf32>
    %39 = vector.extract_strided_slice %38 {offsets = [0, 0], sizes = [34, 4], strides = [1, 1]} : vector<34x24xf32> to vector<34x4xf32>
    %40 = vector.shape_cast %39 : vector<34x4xf32> to vector<2x17x4xf32>
    %41 = vector.extract_strided_slice %38 {offsets = [0, 8], sizes = [34, 4], strides = [1, 1]} : vector<34x24xf32> to vector<34x4xf32>
    %42 = vector.shape_cast %41 : vector<34x4xf32> to vector<2x17x4xf32>
    %43 = vector.extract_strided_slice %38 {offsets = [0, 16], sizes = [34, 4], strides = [1, 1]} : vector<34x24xf32> to vector<34x4xf32>
    %44 = vector.shape_cast %43 : vector<34x4xf32> to vector<2x17x4xf32>
    %45 = arith.truncf %40 : vector<2x17x4xf32> to vector<2x17x4xbf16>
    %46 = arith.truncf %42 : vector<2x17x4xf32> to vector<2x17x4xbf16>
    "tpu.trace_start"() <{level = 10 : i32, message = "bqd,bkd->bqk"}> : () -> ()
    %cst_20 = arith.constant dense<0.000000e+00> : vector<2x17x17xf32>
    %47 = tpu.matmul %45, %46, %cst_20 {dimension_numbers = #tpu.dot_dimension_numbers<[2], [2], [1], [1], [0, 0, 0, 1, 1, 1], [0], [0]>} : vector<2x17x4xbf16>, vector<2x17x4xbf16>, vector<2x17x17xf32> -> vector<2x17x17xf32>
    "tpu.trace_stop"() : () -> ()
    %cst_21 = arith.constant 5.000000e-01 : f32
    %48 = vector.broadcast %cst_21 : f32 to vector<2x17x17xf32>
    %49 = arith.mulf %47, %48 : vector<2x17x17xf32>
    %cst_22 = arith.constant dense<0xFF800000> : vector<2x17xf32>
    %50 = vector.multi_reduction <maximumf>, %49, %cst_22 [2] : vector<2x17x17xf32> to vector<2x17xf32>
    %51 = vector.shape_cast %50 : vector<2x17xf32> to vector<2x17x1xf32>
    %52 = vector.broadcast %51 : vector<2x17x1xf32> to vector<2x17x17xf32>
    %53 = arith.subf %49, %52 : vector<2x17x17xf32>
    %54 = math.exp %53 : vector<2x17x17xf32>
    %cst_23 = arith.constant dense<0.000000e+00> : vector<2x17xf32>
    %55 = vector.multi_reduction <add>, %54, %cst_23 [2] : vector<2x17x17xf32> to vector<2x17xf32>
    %56 = vector.shape_cast %55 : vector<2x17xf32> to vector<2x17x1xf32>
    %57 = vector.broadcast %56 : vector<2x17x1xf32> to vector<2x17x17xf32>
    %58 = arith.divf %54, %57 : vector<2x17x17xf32>
    %59 = arith.truncf %58 : vector<2x17x17xf32> to vector<2x17x17xbf16>
    %60 = arith.truncf %44 : vector<2x17x4xf32> to vector<2x17x4xbf16>
    "tpu.trace_start"() <{level = 10 : i32, message = "bqk,bkd->bqd"}> : () -> ()
    %cst_24 = arith.constant dense<0.000000e+00> : vector<2x17x4xf32>
    %61 = tpu.matmul %59, %60, %cst_24 {dimension_numbers = #tpu.dot_dimension_numbers<[2], [1], [1], [2], [0, 0, 0, 1, 1, 2], [0], [0]>} : vector<2x17x17xbf16>, vector<2x17x4xbf16>, vector<2x17x4xf32> -> vector<2x17x4xf32>
    "tpu.trace_stop"() : () -> ()
    %62 = vector.extract_strided_slice %38 {offsets = [0, 4], sizes = [34, 4], strides = [1, 1]} : vector<34x24xf32> to vector<34x4xf32>
    %63 = vector.shape_cast %62 : vector<34x4xf32> to vector<2x17x4xf32>
    %64 = vector.extract_strided_slice %38 {offsets = [0, 12], sizes = [34, 4], strides = [1, 1]} : vector<34x24xf32> to vector<34x4xf32>
    %65 = vector.shape_cast %64 : vector<34x4xf32> to vector<2x17x4xf32>
    %66 = vector.extract_strided_slice %38 {offsets = [0, 20], sizes = [34, 4], strides = [1, 1]} : vector<34x24xf32> to vector<34x4xf32>
    %67 = vector.shape_cast %66 : vector<34x4xf32> to vector<2x17x4xf32>
    %68 = arith.truncf %63 : vector<2x17x4xf32> to vector<2x17x4xbf16>
    %69 = arith.truncf %65 : vector<2x17x4xf32> to vector<2x17x4xbf16>
    "tpu.trace_start"() <{level = 10 : i32, message = "bqd,bkd->bqk"}> : () -> ()
    %cst_25 = arith.constant dense<0.000000e+00> : vector<2x17x17xf32>
    %70 = tpu.matmul %68, %69, %cst_25 {dimension_numbers = #tpu.dot_dimension_numbers<[2], [2], [1], [1], [0, 0, 0, 1, 1, 1], [0], [0]>} : vector<2x17x4xbf16>, vector<2x17x4xbf16>, vector<2x17x17xf32> -> vector<2x17x17xf32>
    "tpu.trace_stop"() : () -> ()
    %cst_26 = arith.constant 5.000000e-01 : f32
    %71 = vector.broadcast %cst_26 : f32 to vector<2x17x17xf32>
    %72 = arith.mulf %70, %71 : vector<2x17x17xf32>
    %cst_27 = arith.constant dense<0xFF800000> : vector<2x17xf32>
    %73 = vector.multi_reduction <maximumf>, %72, %cst_27 [2] : vector<2x17x17xf32> to vector<2x17xf32>
    %74 = vector.shape_cast %73 : vector<2x17xf32> to vector<2x17x1xf32>
    %75 = vector.broadcast %74 : vector<2x17x1xf32> to vector<2x17x17xf32>
    %76 = arith.subf %72, %75 : vector<2x17x17xf32>
    %77 = math.exp %76 : vector<2x17x17xf32>
    %cst_28 = arith.constant dense<0.000000e+00> : vector<2x17xf32>
    %78 = vector.multi_reduction <add>, %77, %cst_28 [2] : vector<2x17x17xf32> to vector<2x17xf32>
    %79 = vector.shape_cast %78 : vector<2x17xf32> to vector<2x17x1xf32>
    %80 = vector.broadcast %79 : vector<2x17x1xf32> to vector<2x17x17xf32>
    %81 = arith.divf %77, %80 : vector<2x17x17xf32>
    %82 = arith.truncf %81 : vector<2x17x17xf32> to vector<2x17x17xbf16>
    %83 = arith.truncf %67 : vector<2x17x4xf32> to vector<2x17x4xbf16>
    "tpu.trace_start"() <{level = 10 : i32, message = "bqk,bkd->bqd"}> : () -> ()
    %cst_29 = arith.constant dense<0.000000e+00> : vector<2x17x4xf32>
    %84 = tpu.matmul %82, %83, %cst_29 {dimension_numbers = #tpu.dot_dimension_numbers<[2], [1], [1], [2], [0, 0, 0, 1, 1, 2], [0], [0]>} : vector<2x17x17xbf16>, vector<2x17x4xbf16>, vector<2x17x4xf32> -> vector<2x17x4xf32>
    "tpu.trace_stop"() : () -> ()
    %85 = tpu.concatenate %61, %84 in 2 : vector<2x17x4xf32>, vector<2x17x4xf32> -> vector<2x17x8xf32>
    %86 = arith.addf %3, %85 : vector<2x17x8xf32>
    %87 = vector.shape_cast %86 : vector<2x17x8xf32> to vector<34x8xf32>
    %c0_30 = arith.constant 0 : index
    %c0_31 = arith.constant 0 : index
    %c0_32 = arith.constant 0 : index
    %88 = vector.load %arg10[%c0_30, %c0_31, %c0_32] : memref<1x1x8xf32, #tpu.memory_space<vmem>>, vector<1x1x8xf32>
    %89 = vector.shape_cast %88 : vector<1x1x8xf32> to vector<1x8xf32>
    %c0_33 = arith.constant 0 : index
    %c0_34 = arith.constant 0 : index
    %c0_35 = arith.constant 0 : index
    %90 = vector.load %arg11[%c0_33, %c0_34, %c0_35] : memref<1x1x8xf32, #tpu.memory_space<vmem>>, vector<1x1x8xf32>
    %91 = vector.shape_cast %90 : vector<1x1x8xf32> to vector<1x8xf32>
    %cst_36 = arith.constant dense<0.000000e+00> : vector<34xf32>
    %92 = vector.multi_reduction <add>, %87, %cst_36 [1] : vector<34x8xf32> to vector<34xf32>
    %93 = vector.shape_cast %92 : vector<34xf32> to vector<34x1xf32>
    %cst_37 = arith.constant 8.000000e+00 : f32
    %94 = vector.broadcast %cst_37 : f32 to vector<34x1xf32>
    %95 = arith.divf %93, %94 : vector<34x1xf32>
    %96 = vector.broadcast %95 : vector<34x1xf32> to vector<34x8xf32>
    %97 = arith.subf %87, %96 : vector<34x8xf32>
    %98 = arith.mulf %97, %97 : vector<34x8xf32>
    %cst_38 = arith.constant dense<0.000000e+00> : vector<34xf32>
    %99 = vector.multi_reduction <add>, %98, %cst_38 [1] : vector<34x8xf32> to vector<34xf32>
    %100 = vector.shape_cast %99 : vector<34xf32> to vector<34x1xf32>
    %cst_39 = arith.constant 8.000000e+00 : f32
    %101 = vector.broadcast %cst_39 : f32 to vector<34x1xf32>
    %102 = arith.divf %100, %101 : vector<34x1xf32>
    %103 = vector.broadcast %95 : vector<34x1xf32> to vector<34x8xf32>
    %104 = arith.subf %87, %103 : vector<34x8xf32>
    %cst_40 = arith.constant 9.99999974E-6 : f32
    %105 = vector.broadcast %cst_40 : f32 to vector<34x1xf32>
    %106 = arith.addf %102, %105 : vector<34x1xf32>
    %107 = math.rsqrt %106 : vector<34x1xf32>
    %108 = vector.broadcast %107 : vector<34x1xf32> to vector<34x8xf32>
    %109 = arith.mulf %104, %108 : vector<34x8xf32>
    %110 = vector.broadcast %89 : vector<1x8xf32> to vector<34x8xf32>
    %111 = arith.mulf %109, %110 : vector<34x8xf32>
    %112 = vector.broadcast %91 : vector<1x8xf32> to vector<34x8xf32>
    %113 = arith.addf %111, %112 : vector<34x8xf32>
    %c0_41 = arith.constant 0 : index
    %c0_42 = arith.constant 0 : index
    %c0_43 = arith.constant 0 : index
    %114 = vector.load %arg12[%c0_41, %c0_42, %c0_43] : memref<1x8x32xbf16, #tpu.memory_space<vmem>>, vector<1x8x32xbf16>
    %115 = vector.shape_cast %114 : vector<1x8x32xbf16> to vector<8x32xbf16>
    %116 = arith.truncf %113 : vector<34x8xf32> to vector<34x8xbf16>
    %cst_44 = arith.constant dense<0.000000e+00> : vector<34x32xf32>
    %117 = tpu.matmul %116, %115, %cst_44 {dimension_numbers = #tpu.dot_dimension_numbers<[1], [0], [0], [1], [0, 0, 1, 1], [], []>} : vector<34x8xbf16>, vector<8x32xbf16>, vector<34x32xf32> -> vector<34x32xf32>
    %c0_45 = arith.constant 0 : index
    %c0_46 = arith.constant 0 : index
    %c0_47 = arith.constant 0 : index
    %118 = vector.load %arg13[%c0_45, %c0_46, %c0_47] : memref<1x1x32xf32, #tpu.memory_space<vmem>>, vector<1x1x32xf32>
    %119 = vector.shape_cast %118 : vector<1x1x32xf32> to vector<1x32xf32>
    %120 = vector.broadcast %119 : vector<1x32xf32> to vector<34x32xf32>
    %121 = arith.addf %117, %120 : vector<34x32xf32>
    %cst_48 = arith.constant 5.000000e-01 : f32
    %122 = vector.broadcast %cst_48 : f32 to vector<34x32xf32>
    %123 = arith.mulf %122, %121 : vector<34x32xf32>
    %cst_49 = arith.constant 0.707106769 : f32
    %124 = vector.broadcast %cst_49 : f32 to vector<34x32xf32>
    %125 = arith.mulf %121, %124 : vector<34x32xf32>
    %126 = math.erf %125 : vector<34x32xf32>
    %cst_50 = arith.constant 1.000000e+00 : f32
    %127 = vector.broadcast %cst_50 : f32 to vector<34x32xf32>
    %128 = arith.addf %127, %126 : vector<34x32xf32>
    %129 = arith.mulf %123, %128 : vector<34x32xf32>
    %c0_51 = arith.constant 0 : index
    %c0_52 = arith.constant 0 : index
    %c0_53 = arith.constant 0 : index
    %130 = vector.load %arg14[%c0_51, %c0_52, %c0_53] : memref<1x32x8xbf16, #tpu.memory_space<vmem>>, vector<1x32x8xbf16>
    %131 = vector.shape_cast %130 : vector<1x32x8xbf16> to vector<32x8xbf16>
    %132 = arith.truncf %129 : vector<34x32xf32> to vector<34x32xbf16>
    %cst_54 = arith.constant dense<0.000000e+00> : vector<34x8xf32>
    %133 = tpu.matmul %132, %131, %cst_54 {dimension_numbers = #tpu.dot_dimension_numbers<[1], [0], [0], [1], [0, 0, 1, 1], [], []>} : vector<34x32xbf16>, vector<32x8xbf16>, vector<34x8xf32> -> vector<34x8xf32>
    %c0_55 = arith.constant 0 : index
    %c0_56 = arith.constant 0 : index
    %c0_57 = arith.constant 0 : index
    %134 = vector.load %arg15[%c0_55, %c0_56, %c0_57] : memref<1x1x8xf32, #tpu.memory_space<vmem>>, vector<1x1x8xf32>
    %135 = vector.shape_cast %134 : vector<1x1x8xf32> to vector<1x8xf32>
    %136 = vector.broadcast %135 : vector<1x8xf32> to vector<34x8xf32>
    %137 = arith.addf %133, %136 : vector<34x8xf32>
    %138 = vector.shape_cast %137 : vector<34x8xf32> to vector<2x17x8xf32>
    %139 = arith.addf %86, %138 : vector<2x17x8xf32>
    %c0_58 = arith.constant 0 : index
    %c0_59 = arith.constant 0 : index
    %c0_60 = arith.constant 0 : index
    %140 = vector.load %arg17[%c0_58, %c0_59, %c0_60] : memref<2x17x8xf32, #tpu.memory_space<vmem>>, vector<2x17x8xf32>
    tpu.vector_store %arg17[%c0_58, %c0_59, %c0_60], %139 {strides = array<i32>} : memref<2x17x8xf32, #tpu.memory_space<vmem>>, vector<2x17x8xf32>,
    %141 = vector.extract_strided_slice %139 {offsets = [0, 0, 0], sizes = [2, 1, 8], strides = [1, 1, 1]} : vector<2x17x8xf32> to vector<2x1x8xf32>
    %142 = vector.shape_cast %141 : vector<2x1x8xf32> to vector<2x8xf32>
    %c0_61 = arith.constant 0 : index
    %c0_62 = arith.constant 0 : index
    %143 = vector.load %arg16[%c0_61, %c0_62] : memref<2x8xf32, #tpu.memory_space<vmem>>, vector<2x8xf32>
    tpu.vector_store %arg16[%c0_61, %c0_62], %142 {strides = array<i32>} : memref<2x8xf32, #tpu.memory_space<vmem>>, vector<2x8xf32>,
    return
  }
  func.func @transform_0(%arg0: i32, %arg1: i32) -> (i32, i32, i32) {
    %c0_i32 = arith.constant 0 : i32
    %c0_i32_0 = arith.constant 0 : i32
    %c0_i32_1 = arith.constant 0 : i32
    return %arg0, %c0_i32, %c0_i32_0 : i32, i32, i32
  }
  func.func @transform_1(%arg0: i32, %arg1: i32) -> (i32, i32) {
    %c0_i32 = arith.constant 0 : i32
    %c0_i32_0 = arith.constant 0 : i32
    %c0_i32_1 = arith.constant 0 : i32
    return %c0_i32, %c0_i32_0 : i32, i32
  }
  func.func @transform_2(%arg0: i32, %arg1: i32) -> (i32, i32) {
    %c0_i32 = arith.constant 0 : i32
    %c0_i32_0 = arith.constant 0 : i32
    %c0_i32_1 = arith.constant 0 : i32
    return %c0_i32, %c0_i32_0 : i32, i32
  }
  func.func @transform_3(%arg0: i32, %arg1: i32) -> (i32, i32) {
    %c0_i32 = arith.constant 0 : i32
    %c0_i32_0 = arith.constant 0 : i32
    %c0_i32_1 = arith.constant 0 : i32
    return %c0_i32, %c0_i32_0 : i32, i32
  }
  func.func @transform_4(%arg0: i32, %arg1: i32) -> (i32, i32, i32) {
    %c0_i32 = arith.constant 0 : i32
    %c0_i32_0 = arith.constant 0 : i32
    %c0_i32_1 = arith.constant 0 : i32
    return %arg1, %c0_i32, %c0_i32_0 : i32, i32, i32
  }
  func.func @transform_5(%arg0: i32, %arg1: i32) -> (i32, i32, i32) {
    %c0_i32 = arith.constant 0 : i32
    %c0_i32_0 = arith.constant 0 : i32
    %c0_i32_1 = arith.constant 0 : i32
    return %arg1, %c0_i32, %c0_i32_0 : i32, i32, i32
  }
  func.func @transform_6(%arg0: i32, %arg1: i32) -> (i32, i32, i32) {
    %c0_i32 = arith.constant 0 : i32
    %c0_i32_0 = arith.constant 0 : i32
    %c0_i32_1 = arith.constant 0 : i32
    return %arg1, %c0_i32, %c0_i32_0 : i32, i32, i32
  }
  func.func @transform_7(%arg0: i32, %arg1: i32) -> (i32, i32, i32) {
    %c0_i32 = arith.constant 0 : i32
    %c0_i32_0 = arith.constant 0 : i32
    %c0_i32_1 = arith.constant 0 : i32
    return %arg1, %c0_i32, %c0_i32_0 : i32, i32, i32
  }
  func.func @transform_8(%arg0: i32, %arg1: i32) -> (i32, i32, i32) {
    %c0_i32 = arith.constant 0 : i32
    %c0_i32_0 = arith.constant 0 : i32
    %c0_i32_1 = arith.constant 0 : i32
    return %arg1, %c0_i32, %c0_i32_0 : i32, i32, i32
  }
  func.func @transform_9(%arg0: i32, %arg1: i32) -> (i32, i32, i32) {
    %c0_i32 = arith.constant 0 : i32
    %c0_i32_0 = arith.constant 0 : i32
    %c0_i32_1 = arith.constant 0 : i32
    return %arg1, %c0_i32, %c0_i32_0 : i32, i32, i32
  }
  func.func @transform_10(%arg0: i32, %arg1: i32) -> (i32, i32, i32) {
    %c0_i32 = arith.constant 0 : i32
    %c0_i32_0 = arith.constant 0 : i32
    %c0_i32_1 = arith.constant 0 : i32
    return %arg1, %c0_i32, %c0_i32_0 : i32, i32, i32
  }
  func.func @transform_11(%arg0: i32, %arg1: i32) -> (i32, i32, i32) {
    %c0_i32 = arith.constant 0 : i32
    %c0_i32_0 = arith.constant 0 : i32
    %c0_i32_1 = arith.constant 0 : i32
    return %arg1, %c0_i32, %c0_i32_0 : i32, i32, i32
  }
  func.func @transform_12(%arg0: i32, %arg1: i32) -> (i32, i32, i32) {
    %c0_i32 = arith.constant 0 : i32
    %c0_i32_0 = arith.constant 0 : i32
    %c0_i32_1 = arith.constant 0 : i32
    return %arg1, %c0_i32, %c0_i32_0 : i32, i32, i32
  }
  func.func @transform_13(%arg0: i32, %arg1: i32) -> (i32, i32, i32) {
    %c0_i32 = arith.constant 0 : i32
    %c0_i32_0 = arith.constant 0 : i32
    %c0_i32_1 = arith.constant 0 : i32
    return %arg1, %c0_i32, %c0_i32_0 : i32, i32, i32
  }
  func.func @transform_14(%arg0: i32, %arg1: i32) -> (i32, i32) {
    %c0_i32 = arith.constant 0 : i32
    %c0_i32_0 = arith.constant 0 : i32
    return %arg0, %c0_i32 : i32, i32
  }
}

</mosaic_0001>

<llo_original>
// kernel: hybrid_forward.2
$region0: #{hybrid_forward.2}
  #allocation0 [shape = 'u32[]', space=smem, size = 0x4, offset = 0x4, fixed_abs, tag = 'smem constant byte address 0x4 - core index']
  #allocation1 [shape = 'u32[144,128]{1,0:T(1,128)}', space=vmem, size = 0x12000, scoped, tag = 'internal scratch']
  #allocation2 [shape = 'f32[2,17,8]{2,1,0:T(8,128)}', space=vmem, size = 0x6000, scoped, tag = 'scratch operand']
  %s0 = inlined_call_operand.vmem [shape: f32[2,16,64], index: 0, kind: input, shape index: {}]
  %s1 = inlined_call_operand.vmem [shape: bf16[64,8], index: 1, kind: input, shape index: {}]
  %s2 = inlined_call_operand.vmem [shape: f32[1,8], index: 2, kind: input, shape index: {}]
  %s3 = inlined_call_operand.vmem [shape: f32[17,8], index: 3, kind: input, shape index: {}]
  %s4 = inlined_call_operand.vmem [shape: f32[2,1,8], index: 4, kind: input, shape index: {}]
  %s5 = inlined_call_operand.vmem [shape: f32[2,1,8], index: 5, kind: input, shape index: {}]
  %s6 = inlined_call_operand.vmem [shape: bf16[2,8,24], index: 6, kind: input, shape index: {}]
  %s7 = inlined_call_operand.vmem [shape: f32[2,1,24], index: 7, kind: input, shape index: {}]
  %s8 = inlined_call_operand.vmem [shape: f32[2,1,8], index: 8, kind: input, shape index: {}]
  %s9 = inlined_call_operand.vmem [shape: f32[2,1,8], index: 9, kind: input, shape index: {}]
  %s10 = inlined_call_operand.vmem [shape: bf16[2,8,32], index: 10, kind: input, shape index: {}]
  %s11 = inlined_call_operand.vmem [shape: f32[2,1,32], index: 11, kind: input, shape index: {}]
  %s12 = inlined_call_operand.vmem [shape: bf16[2,32,8], index: 12, kind: input, shape index: {}]
  %s13 = inlined_call_operand.vmem [shape: f32[2,1,8], index: 13, kind: input, shape index: {}]
  %s14 = inlined_call_operand.vmem [shape: f32[2,8], index: 14, kind: output, shape index: {}]
  %s15 = sld [smem:[#allocation0]]
  $region93: #{hybrid_forward.2} parent=0
    _
  %s17 = ssub.s32 1, %s15
  %s18 = scalar_select 0, %s17, %s15
  loop: start=0, step=1, limit=4
  $region2: #{hybrid_forward.2} parent=0 // loop_pre_header
    _
  $region3: #{hybrid_forward.2} parent=0 // loop_header
    %s20 = sphi 0, %s24
    %p21 = scmp.ge.s32.totalorder %s20, 4
    %s27 = sphi 0, %s39
    %s28 = sphi 0, %s35
    %s29 = sphi 0, %s27
    %s30 = sphi 0, %s28
    %s31 = sphi 0, %s29
    %s32 = sphi 0, %s30
    %s42 = sphi 0, %s44
    %s45 = sphi 0, %s42
    %s46 = sphi 0, %s45
    %s62 = sphi 0, %s46
    %s66 = sphi 0, %s66
    %s68 = sphi 0, %s66
    %s69 = sphi 0, %s68
    %s83 = sphi 0, %s69
    %s87 = sphi 0, %s87
    %s89 = sphi 0, %s87
    %s90 = sphi 0, %s89
    %s104 = sphi 0, %s90
    %s108 = sphi 0, %s108
    %s110 = sphi 0, %s108
    %s111 = sphi 0, %s110
    %s125 = sphi 0, %s111
    %s131 = sphi 0, %s133
    %s134 = sphi 0, %s131
    %s135 = sphi 0, %s134
    %s151 = sphi 0, %s135
    %s157 = sphi 0, %s159
    %s160 = sphi 0, %s157
    %s161 = sphi 0, %s160
    %s177 = sphi 0, %s161
    %s183 = sphi 0, %s185
    %s186 = sphi 0, %s183
    %s187 = sphi 0, %s186
    %s203 = sphi 0, %s187
    %s209 = sphi 0, %s211
    %s212 = sphi 0, %s209
    %s213 = sphi 0, %s212
    %s229 = sphi 0, %s213
    %s235 = sphi 0, %s237
    %s238 = sphi 0, %s235
    %s239 = sphi 0, %s238
    %s255 = sphi 0, %s239
    %s261 = sphi 0, %s263
    %s264 = sphi 0, %s261
    %s265 = sphi 0, %s264
    %s281 = sphi 0, %s265
    %s287 = sphi 0, %s289
    %s290 = sphi 0, %s287
    %s291 = sphi 0, %s290
    %s307 = sphi 0, %s291
    %s313 = sphi 0, %s315
    %s316 = sphi 0, %s313
    %s317 = sphi 0, %s316
    %s333 = sphi 0, %s317
    %s339 = sphi 0, %s341
    %s342 = sphi 0, %s339
    %s343 = sphi 0, %s342
    %s359 = sphi 0, %s343
    %s365 = sphi 0, %s367
    %s368 = sphi 0, %s365
    %s369 = sphi 0, %s368
    %s385 = sphi 0, %s369
    %s391 = sphi 0, %s393
    %s394 = sphi 0, %s391
    %s395 = sphi 0, %s394
    %s411 = sphi 0, %s395
  $region4: #{hybrid_forward.2} parent=0 // loop_header_branch
    %23 = sbr.rel (%p21) target = $region8
  $region5: #{hybrid_forward.2} parent=0 // loop_body
    %s25 = ssub.s32 %s20, 1
    %s26 = ssub.s32 %s20, 2
    %s33 = sadd.s32 1, %s28
    %p34 = scmp.ge.s32.totalorder %s33, 2
    %s35 = scalar_select %p34, 0, %s33
    %s36 = sadd.s32 1, %s27
    %s37 = scalar_select %p34, %s36, %s27
    %p38 = scmp.ge.s32.totalorder %s37, 1
    %s39 = scalar_select %p38, 0, %s37
    %s40 = ssub.s32 %s27, %s39
    %p41 = scmp.eq.s32.totalorder %s40, 0
    %s43 = sadd.s32 %s42, 1
    %s44 = scalar_select %p41, %s42, %s43
    %p47 = pneg %p41
    %p48 = scmp.eq.s32.totalorder %s20, 1
    %p49 = por %p47, %p48
    %p50 = scmp.ne.s32.totalorder %s42, %s45
    %p51 = scmp.eq.s32.totalorder %s20, 0
    %p52 = por %p50, %p51
    %p53 = scmp.ne.s32.totalorder %s42, %s45
    %p54 = scmp.eq.s32.totalorder %s25, 1
    %p55 = por %p53, %p54
    %p56 = scmp.ne.s32.totalorder %s45, %s46
    %p57 = scmp.eq.s32.totalorder %s25, 0
    %p58 = por %p56, %p57
    %p59 = scmp.ne.s32.totalorder %s45, %s46
    %p60 = scmp.eq.s32.totalorder %s26, 1
    %p61 = por %p59, %p60
    %p63 = scmp.ne.s32.totalorder %s46, %s62
    %p64 = scmp.eq.s32.totalorder %s26, 0
    %p65 = por %p63, %p64
    %s67 = sadd.s32 %s66, 1
    %p70 = scmp.eq.s32.totalorder %s20, 1
    %p71 = scmp.ne.s32.totalorder %s66, %s68
    %p72 = scmp.eq.s32.totalorder %s20, 0
    %p73 = por %p71, %p72
    %p74 = scmp.ne.s32.totalorder %s66, %s68
    %p75 = scmp.eq.s32.totalorder %s25, 1
    %p76 = por %p74, %p75
    %p77 = scmp.ne.s32.totalorder %s68, %s69
    %p78 = scmp.eq.s32.totalorder %s25, 0
    %p79 = por %p77, %p78
    %p80 = scmp.ne.s32.totalorder %s68, %s69
    %p81 = scmp.eq.s32.totalorder %s26, 1
    %p82 = por %p80, %p81
    %p84 = scmp.ne.s32.totalorder %s69, %s83
    %p85 = scmp.eq.s32.totalorder %s26, 0
    %p86 = por %p84, %p85
    %s88 = sadd.s32 %s87, 1
    %p91 = scmp.eq.s32.totalorder %s20, 1
    %p92 = scmp.ne.s32.totalorder %s87, %s89
    %p93 = scmp.eq.s32.totalorder %s20, 0
    %p94 = por %p92, %p93
    %p95 = scmp.ne.s32.totalorder %s87, %s89
    %p96 = scmp.eq.s32.totalorder %s25, 1
    %p97 = por %p95, %p96
    %p98 = scmp.ne.s32.totalorder %s89, %s90
    %p99 = scmp.eq.s32.totalorder %s25, 0
    %p100 = por %p98, %p99
    %p101 = scmp.ne.s32.totalorder %s89, %s90
    %p102 = scmp.eq.s32.totalorder %s26, 1
    %p103 = por %p101, %p102
    %p105 = scmp.ne.s32.totalorder %s90, %s104
    %p106 = scmp.eq.s32.totalorder %s26, 0
    %p107 = por %p105, %p106
    %s109 = sadd.s32 %s108, 1
    %p112 = scmp.eq.s32.totalorder %s20, 1
    %p113 = scmp.ne.s32.totalorder %s108, %s110
    %p114 = scmp.eq.s32.totalorder %s20, 0
    %p115 = por %p113, %p114
    %p116 = scmp.ne.s32.totalorder %s108, %s110
    %p117 = scmp.eq.s32.totalorder %s25, 1
    %p118 = por %p116, %p117
    %p119 = scmp.ne.s32.totalorder %s110, %s111
    %p120 = scmp.eq.s32.totalorder %s25, 0
    %p121 = por %p119, %p120
    %p122 = scmp.ne.s32.totalorder %s110, %s111
    %p123 = scmp.eq.s32.totalorder %s26, 1
    %p124 = por %p122, %p123
    %p126 = scmp.ne.s32.totalorder %s111, %s125
    %p127 = scmp.eq.s32.totalorder %s26, 0
    %p128 = por %p126, %p127
    %s129 = ssub.s32 %s28, %s35
    %p130 = scmp.eq.s32.totalorder %s129, 0
    %s132 = sadd.s32 %s131, 1
    %s133 = scalar_select %p130, %s131, %s132
    %p136 = pneg %p130
    %p137 = scmp.eq.s32.totalorder %s20, 1
    %p138 = por %p136, %p137
    %p139 = scmp.ne.s32.totalorder %s131, %s134
    %p140 = scmp.eq.s32.totalorder %s20, 0
    %p141 = por %p139, %p140
    %p142 = scmp.ne.s32.totalorder %s131, %s134
    %p143 = scmp.eq.s32.totalorder %s25, 1
    %p144 = por %p142, %p143
    %p145 = scmp.ne.s32.totalorder %s134, %s135
    %p146 = scmp.eq.s32.totalorder %s25, 0
    %p147 = por %p145, %p146
    %p148 = scmp.ne.s32.totalorder %s134, %s135
    %p149 = scmp.eq.s32.totalorder %s26, 1
    %p150 = por %p148, %p149
    %p152 = scmp.ne.s32.totalorder %s135, %s151
    %p153 = scmp.eq.s32.totalorder %s26, 0
    %p154 = por %p152, %p153
    %s155 = ssub.s32 %s28, %s35
    %p156 = scmp.eq.s32.totalorder %s155, 0
    %s158 = sadd.s32 %s157, 1
    %s159 = scalar_select %p156, %s157, %s158
    %p162 = pneg %p156
    %p163 = scmp.eq.s32.totalorder %s20, 1
    %p164 = por %p162, %p163
    %p165 = scmp.ne.s32.totalorder %s157, %s160
    %p166 = scmp.eq.s32.totalorder %s20, 0
    %p167 = por %p165, %p166
    %p168 = scmp.ne.s32.totalorder %s157, %s160
    %p169 = scmp.eq.s32.totalorder %s25, 1
    %p170 = por %p168, %p169
    %p171 = scmp.ne.s32.totalorder %s160, %s161
    %p172 = scmp.eq.s32.totalorder %s25, 0
    %p173 = por %p171, %p172
    %p174 = scmp.ne.s32.totalorder %s160, %s161
    %p175 = scmp.eq.s32.totalorder %s26, 1
    %p176 = por %p174, %p175
    %p178 = scmp.ne.s32.totalorder %s161, %s177
    %p179 = scmp.eq.s32.totalorder %s26, 0
    %p180 = por %p178, %p179
    %s181 = ssub.s32 %s28, %s35
    %p182 = scmp.eq.s32.totalorder %s181, 0
    %s184 = sadd.s32 %s183, 1
    %s185 = scalar_select %p182, %s183, %s184
    %p188 = pneg %p182
    %p189 = scmp.eq.s32.totalorder %s20, 1
    %p190 = por %p188, %p189
    %p191 = scmp.ne.s32.totalorder %s183, %s186
    %p192 = scmp.eq.s32.totalorder %s20, 0
    %p193 = por %p191, %p192
    %p194 = scmp.ne.s32.totalorder %s183, %s186
    %p195 = scmp.eq.s32.totalorder %s25, 1
    %p196 = por %p194, %p195
    %p197 = scmp.ne.s32.totalorder %s186, %s187
    %p198 = scmp.eq.s32.totalorder %s25, 0
    %p199 = por %p197, %p198
    %p200 = scmp.ne.s32.totalorder %s186, %s187
    %p201 = scmp.eq.s32.totalorder %s26, 1
    %p202 = por %p200, %p201
    %p204 = scmp.ne.s32.totalorder %s187, %s203
    %p205 = scmp.eq.s32.totalorder %s26, 0
    %p206 = por %p204, %p205
    %s207 = ssub.s32 %s28, %s35
    %p208 = scmp.eq.s32.totalorder %s207, 0
    %s210 = sadd.s32 %s209, 1
    %s211 = scalar_select %p208, %s209, %s210
    %p214 = pneg %p208
    %p215 = scmp.eq.s32.totalorder %s20, 1
    %p216 = por %p214, %p215
    %p217 = scmp.ne.s32.totalorder %s209, %s212
    %p218 = scmp.eq.s32.totalorder %s20, 0
    %p219 = por %p217, %p218
    %p220 = scmp.ne.s32.totalorder %s209, %s212
    %p221 = scmp.eq.s32.totalorder %s25, 1
    %p222 = por %p220, %p221
    %p223 = scmp.ne.s32.totalorder %s212, %s213
    %p224 = scmp.eq.s32.totalorder %s25, 0
    %p225 = por %p223, %p224
    %p226 = scmp.ne.s32.totalorder %s212, %s213
    %p227 = scmp.eq.s32.totalorder %s26, 1
    %p228 = por %p226, %p227
    %p230 = scmp.ne.s32.totalorder %s213, %s229
    %p231 = scmp.eq.s32.totalorder %s26, 0
    %p232 = por %p230, %p231
    %s233 = ssub.s32 %s28, %s35
    %p234 = scmp.eq.s32.totalorder %s233, 0
    %s236 = sadd.s32 %s235, 1
    %s237 = scalar_select %p234, %s235, %s236
    %p240 = pneg %p234
    %p241 = scmp.eq.s32.totalorder %s20, 1
    %p242 = por %p240, %p241
    %p243 = scmp.ne.s32.totalorder %s235, %s238
    %p244 = scmp.eq.s32.totalorder %s20, 0
    %p245 = por %p243, %p244
    %p246 = scmp.ne.s32.totalorder %s235, %s238
    %p247 = scmp.eq.s32.totalorder %s25, 1
    %p248 = por %p246, %p247
    %p249 = scmp.ne.s32.totalorder %s238, %s239
    %p250 = scmp.eq.s32.totalorder %s25, 0
    %p251 = por %p249, %p250
    %p252 = scmp.ne.s32.totalorder %s238, %s239
    %p253 = scmp.eq.s32.totalorder %s26, 1
    %p254 = por %p252, %p253
    %p256 = scmp.ne.s32.totalorder %s239, %s255
    %p257 = scmp.eq.s32.totalorder %s26, 0
    %p258 = por %p256, %p257
    %s259 = ssub.s32 %s28, %s35
    %p260 = scmp.eq.s32.totalorder %s259, 0
    %s262 = sadd.s32 %s261, 1
    %s263 = scalar_select %p260, %s261, %s262
    %p266 = pneg %p260
    %p267 = scmp.eq.s32.totalorder %s20, 1
    %p268 = por %p266, %p267
    %p269 = scmp.ne.s32.totalorder %s261, %s264
    %p270 = scmp.eq.s32.totalorder %s20, 0
    %p271 = por %p269, %p270
    %p272 = scmp.ne.s32.totalorder %s261, %s264
    %p273 = scmp.eq.s32.totalorder %s25, 1
    %p274 = por %p272, %p273
    %p275 = scmp.ne.s32.totalorder %s264, %s265
    %p276 = scmp.eq.s32.totalorder %s25, 0
    %p277 = por %p275, %p276
    %p278 = scmp.ne.s32.totalorder %s264, %s265
    %p279 = scmp.eq.s32.totalorder %s26, 1
    %p280 = por %p278, %p279
    %p282 = scmp.ne.s32.totalorder %s265, %s281
    %p283 = scmp.eq.s32.totalorder %s26, 0
    %p284 = por %p282, %p283
    %s285 = ssub.s32 %s28, %s35
    %p286 = scmp.eq.s32.totalorder %s285, 0
    %s288 = sadd.s32 %s287, 1
    %s289 = scalar_select %p286, %s287, %s288
    %p292 = pneg %p286
    %p293 = scmp.eq.s32.totalorder %s20, 1
    %p294 = por %p292, %p293
    %p295 = scmp.ne.s32.totalorder %s287, %s290
    %p296 = scmp.eq.s32.totalorder %s20, 0
    %p297 = por %p295, %p296
    %p298 = scmp.ne.s32.totalorder %s287, %s290
    %p299 = scmp.eq.s32.totalorder %s25, 1
    %p300 = por %p298, %p299
    %p301 = scmp.ne.s32.totalorder %s290, %s291
    %p302 = scmp.eq.s32.totalorder %s25, 0
    %p303 = por %p301, %p302
    %p304 = scmp.ne.s32.totalorder %s290, %s291
    %p305 = scmp.eq.s32.totalorder %s26, 1
    %p306 = por %p304, %p305
    %p308 = scmp.ne.s32.totalorder %s291, %s307
    %p309 = scmp.eq.s32.totalorder %s26, 0
    %p310 = por %p308, %p309
    %s311 = ssub.s32 %s28, %s35
    %p312 = scmp.eq.s32.totalorder %s311, 0
    %s314 = sadd.s32 %s313, 1
    %s315 = scalar_select %p312, %s313, %s314
    %p318 = pneg %p312
    %p319 = scmp.eq.s32.totalorder %s20, 1
    %p320 = por %p318, %p319
    %p321 = scmp.ne.s32.totalorder %s313, %s316
    %p322 = scmp.eq.s32.totalorder %s20, 0
    %p323 = por %p321, %p322
    %p324 = scmp.ne.s32.totalorder %s313, %s316
    %p325 = scmp.eq.s32.totalorder %s25, 1
    %p326 = por %p324, %p325
    %p327 = scmp.ne.s32.totalorder %s316, %s317
    %p328 = scmp.eq.s32.totalorder %s25, 0
    %p329 = por %p327, %p328
    %p330 = scmp.ne.s32.totalorder %s316, %s317
    %p331 = scmp.eq.s32.totalorder %s26, 1
    %p332 = por %p330, %p331
    %p334 = scmp.ne.s32.totalorder %s317, %s333
    %p335 = scmp.eq.s32.totalorder %s26, 0
    %p336 = por %p334, %p335
    %s337 = ssub.s32 %s28, %s35
    %p338 = scmp.eq.s32.totalorder %s337, 0
    %s340 = sadd.s32 %s339, 1
    %s341 = scalar_select %p338, %s339, %s340
    %p344 = pneg %p338
    %p345 = scmp.eq.s32.totalorder %s20, 1
    %p346 = por %p344, %p345
    %p347 = scmp.ne.s32.totalorder %s339, %s342
    %p348 = scmp.eq.s32.totalorder %s20, 0
    %p349 = por %p347, %p348
    %p350 = scmp.ne.s32.totalorder %s339, %s342
    %p351 = scmp.eq.s32.totalorder %s25, 1
    %p352 = por %p350, %p351
    %p353 = scmp.ne.s32.totalorder %s342, %s343
    %p354 = scmp.eq.s32.totalorder %s25, 0
    %p355 = por %p353, %p354
    %p356 = scmp.ne.s32.totalorder %s342, %s343
    %p357 = scmp.eq.s32.totalorder %s26, 1
    %p358 = por %p356, %p357
    %p360 = scmp.ne.s32.totalorder %s343, %s359
    %p361 = scmp.eq.s32.totalorder %s26, 0
    %p362 = por %p360, %p361
    %s363 = ssub.s32 %s28, %s35
    %p364 = scmp.eq.s32.totalorder %s363, 0
    %s366 = sadd.s32 %s365, 1
    %s367 = scalar_select %p364, %s365, %s366
    %p370 = pneg %p364
    %p371 = scmp.eq.s32.totalorder %s20, 1
    %p372 = por %p370, %p371
    %p373 = scmp.ne.s32.totalorder %s365, %s368
    %p374 = scmp.eq.s32.totalorder %s20, 0
    %p375 = por %p373, %p374
    %p376 = scmp.ne.s32.totalorder %s365, %s368
    %p377 = scmp.eq.s32.totalorder %s25, 1
    %p378 = por %p376, %p377
    %p379 = scmp.ne.s32.totalorder %s368, %s369
    %p380 = scmp.eq.s32.totalorder %s25, 0
    %p381 = por %p379, %p380
    %p382 = scmp.ne.s32.totalorder %s368, %s369
    %p383 = scmp.eq.s32.totalorder %s26, 1
    %p384 = por %p382, %p383
    %p386 = scmp.ne.s32.totalorder %s369, %s385
    %p387 = scmp.eq.s32.totalorder %s26, 0
    %p388 = por %p386, %p387
    %s389 = ssub.s32 %s27, %s39
    %p390 = scmp.eq.s32.totalorder %s389, 0
    %s392 = sadd.s32 %s391, 1
    %s393 = scalar_select %p390, %s391, %s392
    %p396 = pneg %p390
    %p397 = scmp.eq.s32.totalorder %s20, 1
    %p398 = por %p396, %p397
    %p399 = scmp.ne.s32.totalorder %s391, %s394
    %p400 = scmp.eq.s32.totalorder %s20, 0
    %p401 = por %p399, %p400
    %p402 = scmp.ne.s32.totalorder %s391, %s394
    %p403 = scmp.eq.s32.totalorder %s25, 1
    %p404 = por %p402, %p403
    %p405 = scmp.ne.s32.totalorder %s394, %s395
    %p406 = scmp.eq.s32.totalorder %s25, 0
    %p407 = por %p405, %p406
    %p408 = scmp.ne.s32.totalorder %s394, %s395
    %p409 = scmp.eq.s32.totalorder %s26, 1
    %p410 = por %p408, %p409
    %p412 = scmp.ne.s32.totalorder %s395, %s411
    %p413 = scmp.eq.s32.totalorder %s26, 0
    %p414 = por %p412, %p413
    %p415 = scmp.le.s32.totalorder 1, %s20
    %p416 = scmp.lt.s32.totalorder %s20, 3
    %p417 = pnand %p415, %p416
    %p418 = pneg %p417
    // Predicated region
    $region9: #{hybrid_forward.2} parent=5 // pred_check
      _
    $region10: #{hybrid_forward.2} parent=5 // pred_check_branch
      %420 = sbr.rel (%p417) target = $region12
    $region11: #{hybrid_forward.2} parent=5 // pred_region
      %s421 = ssub.s32 %s20, 1
      // Predicated region
      $region13: #{hybrid_forward.2} parent=11 // pred_check
        %p422 = pneg %p58
      $region14: #{hybrid_forward.2} parent=11 // pred_check_branch
        %424 = sbr.rel (%p422) target = $region16
      $region15: #{hybrid_forward.2} parent=11 // pred_region
        %s425 = smul.u32 2, %s29
        %p426 = scmp.lt.s32.totalorder %s425, 1
        %s427 = scalar_select %p426, %s425, 1
        %s428 = smul.addr %s427, 2
        %s429 = smul.addr %s428, 8
        %s430 = scalar_lea.vmem %s0, %s429
        %s431 = smul.u32 2, %s29
      $region16: #{hybrid_forward.2} parent=11 // pred_fallthru
        _
      // Predicated region
      $region17: #{hybrid_forward.2} parent=11 // pred_check
        %p432 = pneg %p79
      $region18: #{hybrid_forward.2} parent=11 // pred_check_branch
        %434 = sbr.rel (%p432) target = $region20
      $region19: #{hybrid_forward.2} parent=11 // pred_region
        _
      $region20: #{hybrid_forward.2} parent=11 // pred_fallthru
        _
      // Predicated region
      $region21: #{hybrid_forward.2} parent=11 // pred_check
        %p435 = pneg %p100
      $region22: #{hybrid_forward.2} parent=11 // pred_check_branch
        %437 = sbr.rel (%p435) target = $region24
      $region23: #{hybrid_forward.2} parent=11 // pred_region
        _
      $region24: #{hybrid_forward.2} parent=11 // pred_fallthru
        _
      // Predicated region
      $region25: #{hybrid_forward.2} parent=11 // pred_check
        %p438 = pneg %p121
      $region26: #{hybrid_forward.2} parent=11 // pred_check_branch
        %440 = sbr.rel (%p438) target = $region28
      $region27: #{hybrid_forward.2} parent=11 // pred_region
        _
      $region28: #{hybrid_forward.2} parent=11 // pred_fallthru
        _
    $region12: #{hybrid_forward.2} parent=5 // pred_fallthru
      _
    %p441 = scmp.lt.s32.totalorder %s20, 2
    // Predicated region
    $region29: #{hybrid_forward.2} parent=5 // pred_check
      %p442 = pneg %p441
    $region30: #{hybrid_forward.2} parent=5 // pred_check_branch
      %444 = sbr.rel (%p442) target = $region32
    $region31: #{hybrid_forward.2} parent=5 // pred_region
      // Predicated region
      $region33: #{hybrid_forward.2} parent=31 // pred_check
        %p445 = pneg %p141
      $region34: #{hybrid_forward.2} parent=31 // pred_check_branch
        %447 = sbr.rel (%p445) target = $region36
      $region35: #{hybrid_forward.2} parent=31 // pred_region
        %p448 = scmp.lt.s32.totalorder %s28, 1
        %s449 = scalar_select %p448, %s28, 1
        %s450 = scalar_lea.vmem %s4, %s449
      $region36: #{hybrid_forward.2} parent=31 // pred_fallthru
        _
      // Predicated region
      $region37: #{hybrid_forward.2} parent=31 // pred_check
        %p451 = pneg %p167
      $region38: #{hybrid_forward.2} parent=31 // pred_check_branch
        %453 = sbr.rel (%p451) target = $region40
      $region39: #{hybrid_forward.2} parent=31 // pred_region
        %p454 = scmp.lt.s32.totalorder %s28, 1
        %s455 = scalar_select %p454, %s28, 1
        %s456 = scalar_lea.vmem %s5, %s455
      $region40: #{hybrid_forward.2} parent=31 // pred_fallthru
        _
      // Predicated region
      $region41: #{hybrid_forward.2} parent=31 // pred_check
        %p457 = pneg %p193
      $region42: #{hybrid_forward.2} parent=31 // pred_check_branch
        %459 = sbr.rel (%p457) target = $region44
      $region43: #{hybrid_forward.2} parent=31 // pred_region
        %p460 = scmp.lt.s32.totalorder %s28, 1
        %s461 = scalar_select %p460, %s28, 1
        %s462 = smul.addr %s461, 4
        %s463 = scalar_lea.vmem %s6, %s462
      $region44: #{hybrid_forward.2} parent=31 // pred_fallthru
        _
      // Predicated region
      $region45: #{hybrid_forward.2} parent=31 // pred_check
        %p464 = pneg %p219
      $region46: #{hybrid_forward.2} parent=31 // pred_check_branch
        %466 = sbr.rel (%p464) target = $region48
      $region47: #{hybrid_forward.2} parent=31 // pred_region
        %p467 = scmp.lt.s32.totalorder %s28, 1
        %s468 = scalar_select %p467, %s28, 1
        %s469 = scalar_lea.vmem %s7, %s468
      $region48: #{hybrid_forward.2} parent=31 // pred_fallthru
        _
      // Predicated region
      $region49: #{hybrid_forward.2} parent=31 // pred_check
        %p470 = pneg %p245
      $region50: #{hybrid_forward.2} parent=31 // pred_check_branch
        %472 = sbr.rel (%p470) target = $region52
      $region51: #{hybrid_forward.2} parent=31 // pred_region
        %p473 = scmp.lt.s32.totalorder %s28, 1
        %s474 = scalar_select %p473, %s28, 1
        %s475 = scalar_lea.vmem %s8, %s474
      $region52: #{hybrid_forward.2} parent=31 // pred_fallthru
        _
      // Predicated region
      $region53: #{hybrid_forward.2} parent=31 // pred_check
        %p476 = pneg %p271
      $region54: #{hybrid_forward.2} parent=31 // pred_check_branch
        %478 = sbr.rel (%p476) target = $region56
      $region55: #{hybrid_forward.2} parent=31 // pred_region
        %p479 = scmp.lt.s32.totalorder %s28, 1
        %s480 = scalar_select %p479, %s28, 1
        %s481 = scalar_lea.vmem %s9, %s480
      $region56: #{hybrid_forward.2} parent=31 // pred_fallthru
        _
      // Predicated region
      $region57: #{hybrid_forward.2} parent=31 // pred_check
        %p482 = pneg %p297
      $region58: #{hybrid_forward.2} parent=31 // pred_check_branch
        %484 = sbr.rel (%p482) target = $region60
      $region59: #{hybrid_forward.2} parent=31 // pred_region
        %p485 = scmp.lt.s32.totalorder %s28, 1
        %s486 = scalar_select %p485, %s28, 1
        %s487 = smul.addr %s486, 4
        %s488 = scalar_lea.vmem %s10, %s487
      $region60: #{hybrid_forward.2} parent=31 // pred_fallthru
        _
      // Predicated region
      $region61: #{hybrid_forward.2} parent=31 // pred_check
        %p489 = pneg %p323
      $region62: #{hybrid_forward.2} parent=31 // pred_check_branch
        %491 = sbr.rel (%p489) target = $region64
      $region63: #{hybrid_forward.2} parent=31 // pred_region
        %p492 = scmp.lt.s32.totalorder %s28, 1
        %s493 = scalar_select %p492, %s28, 1
        %s494 = scalar_lea.vmem %s11, %s493
      $region64: #{hybrid_forward.2} parent=31 // pred_fallthru
        _
      // Predicated region
      $region65: #{hybrid_forward.2} parent=31 // pred_check
        %p495 = pneg %p349
      $region66: #{hybrid_forward.2} parent=31 // pred_check_branch
        %497 = sbr.rel (%p495) target = $region68
      $region67: #{hybrid_forward.2} parent=31 // pred_region
        %p498 = scmp.lt.s32.totalorder %s28, 1
        %s499 = scalar_select %p498, %s28, 1
        %s500 = smul.addr %s499, 4
        %s501 = smul.addr %s500, 4
        %s502 = scalar_lea.vmem %s12, %s501
      $region68: #{hybrid_forward.2} parent=31 // pred_fallthru
        _
      // Predicated region
      $region69: #{hybrid_forward.2} parent=31 // pred_check
        %p503 = pneg %p375
      $region70: #{hybrid_forward.2} parent=31 // pred_check_branch
        %505 = sbr.rel (%p503) target = $region72
      $region71: #{hybrid_forward.2} parent=31 // pred_region
        %p506 = scmp.lt.s32.totalorder %s28, 1
        %s507 = scalar_select %p506, %s28, 1
        %s508 = scalar_lea.vmem %s13, %s507
      $region72: #{hybrid_forward.2} parent=31 // pred_fallthru
        _
    $region32: #{hybrid_forward.2} parent=5 // pred_fallthru
      _
    %p509 = scmp.le.s32.totalorder 1, %s20
    %p510 = scmp.lt.s32.totalorder %s20, 3
    %p511 = pnand %p509, %p510
    %p512 = pneg %p511
    // Predicated region
    $region73: #{hybrid_forward.2} parent=5 // pred_check
      _
    $region74: #{hybrid_forward.2} parent=5 // pred_check_branch
      %514 = sbr.rel (%p511) target = $region76
    $region75: #{hybrid_forward.2} parent=5 // pred_region
      %s515 = ssub.s32 %s20, 1
      %s516 = smul.u32 2, %s29
      %p517 = scmp.lt.s32.totalorder %s516, 1
      %s518 = scalar_select %p517, %s516, 1
      %s519 = smul.addr %s518, 2
      %s520 = smul.addr %s519, 8
      %s521 = scalar_lea.vmem %s0, %s520
      %p522 = pneg %p58
      %p523 = pneg %p55
      %p524 = pneg %p79
      %p525 = pneg %p76
      %p526 = pneg %p100
      %p527 = pneg %p97
      %p528 = pneg %p121
      %p529 = pneg %p118
      %p530 = scmp.lt.s32.totalorder %s30, 1
      %s531 = scalar_select %p530, %s30, 1
      %s532 = scalar_lea.vmem %s4, %s531
      %p533 = pneg %p147
      %p534 = pneg %p144
      %p535 = scmp.lt.s32.totalorder %s30, 1
      %s536 = scalar_select %p535, %s30, 1
      %s537 = scalar_lea.vmem %s5, %s536
      %p538 = pneg %p173
      %p539 = pneg %p170
      %p540 = scmp.lt.s32.totalorder %s30, 1
      %s541 = scalar_select %p540, %s30, 1
      %s542 = smul.addr %s541, 4
      %s543 = scalar_lea.vmem %s6, %s542
      %p544 = pneg %p199
      %p545 = pneg %p196
      %p546 = scmp.lt.s32.totalorder %s30, 1
      %s547 = scalar_select %p546, %s30, 1
      %s548 = scalar_lea.vmem %s7, %s547
      %p549 = pneg %p225
      %p550 = pneg %p222
      %p551 = scmp.lt.s32.totalorder %s30, 1
      %s552 = scalar_select %p551, %s30, 1
      %s553 = scalar_lea.vmem %s8, %s552
      %p554 = pneg %p251
      %p555 = pneg %p248
      %p556 = scmp.lt.s32.totalorder %s30, 1
      %s557 = scalar_select %p556, %s30, 1
      %s558 = scalar_lea.vmem %s9, %s557
      %p559 = pneg %p277
      %p560 = pneg %p274
      %p561 = scmp.lt.s32.totalorder %s30, 1
      %s562 = scalar_select %p561, %s30, 1
      %s563 = smul.addr %s562, 4
      %s564 = scalar_lea.vmem %s10, %s563
      %p565 = pneg %p303
      %p566 = pneg %p300
      %p567 = scmp.lt.s32.totalorder %s30, 1
      %s568 = scalar_select %p567, %s30, 1
      %s569 = scalar_lea.vmem %s11, %s568
      %p570 = pneg %p329
      %p571 = pneg %p326
      %p572 = scmp.lt.s32.totalorder %s30, 1
      %s573 = scalar_select %p572, %s30, 1
      %s574 = smul.addr %s573, 4
      %s575 = smul.addr %s574, 4
      %s576 = scalar_lea.vmem %s12, %s575
      %p577 = pneg %p355
      %p578 = pneg %p352
      %p579 = scmp.lt.s32.totalorder %s30, 1
      %s580 = scalar_select %p579, %s30, 1
      %s581 = scalar_lea.vmem %s13, %s580
      %p582 = pneg %p381
      %p583 = pneg %p378
      %p584 = pneg %p407
      %p585 = pneg %p404
      %p586 = scmp.lt.s32.totalorder %s29, 0
      %s587 = scalar_select %p586, %s29, 0
      %s588 = smul.addr %s587, 2
      %s589 = scalar_lea.vmem %s14, %s588
      %s590 = smul.u32 2, %s29
      %p591 = scmp.lt.s32.totalorder %s590, 1
      %s592 = scalar_select %p591, %s590, 1
      %s593 = smul.addr %s592, 2
      %s594 = smul.addr %s593, 8
      %s595 = scalar_lea.vmem %s0, %s594
      %s596 = smul.u32 2, %s29
      %p597 = scmp.lt.s32.totalorder %s30, 1
      %s598 = scalar_select %p597, %s30, 1
      %s599 = scalar_lea.vmem %s4, %s598
      %p600 = scmp.lt.s32.totalorder %s30, 1
      %s601 = scalar_select %p600, %s30, 1
      %s602 = scalar_lea.vmem %s5, %s601
      %p603 = scmp.lt.s32.totalorder %s30, 1
      %s604 = scalar_select %p603, %s30, 1
      %s605 = smul.addr %s604, 4
      %s606 = scalar_lea.vmem %s6, %s605
      %p607 = scmp.lt.s32.totalorder %s30, 1
      %s608 = scalar_select %p607, %s30, 1
      %s609 = scalar_lea.vmem %s7, %s608
      %p610 = scmp.lt.s32.totalorder %s30, 1
      %s611 = scalar_select %p610, %s30, 1
      %s612 = scalar_lea.vmem %s8, %s611
      %p613 = scmp.lt.s32.totalorder %s30, 1
      %s614 = scalar_select %p613, %s30, 1
      %s615 = scalar_lea.vmem %s9, %s614
      %p616 = scmp.lt.s32.totalorder %s30, 1
      %s617 = scalar_select %p616, %s30, 1
      %s618 = smul.addr %s617, 4
      %s619 = scalar_lea.vmem %s10, %s618
      %p620 = scmp.lt.s32.totalorder %s30, 1
      %s621 = scalar_select %p620, %s30, 1
      %s622 = scalar_lea.vmem %s11, %s621
      %p623 = scmp.lt.s32.totalorder %s30, 1
      %s624 = scalar_select %p623, %s30, 1
      %s625 = smul.addr %s624, 4
      %s626 = smul.addr %s625, 4
      %s627 = scalar_lea.vmem %s12, %s626
      %p628 = scmp.lt.s32.totalorder %s30, 1
      %s629 = scalar_select %p628, %s30, 1
      %s630 = scalar_lea.vmem %s13, %s629
      %p631 = scmp.lt.s32.totalorder %s29, 0
      %s632 = scalar_select %p631, %s29, 0
      %s633 = smul.addr %s632, 2
      %s634 = scalar_lea.vmem %s14, %s633
      %p636 = scmp.eq.s32.totalorder %s30, 0
      // Predicated region
      $region77: #{hybrid_forward.2} parent=75 // pred_check
        %p637 = pneg %p636
      $region78: #{hybrid_forward.2} parent=75 // pred_check_branch
        %639 = sbr.rel (%p637) target = $region80
      $region79: #{hybrid_forward.2} parent=75 // pred_region
        %v640 = vld [vmem:[%s595] sm:$0xff]
        %v641 = vld [vmem:[%s595 + $0x8] sm:$0xff]
        %v642 = vld [vmem:[%s595 + $0x10] sm:$0xff]
        %v643 = vld [vmem:[%s595 + $0x18] sm:$0xff]
        %v644 = vld [vmem:[%s1] sm:$0xf]
        %v645 = vld [vmem:[%s1 + $0x4] sm:$0xf]
        %v646 = vld [vmem:[%s1 + $0x8] sm:$0xf]
        %v647 = vld [vmem:[%s1 + $0xc] sm:$0xf]
        %v648 = vld [vmem:[%s1 + $0x10] sm:$0xf]
        %v649 = vld [vmem:[%s1 + $0x14] sm:$0xf]
        %v650 = vld [vmem:[%s1 + $0x18] sm:$0xf]
        %v651 = vld [vmem:[%s1 + $0x1c] sm:$0xf]
        %v652 = vpack.c.bf16 %v641, %v640
        %v653 = vpack.c.bf16 %v643, %v642
        %v654 = vld [vmem:[%s2] sm:$0x1]
        %v656 = vlaneseq
        %v657 = vshrl.u32 %v656, 7
        %v658 = vsub.s32 0, %v657
        %v659 = vrot.slane %v654, %v658
        %v669 = vunpack.c.l.b16 %v644
        %v670 = vunpack.c.l.b16 %v645
        %v671 = vunpack.c.l.b16 %v646
        %v672 = vunpack.c.l.b16 %v647
        %v673 = vunpack.c.l.b16 %v648
        %v674 = vunpack.c.l.b16 %v649
        %v675 = vunpack.c.l.b16 %v650
        %v676 = vunpack.c.l.b16 %v651
        %v677 = vpack.c.b16 %v670, %v669
        %v678 = vpack.c.b16 %v672, %v671
        %v679 = vpack.c.b16 %v674, %v673
        %v680 = vpack.c.b16 %v676, %v675
        %vm685 = vcmask 523264
        %v687 = vsel %vm685, %v652, 0
        %v690 = vsel %vm685, %v653, 0
        %692 = vmatprep.subr.bf16.mxu0 0
        %693 = vmatpush1.bf16.msra.mxu0 0
        %694 = vmatprep.subr.bf16.mxu0 0
        %695 = vmatpush1.bf16.msra.mxu0 0
        %696 = vmatprep.subr.bf16.mxu0 0
        %697 = vmatpush1.bf16.msra.mxu0 0
        %698 = vmatprep.subr.bf16.mxu0 0
        %699 = vmatpush1.bf16.msra.mxu0 0
        %700 = vmatprep.subr.bf16.mxu0 0
        %701 = vmatpush1.bf16.msra.mxu0 %v680
        %702 = vmatprep.subr.bf16.mxu0 0
        %703 = vmatpush1.bf16.msra.mxu0 %v679
        %704 = vmatprep.subr.bf16.mxu0 0
        %705 = vmatpush1.bf16.msra.mxu0 %v678
        %706 = vmatprep.subr.bf16.mxu0 0
        %707 = vmatpush1.bf16.msra.mxu0 %v677
        %708 = vmatprep.subr.bf16.mxu0 0
        %709 = vmatpush2.bf16.msra.mxu0 0
        %710 = vmatprep.subr.bf16.mxu0 0
        %711 = vmatpush2.bf16.msra.mxu0 0
        %712 = vmatprep.subr.bf16.mxu0 0
        %713 = vmatpush2.bf16.msra.mxu0 0
        %714 = vmatprep.subr.bf16.mxu0 0
        %715 = vmatpush2.bf16.msra.mxu0 0
        %716 = vmatprep.subr.bf16.mxu0 0
        %717 = vmatpush2.bf16.msra.mxu0 0
        %718 = vmatprep.subr.bf16.mxu0 0
        %719 = vmatpush2.bf16.msra.mxu0 0
        %720 = vmatprep.subr.bf16.mxu0 0
        %721 = vmatpush2.bf16.msra.mxu0 0
        %722 = vmatprep.subr.bf16.mxu0 0
        %723 = vmatpush2.bf16.msra.mxu0 0
        %724 = vmatprep.mubr.bf16.mxu0 0
        %725 = vmatmul.mubr.bf16.gmra.mxu0 %v687
        %v726 = vpop.f32.mrf.mxu0
        %v727 = vadd.f32 %v659, %v726
        %v728 = vpop.f32.mrf.mxu0
        %v729 = vpop.f32.mrf.mxu0
        %v730 = vadd.f32 %v659, %v729
        %v731 = vpop.f32.mrf.mxu0
        %732 = vmatprep.mubr.bf16.mxu0 0
        %733 = vmatmul.mubr.bf16.gmra.mxu0 %v690
        %v734 = vpop.f32.mrf.mxu0
        %v735 = vadd.f32 %v659, %v734
        %v736 = vpop.f32.mrf.mxu0
        %v737 = vpop.f32.mrf.mxu0
        %v738 = vadd.f32 %v659, %v737
        %v739 = vpop.f32.mrf.mxu0
        %740 = vdwg.mxu0
        %v741 = vld [vmem:[%s3] sm:$0xff]
        %v742 = vld [vmem:[%s3 + $0x8] sm:$0xff]
        %v743 = vld [vmem:[%s3 + $0x10] sm:$0x1]
        %vm747 = vcmask 1046528
        %v748 = vrot.slane %v741, 1
        %v749 = vrot.slane %v742, 1
        %v750 = vsel %vm747, %v748, %v749
        %v751 = vrot.slane %v743, 1
        %v752 = vsel %vm747, %v749, %v751
        %v755 = vadd.f32 %v727, %v750
        %v756 = vadd.f32 %v730, %v752
        %v757 = vadd.f32 %v735, %v750
        %v758 = vadd.f32 %v738, %v752
        %vm763 = vcmask 1040384
        %v764 = vrot.slane %v755, 7
        %v765 = vrot.slane %v756, 7
        %v766 = vsel %vm763, %v764, %v765
        %v767 = vrot.slane %v757, 7
        %v768 = vrot.slane %v758, 7
        %v769 = vsel %vm763, %v767, %v768
        %v776 = vsel %vm763, %v741, %v764
        %v777 = vsel %vm763, %v741, %v767
        %vm778 = vcmask 64512
        %779 = vst.msk [vmem:[#allocation2] sm:$0xff] %vm778, %v776
        %780 = vst.msk [vmem:[#allocation2 + $0x8] sm:$0xff] %vm778, %v766
        %vm781 = vcmask 57344
        %782 = vst.msk [vmem:[#allocation2 + $0x10] sm:$0x1] %vm781, %v765
        %783 = vst.msk [vmem:[#allocation2 + $0x18] sm:$0xff] %vm778, %v777
        %784 = vst.msk [vmem:[#allocation2 + $0x20] sm:$0xff] %vm778, %v769
        %785 = vst.msk [vmem:[#allocation2 + $0x28] sm:$0x1] %vm781, %v768
      $region80: #{hybrid_forward.2} parent=75 // pred_fallthru
        _
      %v786 = vld [vmem:[#allocation2] sm:$0xff]
      %v787 = vld [vmem:[#allocation2 + $0x8] sm:$0xff]
      %v788 = vld [vmem:[#allocation2 + $0x10] sm:$0x1]
      %v789 = vld [vmem:[#allocation2 + $0x18] sm:$0xff]
      %v790 = vld [vmem:[#allocation2 + $0x20] sm:$0xff]
      %v791 = vld [vmem:[#allocation2 + $0x28] sm:$0x1]
      %v798 = vcombine.high %v786, %v786
      %v800 = vunpack.c.l.s4 1966171168
      %v801 = vunpack.c.0.s8 %v800
      %v802 = vlaneseq
      %v803 = vshrl.u32 %v802, 7
      %v804 = vsub.s32 %v801, %v803
      %v805 = vrot.slane %v786, %v804
      %v807 = vunpack.c.l.s4 1966171168
      %v808 = vunpack.c.0.s8 %v807
      %v809 = vlaneseq
      %v810 = vshrl.u32 %v809, 7
      %v811 = vsub.s32 %v808, %v810
      %v812 = vrot.slane %v798, %v811
      %v813 = vcombine.high %v805, %v805
      %v814 = vcombine.high %v812, %v812
      %v816 = vunpack.c.l.s4 1966171168
      %v817 = vunpack.c.0.s8 %v816
      %v818 = vlaneseq
      %v819 = vshrl.u32 %v818, 7
      %v820 = vsub.s32 %v817, %v819
      %v821 = vrot.slane %v805, %v820
      %v823 = vunpack.c.l.s4 1966171168
      %v824 = vunpack.c.0.s8 %v823
      %v825 = vlaneseq
      %v826 = vshrl.u32 %v825, 7
      %v827 = vsub.s32 %v824, %v826
      %v828 = vrot.slane %v812, %v827
      %v830 = vunpack.c.l.s4 1966171168
      %v831 = vunpack.c.0.s8 %v830
      %v832 = vlaneseq
      %v833 = vshrl.u32 %v832, 7
      %v834 = vsub.s32 %v831, %v833
      %v835 = vrot.slane %v813, %v834
      %v837 = vunpack.c.l.s4 1966171168
      %v838 = vunpack.c.0.s8 %v837
      %v839 = vlaneseq
      %v840 = vshrl.u32 %v839, 7
      %v841 = vsub.s32 %v838, %v840
      %v842 = vrot.slane %v814, %v841
      %v843 = vcombine.high %v821, %v821
      %v844 = vcombine.high %v828, %v828
      %v845 = vcombine.high %v835, %v835
      %v846 = vcombine.high %v842, %v842
      %v847 = vcombine.high %v787, %v787
      %v849 = vunpack.c.l.s4 1966171168
      %v850 = vunpack.c.0.s8 %v849
      %v851 = vlaneseq
      %v852 = vshrl.u32 %v851, 7
      %v853 = vsub.s32 %v850, %v852
      %v854 = vrot.slane %v787, %v853
      %v856 = vunpack.c.l.s4 1966171168
      %v857 = vunpack.c.0.s8 %v856
      %v858 = vlaneseq
      %v859 = vshrl.u32 %v858, 7
      %v860 = vsub.s32 %v857, %v859
      %v861 = vrot.slane %v847, %v860
      %v862 = vcombine.high %v854, %v854
      %v863 = vcombine.high %v861, %v861
      %v865 = vunpack.c.l.s4 1966171168
      %v866 = vunpack.c.0.s8 %v865
      %v867 = vlaneseq
      %v868 = vshrl.u32 %v867, 7
      %v869 = vsub.s32 %v866, %v868
      %v870 = vrot.slane %v854, %v869
      %v872 = vunpack.c.l.s4 1966171168
      %v873 = vunpack.c.0.s8 %v872
      %v874 = vlaneseq
      %v875 = vshrl.u32 %v874, 7
      %v876 = vsub.s32 %v873, %v875
      %v877 = vrot.slane %v861, %v876
      %v879 = vunpack.c.l.s4 1966171168
      %v880 = vunpack.c.0.s8 %v879
      %v881 = vlaneseq
      %v882 = vshrl.u32 %v881, 7
      %v883 = vsub.s32 %v880, %v882
      %v884 = vrot.slane %v862, %v883
      %v886 = vunpack.c.l.s4 1966171168
      %v887 = vunpack.c.0.s8 %v886
      %v888 = vlaneseq
      %v889 = vshrl.u32 %v888, 7
      %v890 = vsub.s32 %v887, %v889
      %v891 = vrot.slane %v863, %v890
      %v892 = vcombine.high %v870, %v870
      %v893 = vcombine.high %v877, %v877
      %v894 = vcombine.high %v884, %v884
      %v895 = vcombine.high %v891, %v891
      %v897 = vunpack.c.l.s4 1966171168
      %v898 = vunpack.c.0.s8 %v897
      %v899 = vlaneseq
      %v900 = vshrl.u32 %v899, 7
      %v901 = vsub.s32 %v898, %v900
      %v902 = vrot.slane %v788, %v901
      %v904 = vunpack.c.l.s4 1966171168
      %v905 = vunpack.c.0.s8 %v904
      %v906 = vlaneseq
      %v907 = vshrl.u32 %v906, 7
      %v908 = vsub.s32 %v905, %v907
      %v909 = vrot.slane %v902, %v908
      %v910 = vcombine.high %v789, %v789
      %v912 = vunpack.c.l.s4 1966171168
      %v913 = vunpack.c.0.s8 %v912
      %v914 = vlaneseq
      %v915 = vshrl.u32 %v914, 7
      %v916 = vsub.s32 %v913, %v915
      %v917 = vrot.slane %v789, %v916
      %v919 = vunpack.c.l.s4 1966171168
      %v920 = vunpack.c.0.s8 %v919
      %v921 = vlaneseq
      %v922 = vshrl.u32 %v921, 7
      %v923 = vsub.s32 %v920, %v922
      %v924 = vrot.slane %v910, %v923
      %v925 = vcombine.high %v917, %v917
      %v926 = vcombine.high %v924, %v924
      %v928 = vunpack.c.l.s4 1966171168
      %v929 = vunpack.c.0.s8 %v928
      %v930 = vlaneseq
      %v931 = vshrl.u32 %v930, 7
      %v932 = vsub.s32 %v929, %v931
      %v933 = vrot.slane %v917, %v932
      %v935 = vunpack.c.l.s4 1966171168
      %v936 = vunpack.c.0.s8 %v935
      %v937 = vlaneseq
      %v938 = vshrl.u32 %v937, 7
      %v939 = vsub.s32 %v936, %v938
      %v940 = vrot.slane %v924, %v939
      %v942 = vunpack.c.l.s4 1966171168
      %v943 = vunpack.c.0.s8 %v942
      %v944 = vlaneseq
      %v945 = vshrl.u32 %v944, 7
      %v946 = vsub.s32 %v943, %v945
      %v947 = vrot.slane %v925, %v946
      %v949 = vunpack.c.l.s4 1966171168
      %v950 = vunpack.c.0.s8 %v949
      %v951 = vlaneseq
      %v952 = vshrl.u32 %v951, 7
      %v953 = vsub.s32 %v950, %v952
      %v954 = vrot.slane %v926, %v953
      %v955 = vcombine.high %v933, %v933
      %v956 = vcombine.high %v940, %v940
      %v957 = vcombine.high %v947, %v947
      %v958 = vcombine.high %v954, %v954
      %v959 = vcombine.high %v790, %v790
      %v961 = vunpack.c.l.s4 1966171168
      %v962 = vunpack.c.0.s8 %v961
      %v963 = vlaneseq
      %v964 = vshrl.u32 %v963, 7
      %v965 = vsub.s32 %v962, %v964
      %v966 = vrot.slane %v790, %v965
      %v968 = vunpack.c.l.s4 1966171168
      %v969 = vunpack.c.0.s8 %v968
      %v970 = vlaneseq
      %v971 = vshrl.u32 %v970, 7
      %v972 = vsub.s32 %v969, %v971
      %v973 = vrot.slane %v959, %v972
      %v974 = vcombine.high %v966, %v966
      %v975 = vcombine.high %v973, %v973
      %v977 = vunpack.c.l.s4 1966171168
      %v978 = vunpack.c.0.s8 %v977
      %v979 = vlaneseq
      %v980 = vshrl.u32 %v979, 7
      %v981 = vsub.s32 %v978, %v980
      %v982 = vrot.slane %v966, %v981
      %v984 = vunpack.c.l.s4 1966171168
      %v985 = vunpack.c.0.s8 %v984
      %v986 = vlaneseq
      %v987 = vshrl.u32 %v986, 7
      %v988 = vsub.s32 %v985, %v987
      %v989 = vrot.slane %v973, %v988
      %v991 = vunpack.c.l.s4 1966171168
      %v992 = vunpack.c.0.s8 %v991
      %v993 = vlaneseq
      %v994 = vshrl.u32 %v993, 7
      %v995 = vsub.s32 %v992, %v994
      %v996 = vrot.slane %v974, %v995
      %v998 = vunpack.c.l.s4 1966171168
      %v999 = vunpack.c.0.s8 %v998
      %v1000 = vlaneseq
      %v1001 = vshrl.u32 %v1000, 7
      %v1002 = vsub.s32 %v999, %v1001
      %v1003 = vrot.slane %v975, %v1002
      %v1004 = vcombine.high %v982, %v982
      %v1005 = vcombine.high %v989, %v989
      %v1006 = vcombine.high %v996, %v996
      %v1007 = vcombine.high %v1003, %v1003
      %v1009 = vunpack.c.l.s4 1966171168
      %v1010 = vunpack.c.0.s8 %v1009
      %v1011 = vlaneseq
      %v1012 = vshrl.u32 %v1011, 7
      %v1013 = vsub.s32 %v1010, %v1012
      %v1014 = vrot.slane %v791, %v1013
      %v1016 = vunpack.c.l.s4 1966171168
      %v1017 = vunpack.c.0.s8 %v1016
      %v1018 = vlaneseq
      %v1019 = vshrl.u32 %v1018, 7
      %v1020 = vsub.s32 %v1017, %v1019
      %v1021 = vrot.slane %v1014, %v1020
      %v1056 = vld [vmem:[%s599] sm:$0x1]
      %v1057 = vld [vmem:[%s602] sm:$0x1]
      %v1058 = vcombine.low %v821, %v835
      %v1059 = vcombine.low %v843, %v845
      %v1060 = vcombine.low %v828, %v842
      %v1061 = vcombine.low %v844, %v846
      %v1063 = vunpack.c.l.s4 1966171168
      %v1064 = vunpack.c.0.s8 %v1063
      %v1065 = vlaneseq
      %v1066 = vshrl.u32 %v1065, 7
      %v1067 = vsub.s32 %v1064, %v1066
      %v1068 = vrot.slane %v1058, %v1067
      %v1070 = vunpack.c.l.s4 1966171168
      %v1071 = vunpack.c.0.s8 %v1070
      %v1072 = vlaneseq
      %v1073 = vshrl.u32 %v1072, 7
      %v1074 = vsub.s32 %v1071, %v1073
      %v1075 = vrot.slane %v1059, %v1074
      %v1077 = vunpack.c.l.s4 1966171168
      %v1078 = vunpack.c.0.s8 %v1077
      %v1079 = vlaneseq
      %v1080 = vshrl.u32 %v1079, 7
      %v1081 = vsub.s32 %v1078, %v1080
      %v1082 = vrot.slane %v1060, %v1081
      %v1084 = vunpack.c.l.s4 1966171168
      %v1085 = vunpack.c.0.s8 %v1084
      %v1086 = vlaneseq
      %v1087 = vshrl.u32 %v1086, 7
      %v1088 = vsub.s32 %v1085, %v1087
      %v1089 = vrot.slane %v1061, %v1088
      %v1090 = vcombine.low %v1068, %v1075
      %v1091 = vcombine.low %v1082, %v1089
      %v1093 = vunpack.c.l.s4 1966171168
      %v1094 = vunpack.c.0.s8 %v1093
      %v1095 = vlaneseq
      %v1096 = vshrl.u32 %v1095, 7
      %v1097 = vsub.s32 %v1094, %v1096
      %v1098 = vrot.slane %v1090, %v1097
      %v1100 = vunpack.c.l.s4 1966171168
      %v1101 = vunpack.c.0.s8 %v1100
      %v1102 = vlaneseq
      %v1103 = vshrl.u32 %v1102, 7
      %v1104 = vsub.s32 %v1101, %v1103
      %v1105 = vrot.slane %v1091, %v1104
      %v1106 = vcombine.low %v1098, %v1105
      %v1107 = vcombine.low %v870, %v884
      %v1108 = vcombine.low %v892, %v894
      %v1109 = vcombine.low %v877, %v891
      %v1110 = vcombine.low %v893, %v895
      %v1112 = vunpack.c.l.s4 1966171168
      %v1113 = vunpack.c.0.s8 %v1112
      %v1114 = vlaneseq
      %v1115 = vshrl.u32 %v1114, 7
      %v1116 = vsub.s32 %v1113, %v1115
      %v1117 = vrot.slane %v1107, %v1116
      %v1119 = vunpack.c.l.s4 1966171168
      %v1120 = vunpack.c.0.s8 %v1119
      %v1121 = vlaneseq
      %v1122 = vshrl.u32 %v1121, 7
      %v1123 = vsub.s32 %v1120, %v1122
      %v1124 = vrot.slane %v1108, %v1123
      %v1126 = vunpack.c.l.s4 1966171168
      %v1127 = vunpack.c.0.s8 %v1126
      %v1128 = vlaneseq
      %v1129 = vshrl.u32 %v1128, 7
      %v1130 = vsub.s32 %v1127, %v1129
      %v1131 = vrot.slane %v1109, %v1130
      %v1133 = vunpack.c.l.s4 1966171168
      %v1134 = vunpack.c.0.s8 %v1133
      %v1135 = vlaneseq
      %v1136 = vshrl.u32 %v1135, 7
      %v1137 = vsub.s32 %v1134, %v1136
      %v1138 = vrot.slane %v1110, %v1137
      %v1139 = vcombine.low %v1117, %v1124
      %v1140 = vcombine.low %v1131, %v1138
      %v1142 = vunpack.c.l.s4 1966171168
      %v1143 = vunpack.c.0.s8 %v1142
      %v1144 = vlaneseq
      %v1145 = vshrl.u32 %v1144, 7
      %v1146 = vsub.s32 %v1143, %v1145
      %v1147 = vrot.slane %v1139, %v1146
      %v1149 = vunpack.c.l.s4 1966171168
      %v1150 = vunpack.c.0.s8 %v1149
      %v1151 = vlaneseq
      %v1152 = vshrl.u32 %v1151, 7
      %v1153 = vsub.s32 %v1150, %v1152
      %v1154 = vrot.slane %v1140, %v1153
      %v1155 = vcombine.low %v1147, %v1154
      %v1156 = vcombine.low %v909, %v933
      %v1157 = vcombine.low %v947, %v955
      %v1158 = vcombine.low %v957, %v940
      %v1159 = vcombine.low %v954, %v956
      %v1161 = vunpack.c.l.s4 1966171168
      %v1162 = vunpack.c.0.s8 %v1161
      %v1163 = vlaneseq
      %v1164 = vshrl.u32 %v1163, 7
      %v1165 = vsub.s32 %v1162, %v1164
      %v1166 = vrot.slane %v1156, %v1165
      %v1168 = vunpack.c.l.s4 1966171168
      %v1169 = vunpack.c.0.s8 %v1168
      %v1170 = vlaneseq
      %v1171 = vshrl.u32 %v1170, 7
      %v1172 = vsub.s32 %v1169, %v1171
      %v1173 = vrot.slane %v1157, %v1172
      %v1175 = vunpack.c.l.s4 1966171168
      %v1176 = vunpack.c.0.s8 %v1175
      %v1177 = vlaneseq
      %v1178 = vshrl.u32 %v1177, 7
      %v1179 = vsub.s32 %v1176, %v1178
      %v1180 = vrot.slane %v1158, %v1179
      %v1182 = vunpack.c.l.s4 1966171168
      %v1183 = vunpack.c.0.s8 %v1182
      %v1184 = vlaneseq
      %v1185 = vshrl.u32 %v1184, 7
      %v1186 = vsub.s32 %v1183, %v1185
      %v1187 = vrot.slane %v1159, %v1186
      %v1188 = vcombine.low %v1166, %v1173
      %v1189 = vcombine.low %v1180, %v1187
      %v1191 = vunpack.c.l.s4 1966171168
      %v1192 = vunpack.c.0.s8 %v1191
      %v1193 = vlaneseq
      %v1194 = vshrl.u32 %v1193, 7
      %v1195 = vsub.s32 %v1192, %v1194
      %v1196 = vrot.slane %v1188, %v1195
      %v1198 = vunpack.c.l.s4 1966171168
      %v1199 = vunpack.c.0.s8 %v1198
      %v1200 = vlaneseq
      %v1201 = vshrl.u32 %v1200, 7
      %v1202 = vsub.s32 %v1199, %v1201
      %v1203 = vrot.slane %v1189, %v1202
      %v1204 = vcombine.low %v1196, %v1203
      %v1205 = vcombine.low %v958, %v982
      %v1206 = vcombine.low %v996, %v1004
      %v1207 = vcombine.low %v1006, %v989
      %v1208 = vcombine.low %v1003, %v1005
      %v1210 = vunpack.c.l.s4 1966171168
      %v1211 = vunpack.c.0.s8 %v1210
      %v1212 = vlaneseq
      %v1213 = vshrl.u32 %v1212, 7
      %v1214 = vsub.s32 %v1211, %v1213
      %v1215 = vrot.slane %v1205, %v1214
      %v1217 = vunpack.c.l.s4 1966171168
      %v1218 = vunpack.c.0.s8 %v1217
      %v1219 = vlaneseq
      %v1220 = vshrl.u32 %v1219, 7
      %v1221 = vsub.s32 %v1218, %v1220
      %v1222 = vrot.slane %v1206, %v1221
      %v1224 = vunpack.c.l.s4 1966171168
      %v1225 = vunpack.c.0.s8 %v1224
      %v1226 = vlaneseq
      %v1227 = vshrl.u32 %v1226, 7
      %v1228 = vsub.s32 %v1225, %v1227
      %v1229 = vrot.slane %v1207, %v1228
      %v1231 = vunpack.c.l.s4 1966171168
      %v1232 = vunpack.c.0.s8 %v1231
      %v1233 = vlaneseq
      %v1234 = vshrl.u32 %v1233, 7
      %v1235 = vsub.s32 %v1232, %v1234
      %v1236 = vrot.slane %v1208, %v1235
      %v1237 = vcombine.low %v1215, %v1222
      %v1238 = vcombine.low %v1229, %v1236
      %v1240 = vunpack.c.l.s4 1966171168
      %v1241 = vunpack.c.0.s8 %v1240
      %v1242 = vlaneseq
      %v1243 = vshrl.u32 %v1242, 7
      %v1244 = vsub.s32 %v1241, %v1243
      %v1245 = vrot.slane %v1237, %v1244
      %v1247 = vunpack.c.l.s4 1966171168
      %v1248 = vunpack.c.0.s8 %v1247
      %v1249 = vlaneseq
      %v1250 = vshrl.u32 %v1249, 7
      %v1251 = vsub.s32 %v1248, %v1250
      %v1252 = vrot.slane %v1238, %v1251
      %v1253 = vcombine.low %v1245, %v1252
      %v1254 = vcombine.low %v1007, %v1021
      %v1256 = vunpack.c.l.s4 1966171168
      %v1257 = vunpack.c.0.s8 %v1256
      %v1258 = vlaneseq
      %v1259 = vshrl.u32 %v1258, 7
      %v1260 = vsub.s32 %v1257, %v1259
      %v1261 = vrot.slane %v1254, %v1260
      %v1263 = vunpack.c.l.s4 1966171168
      %v1264 = vunpack.c.0.s8 %v1263
      %v1265 = vlaneseq
      %v1266 = vshrl.u32 %v1265, 7
      %v1267 = vsub.s32 %v1264, %v1266
      %v1268 = vrot.slane %v1261, %v1267
      %vm1274 = vcmask 64512
      %v1275 = vsel %vm1274, %v1106, 0.0
      %1276 = vadd.xlane.f32.xlu0 %v1275
      %v1277 = vpop.xlane.xlu0 %1276
      %v1278 = vsel %vm1274, %v1155, 0.0
      %1279 = vadd.xlane.f32.xlu0 %v1278
      %v1280 = vpop.xlane.xlu0 %1279
      %v1281 = vsel %vm1274, %v1204, 0.0
      %1282 = vadd.xlane.f32.xlu0 %v1281
      %v1283 = vpop.xlane.xlu0 %1282
      %v1284 = vsel %vm1274, %v1253, 0.0
      %1285 = vadd.xlane.f32.xlu0 %v1284
      %v1286 = vpop.xlane.xlu0 %1285
      %vm1287 = vcmask 58368
      %v1288 = vsel %vm1287, %v1268, 0.0
      %1289 = vadd.xlane.f32.xlu0 %v1288
      %v1290 = vpop.xlane.xlu0 %1289
      %v1291 = vrcp.pop 8.0
      %v1292 = vmul.f32 %v1277, %v1291
      %v1293 = vmul.f32 %v1280, %v1291
      %v1294 = vmul.f32 %v1283, %v1291
      %v1295 = vmul.f32 %v1286, %v1291
      %v1296 = vmul.f32 %v1290, %v1291
      %v1302 = vlaneseq
      %v1303 = vshrl.u32 %v1302, 7
      %v1304 = vsub.s32 0, %v1303
      %v1305 = vrot.slane %v1292, %v1304
      %v1306 = vlaneseq
      %v1307 = vshrl.u32 %v1306, 7
      %v1308 = vsub.s32 1, %v1307
      %v1309 = vrot.slane %v1292, %v1308
      %v1310 = vlaneseq
      %v1311 = vshrl.u32 %v1310, 7
      %v1312 = vsub.s32 2, %v1311
      %v1313 = vrot.slane %v1292, %v1312
      %v1314 = vlaneseq
      %v1315 = vshrl.u32 %v1314, 7
      %v1316 = vsub.s32 3, %v1315
      %v1317 = vrot.slane %v1292, %v1316
      %v1318 = vlaneseq
      %v1319 = vshrl.u32 %v1318, 7
      %v1320 = vsub.s32 4, %v1319
      %v1321 = vrot.slane %v1292, %v1320
      %v1322 = vlaneseq
      %v1323 = vshrl.u32 %v1322, 7
      %v1324 = vsub.s32 5, %v1323
      %v1325 = vrot.slane %v1292, %v1324
      %v1326 = vlaneseq
      %v1327 = vshrl.u32 %v1326, 7
      %v1328 = vsub.s32 6, %v1327
      %v1329 = vrot.slane %v1292, %v1328
      %v1330 = vlaneseq
      %v1331 = vshrl.u32 %v1330, 7
      %v1332 = vsub.s32 7, %v1331
      %v1333 = vrot.slane %v1292, %v1332
      %v1334 = vlaneseq
      %v1335 = vshrl.u32 %v1334, 7
      %v1336 = vsub.s32 0, %v1335
      %v1337 = vrot.slane %v1293, %v1336
      %v1338 = vlaneseq
      %v1339 = vshrl.u32 %v1338, 7
      %v1340 = vsub.s32 1, %v1339
      %v1341 = vrot.slane %v1293, %v1340
      %v1342 = vlaneseq
      %v1343 = vshrl.u32 %v1342, 7
      %v1344 = vsub.s32 2, %v1343
      %v1345 = vrot.slane %v1293, %v1344
      %v1346 = vlaneseq
      %v1347 = vshrl.u32 %v1346, 7
      %v1348 = vsub.s32 3, %v1347
      %v1349 = vrot.slane %v1293, %v1348
      %v1350 = vlaneseq
      %v1351 = vshrl.u32 %v1350, 7
      %v1352 = vsub.s32 4, %v1351
      %v1353 = vrot.slane %v1293, %v1352
      %v1354 = vlaneseq
      %v1355 = vshrl.u32 %v1354, 7
      %v1356 = vsub.s32 5, %v1355
      %v1357 = vrot.slane %v1293, %v1356
      %v1358 = vlaneseq
      %v1359 = vshrl.u32 %v1358, 7
      %v1360 = vsub.s32 6, %v1359
      %v1361 = vrot.slane %v1293, %v1360
      %v1362 = vlaneseq
      %v1363 = vshrl.u32 %v1362, 7
      %v1364 = vsub.s32 7, %v1363
      %v1365 = vrot.slane %v1293, %v1364
      %v1366 = vlaneseq
      %v1367 = vshrl.u32 %v1366, 7
      %v1368 = vsub.s32 0, %v1367
      %v1369 = vrot.slane %v1294, %v1368
      %v1370 = vlaneseq
      %v1371 = vshrl.u32 %v1370, 7
      %v1372 = vsub.s32 1, %v1371
      %v1373 = vrot.slane %v1294, %v1372
      %v1374 = vlaneseq
      %v1375 = vshrl.u32 %v1374, 7
      %v1376 = vsub.s32 2, %v1375
      %v1377 = vrot.slane %v1294, %v1376
      %v1378 = vlaneseq
      %v1379 = vshrl.u32 %v1378, 7
      %v1380 = vsub.s32 3, %v1379
      %v1381 = vrot.slane %v1294, %v1380
      %v1382 = vlaneseq
      %v1383 = vshrl.u32 %v1382, 7
      %v1384 = vsub.s32 4, %v1383
      %v1385 = vrot.slane %v1294, %v1384
      %v1386 = vlaneseq
      %v1387 = vshrl.u32 %v1386, 7
      %v1388 = vsub.s32 5, %v1387
      %v1389 = vrot.slane %v1294, %v1388
      %v1390 = vlaneseq
      %v1391 = vshrl.u32 %v1390, 7
      %v1392 = vsub.s32 6, %v1391
      %v1393 = vrot.slane %v1294, %v1392
      %v1394 = vlaneseq
      %v1395 = vshrl.u32 %v1394, 7
      %v1396 = vsub.s32 7, %v1395
      %v1397 = vrot.slane %v1294, %v1396
      %v1398 = vlaneseq
      %v1399 = vshrl.u32 %v1398, 7
      %v1400 = vsub.s32 0, %v1399
      %v1401 = vrot.slane %v1295, %v1400
      %v1402 = vlaneseq
      %v1403 = vshrl.u32 %v1402, 7
      %v1404 = vsub.s32 1, %v1403
      %v1405 = vrot.slane %v1295, %v1404
      %v1406 = vlaneseq
      %v1407 = vshrl.u32 %v1406, 7
      %v1408 = vsub.s32 2, %v1407
      %v1409 = vrot.slane %v1295, %v1408
      %v1410 = vlaneseq
      %v1411 = vshrl.u32 %v1410, 7
      %v1412 = vsub.s32 3, %v1411
      %v1413 = vrot.slane %v1295, %v1412
      %v1414 = vlaneseq
      %v1415 = vshrl.u32 %v1414, 7
      %v1416 = vsub.s32 4, %v1415
      %v1417 = vrot.slane %v1295, %v1416
      %v1418 = vlaneseq
      %v1419 = vshrl.u32 %v1418, 7
      %v1420 = vsub.s32 5, %v1419
      %v1421 = vrot.slane %v1295, %v1420
      %v1422 = vlaneseq
      %v1423 = vshrl.u32 %v1422, 7
      %v1424 = vsub.s32 6, %v1423
      %v1425 = vrot.slane %v1295, %v1424
      %v1426 = vlaneseq
      %v1427 = vshrl.u32 %v1426, 7
      %v1428 = vsub.s32 7, %v1427
      %v1429 = vrot.slane %v1295, %v1428
      %v1430 = vlaneseq
      %v1431 = vshrl.u32 %v1430, 7
      %v1432 = vsub.s32 0, %v1431
      %v1433 = vrot.slane %v1296, %v1432
      %v1434 = vlaneseq
      %v1435 = vshrl.u32 %v1434, 7
      %v1436 = vsub.s32 1, %v1435
      %v1437 = vrot.slane %v1296, %v1436
      %v1472 = vsub.f32 %v821, %v1305
      %v1473 = vsub.f32 %v835, %v1309
      %v1474 = vsub.f32 %v843, %v1313
      %v1475 = vsub.f32 %v845, %v1317
      %v1476 = vsub.f32 %v828, %v1321
      %v1477 = vsub.f32 %v842, %v1325
      %v1478 = vsub.f32 %v844, %v1329
      %v1479 = vsub.f32 %v846, %v1333
      %v1480 = vsub.f32 %v870, %v1337
      %v1481 = vsub.f32 %v884, %v1341
      %v1482 = vsub.f32 %v892, %v1345
      %v1483 = vsub.f32 %v894, %v1349
      %v1484 = vsub.f32 %v877, %v1353
      %v1485 = vsub.f32 %v891, %v1357
      %v1486 = vsub.f32 %v893, %v1361
      %v1487 = vsub.f32 %v895, %v1365
      %v1488 = vsub.f32 %v909, %v1369
      %v1489 = vsub.f32 %v933, %v1373
      %v1490 = vsub.f32 %v947, %v1377
      %v1491 = vsub.f32 %v955, %v1381
      %v1492 = vsub.f32 %v957, %v1385
      %v1493 = vsub.f32 %v940, %v1389
      %v1494 = vsub.f32 %v954, %v1393
      %v1495 = vsub.f32 %v956, %v1397
      %v1496 = vsub.f32 %v958, %v1401
      %v1497 = vsub.f32 %v982, %v1405
      %v1498 = vsub.f32 %v996, %v1409
      %v1499 = vsub.f32 %v1004, %v1413
      %v1500 = vsub.f32 %v1006, %v1417
      %v1501 = vsub.f32 %v989, %v1421
      %v1502 = vsub.f32 %v1003, %v1425
      %v1503 = vsub.f32 %v1005, %v1429
      %v1504 = vsub.f32 %v1007, %v1433
      %v1505 = vsub.f32 %v1021, %v1437
      %v1506 = vmul.f32 %v1472, %v1472
      %v1507 = vmul.f32 %v1473, %v1473
      %v1508 = vmul.f32 %v1474, %v1474
      %v1509 = vmul.f32 %v1475, %v1475
      %v1510 = vmul.f32 %v1476, %v1476
      %v1511 = vmul.f32 %v1477, %v1477
      %v1512 = vmul.f32 %v1478, %v1478
      %v1513 = vmul.f32 %v1479, %v1479
      %v1514 = vmul.f32 %v1480, %v1480
      %v1515 = vmul.f32 %v1481, %v1481
      %v1516 = vmul.f32 %v1482, %v1482
      %v1517 = vmul.f32 %v1483, %v1483
      %v1518 = vmul.f32 %v1484, %v1484
      %v1519 = vmul.f32 %v1485, %v1485
      %v1520 = vmul.f32 %v1486, %v1486
      %v1521 = vmul.f32 %v1487, %v1487
      %v1522 = vmul.f32 %v1488, %v1488
      %v1523 = vmul.f32 %v1489, %v1489
      %v1524 = vmul.f32 %v1490, %v1490
      %v1525 = vmul.f32 %v1491, %v1491
      %v1526 = vmul.f32 %v1492, %v1492
      %v1527 = vmul.f32 %v1493, %v1493
      %v1528 = vmul.f32 %v1494, %v1494
      %v1529 = vmul.f32 %v1495, %v1495
      %v1530 = vmul.f32 %v1496, %v1496
      %v1531 = vmul.f32 %v1497, %v1497
      %v1532 = vmul.f32 %v1498, %v1498
      %v1533 = vmul.f32 %v1499, %v1499
      %v1534 = vmul.f32 %v1500, %v1500
      %v1535 = vmul.f32 %v1501, %v1501
      %v1536 = vmul.f32 %v1502, %v1502
      %v1537 = vmul.f32 %v1503, %v1503
      %v1538 = vmul.f32 %v1504, %v1504
      %v1539 = vmul.f32 %v1505, %v1505
      %v1574 = vcombine.low %v1506, %v1507
      %v1575 = vcombine.low %v1508, %v1509
      %v1576 = vcombine.low %v1510, %v1511
      %v1577 = vcombine.low %v1512, %v1513
      %v1579 = vunpack.c.l.s4 1966171168
      %v1580 = vunpack.c.0.s8 %v1579
      %v1581 = vlaneseq
      %v1582 = vshrl.u32 %v1581, 7
      %v1583 = vsub.s32 %v1580, %v1582
      %v1584 = vrot.slane %v1574, %v1583
      %v1586 = vunpack.c.l.s4 1966171168
      %v1587 = vunpack.c.0.s8 %v1586
      %v1588 = vlaneseq
      %v1589 = vshrl.u32 %v1588, 7
      %v1590 = vsub.s32 %v1587, %v1589
      %v1591 = vrot.slane %v1575, %v1590
      %v1593 = vunpack.c.l.s4 1966171168
      %v1594 = vunpack.c.0.s8 %v1593
      %v1595 = vlaneseq
      %v1596 = vshrl.u32 %v1595, 7
      %v1597 = vsub.s32 %v1594, %v1596
      %v1598 = vrot.slane %v1576, %v1597
      %v1600 = vunpack.c.l.s4 1966171168
      %v1601 = vunpack.c.0.s8 %v1600
      %v1602 = vlaneseq
      %v1603 = vshrl.u32 %v1602, 7
      %v1604 = vsub.s32 %v1601, %v1603
      %v1605 = vrot.slane %v1577, %v1604
      %v1606 = vcombine.low %v1584, %v1591
      %v1607 = vcombine.low %v1598, %v1605
      %v1609 = vunpack.c.l.s4 1966171168
      %v1610 = vunpack.c.0.s8 %v1609
      %v1611 = vlaneseq
      %v1612 = vshrl.u32 %v1611, 7
      %v1613 = vsub.s32 %v1610, %v1612
      %v1614 = vrot.slane %v1606, %v1613
      %v1616 = vunpack.c.l.s4 1966171168
      %v1617 = vunpack.c.0.s8 %v1616
      %v1618 = vlaneseq
      %v1619 = vshrl.u32 %v1618, 7
      %v1620 = vsub.s32 %v1617, %v1619
      %v1621 = vrot.slane %v1607, %v1620
      %v1622 = vcombine.low %v1614, %v1621
      %v1623 = vcombine.low %v1514, %v1515
      %v1624 = vcombine.low %v1516, %v1517
      %v1625 = vcombine.low %v1518, %v1519
      %v1626 = vcombine.low %v1520, %v1521
      %v1628 = vunpack.c.l.s4 1966171168
      %v1629 = vunpack.c.0.s8 %v1628
      %v1630 = vlaneseq
      %v1631 = vshrl.u32 %v1630, 7
      %v1632 = vsub.s32 %v1629, %v1631
      %v1633 = vrot.slane %v1623, %v1632
      %v1635 = vunpack.c.l.s4 1966171168
      %v1636 = vunpack.c.0.s8 %v1635
      %v1637 = vlaneseq
      %v1638 = vshrl.u32 %v1637, 7
      %v1639 = vsub.s32 %v1636, %v1638
      %v1640 = vrot.slane %v1624, %v1639
      %v1642 = vunpack.c.l.s4 1966171168
      %v1643 = vunpack.c.0.s8 %v1642
      %v1644 = vlaneseq
      %v1645 = vshrl.u32 %v1644, 7
      %v1646 = vsub.s32 %v1643, %v1645
      %v1647 = vrot.slane %v1625, %v1646
      %v1649 = vunpack.c.l.s4 1966171168
      %v1650 = vunpack.c.0.s8 %v1649
      %v1651 = vlaneseq
      %v1652 = vshrl.u32 %v1651, 7
      %v1653 = vsub.s32 %v1650, %v1652
      %v1654 = vrot.slane %v1626, %v1653
      %v1655 = vcombine.low %v1633, %v1640
      %v1656 = vcombine.low %v1647, %v1654
      %v1658 = vunpack.c.l.s4 1966171168
      %v1659 = vunpack.c.0.s8 %v1658
      %v1660 = vlaneseq
      %v1661 = vshrl.u32 %v1660, 7
      %v1662 = vsub.s32 %v1659, %v1661
      %v1663 = vrot.slane %v1655, %v1662
      %v1665 = vunpack.c.l.s4 1966171168
      %v1666 = vunpack.c.0.s8 %v1665
      %v1667 = vlaneseq
      %v1668 = vshrl.u32 %v1667, 7
      %v1669 = vsub.s32 %v1666, %v1668
      %v1670 = vrot.slane %v1656, %v1669
      %v1671 = vcombine.low %v1663, %v1670
      %v1672 = vcombine.low %v1522, %v1523
      %v1673 = vcombine.low %v1524, %v1525
      %v1674 = vcombine.low %v1526, %v1527
      %v1675 = vcombine.low %v1528, %v1529
      %v1677 = vunpack.c.l.s4 1966171168
      %v1678 = vunpack.c.0.s8 %v1677
      %v1679 = vlaneseq
      %v1680 = vshrl.u32 %v1679, 7
      %v1681 = vsub.s32 %v1678, %v1680
      %v1682 = vrot.slane %v1672, %v1681
      %v1684 = vunpack.c.l.s4 1966171168
      %v1685 = vunpack.c.0.s8 %v1684
      %v1686 = vlaneseq
      %v1687 = vshrl.u32 %v1686, 7
      %v1688 = vsub.s32 %v1685, %v1687
      %v1689 = vrot.slane %v1673, %v1688
      %v1691 = vunpack.c.l.s4 1966171168
      %v1692 = vunpack.c.0.s8 %v1691
      %v1693 = vlaneseq
      %v1694 = vshrl.u32 %v1693, 7
      %v1695 = vsub.s32 %v1692, %v1694
      %v1696 = vrot.slane %v1674, %v1695
      %v1698 = vunpack.c.l.s4 1966171168
      %v1699 = vunpack.c.0.s8 %v1698
      %v1700 = vlaneseq
      %v1701 = vshrl.u32 %v1700, 7
      %v1702 = vsub.s32 %v1699, %v1701
      %v1703 = vrot.slane %v1675, %v1702
      %v1704 = vcombine.low %v1682, %v1689
      %v1705 = vcombine.low %v1696, %v1703
      %v1707 = vunpack.c.l.s4 1966171168
      %v1708 = vunpack.c.0.s8 %v1707
      %v1709 = vlaneseq
      %v1710 = vshrl.u32 %v1709, 7
      %v1711 = vsub.s32 %v1708, %v1710
      %v1712 = vrot.slane %v1704, %v1711
      %v1714 = vunpack.c.l.s4 1966171168
      %v1715 = vunpack.c.0.s8 %v1714
      %v1716 = vlaneseq
      %v1717 = vshrl.u32 %v1716, 7
      %v1718 = vsub.s32 %v1715, %v1717
      %v1719 = vrot.slane %v1705, %v1718
      %v1720 = vcombine.low %v1712, %v1719
      %v1721 = vcombine.low %v1530, %v1531
      %v1722 = vcombine.low %v1532, %v1533
      %v1723 = vcombine.low %v1534, %v1535
      %v1724 = vcombine.low %v1536, %v1537
      %v1726 = vunpack.c.l.s4 1966171168
      %v1727 = vunpack.c.0.s8 %v1726
      %v1728 = vlaneseq
      %v1729 = vshrl.u32 %v1728, 7
      %v1730 = vsub.s32 %v1727, %v1729
      %v1731 = vrot.slane %v1721, %v1730
      %v1733 = vunpack.c.l.s4 1966171168
      %v1734 = vunpack.c.0.s8 %v1733
      %v1735 = vlaneseq
      %v1736 = vshrl.u32 %v1735, 7
      %v1737 = vsub.s32 %v1734, %v1736
      %v1738 = vrot.slane %v1722, %v1737
      %v1740 = vunpack.c.l.s4 1966171168
      %v1741 = vunpack.c.0.s8 %v1740
      %v1742 = vlaneseq
      %v1743 = vshrl.u32 %v1742, 7
      %v1744 = vsub.s32 %v1741, %v1743
      %v1745 = vrot.slane %v1723, %v1744
      %v1747 = vunpack.c.l.s4 1966171168
      %v1748 = vunpack.c.0.s8 %v1747
      %v1749 = vlaneseq
      %v1750 = vshrl.u32 %v1749, 7
      %v1751 = vsub.s32 %v1748, %v1750
      %v1752 = vrot.slane %v1724, %v1751
      %v1753 = vcombine.low %v1731, %v1738
      %v1754 = vcombine.low %v1745, %v1752
      %v1756 = vunpack.c.l.s4 1966171168
      %v1757 = vunpack.c.0.s8 %v1756
      %v1758 = vlaneseq
      %v1759 = vshrl.u32 %v1758, 7
      %v1760 = vsub.s32 %v1757, %v1759
      %v1761 = vrot.slane %v1753, %v1760
      %v1763 = vunpack.c.l.s4 1966171168
      %v1764 = vunpack.c.0.s8 %v1763
      %v1765 = vlaneseq
      %v1766 = vshrl.u32 %v1765, 7
      %v1767 = vsub.s32 %v1764, %v1766
      %v1768 = vrot.slane %v1754, %v1767
      %v1769 = vcombine.low %v1761, %v1768
      %v1770 = vcombine.low %v1538, %v1539
      %v1772 = vunpack.c.l.s4 1966171168
      %v1773 = vunpack.c.0.s8 %v1772
      %v1774 = vlaneseq
      %v1775 = vshrl.u32 %v1774, 7
      %v1776 = vsub.s32 %v1773, %v1775
      %v1777 = vrot.slane %v1770, %v1776
      %v1779 = vunpack.c.l.s4 1966171168
      %v1780 = vunpack.c.0.s8 %v1779
      %v1781 = vlaneseq
      %v1782 = vshrl.u32 %v1781, 7
      %v1783 = vsub.s32 %v1780, %v1782
      %v1784 = vrot.slane %v1777, %v1783
      %v1790 = vsel %vm1274, %v1622, 0.0
      %1791 = vadd.xlane.f32.xlu0 %v1790
      %v1792 = vpop.xlane.xlu0 %1791
      %v1793 = vsel %vm1274, %v1671, 0.0
      %1794 = vadd.xlane.f32.xlu0 %v1793
      %v1795 = vpop.xlane.xlu0 %1794
      %v1796 = vsel %vm1274, %v1720, 0.0
      %1797 = vadd.xlane.f32.xlu0 %v1796
      %v1798 = vpop.xlane.xlu0 %1797
      %v1799 = vsel %vm1274, %v1769, 0.0
      %1800 = vadd.xlane.f32.xlu0 %v1799
      %v1801 = vpop.xlane.xlu0 %1800
      %v1802 = vsel %vm1287, %v1784, 0.0
      %1803 = vadd.xlane.f32.xlu0 %v1802
      %v1804 = vpop.xlane.xlu0 %1803
      %v1805 = vmul.f32 %v1792, %v1291
      %v1806 = vmul.f32 %v1795, %v1291
      %v1807 = vmul.f32 %v1798, %v1291
      %v1808 = vmul.f32 %v1801, %v1291
      %v1809 = vmul.f32 %v1804, %v1291
      %v1810 = vadd.f32 %v1805, 1e-05
      %v1811 = vadd.f32 %v1806, 1e-05
      %v1812 = vadd.f32 %v1807, 1e-05
      %v1813 = vadd.f32 %v1808, 1e-05
      %v1814 = vadd.f32 %v1809, 1e-05
      %v1815 = vrsqrt.pop %v1810
      %v1816 = vrsqrt.pop %v1811
      %v1817 = vrsqrt.pop %v1812
      %v1818 = vrsqrt.pop %v1813
      %v1819 = vrsqrt.pop %v1814
      %v1825 = vlaneseq
      %v1826 = vshrl.u32 %v1825, 7
      %v1827 = vsub.s32 0, %v1826
      %v1828 = vrot.slane %v1815, %v1827
      %v1829 = vlaneseq
      %v1830 = vshrl.u32 %v1829, 7
      %v1831 = vsub.s32 1, %v1830
      %v1832 = vrot.slane %v1815, %v1831
      %v1833 = vlaneseq
      %v1834 = vshrl.u32 %v1833, 7
      %v1835 = vsub.s32 2, %v1834
      %v1836 = vrot.slane %v1815, %v1835
      %v1837 = vlaneseq
      %v1838 = vshrl.u32 %v1837, 7
      %v1839 = vsub.s32 3, %v1838
      %v1840 = vrot.slane %v1815, %v1839
      %v1841 = vlaneseq
      %v1842 = vshrl.u32 %v1841, 7
      %v1843 = vsub.s32 4, %v1842
      %v1844 = vrot.slane %v1815, %v1843
      %v1845 = vlaneseq
      %v1846 = vshrl.u32 %v1845, 7
      %v1847 = vsub.s32 5, %v1846
      %v1848 = vrot.slane %v1815, %v1847
      %v1849 = vlaneseq
      %v1850 = vshrl.u32 %v1849, 7
      %v1851 = vsub.s32 6, %v1850
      %v1852 = vrot.slane %v1815, %v1851
      %v1853 = vlaneseq
      %v1854 = vshrl.u32 %v1853, 7
      %v1855 = vsub.s32 7, %v1854
      %v1856 = vrot.slane %v1815, %v1855
      %v1857 = vlaneseq
      %v1858 = vshrl.u32 %v1857, 7
      %v1859 = vsub.s32 0, %v1858
      %v1860 = vrot.slane %v1816, %v1859
      %v1861 = vlaneseq
      %v1862 = vshrl.u32 %v1861, 7
      %v1863 = vsub.s32 1, %v1862
      %v1864 = vrot.slane %v1816, %v1863
      %v1865 = vlaneseq
      %v1866 = vshrl.u32 %v1865, 7
      %v1867 = vsub.s32 2, %v1866
      %v1868 = vrot.slane %v1816, %v1867
      %v1869 = vlaneseq
      %v1870 = vshrl.u32 %v1869, 7
      %v1871 = vsub.s32 3, %v1870
      %v1872 = vrot.slane %v1816, %v1871
      %v1873 = vlaneseq
      %v1874 = vshrl.u32 %v1873, 7
      %v1875 = vsub.s32 4, %v1874
      %v1876 = vrot.slane %v1816, %v1875
      %v1877 = vlaneseq
      %v1878 = vshrl.u32 %v1877, 7
      %v1879 = vsub.s32 5, %v1878
      %v1880 = vrot.slane %v1816, %v1879
      %v1881 = vlaneseq
      %v1882 = vshrl.u32 %v1881, 7
      %v1883 = vsub.s32 6, %v1882
      %v1884 = vrot.slane %v1816, %v1883
      %v1885 = vlaneseq
      %v1886 = vshrl.u32 %v1885, 7
      %v1887 = vsub.s32 7, %v1886
      %v1888 = vrot.slane %v1816, %v1887
      %v1889 = vlaneseq
      %v1890 = vshrl.u32 %v1889, 7
      %v1891 = vsub.s32 0, %v1890
      %v1892 = vrot.slane %v1817, %v1891
      %v1893 = vlaneseq
      %v1894 = vshrl.u32 %v1893, 7
      %v1895 = vsub.s32 1, %v1894
      %v1896 = vrot.slane %v1817, %v1895
      %v1897 = vlaneseq
      %v1898 = vshrl.u32 %v1897, 7
      %v1899 = vsub.s32 2, %v1898
      %v1900 = vrot.slane %v1817, %v1899
      %v1901 = vlaneseq
      %v1902 = vshrl.u32 %v1901, 7
      %v1903 = vsub.s32 3, %v1902
      %v1904 = vrot.slane %v1817, %v1903
      %v1905 = vlaneseq
      %v1906 = vshrl.u32 %v1905, 7
      %v1907 = vsub.s32 4, %v1906
      %v1908 = vrot.slane %v1817, %v1907
      %v1909 = vlaneseq
      %v1910 = vshrl.u32 %v1909, 7
      %v1911 = vsub.s32 5, %v1910
      %v1912 = vrot.slane %v1817, %v1911
      %v1913 = vlaneseq
      %v1914 = vshrl.u32 %v1913, 7
      %v1915 = vsub.s32 6, %v1914
      %v1916 = vrot.slane %v1817, %v1915
      %v1917 = vlaneseq
      %v1918 = vshrl.u32 %v1917, 7
      %v1919 = vsub.s32 7, %v1918
      %v1920 = vrot.slane %v1817, %v1919
      %v1921 = vlaneseq
      %v1922 = vshrl.u32 %v1921, 7
      %v1923 = vsub.s32 0, %v1922
      %v1924 = vrot.slane %v1818, %v1923
      %v1925 = vlaneseq
      %v1926 = vshrl.u32 %v1925, 7
      %v1927 = vsub.s32 1, %v1926
      %v1928 = vrot.slane %v1818, %v1927
      %v1929 = vlaneseq
      %v1930 = vshrl.u32 %v1929, 7
      %v1931 = vsub.s32 2, %v1930
      %v1932 = vrot.slane %v1818, %v1931
      %v1933 = vlaneseq
      %v1934 = vshrl.u32 %v1933, 7
      %v1935 = vsub.s32 3, %v1934
      %v1936 = vrot.slane %v1818, %v1935
      %v1937 = vlaneseq
      %v1938 = vshrl.u32 %v1937, 7
      %v1939 = vsub.s32 4, %v1938
      %v1940 = vrot.slane %v1818, %v1939
      %v1941 = vlaneseq
      %v1942 = vshrl.u32 %v1941, 7
      %v1943 = vsub.s32 5, %v1942
      %v1944 = vrot.slane %v1818, %v1943
      %v1945 = vlaneseq
      %v1946 = vshrl.u32 %v1945, 7
      %v1947 = vsub.s32 6, %v1946
      %v1948 = vrot.slane %v1818, %v1947
      %v1949 = vlaneseq
      %v1950 = vshrl.u32 %v1949, 7
      %v1951 = vsub.s32 7, %v1950
      %v1952 = vrot.slane %v1818, %v1951
      %v1953 = vlaneseq
      %v1954 = vshrl.u32 %v1953, 7
      %v1955 = vsub.s32 0, %v1954
      %v1956 = vrot.slane %v1819, %v1955
      %v1957 = vlaneseq
      %v1958 = vshrl.u32 %v1957, 7
      %v1959 = vsub.s32 1, %v1958
      %v1960 = vrot.slane %v1819, %v1959
      %v1995 = vmul.f32 %v1472, %v1828
      %v1996 = vmul.f32 %v1473, %v1832
      %v1997 = vmul.f32 %v1474, %v1836
      %v1998 = vmul.f32 %v1475, %v1840
      %v1999 = vmul.f32 %v1476, %v1844
      %v2000 = vmul.f32 %v1477, %v1848
      %v2001 = vmul.f32 %v1478, %v1852
      %v2002 = vmul.f32 %v1479, %v1856
      %v2003 = vmul.f32 %v1480, %v1860
      %v2004 = vmul.f32 %v1481, %v1864
      %v2005 = vmul.f32 %v1482, %v1868
      %v2006 = vmul.f32 %v1483, %v1872
      %v2007 = vmul.f32 %v1484, %v1876
      %v2008 = vmul.f32 %v1485, %v1880
      %v2009 = vmul.f32 %v1486, %v1884
      %v2010 = vmul.f32 %v1487, %v1888
      %v2011 = vmul.f32 %v1488, %v1892
      %v2012 = vmul.f32 %v1489, %v1896
      %v2013 = vmul.f32 %v1490, %v1900
      %v2014 = vmul.f32 %v1491, %v1904
      %v2015 = vmul.f32 %v1492, %v1908
      %v2016 = vmul.f32 %v1493, %v1912
      %v2017 = vmul.f32 %v1494, %v1916
      %v2018 = vmul.f32 %v1495, %v1920
      %v2019 = vmul.f32 %v1496, %v1924
      %v2020 = vmul.f32 %v1497, %v1928
      %v2021 = vmul.f32 %v1498, %v1932
      %v2022 = vmul.f32 %v1499, %v1936
      %v2023 = vmul.f32 %v1500, %v1940
      %v2024 = vmul.f32 %v1501, %v1944
      %v2025 = vmul.f32 %v1502, %v1948
      %v2026 = vmul.f32 %v1503, %v1952
      %v2027 = vmul.f32 %v1504, %v1956
      %v2028 = vmul.f32 %v1505, %v1960
      %v2030 = vlaneseq
      %v2031 = vshrl.u32 %v2030, 7
      %v2032 = vsub.s32 0, %v2031
      %v2033 = vrot.slane %v1056, %v2032
      %v2034 = vcombine.high %v2033, %v2033
      %v2036 = vunpack.c.l.s4 1966171168
      %v2037 = vunpack.c.0.s8 %v2036
      %v2038 = vlaneseq
      %v2039 = vshrl.u32 %v2038, 7
      %v2040 = vsub.s32 %v2037, %v2039
      %v2041 = vrot.slane %v2033, %v2040
      %v2043 = vunpack.c.l.s4 1966171168
      %v2044 = vunpack.c.0.s8 %v2043
      %v2045 = vlaneseq
      %v2046 = vshrl.u32 %v2045, 7
      %v2047 = vsub.s32 %v2044, %v2046
      %v2048 = vrot.slane %v2034, %v2047
      %v2049 = vcombine.high %v2041, %v2041
      %v2050 = vcombine.high %v2048, %v2048
      %v2052 = vunpack.c.l.s4 1966171168
      %v2053 = vunpack.c.0.s8 %v2052
      %v2054 = vlaneseq
      %v2055 = vshrl.u32 %v2054, 7
      %v2056 = vsub.s32 %v2053, %v2055
      %v2057 = vrot.slane %v2041, %v2056
      %v2059 = vunpack.c.l.s4 1966171168
      %v2060 = vunpack.c.0.s8 %v2059
      %v2061 = vlaneseq
      %v2062 = vshrl.u32 %v2061, 7
      %v2063 = vsub.s32 %v2060, %v2062
      %v2064 = vrot.slane %v2048, %v2063
      %v2066 = vunpack.c.l.s4 1966171168
      %v2067 = vunpack.c.0.s8 %v2066
      %v2068 = vlaneseq
      %v2069 = vshrl.u32 %v2068, 7
      %v2070 = vsub.s32 %v2067, %v2069
      %v2071 = vrot.slane %v2049, %v2070
      %v2073 = vunpack.c.l.s4 1966171168
      %v2074 = vunpack.c.0.s8 %v2073
      %v2075 = vlaneseq
      %v2076 = vshrl.u32 %v2075, 7
      %v2077 = vsub.s32 %v2074, %v2076
      %v2078 = vrot.slane %v2050, %v2077
      %v2079 = vcombine.high %v2057, %v2057
      %v2080 = vcombine.high %v2064, %v2064
      %v2081 = vcombine.high %v2071, %v2071
      %v2082 = vcombine.high %v2078, %v2078
      %v2091 = vmul.f32 %v1995, %v2057
      %v2092 = vmul.f32 %v1996, %v2071
      %v2093 = vmul.f32 %v1997, %v2079
      %v2094 = vmul.f32 %v1998, %v2081
      %v2095 = vmul.f32 %v1999, %v2064
      %v2096 = vmul.f32 %v2000, %v2078
      %v2097 = vmul.f32 %v2001, %v2080
      %v2098 = vmul.f32 %v2002, %v2082
      %v2099 = vmul.f32 %v2003, %v2057
      %v2100 = vmul.f32 %v2004, %v2071
      %v2101 = vmul.f32 %v2005, %v2079
      %v2102 = vmul.f32 %v2006, %v2081
      %v2103 = vmul.f32 %v2007, %v2064
      %v2104 = vmul.f32 %v2008, %v2078
      %v2105 = vmul.f32 %v2009, %v2080
      %v2106 = vmul.f32 %v2010, %v2082
      %v2107 = vmul.f32 %v2011, %v2057
      %v2108 = vmul.f32 %v2012, %v2071
      %v2109 = vmul.f32 %v2013, %v2079
      %v2110 = vmul.f32 %v2014, %v2081
      %v2111 = vmul.f32 %v2015, %v2064
      %v2112 = vmul.f32 %v2016, %v2078
      %v2113 = vmul.f32 %v2017, %v2080
      %v2114 = vmul.f32 %v2018, %v2082
      %v2115 = vmul.f32 %v2019, %v2057
      %v2116 = vmul.f32 %v2020, %v2071
      %v2117 = vmul.f32 %v2021, %v2079
      %v2118 = vmul.f32 %v2022, %v2081
      %v2119 = vmul.f32 %v2023, %v2064
      %v2120 = vmul.f32 %v2024, %v2078
      %v2121 = vmul.f32 %v2025, %v2080
      %v2122 = vmul.f32 %v2026, %v2082
      %v2123 = vmul.f32 %v2027, %v2057
      %v2124 = vmul.f32 %v2028, %v2071
      %v2126 = vlaneseq
      %v2127 = vshrl.u32 %v2126, 7
      %v2128 = vsub.s32 0, %v2127
      %v2129 = vrot.slane %v1057, %v2128
      %v2130 = vcombine.high %v2129, %v2129
      %v2132 = vunpack.c.l.s4 1966171168
      %v2133 = vunpack.c.0.s8 %v2132
      %v2134 = vlaneseq
      %v2135 = vshrl.u32 %v2134, 7
      %v2136 = vsub.s32 %v2133, %v2135
      %v2137 = vrot.slane %v2129, %v2136
      %v2139 = vunpack.c.l.s4 1966171168
      %v2140 = vunpack.c.0.s8 %v2139
      %v2141 = vlaneseq
      %v2142 = vshrl.u32 %v2141, 7
      %v2143 = vsub.s32 %v2140, %v2142
      %v2144 = vrot.slane %v2130, %v2143
      %v2145 = vcombine.high %v2137, %v2137
      %v2146 = vcombine.high %v2144, %v2144
      %v2148 = vunpack.c.l.s4 1966171168
      %v2149 = vunpack.c.0.s8 %v2148
      %v2150 = vlaneseq
      %v2151 = vshrl.u32 %v2150, 7
      %v2152 = vsub.s32 %v2149, %v2151
      %v2153 = vrot.slane %v2137, %v2152
      %v2155 = vunpack.c.l.s4 1966171168
      %v2156 = vunpack.c.0.s8 %v2155
      %v2157 = vlaneseq
      %v2158 = vshrl.u32 %v2157, 7
      %v2159 = vsub.s32 %v2156, %v2158
      %v2160 = vrot.slane %v2144, %v2159
      %v2162 = vunpack.c.l.s4 1966171168
      %v2163 = vunpack.c.0.s8 %v2162
      %v2164 = vlaneseq
      %v2165 = vshrl.u32 %v2164, 7
      %v2166 = vsub.s32 %v2163, %v2165
      %v2167 = vrot.slane %v2145, %v2166
      %v2169 = vunpack.c.l.s4 1966171168
      %v2170 = vunpack.c.0.s8 %v2169
      %v2171 = vlaneseq
      %v2172 = vshrl.u32 %v2171, 7
      %v2173 = vsub.s32 %v2170, %v2172
      %v2174 = vrot.slane %v2146, %v2173
      %v2175 = vcombine.high %v2153, %v2153
      %v2176 = vcombine.high %v2160, %v2160
      %v2177 = vcombine.high %v2167, %v2167
      %v2178 = vcombine.high %v2174, %v2174
      %v2187 = vadd.f32 %v2091, %v2153
      %v2188 = vadd.f32 %v2092, %v2167
      %v2189 = vadd.f32 %v2093, %v2175
      %v2190 = vadd.f32 %v2094, %v2177
      %v2191 = vadd.f32 %v2095, %v2160
      %v2192 = vadd.f32 %v2096, %v2174
      %v2193 = vadd.f32 %v2097, %v2176
      %v2194 = vadd.f32 %v2098, %v2178
      %v2195 = vadd.f32 %v2099, %v2153
      %v2196 = vadd.f32 %v2100, %v2167
      %v2197 = vadd.f32 %v2101, %v2175
      %v2198 = vadd.f32 %v2102, %v2177
      %v2199 = vadd.f32 %v2103, %v2160
      %v2200 = vadd.f32 %v2104, %v2174
      %v2201 = vadd.f32 %v2105, %v2176
      %v2202 = vadd.f32 %v2106, %v2178
      %v2203 = vadd.f32 %v2107, %v2153
      %v2204 = vadd.f32 %v2108, %v2167
      %v2205 = vadd.f32 %v2109, %v2175
      %v2206 = vadd.f32 %v2110, %v2177
      %v2207 = vadd.f32 %v2111, %v2160
      %v2208 = vadd.f32 %v2112, %v2174
      %v2209 = vadd.f32 %v2113, %v2176
      %v2210 = vadd.f32 %v2114, %v2178
      %v2211 = vadd.f32 %v2115, %v2153
      %v2212 = vadd.f32 %v2116, %v2167
      %v2213 = vadd.f32 %v2117, %v2175
      %v2214 = vadd.f32 %v2118, %v2177
      %v2215 = vadd.f32 %v2119, %v2160
      %v2216 = vadd.f32 %v2120, %v2174
      %v2217 = vadd.f32 %v2121, %v2176
      %v2218 = vadd.f32 %v2122, %v2178
      %v2219 = vadd.f32 %v2123, %v2153
      %v2220 = vadd.f32 %v2124, %v2167
      %v2221 = vld [vmem:[%s606] sm:$0xf]
      %v2256 = vcombine.low %v2187, %v2188
      %v2257 = vcombine.low %v2189, %v2190
      %v2258 = vcombine.low %v2191, %v2192
      %v2259 = vcombine.low %v2193, %v2194
      %v2261 = vunpack.c.l.s4 1966171168
      %v2262 = vunpack.c.0.s8 %v2261
      %v2263 = vlaneseq
      %v2264 = vshrl.u32 %v2263, 7
      %v2265 = vsub.s32 %v2262, %v2264
      %v2266 = vrot.slane %v2256, %v2265
      %v2268 = vunpack.c.l.s4 1966171168
      %v2269 = vunpack.c.0.s8 %v2268
      %v2270 = vlaneseq
      %v2271 = vshrl.u32 %v2270, 7
      %v2272 = vsub.s32 %v2269, %v2271
      %v2273 = vrot.slane %v2257, %v2272
      %v2275 = vunpack.c.l.s4 1966171168
      %v2276 = vunpack.c.0.s8 %v2275
      %v2277 = vlaneseq
      %v2278 = vshrl.u32 %v2277, 7
      %v2279 = vsub.s32 %v2276, %v2278
      %v2280 = vrot.slane %v2258, %v2279
      %v2282 = vunpack.c.l.s4 1966171168
      %v2283 = vunpack.c.0.s8 %v2282
      %v2284 = vlaneseq
      %v2285 = vshrl.u32 %v2284, 7
      %v2286 = vsub.s32 %v2283, %v2285
      %v2287 = vrot.slane %v2259, %v2286
      %v2288 = vcombine.low %v2266, %v2273
      %v2289 = vcombine.low %v2280, %v2287
      %v2291 = vunpack.c.l.s4 1966171168
      %v2292 = vunpack.c.0.s8 %v2291
      %v2293 = vlaneseq
      %v2294 = vshrl.u32 %v2293, 7
      %v2295 = vsub.s32 %v2292, %v2294
      %v2296 = vrot.slane %v2288, %v2295
      %v2298 = vunpack.c.l.s4 1966171168
      %v2299 = vunpack.c.0.s8 %v2298
      %v2300 = vlaneseq
      %v2301 = vshrl.u32 %v2300, 7
      %v2302 = vsub.s32 %v2299, %v2301
      %v2303 = vrot.slane %v2289, %v2302
      %v2304 = vcombine.low %v2296, %v2303
      %v2305 = vcombine.low %v2195, %v2196
      %v2306 = vcombine.low %v2197, %v2198
      %v2307 = vcombine.low %v2199, %v2200
      %v2308 = vcombine.low %v2201, %v2202
      %v2310 = vunpack.c.l.s4 1966171168
      %v2311 = vunpack.c.0.s8 %v2310
      %v2312 = vlaneseq
      %v2313 = vshrl.u32 %v2312, 7
      %v2314 = vsub.s32 %v2311, %v2313
      %v2315 = vrot.slane %v2305, %v2314
      %v2317 = vunpack.c.l.s4 1966171168
      %v2318 = vunpack.c.0.s8 %v2317
      %v2319 = vlaneseq
      %v2320 = vshrl.u32 %v2319, 7
      %v2321 = vsub.s32 %v2318, %v2320
      %v2322 = vrot.slane %v2306, %v2321
      %v2324 = vunpack.c.l.s4 1966171168
      %v2325 = vunpack.c.0.s8 %v2324
      %v2326 = vlaneseq
      %v2327 = vshrl.u32 %v2326, 7
      %v2328 = vsub.s32 %v2325, %v2327
      %v2329 = vrot.slane %v2307, %v2328
      %v2331 = vunpack.c.l.s4 1966171168
      %v2332 = vunpack.c.0.s8 %v2331
      %v2333 = vlaneseq
      %v2334 = vshrl.u32 %v2333, 7
      %v2335 = vsub.s32 %v2332, %v2334
      %v2336 = vrot.slane %v2308, %v2335
      %v2337 = vcombine.low %v2315, %v2322
      %v2338 = vcombine.low %v2329, %v2336
      %v2340 = vunpack.c.l.s4 1966171168
      %v2341 = vunpack.c.0.s8 %v2340
      %v2342 = vlaneseq
      %v2343 = vshrl.u32 %v2342, 7
      %v2344 = vsub.s32 %v2341, %v2343
      %v2345 = vrot.slane %v2337, %v2344
      %v2347 = vunpack.c.l.s4 1966171168
      %v2348 = vunpack.c.0.s8 %v2347
      %v2349 = vlaneseq
      %v2350 = vshrl.u32 %v2349, 7
      %v2351 = vsub.s32 %v2348, %v2350
      %v2352 = vrot.slane %v2338, %v2351
      %v2353 = vcombine.low %v2345, %v2352
      %v2354 = vcombine.low %v2203, %v2204
      %v2355 = vcombine.low %v2205, %v2206
      %v2356 = vcombine.low %v2207, %v2208
      %v2357 = vcombine.low %v2209, %v2210
      %v2359 = vunpack.c.l.s4 1966171168
      %v2360 = vunpack.c.0.s8 %v2359
      %v2361 = vlaneseq
      %v2362 = vshrl.u32 %v2361, 7
      %v2363 = vsub.s32 %v2360, %v2362
      %v2364 = vrot.slane %v2354, %v2363
      %v2366 = vunpack.c.l.s4 1966171168
      %v2367 = vunpack.c.0.s8 %v2366
      %v2368 = vlaneseq
      %v2369 = vshrl.u32 %v2368, 7
      %v2370 = vsub.s32 %v2367, %v2369
      %v2371 = vrot.slane %v2355, %v2370
      %v2373 = vunpack.c.l.s4 1966171168
      %v2374 = vunpack.c.0.s8 %v2373
      %v2375 = vlaneseq
      %v2376 = vshrl.u32 %v2375, 7
      %v2377 = vsub.s32 %v2374, %v2376
      %v2378 = vrot.slane %v2356, %v2377
      %v2380 = vunpack.c.l.s4 1966171168
      %v2381 = vunpack.c.0.s8 %v2380
      %v2382 = vlaneseq
      %v2383 = vshrl.u32 %v2382, 7
      %v2384 = vsub.s32 %v2381, %v2383
      %v2385 = vrot.slane %v2357, %v2384
      %v2386 = vcombine.low %v2364, %v2371
      %v2387 = vcombine.low %v2378, %v2385
      %v2389 = vunpack.c.l.s4 1966171168
      %v2390 = vunpack.c.0.s8 %v2389
      %v2391 = vlaneseq
      %v2392 = vshrl.u32 %v2391, 7
      %v2393 = vsub.s32 %v2390, %v2392
      %v2394 = vrot.slane %v2386, %v2393
      %v2396 = vunpack.c.l.s4 1966171168
      %v2397 = vunpack.c.0.s8 %v2396
      %v2398 = vlaneseq
      %v2399 = vshrl.u32 %v2398, 7
      %v2400 = vsub.s32 %v2397, %v2399
      %v2401 = vrot.slane %v2387, %v2400
      %v2402 = vcombine.low %v2394, %v2401
      %v2403 = vcombine.low %v2211, %v2212
      %v2404 = vcombine.low %v2213, %v2214
      %v2405 = vcombine.low %v2215, %v2216
      %v2406 = vcombine.low %v2217, %v2218
      %v2408 = vunpack.c.l.s4 1966171168
      %v2409 = vunpack.c.0.s8 %v2408
      %v2410 = vlaneseq
      %v2411 = vshrl.u32 %v2410, 7
      %v2412 = vsub.s32 %v2409, %v2411
      %v2413 = vrot.slane %v2403, %v2412
      %v2415 = vunpack.c.l.s4 1966171168
      %v2416 = vunpack.c.0.s8 %v2415
      %v2417 = vlaneseq
      %v2418 = vshrl.u32 %v2417, 7
      %v2419 = vsub.s32 %v2416, %v2418
      %v2420 = vrot.slane %v2404, %v2419
      %v2422 = vunpack.c.l.s4 1966171168
      %v2423 = vunpack.c.0.s8 %v2422
      %v2424 = vlaneseq
      %v2425 = vshrl.u32 %v2424, 7
      %v2426 = vsub.s32 %v2423, %v2425
      %v2427 = vrot.slane %v2405, %v2426
      %v2429 = vunpack.c.l.s4 1966171168
      %v2430 = vunpack.c.0.s8 %v2429
      %v2431 = vlaneseq
      %v2432 = vshrl.u32 %v2431, 7
      %v2433 = vsub.s32 %v2430, %v2432
      %v2434 = vrot.slane %v2406, %v2433
      %v2435 = vcombine.low %v2413, %v2420
      %v2436 = vcombine.low %v2427, %v2434
      %v2438 = vunpack.c.l.s4 1966171168
      %v2439 = vunpack.c.0.s8 %v2438
      %v2440 = vlaneseq
      %v2441 = vshrl.u32 %v2440, 7
      %v2442 = vsub.s32 %v2439, %v2441
      %v2443 = vrot.slane %v2435, %v2442
      %v2445 = vunpack.c.l.s4 1966171168
      %v2446 = vunpack.c.0.s8 %v2445
      %v2447 = vlaneseq
      %v2448 = vshrl.u32 %v2447, 7
      %v2449 = vsub.s32 %v2446, %v2448
      %v2450 = vrot.slane %v2436, %v2449
      %v2451 = vcombine.low %v2443, %v2450
      %v2452 = vcombine.low %v2219, %v2220
      %v2454 = vunpack.c.l.s4 1966171168
      %v2455 = vunpack.c.0.s8 %v2454
      %v2456 = vlaneseq
      %v2457 = vshrl.u32 %v2456, 7
      %v2458 = vsub.s32 %v2455, %v2457
      %v2459 = vrot.slane %v2452, %v2458
      %v2461 = vunpack.c.l.s4 1966171168
      %v2462 = vunpack.c.0.s8 %v2461
      %v2463 = vlaneseq
      %v2464 = vshrl.u32 %v2463, 7
      %v2465 = vsub.s32 %v2462, %v2464
      %v2466 = vrot.slane %v2459, %v2465
      %v2472 = vpack.c.bf16 %v2353, %v2304
      %v2473 = vpack.c.bf16 %v2451, %v2402
      %v2474 = vpack.c.bf16 %v2466, %v2466
      %v2475 = vld [vmem:[%s609] sm:$0x1]
      %v2477 = vlaneseq
      %v2478 = vshrl.u32 %v2477, 7
      %v2479 = vsub.s32 0, %v2478
      %v2480 = vrot.slane %v2475, %v2479
      %v2483 = vsel %vm1274, %v2472, 0
      %v2486 = vsel %vm1274, %v2473, 0
      %v2489 = vsel %vm1274, %v2474, 0
      %vm2491 = vcmask 1043456
      %v2493 = vsel %vm2491, %v2221, 0
      %2495 = vmatprep.subr.bf16.mxu0 0
      %2496 = vmatpush1.bf16.msra.mxu0 0
      %2497 = vmatprep.subr.bf16.mxu0 0
      %2498 = vmatpush1.bf16.msra.mxu0 0
      %2499 = vmatprep.subr.bf16.mxu0 0
      %2500 = vmatpush1.bf16.msra.mxu0 0
      %2501 = vmatprep.subr.bf16.mxu0 0
      %2502 = vmatpush1.bf16.msra.mxu0 0
      %2503 = vmatprep.subr.bf16.mxu0 0
      %2504 = vmatpush1.bf16.msra.mxu0 0
      %2505 = vmatprep.subr.bf16.mxu0 0
      %2506 = vmatpush1.bf16.msra.mxu0 0
      %2507 = vmatprep.subr.bf16.mxu0 0
      %2508 = vmatpush1.bf16.msra.mxu0 0
      %2509 = vmatprep.subr.bf16.mxu0 0
      %2510 = vmatpush1.bf16.msra.mxu0 %v2493
      %2511 = vmatprep.subr.bf16.mxu0 0
      %2512 = vmatpush2.bf16.msra.mxu0 0
      %2513 = vmatprep.subr.bf16.mxu0 0
      %2514 = vmatpush2.bf16.msra.mxu0 0
      %2515 = vmatprep.subr.bf16.mxu0 0
      %2516 = vmatpush2.bf16.msra.mxu0 0
      %2517 = vmatprep.subr.bf16.mxu0 0
      %2518 = vmatpush2.bf16.msra.mxu0 0
      %2519 = vmatprep.subr.bf16.mxu0 0
      %2520 = vmatpush2.bf16.msra.mxu0 0
      %2521 = vmatprep.subr.bf16.mxu0 0
      %2522 = vmatpush2.bf16.msra.mxu0 0
      %2523 = vmatprep.subr.bf16.mxu0 0
      %2524 = vmatpush2.bf16.msra.mxu0 0
      %2525 = vmatprep.subr.bf16.mxu0 0
      %2526 = vmatpush2.bf16.msra.mxu0 0
      %2527 = vmatprep.mubr.bf16.mxu0 0
      %2528 = vmatmul.mubr.bf16.gmra.mxu0 %v2483
      %v2529 = vpop.f32.mrf.mxu0
      %v2530 = vadd.f32 %v2480, %v2529
      %v2531 = vpop.f32.mrf.mxu0
      %v2532 = vpop.f32.mrf.mxu0
      %v2533 = vadd.f32 %v2480, %v2532
      %v2534 = vpop.f32.mrf.mxu0
      %2535 = vmatprep.mubr.bf16.mxu0 0
      %2536 = vmatmul.mubr.bf16.gmra.mxu0 %v2486
      %v2537 = vpop.f32.mrf.mxu0
      %v2538 = vadd.f32 %v2480, %v2537
      %v2539 = vpop.f32.mrf.mxu0
      %v2540 = vpop.f32.mrf.mxu0
      %v2541 = vadd.f32 %v2480, %v2540
      %v2542 = vpop.f32.mrf.mxu0
      %2543 = vmatprep.mubr.bf16.mxu0 0
      %2544 = vmatmul.mubr.bf16.gmra.mxu0 %v2489
      %v2545 = vpop.f32.mrf.mxu0
      %v2546 = vadd.f32 %v2480, %v2545
      %v2547 = vpop.f32.mrf.mxu0
      %v2548 = vpop.f32.mrf.mxu0
      %v2549 = vpop.f32.mrf.mxu0
      %2550 = vdwg.mxu0
      %v2556 = vcombine.high %v2530, %v2530
      %v2558 = vunpack.c.l.s4 1966171168
      %v2559 = vunpack.c.0.s8 %v2558
      %v2560 = vlaneseq
      %v2561 = vshrl.u32 %v2560, 7
      %v2562 = vsub.s32 %v2559, %v2561
      %v2563 = vrot.slane %v2530, %v2562
      %v2565 = vunpack.c.l.s4 1966171168
      %v2566 = vunpack.c.0.s8 %v2565
      %v2567 = vlaneseq
      %v2568 = vshrl.u32 %v2567, 7
      %v2569 = vsub.s32 %v2566, %v2568
      %v2570 = vrot.slane %v2556, %v2569
      %v2571 = vcombine.high %v2563, %v2563
      %v2572 = vcombine.high %v2570, %v2570
      %v2574 = vunpack.c.l.s4 1966171168
      %v2575 = vunpack.c.0.s8 %v2574
      %v2576 = vlaneseq
      %v2577 = vshrl.u32 %v2576, 7
      %v2578 = vsub.s32 %v2575, %v2577
      %v2579 = vrot.slane %v2563, %v2578
      %v2581 = vunpack.c.l.s4 1966171168
      %v2582 = vunpack.c.0.s8 %v2581
      %v2583 = vlaneseq
      %v2584 = vshrl.u32 %v2583, 7
      %v2585 = vsub.s32 %v2582, %v2584
      %v2586 = vrot.slane %v2570, %v2585
      %v2588 = vunpack.c.l.s4 1966171168
      %v2589 = vunpack.c.0.s8 %v2588
      %v2590 = vlaneseq
      %v2591 = vshrl.u32 %v2590, 7
      %v2592 = vsub.s32 %v2589, %v2591
      %v2593 = vrot.slane %v2571, %v2592
      %v2595 = vunpack.c.l.s4 1966171168
      %v2596 = vunpack.c.0.s8 %v2595
      %v2597 = vlaneseq
      %v2598 = vshrl.u32 %v2597, 7
      %v2599 = vsub.s32 %v2596, %v2598
      %v2600 = vrot.slane %v2572, %v2599
      %v2601 = vcombine.high %v2579, %v2579
      %v2602 = vcombine.high %v2586, %v2586
      %v2603 = vcombine.high %v2593, %v2593
      %v2604 = vcombine.high %v2600, %v2600
      %v2605 = vcombine.high %v2533, %v2533
      %v2607 = vunpack.c.l.s4 1966171168
      %v2608 = vunpack.c.0.s8 %v2607
      %v2609 = vlaneseq
      %v2610 = vshrl.u32 %v2609, 7
      %v2611 = vsub.s32 %v2608, %v2610
      %v2612 = vrot.slane %v2533, %v2611
      %v2614 = vunpack.c.l.s4 1966171168
      %v2615 = vunpack.c.0.s8 %v2614
      %v2616 = vlaneseq
      %v2617 = vshrl.u32 %v2616, 7
      %v2618 = vsub.s32 %v2615, %v2617
      %v2619 = vrot.slane %v2605, %v2618
      %v2620 = vcombine.high %v2612, %v2612
      %v2621 = vcombine.high %v2619, %v2619
      %v2623 = vunpack.c.l.s4 1966171168
      %v2624 = vunpack.c.0.s8 %v2623
      %v2625 = vlaneseq
      %v2626 = vshrl.u32 %v2625, 7
      %v2627 = vsub.s32 %v2624, %v2626
      %v2628 = vrot.slane %v2612, %v2627
      %v2630 = vunpack.c.l.s4 1966171168
      %v2631 = vunpack.c.0.s8 %v2630
      %v2632 = vlaneseq
      %v2633 = vshrl.u32 %v2632, 7
      %v2634 = vsub.s32 %v2631, %v2633
      %v2635 = vrot.slane %v2619, %v2634
      %v2637 = vunpack.c.l.s4 1966171168
      %v2638 = vunpack.c.0.s8 %v2637
      %v2639 = vlaneseq
      %v2640 = vshrl.u32 %v2639, 7
      %v2641 = vsub.s32 %v2638, %v2640
      %v2642 = vrot.slane %v2620, %v2641
      %v2644 = vunpack.c.l.s4 1966171168
      %v2645 = vunpack.c.0.s8 %v2644
      %v2646 = vlaneseq
      %v2647 = vshrl.u32 %v2646, 7
      %v2648 = vsub.s32 %v2645, %v2647
      %v2649 = vrot.slane %v2621, %v2648
      %v2650 = vcombine.high %v2628, %v2628
      %v2651 = vcombine.high %v2635, %v2635
      %v2652 = vcombine.high %v2642, %v2642
      %v2653 = vcombine.high %v2649, %v2649
      %v2654 = vcombine.high %v2538, %v2538
      %v2656 = vunpack.c.l.s4 1966171168
      %v2657 = vunpack.c.0.s8 %v2656
      %v2658 = vlaneseq
      %v2659 = vshrl.u32 %v2658, 7
      %v2660 = vsub.s32 %v2657, %v2659
      %v2661 = vrot.slane %v2538, %v2660
      %v2663 = vunpack.c.l.s4 1966171168
      %v2664 = vunpack.c.0.s8 %v2663
      %v2665 = vlaneseq
      %v2666 = vshrl.u32 %v2665, 7
      %v2667 = vsub.s32 %v2664, %v2666
      %v2668 = vrot.slane %v2654, %v2667
      %v2669 = vcombine.high %v2661, %v2661
      %v2670 = vcombine.high %v2668, %v2668
      %v2672 = vunpack.c.l.s4 1966171168
      %v2673 = vunpack.c.0.s8 %v2672
      %v2674 = vlaneseq
      %v2675 = vshrl.u32 %v2674, 7
      %v2676 = vsub.s32 %v2673, %v2675
      %v2677 = vrot.slane %v2661, %v2676
      %v2679 = vunpack.c.l.s4 1966171168
      %v2680 = vunpack.c.0.s8 %v2679
      %v2681 = vlaneseq
      %v2682 = vshrl.u32 %v2681, 7
      %v2683 = vsub.s32 %v2680, %v2682
      %v2684 = vrot.slane %v2668, %v2683
      %v2686 = vunpack.c.l.s4 1966171168
      %v2687 = vunpack.c.0.s8 %v2686
      %v2688 = vlaneseq
      %v2689 = vshrl.u32 %v2688, 7
      %v2690 = vsub.s32 %v2687, %v2689
      %v2691 = vrot.slane %v2669, %v2690
      %v2693 = vunpack.c.l.s4 1966171168
      %v2694 = vunpack.c.0.s8 %v2693
      %v2695 = vlaneseq
      %v2696 = vshrl.u32 %v2695, 7
      %v2697 = vsub.s32 %v2694, %v2696
      %v2698 = vrot.slane %v2670, %v2697
      %v2699 = vcombine.high %v2677, %v2677
      %v2700 = vcombine.high %v2684, %v2684
      %v2701 = vcombine.high %v2691, %v2691
      %v2702 = vcombine.high %v2698, %v2698
      %v2703 = vcombine.high %v2541, %v2541
      %v2705 = vunpack.c.l.s4 1966171168
      %v2706 = vunpack.c.0.s8 %v2705
      %v2707 = vlaneseq
      %v2708 = vshrl.u32 %v2707, 7
      %v2709 = vsub.s32 %v2706, %v2708
      %v2710 = vrot.slane %v2541, %v2709
      %v2712 = vunpack.c.l.s4 1966171168
      %v2713 = vunpack.c.0.s8 %v2712
      %v2714 = vlaneseq
      %v2715 = vshrl.u32 %v2714, 7
      %v2716 = vsub.s32 %v2713, %v2715
      %v2717 = vrot.slane %v2703, %v2716
      %v2718 = vcombine.high %v2710, %v2710
      %v2719 = vcombine.high %v2717, %v2717
      %v2721 = vunpack.c.l.s4 1966171168
      %v2722 = vunpack.c.0.s8 %v2721
      %v2723 = vlaneseq
      %v2724 = vshrl.u32 %v2723, 7
      %v2725 = vsub.s32 %v2722, %v2724
      %v2726 = vrot.slane %v2710, %v2725
      %v2728 = vunpack.c.l.s4 1966171168
      %v2729 = vunpack.c.0.s8 %v2728
      %v2730 = vlaneseq
      %v2731 = vshrl.u32 %v2730, 7
      %v2732 = vsub.s32 %v2729, %v2731
      %v2733 = vrot.slane %v2717, %v2732
      %v2735 = vunpack.c.l.s4 1966171168
      %v2736 = vunpack.c.0.s8 %v2735
      %v2737 = vlaneseq
      %v2738 = vshrl.u32 %v2737, 7
      %v2739 = vsub.s32 %v2736, %v2738
      %v2740 = vrot.slane %v2718, %v2739
      %v2742 = vunpack.c.l.s4 1966171168
      %v2743 = vunpack.c.0.s8 %v2742
      %v2744 = vlaneseq
      %v2745 = vshrl.u32 %v2744, 7
      %v2746 = vsub.s32 %v2743, %v2745
      %v2747 = vrot.slane %v2719, %v2746
      %v2748 = vcombine.high %v2726, %v2726
      %v2749 = vcombine.high %v2733, %v2733
      %v2750 = vcombine.high %v2740, %v2740
      %v2751 = vcombine.high %v2747, %v2747
      %v2753 = vunpack.c.l.s4 1966171168
      %v2754 = vunpack.c.0.s8 %v2753
      %v2755 = vlaneseq
      %v2756 = vshrl.u32 %v2755, 7
      %v2757 = vsub.s32 %v2754, %v2756
      %v2758 = vrot.slane %v2546, %v2757
      %v2759 = vcombine.high %v2758, %v2758
      %v2761 = vunpack.c.l.s4 1966171168
      %v2762 = vunpack.c.0.s8 %v2761
      %v2763 = vlaneseq
      %v2764 = vshrl.u32 %v2763, 7
      %v2765 = vsub.s32 %v2762, %v2764
      %v2766 = vrot.slane %v2758, %v2765
      %v2768 = vunpack.c.l.s4 1966171168
      %v2769 = vunpack.c.0.s8 %v2768
      %v2770 = vlaneseq
      %v2771 = vshrl.u32 %v2770, 7
      %v2772 = vsub.s32 %v2769, %v2771
      %v2773 = vrot.slane %v2759, %v2772
      %v2774 = vcombine.low %v2579, %v2593
      %v2775 = vcombine.low %v2601, %v2603
      %v2776 = vcombine.low %v2586, %v2600
      %v2777 = vcombine.low %v2602, %v2604
      %v2779 = vunpack.c.l.s4 1966171168
      %v2780 = vunpack.c.0.s8 %v2779
      %v2781 = vlaneseq
      %v2782 = vshrl.u32 %v2781, 7
      %v2783 = vsub.s32 %v2780, %v2782
      %v2784 = vrot.slane %v2774, %v2783
      %v2786 = vunpack.c.l.s4 1966171168
      %v2787 = vunpack.c.0.s8 %v2786
      %v2788 = vlaneseq
      %v2789 = vshrl.u32 %v2788, 7
      %v2790 = vsub.s32 %v2787, %v2789
      %v2791 = vrot.slane %v2775, %v2790
      %v2793 = vunpack.c.l.s4 1966171168
      %v2794 = vunpack.c.0.s8 %v2793
      %v2795 = vlaneseq
      %v2796 = vshrl.u32 %v2795, 7
      %v2797 = vsub.s32 %v2794, %v2796
      %v2798 = vrot.slane %v2776, %v2797
      %v2800 = vunpack.c.l.s4 1966171168
      %v2801 = vunpack.c.0.s8 %v2800
      %v2802 = vlaneseq
      %v2803 = vshrl.u32 %v2802, 7
      %v2804 = vsub.s32 %v2801, %v2803
      %v2805 = vrot.slane %v2777, %v2804
      %v2806 = vcombine.low %v2784, %v2791
      %v2807 = vcombine.low %v2798, %v2805
      %v2809 = vunpack.c.l.s4 1966171168
      %v2810 = vunpack.c.0.s8 %v2809
      %v2811 = vlaneseq
      %v2812 = vshrl.u32 %v2811, 7
      %v2813 = vsub.s32 %v2810, %v2812
      %v2814 = vrot.slane %v2806, %v2813
      %v2816 = vunpack.c.l.s4 1966171168
      %v2817 = vunpack.c.0.s8 %v2816
      %v2818 = vlaneseq
      %v2819 = vshrl.u32 %v2818, 7
      %v2820 = vsub.s32 %v2817, %v2819
      %v2821 = vrot.slane %v2807, %v2820
      %v2822 = vcombine.low %v2814, %v2821
      %v2823 = vcombine.low %v2628, %v2642
      %v2824 = vcombine.low %v2650, %v2652
      %v2825 = vcombine.low %v2635, %v2649
      %v2826 = vcombine.low %v2651, %v2653
      %v2828 = vunpack.c.l.s4 1966171168
      %v2829 = vunpack.c.0.s8 %v2828
      %v2830 = vlaneseq
      %v2831 = vshrl.u32 %v2830, 7
      %v2832 = vsub.s32 %v2829, %v2831
      %v2833 = vrot.slane %v2823, %v2832
      %v2835 = vunpack.c.l.s4 1966171168
      %v2836 = vunpack.c.0.s8 %v2835
      %v2837 = vlaneseq
      %v2838 = vshrl.u32 %v2837, 7
      %v2839 = vsub.s32 %v2836, %v2838
      %v2840 = vrot.slane %v2824, %v2839
      %v2842 = vunpack.c.l.s4 1966171168
      %v2843 = vunpack.c.0.s8 %v2842
      %v2844 = vlaneseq
      %v2845 = vshrl.u32 %v2844, 7
      %v2846 = vsub.s32 %v2843, %v2845
      %v2847 = vrot.slane %v2825, %v2846
      %v2849 = vunpack.c.l.s4 1966171168
      %v2850 = vunpack.c.0.s8 %v2849
      %v2851 = vlaneseq
      %v2852 = vshrl.u32 %v2851, 7
      %v2853 = vsub.s32 %v2850, %v2852
      %v2854 = vrot.slane %v2826, %v2853
      %v2855 = vcombine.low %v2833, %v2840
      %v2856 = vcombine.low %v2847, %v2854
      %v2858 = vunpack.c.l.s4 1966171168
      %v2859 = vunpack.c.0.s8 %v2858
      %v2860 = vlaneseq
      %v2861 = vshrl.u32 %v2860, 7
      %v2862 = vsub.s32 %v2859, %v2861
      %v2863 = vrot.slane %v2855, %v2862
      %v2865 = vunpack.c.l.s4 1966171168
      %v2866 = vunpack.c.0.s8 %v2865
      %v2867 = vlaneseq
      %v2868 = vshrl.u32 %v2867, 7
      %v2869 = vsub.s32 %v2866, %v2868
      %v2870 = vrot.slane %v2856, %v2869
      %v2871 = vcombine.low %v2863, %v2870
      %v2873 = vunpack.c.l.s4 1966171168
      %v2874 = vunpack.c.0.s8 %v2873
      %v2875 = vlaneseq
      %v2876 = vshrl.u32 %v2875, 7
      %v2877 = vsub.s32 %v2874, %v2876
      %v2878 = vrot.slane %v2677, %v2877
      %v2880 = vunpack.c.l.s4 1966171168
      %v2881 = vunpack.c.0.s8 %v2880
      %v2882 = vlaneseq
      %v2883 = vshrl.u32 %v2882, 7
      %v2884 = vsub.s32 %v2881, %v2883
      %v2885 = vrot.slane %v2878, %v2884
      %v2886 = vcombine.low %v2691, %v2699
      %v2887 = vcombine.low %v2701, %v2684
      %v2888 = vcombine.low %v2698, %v2700
      %v2889 = vcombine.low %v2702, %v2726
      %v2891 = vunpack.c.l.s4 1966171168
      %v2892 = vunpack.c.0.s8 %v2891
      %v2893 = vlaneseq
      %v2894 = vshrl.u32 %v2893, 7
      %v2895 = vsub.s32 %v2892, %v2894
      %v2896 = vrot.slane %v2886, %v2895
      %v2898 = vunpack.c.l.s4 1966171168
      %v2899 = vunpack.c.0.s8 %v2898
      %v2900 = vlaneseq
      %v2901 = vshrl.u32 %v2900, 7
      %v2902 = vsub.s32 %v2899, %v2901
      %v2903 = vrot.slane %v2887, %v2902
      %v2905 = vunpack.c.l.s4 1966171168
      %v2906 = vunpack.c.0.s8 %v2905
      %v2907 = vlaneseq
      %v2908 = vshrl.u32 %v2907, 7
      %v2909 = vsub.s32 %v2906, %v2908
      %v2910 = vrot.slane %v2888, %v2909
      %v2912 = vunpack.c.l.s4 1966171168
      %v2913 = vunpack.c.0.s8 %v2912
      %v2914 = vlaneseq
      %v2915 = vshrl.u32 %v2914, 7
      %v2916 = vsub.s32 %v2913, %v2915
      %v2917 = vrot.slane %v2889, %v2916
      %v2918 = vcombine.low %v2896, %v2903
      %v2919 = vcombine.low %v2910, %v2917
      %v2921 = vunpack.c.l.s4 1966171168
      %v2922 = vunpack.c.0.s8 %v2921
      %v2923 = vlaneseq
      %v2924 = vshrl.u32 %v2923, 7
      %v2925 = vsub.s32 %v2922, %v2924
      %v2926 = vrot.slane %v2918, %v2925
      %v2928 = vunpack.c.l.s4 1966171168
      %v2929 = vunpack.c.0.s8 %v2928
      %v2930 = vlaneseq
      %v2931 = vshrl.u32 %v2930, 7
      %v2932 = vsub.s32 %v2929, %v2931
      %v2933 = vrot.slane %v2919, %v2932
      %v2934 = vcombine.low %v2926, %v2933
      %v2935 = vcombine.low %v2740, %v2748
      %v2936 = vcombine.low %v2750, %v2733
      %v2937 = vcombine.low %v2747, %v2749
      %v2938 = vcombine.low %v2751, %v2766
      %v2940 = vunpack.c.l.s4 1966171168
      %v2941 = vunpack.c.0.s8 %v2940
      %v2942 = vlaneseq
      %v2943 = vshrl.u32 %v2942, 7
      %v2944 = vsub.s32 %v2941, %v2943
      %v2945 = vrot.slane %v2935, %v2944
      %v2947 = vunpack.c.l.s4 1966171168
      %v2948 = vunpack.c.0.s8 %v2947
      %v2949 = vlaneseq
      %v2950 = vshrl.u32 %v2949, 7
      %v2951 = vsub.s32 %v2948, %v2950
      %v2952 = vrot.slane %v2936, %v2951
      %v2954 = vunpack.c.l.s4 1966171168
      %v2955 = vunpack.c.0.s8 %v2954
      %v2956 = vlaneseq
      %v2957 = vshrl.u32 %v2956, 7
      %v2958 = vsub.s32 %v2955, %v2957
      %v2959 = vrot.slane %v2937, %v2958
      %v2961 = vunpack.c.l.s4 1966171168
      %v2962 = vunpack.c.0.s8 %v2961
      %v2963 = vlaneseq
      %v2964 = vshrl.u32 %v2963, 7
      %v2965 = vsub.s32 %v2962, %v2964
      %v2966 = vrot.slane %v2938, %v2965
      %v2967 = vcombine.low %v2945, %v2952
      %v2968 = vcombine.low %v2959, %v2966
      %v2970 = vunpack.c.l.s4 1966171168
      %v2971 = vunpack.c.0.s8 %v2970
      %v2972 = vlaneseq
      %v2973 = vshrl.u32 %v2972, 7
      %v2974 = vsub.s32 %v2971, %v2973
      %v2975 = vrot.slane %v2967, %v2974
      %v2977 = vunpack.c.l.s4 1966171168
      %v2978 = vunpack.c.0.s8 %v2977
      %v2979 = vlaneseq
      %v2980 = vshrl.u32 %v2979, 7
      %v2981 = vsub.s32 %v2978, %v2980
      %v2982 = vrot.slane %v2968, %v2981
      %v2983 = vcombine.low %v2975, %v2982
      %v2985 = vunpack.c.l.s4 1966171168
      %v2986 = vunpack.c.0.s8 %v2985
      %v2987 = vlaneseq
      %v2988 = vshrl.u32 %v2987, 7
      %v2989 = vsub.s32 %v2986, %v2988
      %v2990 = vrot.slane %v2773, %v2989
      %v2992 = vunpack.c.l.s4 1966171168
      %v2993 = vunpack.c.0.s8 %v2992
      %v2994 = vlaneseq
      %v2995 = vshrl.u32 %v2994, 7
      %v2996 = vsub.s32 %v2993, %v2995
      %v2997 = vrot.slane %v2990, %v2996
      %v3004 = vpack.c.bf16 %v2871, %v2822
      %v3005 = vpack.c.bf16 %v2885, %v2885
      %v3006 = vpack.c.bf16 %v2983, %v2934
      %v3007 = vpack.c.bf16 %v2997, %v2997
      %3010 = vrot.lane.b32.xlu0 %v3004, 120
      %v3011 = vpop.permute.xlu0 %3010
      %3012 = vrot.lane.b32.xlu0 %v3005, 120
      %v3013 = vpop.permute.xlu0 %3012
      %vm3014 = vcmask 31744
      %v3016 = vsel %vm3014, %v3004, 0
      %v3019 = vsel %vm3014, %v3005, 0
      %v3022 = vsel %vm3014, %v3011, 0
      %v3025 = vsel %vm3014, %v3013, 0
      %3027 = vmatprep.subr.bf16.mxu0 0
      %3028 = vmatpush1.bf16.xpose.msra.mxu0 0
      %3029 = vmatprep.subr.bf16.mxu0 0
      %3030 = vmatpush1.bf16.xpose.msra.mxu0 0
      %3031 = vmatprep.subr.bf16.mxu0 0
      %3032 = vmatpush1.bf16.xpose.msra.mxu0 0
      %3033 = vmatprep.subr.bf16.mxu0 0
      %3034 = vmatpush1.bf16.xpose.msra.mxu0 0
      %3035 = vmatprep.subr.bf16.mxu0 0
      %3036 = vmatpush1.bf16.xpose.msra.mxu0 0
      %3037 = vmatprep.subr.bf16.mxu0 0
      %3038 = vmatpush1.bf16.xpose.msra.mxu0 0
      %3039 = vmatprep.subr.bf16.mxu0 0
      %3040 = vmatpush1.bf16.xpose.msra.mxu0 %v3025
      %3041 = vmatprep.subr.bf16.mxu0 0
      %3042 = vmatpush1.bf16.xpose.msra.mxu0 %v3022
      %3043 = vmatprep.subr.bf16.mxu0 0
      %3044 = vmatpush2.bf16.xpose.msra.mxu0 0
      %3045 = vmatprep.subr.bf16.mxu0 0
      %3046 = vmatpush2.bf16.xpose.msra.mxu0 0
      %3047 = vmatprep.subr.bf16.mxu0 0
      %3048 = vmatpush2.bf16.xpose.msra.mxu0 0
      %3049 = vmatprep.subr.bf16.mxu0 0
      %3050 = vmatpush2.bf16.xpose.msra.mxu0 0
      %3051 = vmatprep.subr.bf16.mxu0 0
      %3052 = vmatpush2.bf16.xpose.msra.mxu0 0
      %3053 = vmatprep.subr.bf16.mxu0 0
      %3054 = vmatpush2.bf16.xpose.msra.mxu0 0
      %3055 = vmatprep.subr.bf16.mxu0 0
      %3056 = vmatpush2.bf16.xpose.msra.mxu0 0
      %3057 = vmatprep.subr.bf16.mxu0 0
      %3058 = vmatpush2.bf16.xpose.msra.mxu0 0
      %3059 = vmatprep.mubr.bf16.mxu0 0
      %3060 = vmatmul.mubr.bf16.gmra.mxu0 %v3016
      %v3061 = vpop.f32.mrf.mxu0
      %v3062 = vadd.f32 0.0, %v3061
      %v3063 = vpop.f32.mrf.mxu0
      %v3064 = vpop.f32.mrf.mxu0
      %v3065 = vadd.f32 0.0, %v3064
      %v3066 = vpop.f32.mrf.mxu0
      %3067 = vmatprep.mubr.bf16.mxu0 0
      %3068 = vmatmul.mubr.bf16.gmra.mxu0 %v3019
      %v3069 = vpop.f32.mrf.mxu0
      %v3070 = vadd.f32 0.0, %v3069
      %v3071 = vpop.f32.mrf.mxu0
      %v3072 = vpop.f32.mrf.mxu0
      %v3073 = vpop.f32.mrf.mxu0
      %3074 = vdwg.mxu0
      %3077 = vrot.lane.b32.xlu0 %v3006, 120
      %v3078 = vpop.permute.xlu0 %3077
      %3079 = vrot.lane.b32.xlu0 %v3007, 120
      %v3080 = vpop.permute.xlu0 %3079
      %v3082 = vsel %vm3014, %v3006, 0
      %v3085 = vsel %vm3014, %v3007, 0
      %v3088 = vsel %vm3014, %v3078, 0
      %v3091 = vsel %vm3014, %v3080, 0
      %3093 = vmatprep.subr.bf16.mxu0 0
      %3094 = vmatpush1.bf16.xpose.msra.mxu0 0
      %3095 = vmatprep.subr.bf16.mxu0 0
      %3096 = vmatpush1.bf16.xpose.msra.mxu0 0
      %3097 = vmatprep.subr.bf16.mxu0 0
      %3098 = vmatpush1.bf16.xpose.msra.mxu0 0
      %3099 = vmatprep.subr.bf16.mxu0 0
      %3100 = vmatpush1.bf16.xpose.msra.mxu0 0
      %3101 = vmatprep.subr.bf16.mxu0 0
      %3102 = vmatpush1.bf16.xpose.msra.mxu0 0
      %3103 = vmatprep.subr.bf16.mxu0 0
      %3104 = vmatpush1.bf16.xpose.msra.mxu0 0
      %3105 = vmatprep.subr.bf16.mxu0 0
      %3106 = vmatpush1.bf16.xpose.msra.mxu0 %v3091
      %3107 = vmatprep.subr.bf16.mxu0 0
      %3108 = vmatpush1.bf16.xpose.msra.mxu0 %v3088
      %3109 = vmatprep.subr.bf16.mxu0 0
      %3110 = vmatpush2.bf16.xpose.msra.mxu0 0
      %3111 = vmatprep.subr.bf16.mxu0 0
      %3112 = vmatpush2.bf16.xpose.msra.mxu0 0
      %3113 = vmatprep.subr.bf16.mxu0 0
      %3114 = vmatpush2.bf16.xpose.msra.mxu0 0
      %3115 = vmatprep.subr.bf16.mxu0 0
      %3116 = vmatpush2.bf16.xpose.msra.mxu0 0
      %3117 = vmatprep.subr.bf16.mxu0 0
      %3118 = vmatpush2.bf16.xpose.msra.mxu0 0
      %3119 = vmatprep.subr.bf16.mxu0 0
      %3120 = vmatpush2.bf16.xpose.msra.mxu0 0
      %3121 = vmatprep.subr.bf16.mxu0 0
      %3122 = vmatpush2.bf16.xpose.msra.mxu0 0
      %3123 = vmatprep.subr.bf16.mxu0 0
      %3124 = vmatpush2.bf16.xpose.msra.mxu0 0
      %3125 = vmatprep.mubr.bf16.mxu0 0
      %3126 = vmatmul.mubr.bf16.gmra.mxu0 %v3082
      %v3127 = vpop.f32.mrf.mxu0
      %v3128 = vadd.f32 0.0, %v3127
      %v3129 = vpop.f32.mrf.mxu0
      %v3130 = vpop.f32.mrf.mxu0
      %v3131 = vadd.f32 0.0, %v3130
      %v3132 = vpop.f32.mrf.mxu0
      %3133 = vmatprep.mubr.bf16.mxu0 0
      %3134 = vmatmul.mubr.bf16.gmra.mxu0 %v3085
      %v3135 = vpop.f32.mrf.mxu0
      %v3136 = vadd.f32 0.0, %v3135
      %v3137 = vpop.f32.mrf.mxu0
      %v3138 = vpop.f32.mrf.mxu0
      %v3139 = vpop.f32.mrf.mxu0
      %3140 = vdwg.mxu0
      %v3141 = vmul.f32 %v3062, 0.5
      %v3142 = vmul.f32 %v3065, 0.5
      %v3143 = vmul.f32 %v3070, 0.5
      %v3144 = vmul.f32 %v3128, 0.5
      %v3145 = vmul.f32 %v3131, 0.5
      %v3146 = vmul.f32 %v3136, 0.5
      %vm3147 = vcmask 138240
      %v3148 = vsel %vm3147, %v3141, -inf
      %3149 = vmax.xlane.f32.xlu0 %v3148
      %v3150 = vpop.xlane.xlu0 %3149
      %v3151 = vsel %vm3147, %v3142, -inf
      %3152 = vmax.xlane.f32.xlu0 %v3151
      %v3153 = vpop.xlane.xlu0 %3152
      %vm3154 = vcmask 131072
      %v3155 = vsel %vm3154, %v3143, -inf
      %3156 = vmax.xlane.f32.xlu0 %v3155
      %v3157 = vpop.xlane.xlu0 %3156
      %v3158 = vsel %vm3147, %v3144, -inf
      %3159 = vmax.xlane.f32.xlu0 %v3158
      %v3160 = vpop.xlane.xlu0 %3159
      %v3161 = vsel %vm3147, %v3145, -inf
      %3162 = vmax.xlane.f32.xlu0 %v3161
      %v3163 = vpop.xlane.xlu0 %3162
      %v3164 = vsel %vm3154, %v3146, -inf
      %3165 = vmax.xlane.f32.xlu0 %v3164
      %v3166 = vpop.xlane.xlu0 %3165
      %v3167 = vsub.f32 %v3141, %v3150
      %v3168 = vsub.f32 %v3142, %v3153
      %v3169 = vsub.f32 %v3143, %v3157
      %v3170 = vsub.f32 %v3144, %v3160
      %v3171 = vsub.f32 %v3145, %v3163
      %v3172 = vsub.f32 %v3146, %v3166
      %v3173 = vmul.f32 %v3167, 1.442695
      %v3174 = vpow.pop %v3173
      %v3175 = vmul.f32 %v3168, 1.442695
      %v3176 = vpow.pop %v3175
      %v3177 = vmul.f32 %v3169, 1.442695
      %v3178 = vpow.pop %v3177
      %v3179 = vmul.f32 %v3170, 1.442695
      %v3180 = vpow.pop %v3179
      %v3181 = vmul.f32 %v3171, 1.442695
      %v3182 = vpow.pop %v3181
      %v3183 = vmul.f32 %v3172, 1.442695
      %v3184 = vpow.pop %v3183
      %v3185 = vsel %vm3147, %v3174, 0.0
      %3186 = vadd.xlane.f32.xlu0 %v3185
      %v3187 = vpop.xlane.xlu0 %3186
      %v3188 = vsel %vm3147, %v3176, 0.0
      %3189 = vadd.xlane.f32.xlu0 %v3188
      %v3190 = vpop.xlane.xlu0 %3189
      %v3191 = vsel %vm3154, %v3178, 0.0
      %3192 = vadd.xlane.f32.xlu0 %v3191
      %v3193 = vpop.xlane.xlu0 %3192
      %v3194 = vsel %vm3147, %v3180, 0.0
      %3195 = vadd.xlane.f32.xlu0 %v3194
      %v3196 = vpop.xlane.xlu0 %3195
      %v3197 = vsel %vm3147, %v3182, 0.0
      %3198 = vadd.xlane.f32.xlu0 %v3197
      %v3199 = vpop.xlane.xlu0 %3198
      %v3200 = vsel %vm3154, %v3184, 0.0
      %3201 = vadd.xlane.f32.xlu0 %v3200
      %v3202 = vpop.xlane.xlu0 %3201
      %v3203 = vrcp.pop %v3187
      %v3204 = vmul.f32 %v3174, %v3203
      %v3205 = vrcp.pop %v3190
      %v3206 = vmul.f32 %v3176, %v3205
      %v3207 = vrcp.pop %v3193
      %v3208 = vmul.f32 %v3178, %v3207
      %v3209 = vrcp.pop %v3196
      %v3210 = vmul.f32 %v3180, %v3209
      %v3211 = vrcp.pop %v3199
      %v3212 = vmul.f32 %v3182, %v3211
      %v3213 = vrcp.pop %v3202
      %v3214 = vmul.f32 %v3184, %v3213
      %v3215 = vpack.c.bf16 %v3206, %v3204
      %v3216 = vpack.c.bf16 %v3208, %v3208
      %v3217 = vpack.c.bf16 %v3212, %v3210
      %v3218 = vpack.c.bf16 %v3214, %v3214
      %3219 = vrot.lane.b32.xlu0 %v3004, 112
      %v3220 = vpop.permute.xlu0 %3219
      %3221 = vrot.lane.b32.xlu0 %v3005, 112
      %v3222 = vpop.permute.xlu0 %3221
      %v3225 = vsel %vm3147, %v3215, 0
      %v3228 = vsel %vm3147, %v3216, 0
      %vm3230 = vcmask 1040384
      %v3231 = vsel 0, 4294967295, 65535
      %v3232 = vsel %vm3230, %v3231, 0
      %v3234 = vand.u32 %v3222, %v3232
      %3236 = vmatprep.subr.bf16.mxu0 0
      %3237 = vmatpush1.bf16.msra.mxu0 0
      %3238 = vmatprep.subr.bf16.mxu0 0
      %3239 = vmatpush1.bf16.msra.mxu0 0
      %3240 = vmatprep.subr.bf16.mxu0 0
      %3241 = vmatpush1.bf16.msra.mxu0 0
      %3242 = vmatprep.subr.bf16.mxu0 0
      %3243 = vmatpush1.bf16.msra.mxu0 0
      %3244 = vmatprep.subr.bf16.mxu0 0
      %3245 = vmatpush1.bf16.msra.mxu0 0
      %3246 = vmatprep.subr.bf16.mxu0 0
      %3247 = vmatpush1.bf16.msra.mxu0 0
      %3248 = vmatprep.subr.bf16.mxu0 0
      %3249 = vmatpush1.bf16.msra.mxu0 %v3234
      %3250 = vmatprep.subr.bf16.mxu0 0
      %3251 = vmatpush1.bf16.msra.mxu0 %v3220
      %3252 = vmatprep.subr.bf16.mxu0 0
      %3253 = vmatpush2.bf16.msra.mxu0 0
      %3254 = vmatprep.subr.bf16.mxu0 0
      %3255 = vmatpush2.bf16.msra.mxu0 0
      %3256 = vmatprep.subr.bf16.mxu0 0
      %3257 = vmatpush2.bf16.msra.mxu0 0
      %3258 = vmatprep.subr.bf16.mxu0 0
      %3259 = vmatpush2.bf16.msra.mxu0 0
      %3260 = vmatprep.subr.bf16.mxu0 0
      %3261 = vmatpush2.bf16.msra.mxu0 0
      %3262 = vmatprep.subr.bf16.mxu0 0
      %3263 = vmatpush2.bf16.msra.mxu0 0
      %3264 = vmatprep.subr.bf16.mxu0 0
      %3265 = vmatpush2.bf16.msra.mxu0 0
      %3266 = vmatprep.subr.bf16.mxu0 0
      %3267 = vmatpush2.bf16.msra.mxu0 0
      %3268 = vmatprep.mubr.bf16.mxu0 0
      %3269 = vmatmul.mubr.bf16.gmra.mxu0 %v3225
      %v3270 = vpop.f32.mrf.mxu0
      %v3271 = vadd.f32 0.0, %v3270
      %v3272 = vpop.f32.mrf.mxu0
      %v3273 = vpop.f32.mrf.mxu0
      %v3274 = vadd.f32 0.0, %v3273
      %v3275 = vpop.f32.mrf.mxu0
      %3276 = vmatprep.mubr.bf16.mxu0 0
      %3277 = vmatmul.mubr.bf16.gmra.mxu0 %v3228
      %v3278 = vpop.f32.mrf.mxu0
      %v3279 = vadd.f32 0.0, %v3278
      %v3280 = vpop.f32.mrf.mxu0
      %v3281 = vpop.f32.mrf.mxu0
      %v3282 = vpop.f32.mrf.mxu0
      %3283 = vdwg.mxu0
      %3284 = vrot.lane.b32.xlu0 %v3006, 112
      %v3285 = vpop.permute.xlu0 %3284
      %3286 = vrot.lane.b32.xlu0 %v3007, 112
      %v3287 = vpop.permute.xlu0 %3286
      %v3290 = vsel %vm3147, %v3217, 0
      %v3293 = vsel %vm3147, %v3218, 0
      %v3296 = vand.u32 %v3287, %v3232
      %3298 = vmatprep.subr.bf16.mxu0 0
      %3299 = vmatpush1.bf16.msra.mxu0 0
      %3300 = vmatprep.subr.bf16.mxu0 0
      %3301 = vmatpush1.bf16.msra.mxu0 0
      %3302 = vmatprep.subr.bf16.mxu0 0
      %3303 = vmatpush1.bf16.msra.mxu0 0
      %3304 = vmatprep.subr.bf16.mxu0 0
      %3305 = vmatpush1.bf16.msra.mxu0 0
      %3306 = vmatprep.subr.bf16.mxu0 0
      %3307 = vmatpush1.bf16.msra.mxu0 0
      %3308 = vmatprep.subr.bf16.mxu0 0
      %3309 = vmatpush1.bf16.msra.mxu0 0
      %3310 = vmatprep.subr.bf16.mxu0 0
      %3311 = vmatpush1.bf16.msra.mxu0 %v3296
      %3312 = vmatprep.subr.bf16.mxu0 0
      %3313 = vmatpush1.bf16.msra.mxu0 %v3285
      %3314 = vmatprep.subr.bf16.mxu0 0
      %3315 = vmatpush2.bf16.msra.mxu0 0
      %3316 = vmatprep.subr.bf16.mxu0 0
      %3317 = vmatpush2.bf16.msra.mxu0 0
      %3318 = vmatprep.subr.bf16.mxu0 0
      %3319 = vmatpush2.bf16.msra.mxu0 0
      %3320 = vmatprep.subr.bf16.mxu0 0
      %3321 = vmatpush2.bf16.msra.mxu0 0
      %3322 = vmatprep.subr.bf16.mxu0 0
      %3323 = vmatpush2.bf16.msra.mxu0 0
      %3324 = vmatprep.subr.bf16.mxu0 0
      %3325 = vmatpush2.bf16.msra.mxu0 0
      %3326 = vmatprep.subr.bf16.mxu0 0
      %3327 = vmatpush2.bf16.msra.mxu0 0
      %3328 = vmatprep.subr.bf16.mxu0 0
      %3329 = vmatpush2.bf16.msra.mxu0 0
      %3330 = vmatprep.mubr.bf16.mxu0 0
      %3331 = vmatmul.mubr.bf16.gmra.mxu0 %v3290
      %v3332 = vpop.f32.mrf.mxu0
      %v3333 = vadd.f32 0.0, %v3332
      %v3334 = vpop.f32.mrf.mxu0
      %v3335 = vpop.f32.mrf.mxu0
      %v3336 = vadd.f32 0.0, %v3335
      %v3337 = vpop.f32.mrf.mxu0
      %3338 = vmatprep.mubr.bf16.mxu0 0
      %3339 = vmatmul.mubr.bf16.gmra.mxu0 %v3293
      %v3340 = vpop.f32.mrf.mxu0
      %v3341 = vadd.f32 0.0, %v3340
      %v3342 = vpop.f32.mrf.mxu0
      %v3343 = vpop.f32.mrf.mxu0
      %v3344 = vpop.f32.mrf.mxu0
      %3345 = vdwg.mxu0
      %3346 = vrot.lane.b32.xlu0 %v3004, 124
      %v3347 = vpop.permute.xlu0 %3346
      %3348 = vrot.lane.b32.xlu0 %v3005, 124
      %v3349 = vpop.permute.xlu0 %3348
      %3350 = vrot.lane.b32.xlu0 %v3004, 116
      %v3351 = vpop.permute.xlu0 %3350
      %3352 = vrot.lane.b32.xlu0 %v3005, 116
      %v3353 = vpop.permute.xlu0 %3352
      %v3355 = vsel %vm3014, %v3347, 0
      %v3358 = vsel %vm3014, %v3349, 0
      %v3361 = vsel %vm3014, %v3351, 0
      %v3364 = vsel %vm3014, %v3353, 0
      %3366 = vmatprep.subr.bf16.mxu0 0
      %3367 = vmatpush1.bf16.xpose.msra.mxu0 0
      %3368 = vmatprep.subr.bf16.mxu0 0
      %3369 = vmatpush1.bf16.xpose.msra.mxu0 0
      %3370 = vmatprep.subr.bf16.mxu0 0
      %3371 = vmatpush1.bf16.xpose.msra.mxu0 0
      %3372 = vmatprep.subr.bf16.mxu0 0
      %3373 = vmatpush1.bf16.xpose.msra.mxu0 0
      %3374 = vmatprep.subr.bf16.mxu0 0
      %3375 = vmatpush1.bf16.xpose.msra.mxu0 0
      %3376 = vmatprep.subr.bf16.mxu0 0
      %3377 = vmatpush1.bf16.xpose.msra.mxu0 0
      %3378 = vmatprep.subr.bf16.mxu0 0
      %3379 = vmatpush1.bf16.xpose.msra.mxu0 %v3364
      %3380 = vmatprep.subr.bf16.mxu0 0
      %3381 = vmatpush1.bf16.xpose.msra.mxu0 %v3361
      %3382 = vmatprep.subr.bf16.mxu0 0
      %3383 = vmatpush2.bf16.xpose.msra.mxu0 0
      %3384 = vmatprep.subr.bf16.mxu0 0
      %3385 = vmatpush2.bf16.xpose.msra.mxu0 0
      %3386 = vmatprep.subr.bf16.mxu0 0
      %3387 = vmatpush2.bf16.xpose.msra.mxu0 0
      %3388 = vmatprep.subr.bf16.mxu0 0
      %3389 = vmatpush2.bf16.xpose.msra.mxu0 0
      %3390 = vmatprep.subr.bf16.mxu0 0
      %3391 = vmatpush2.bf16.xpose.msra.mxu0 0
      %3392 = vmatprep.subr.bf16.mxu0 0
      %3393 = vmatpush2.bf16.xpose.msra.mxu0 0
      %3394 = vmatprep.subr.bf16.mxu0 0
      %3395 = vmatpush2.bf16.xpose.msra.mxu0 0
      %3396 = vmatprep.subr.bf16.mxu0 0
      %3397 = vmatpush2.bf16.xpose.msra.mxu0 0
      %3398 = vmatprep.mubr.bf16.mxu0 0
      %3399 = vmatmul.mubr.bf16.gmra.mxu0 %v3355
      %v3400 = vpop.f32.mrf.mxu0
      %v3401 = vadd.f32 0.0, %v3400
      %v3402 = vpop.f32.mrf.mxu0
      %v3403 = vpop.f32.mrf.mxu0
      %v3404 = vadd.f32 0.0, %v3403
      %v3405 = vpop.f32.mrf.mxu0
      %3406 = vmatprep.mubr.bf16.mxu0 0
      %3407 = vmatmul.mubr.bf16.gmra.mxu0 %v3358
      %v3408 = vpop.f32.mrf.mxu0
      %v3409 = vadd.f32 0.0, %v3408
      %v3410 = vpop.f32.mrf.mxu0
      %v3411 = vpop.f32.mrf.mxu0
      %v3412 = vpop.f32.mrf.mxu0
      %3413 = vdwg.mxu0
      %3414 = vrot.lane.b32.xlu0 %v3006, 124
      %v3415 = vpop.permute.xlu0 %3414
      %3416 = vrot.lane.b32.xlu0 %v3007, 124
      %v3417 = vpop.permute.xlu0 %3416
      %3418 = vrot.lane.b32.xlu0 %v3006, 116
      %v3419 = vpop.permute.xlu0 %3418
      %3420 = vrot.lane.b32.xlu0 %v3007, 116
      %v3421 = vpop.permute.xlu0 %3420
      %v3423 = vsel %vm3014, %v3415, 0
      %v3426 = vsel %vm3014, %v3417, 0
      %v3429 = vsel %vm3014, %v3419, 0
      %v3432 = vsel %vm3014, %v3421, 0
      %3434 = vmatprep.subr.bf16.mxu0 0
      %3435 = vmatpush1.bf16.xpose.msra.mxu0 0
      %3436 = vmatprep.subr.bf16.mxu0 0
      %3437 = vmatpush1.bf16.xpose.msra.mxu0 0
      %3438 = vmatprep.subr.bf16.mxu0 0
      %3439 = vmatpush1.bf16.xpose.msra.mxu0 0
      %3440 = vmatprep.subr.bf16.mxu0 0
      %3441 = vmatpush1.bf16.xpose.msra.mxu0 0
      %3442 = vmatprep.subr.bf16.mxu0 0
      %3443 = vmatpush1.bf16.xpose.msra.mxu0 0
      %3444 = vmatprep.subr.bf16.mxu0 0
      %3445 = vmatpush1.bf16.xpose.msra.mxu0 0
      %3446 = vmatprep.subr.bf16.mxu0 0
      %3447 = vmatpush1.bf16.xpose.msra.mxu0 %v3432
      %3448 = vmatprep.subr.bf16.mxu0 0
      %3449 = vmatpush1.bf16.xpose.msra.mxu0 %v3429
      %3450 = vmatprep.subr.bf16.mxu0 0
      %3451 = vmatpush2.bf16.xpose.msra.mxu0 0
      %3452 = vmatprep.subr.bf16.mxu0 0
      %3453 = vmatpush2.bf16.xpose.msra.mxu0 0
      %3454 = vmatprep.subr.bf16.mxu0 0
      %3455 = vmatpush2.bf16.xpose.msra.mxu0 0
      %3456 = vmatprep.subr.bf16.mxu0 0
      %3457 = vmatpush2.bf16.xpose.msra.mxu0 0
      %3458 = vmatprep.subr.bf16.mxu0 0
      %3459 = vmatpush2.bf16.xpose.msra.mxu0 0
      %3460 = vmatprep.subr.bf16.mxu0 0
      %3461 = vmatpush2.bf16.xpose.msra.mxu0 0
      %3462 = vmatprep.subr.bf16.mxu0 0
      %3463 = vmatpush2.bf16.xpose.msra.mxu0 0
      %3464 = vmatprep.subr.bf16.mxu0 0
      %3465 = vmatpush2.bf16.xpose.msra.mxu0 0
      %3466 = vmatprep.mubr.bf16.mxu0 0
      %3467 = vmatmul.mubr.bf16.gmra.mxu0 %v3423
      %v3468 = vpop.f32.mrf.mxu0
      %v3469 = vadd.f32 0.0, %v3468
      %v3470 = vpop.f32.mrf.mxu0
      %v3471 = vpop.f32.mrf.mxu0
      %v3472 = vadd.f32 0.0, %v3471
      %v3473 = vpop.f32.mrf.mxu0
      %3474 = vmatprep.mubr.bf16.mxu0 0
      %3475 = vmatmul.mubr.bf16.gmra.mxu0 %v3426
      %v3476 = vpop.f32.mrf.mxu0
      %v3477 = vadd.f32 0.0, %v3476
      %v3478 = vpop.f32.mrf.mxu0
      %v3479 = vpop.f32.mrf.mxu0
      %v3480 = vpop.f32.mrf.mxu0
      %3481 = vdwg.mxu0
      %v3482 = vmul.f32 %v3401, 0.5
      %v3483 = vmul.f32 %v3404, 0.5
      %v3484 = vmul.f32 %v3409, 0.5
      %v3485 = vmul.f32 %v3469, 0.5
      %v3486 = vmul.f32 %v3472, 0.5
      %v3487 = vmul.f32 %v3477, 0.5
      %v3488 = vsel %vm3147, %v3482, -inf
      %3489 = vmax.xlane.f32.xlu0 %v3488
      %v3490 = vpop.xlane.xlu0 %3489
      %v3491 = vsel %vm3147, %v3483, -inf
      %3492 = vmax.xlane.f32.xlu0 %v3491
      %v3493 = vpop.xlane.xlu0 %3492
      %v3494 = vsel %vm3154, %v3484, -inf
      %3495 = vmax.xlane.f32.xlu0 %v3494
      %v3496 = vpop.xlane.xlu0 %3495
      %v3497 = vsel %vm3147, %v3485, -inf
      %3498 = vmax.xlane.f32.xlu0 %v3497
      %v3499 = vpop.xlane.xlu0 %3498
      %v3500 = vsel %vm3147, %v3486, -inf
      %3501 = vmax.xlane.f32.xlu0 %v3500
      %v3502 = vpop.xlane.xlu0 %3501
      %v3503 = vsel %vm3154, %v3487, -inf
      %3504 = vmax.xlane.f32.xlu0 %v3503
      %v3505 = vpop.xlane.xlu0 %3504
      %v3506 = vsub.f32 %v3482, %v3490
      %v3507 = vsub.f32 %v3483, %v3493
      %v3508 = vsub.f32 %v3484, %v3496
      %v3509 = vsub.f32 %v3485, %v3499
      %v3510 = vsub.f32 %v3486, %v3502
      %v3511 = vsub.f32 %v3487, %v3505
      %v3512 = vmul.f32 %v3506, 1.442695
      %v3513 = vpow.pop %v3512
      %v3514 = vmul.f32 %v3507, 1.442695
      %v3515 = vpow.pop %v3514
      %v3516 = vmul.f32 %v3508, 1.442695
      %v3517 = vpow.pop %v3516
      %v3518 = vmul.f32 %v3509, 1.442695
      %v3519 = vpow.pop %v3518
      %v3520 = vmul.f32 %v3510, 1.442695
      %v3521 = vpow.pop %v3520
      %v3522 = vmul.f32 %v3511, 1.442695
      %v3523 = vpow.pop %v3522
      %v3524 = vsel %vm3147, %v3513, 0.0
      %3525 = vadd.xlane.f32.xlu0 %v3524
      %v3526 = vpop.xlane.xlu0 %3525
      %v3527 = vsel %vm3147, %v3515, 0.0
      %3528 = vadd.xlane.f32.xlu0 %v3527
      %v3529 = vpop.xlane.xlu0 %3528
      %v3530 = vsel %vm3154, %v3517, 0.0
      %3531 = vadd.xlane.f32.xlu0 %v3530
      %v3532 = vpop.xlane.xlu0 %3531
      %v3533 = vsel %vm3147, %v3519, 0.0
      %3534 = vadd.xlane.f32.xlu0 %v3533
      %v3535 = vpop.xlane.xlu0 %3534
      %v3536 = vsel %vm3147, %v3521, 0.0
      %3537 = vadd.xlane.f32.xlu0 %v3536
      %v3538 = vpop.xlane.xlu0 %3537
      %v3539 = vsel %vm3154, %v3523, 0.0
      %3540 = vadd.xlane.f32.xlu0 %v3539
      %v3541 = vpop.xlane.xlu0 %3540
      %v3542 = vrcp.pop %v3526
      %v3543 = vmul.f32 %v3513, %v3542
      %v3544 = vrcp.pop %v3529
      %v3545 = vmul.f32 %v3515, %v3544
      %v3546 = vrcp.pop %v3532
      %v3547 = vmul.f32 %v3517, %v3546
      %v3548 = vrcp.pop %v3535
      %v3549 = vmul.f32 %v3519, %v3548
      %v3550 = vrcp.pop %v3538
      %v3551 = vmul.f32 %v3521, %v3550
      %v3552 = vrcp.pop %v3541
      %v3553 = vmul.f32 %v3523, %v3552
      %v3554 = vpack.c.bf16 %v3545, %v3543
      %v3555 = vpack.c.bf16 %v3547, %v3547
      %v3556 = vpack.c.bf16 %v3551, %v3549
      %v3557 = vpack.c.bf16 %v3553, %v3553
      %3558 = vrot.lane.b32.xlu0 %v3004, 108
      %v3559 = vpop.permute.xlu0 %3558
      %3560 = vrot.lane.b32.xlu0 %v3005, 108
      %v3561 = vpop.permute.xlu0 %3560
      %v3564 = vsel %vm3147, %v3554, 0
      %v3567 = vsel %vm3147, %v3555, 0
      %v3570 = vand.u32 %v3561, %v3232
      %3572 = vmatprep.subr.bf16.mxu0 0
      %3573 = vmatpush1.bf16.msra.mxu0 0
      %3574 = vmatprep.subr.bf16.mxu0 0
      %3575 = vmatpush1.bf16.msra.mxu0 0
      %3576 = vmatprep.subr.bf16.mxu0 0
      %3577 = vmatpush1.bf16.msra.mxu0 0
      %3578 = vmatprep.subr.bf16.mxu0 0
      %3579 = vmatpush1.bf16.msra.mxu0 0
      %3580 = vmatprep.subr.bf16.mxu0 0
      %3581 = vmatpush1.bf16.msra.mxu0 0
      %3582 = vmatprep.subr.bf16.mxu0 0
      %3583 = vmatpush1.bf16.msra.mxu0 0
      %3584 = vmatprep.subr.bf16.mxu0 0
      %3585 = vmatpush1.bf16.msra.mxu0 %v3570
      %3586 = vmatprep.subr.bf16.mxu0 0
      %3587 = vmatpush1.bf16.msra.mxu0 %v3559
      %3588 = vmatprep.subr.bf16.mxu0 0
      %3589 = vmatpush2.bf16.msra.mxu0 0
      %3590 = vmatprep.subr.bf16.mxu0 0
      %3591 = vmatpush2.bf16.msra.mxu0 0
      %3592 = vmatprep.subr.bf16.mxu0 0
      %3593 = vmatpush2.bf16.msra.mxu0 0
      %3594 = vmatprep.subr.bf16.mxu0 0
      %3595 = vmatpush2.bf16.msra.mxu0 0
      %3596 = vmatprep.subr.bf16.mxu0 0
      %3597 = vmatpush2.bf16.msra.mxu0 0
      %3598 = vmatprep.subr.bf16.mxu0 0
      %3599 = vmatpush2.bf16.msra.mxu0 0
      %3600 = vmatprep.subr.bf16.mxu0 0
      %3601 = vmatpush2.bf16.msra.mxu0 0
      %3602 = vmatprep.subr.bf16.mxu0 0
      %3603 = vmatpush2.bf16.msra.mxu0 0
      %3604 = vmatprep.mubr.bf16.mxu0 0
      %3605 = vmatmul.mubr.bf16.gmra.mxu0 %v3564
      %v3606 = vpop.f32.mrf.mxu0
      %v3607 = vadd.f32 0.0, %v3606
      %v3608 = vpop.f32.mrf.mxu0
      %v3609 = vpop.f32.mrf.mxu0
      %v3610 = vadd.f32 0.0, %v3609
      %v3611 = vpop.f32.mrf.mxu0
      %3612 = vmatprep.mubr.bf16.mxu0 0
      %3613 = vmatmul.mubr.bf16.gmra.mxu0 %v3567
      %v3614 = vpop.f32.mrf.mxu0
      %v3615 = vadd.f32 0.0, %v3614
      %v3616 = vpop.f32.mrf.mxu0
      %v3617 = vpop.f32.mrf.mxu0
      %v3618 = vpop.f32.mrf.mxu0
      %3619 = vdwg.mxu0
      %3620 = vrot.lane.b32.xlu0 %v3006, 108
      %v3621 = vpop.permute.xlu0 %3620
      %3622 = vrot.lane.b32.xlu0 %v3007, 108
      %v3623 = vpop.permute.xlu0 %3622
      %v3626 = vsel %vm3147, %v3556, 0
      %v3629 = vsel %vm3147, %v3557, 0
      %v3632 = vand.u32 %v3623, %v3232
      %3634 = vmatprep.subr.bf16.mxu0 0
      %3635 = vmatpush1.bf16.msra.mxu0 0
      %3636 = vmatprep.subr.bf16.mxu0 0
      %3637 = vmatpush1.bf16.msra.mxu0 0
      %3638 = vmatprep.subr.bf16.mxu0 0
      %3639 = vmatpush1.bf16.msra.mxu0 0
      %3640 = vmatprep.subr.bf16.mxu0 0
      %3641 = vmatpush1.bf16.msra.mxu0 0
      %3642 = vmatprep.subr.bf16.mxu0 0
      %3643 = vmatpush1.bf16.msra.mxu0 0
      %3644 = vmatprep.subr.bf16.mxu0 0
      %3645 = vmatpush1.bf16.msra.mxu0 0
      %3646 = vmatprep.subr.bf16.mxu0 0
      %3647 = vmatpush1.bf16.msra.mxu0 %v3632
      %3648 = vmatprep.subr.bf16.mxu0 0
      %3649 = vmatpush1.bf16.msra.mxu0 %v3621
      %3650 = vmatprep.subr.bf16.mxu0 0
      %3651 = vmatpush2.bf16.msra.mxu0 0
      %3652 = vmatprep.subr.bf16.mxu0 0
      %3653 = vmatpush2.bf16.msra.mxu0 0
      %3654 = vmatprep.subr.bf16.mxu0 0
      %3655 = vmatpush2.bf16.msra.mxu0 0
      %3656 = vmatprep.subr.bf16.mxu0 0
      %3657 = vmatpush2.bf16.msra.mxu0 0
      %3658 = vmatprep.subr.bf16.mxu0 0
      %3659 = vmatpush2.bf16.msra.mxu0 0
      %3660 = vmatprep.subr.bf16.mxu0 0
      %3661 = vmatpush2.bf16.msra.mxu0 0
      %3662 = vmatprep.subr.bf16.mxu0 0
      %3663 = vmatpush2.bf16.msra.mxu0 0
      %3664 = vmatprep.subr.bf16.mxu0 0
      %3665 = vmatpush2.bf16.msra.mxu0 0
      %3666 = vmatprep.mubr.bf16.mxu0 0
      %3667 = vmatmul.mubr.bf16.gmra.mxu0 %v3626
      %v3668 = vpop.f32.mrf.mxu0
      %v3669 = vadd.f32 0.0, %v3668
      %v3670 = vpop.f32.mrf.mxu0
      %v3671 = vpop.f32.mrf.mxu0
      %v3672 = vadd.f32 0.0, %v3671
      %v3673 = vpop.f32.mrf.mxu0
      %3674 = vmatprep.mubr.bf16.mxu0 0
      %3675 = vmatmul.mubr.bf16.gmra.mxu0 %v3629
      %v3676 = vpop.f32.mrf.mxu0
      %v3677 = vadd.f32 0.0, %v3676
      %v3678 = vpop.f32.mrf.mxu0
      %v3679 = vpop.f32.mrf.mxu0
      %v3680 = vpop.f32.mrf.mxu0
      %3681 = vdwg.mxu0
      %3688 = vrot.lane.b32.xlu0 %v3607, 4
      %v3689 = vpop.permute.xlu0 %3688
      %3690 = vrot.lane.b32.xlu0 %v3610, 4
      %v3691 = vpop.permute.xlu0 %3690
      %3692 = vrot.lane.b32.xlu0 %v3615, 4
      %v3693 = vpop.permute.xlu0 %3692
      %3694 = vrot.lane.b32.xlu0 %v3669, 4
      %v3695 = vpop.permute.xlu0 %3694
      %3696 = vrot.lane.b32.xlu0 %v3672, 4
      %v3697 = vpop.permute.xlu0 %3696
      %3698 = vrot.lane.b32.xlu0 %v3677, 4
      %v3699 = vpop.permute.xlu0 %3698
      %v3706 = vsel %vm3014, %v3271, %v3689
      %v3707 = vsel %vm3014, %v3274, %v3691
      %v3708 = vsel %vm3014, %v3279, %v3693
      %v3709 = vsel %vm3014, %v3333, %v3695
      %v3710 = vsel %vm3014, %v3336, %v3697
      %v3711 = vsel %vm3014, %v3341, %v3699
      %v3712 = vadd.f32 %v786, %v3706
      %v3713 = vadd.f32 %v787, %v3707
      %v3714 = vadd.f32 %v788, %v3708
      %v3715 = vadd.f32 %v789, %v3709
      %v3716 = vadd.f32 %v790, %v3710
      %v3717 = vadd.f32 %v791, %v3711
      %v3724 = vcombine.high %v3712, %v3712
      %v3726 = vunpack.c.l.s4 1966171168
      %v3727 = vunpack.c.0.s8 %v3726
      %v3728 = vlaneseq
      %v3729 = vshrl.u32 %v3728, 7
      %v3730 = vsub.s32 %v3727, %v3729
      %v3731 = vrot.slane %v3712, %v3730
      %v3733 = vunpack.c.l.s4 1966171168
      %v3734 = vunpack.c.0.s8 %v3733
      %v3735 = vlaneseq
      %v3736 = vshrl.u32 %v3735, 7
      %v3737 = vsub.s32 %v3734, %v3736
      %v3738 = vrot.slane %v3724, %v3737
      %v3739 = vcombine.high %v3731, %v3731
      %v3740 = vcombine.high %v3738, %v3738
      %v3742 = vunpack.c.l.s4 1966171168
      %v3743 = vunpack.c.0.s8 %v3742
      %v3744 = vlaneseq
      %v3745 = vshrl.u32 %v3744, 7
      %v3746 = vsub.s32 %v3743, %v3745
      %v3747 = vrot.slane %v3731, %v3746
      %v3749 = vunpack.c.l.s4 1966171168
      %v3750 = vunpack.c.0.s8 %v3749
      %v3751 = vlaneseq
      %v3752 = vshrl.u32 %v3751, 7
      %v3753 = vsub.s32 %v3750, %v3752
      %v3754 = vrot.slane %v3738, %v3753
      %v3756 = vunpack.c.l.s4 1966171168
      %v3757 = vunpack.c.0.s8 %v3756
      %v3758 = vlaneseq
      %v3759 = vshrl.u32 %v3758, 7
      %v3760 = vsub.s32 %v3757, %v3759
      %v3761 = vrot.slane %v3739, %v3760
      %v3763 = vunpack.c.l.s4 1966171168
      %v3764 = vunpack.c.0.s8 %v3763
      %v3765 = vlaneseq
      %v3766 = vshrl.u32 %v3765, 7
      %v3767 = vsub.s32 %v3764, %v3766
      %v3768 = vrot.slane %v3740, %v3767
      %v3769 = vcombine.high %v3747, %v3747
      %v3770 = vcombine.high %v3754, %v3754
      %v3771 = vcombine.high %v3761, %v3761
      %v3772 = vcombine.high %v3768, %v3768
      %v3773 = vcombine.high %v3713, %v3713
      %v3775 = vunpack.c.l.s4 1966171168
      %v3776 = vunpack.c.0.s8 %v3775
      %v3777 = vlaneseq
      %v3778 = vshrl.u32 %v3777, 7
      %v3779 = vsub.s32 %v3776, %v3778
      %v3780 = vrot.slane %v3713, %v3779
      %v3782 = vunpack.c.l.s4 1966171168
      %v3783 = vunpack.c.0.s8 %v3782
      %v3784 = vlaneseq
      %v3785 = vshrl.u32 %v3784, 7
      %v3786 = vsub.s32 %v3783, %v3785
      %v3787 = vrot.slane %v3773, %v3786
      %v3788 = vcombine.high %v3780, %v3780
      %v3789 = vcombine.high %v3787, %v3787
      %v3791 = vunpack.c.l.s4 1966171168
      %v3792 = vunpack.c.0.s8 %v3791
      %v3793 = vlaneseq
      %v3794 = vshrl.u32 %v3793, 7
      %v3795 = vsub.s32 %v3792, %v3794
      %v3796 = vrot.slane %v3780, %v3795
      %v3798 = vunpack.c.l.s4 1966171168
      %v3799 = vunpack.c.0.s8 %v3798
      %v3800 = vlaneseq
      %v3801 = vshrl.u32 %v3800, 7
      %v3802 = vsub.s32 %v3799, %v3801
      %v3803 = vrot.slane %v3787, %v3802
      %v3805 = vunpack.c.l.s4 1966171168
      %v3806 = vunpack.c.0.s8 %v3805
      %v3807 = vlaneseq
      %v3808 = vshrl.u32 %v3807, 7
      %v3809 = vsub.s32 %v3806, %v3808
      %v3810 = vrot.slane %v3788, %v3809
      %v3812 = vunpack.c.l.s4 1966171168
      %v3813 = vunpack.c.0.s8 %v3812
      %v3814 = vlaneseq
      %v3815 = vshrl.u32 %v3814, 7
      %v3816 = vsub.s32 %v3813, %v3815
      %v3817 = vrot.slane %v3789, %v3816
      %v3818 = vcombine.high %v3796, %v3796
      %v3819 = vcombine.high %v3803, %v3803
      %v3820 = vcombine.high %v3810, %v3810
      %v3821 = vcombine.high %v3817, %v3817
      %v3823 = vunpack.c.l.s4 1966171168
      %v3824 = vunpack.c.0.s8 %v3823
      %v3825 = vlaneseq
      %v3826 = vshrl.u32 %v3825, 7
      %v3827 = vsub.s32 %v3824, %v3826
      %v3828 = vrot.slane %v3714, %v3827
      %v3830 = vunpack.c.l.s4 1966171168
      %v3831 = vunpack.c.0.s8 %v3830
      %v3832 = vlaneseq
      %v3833 = vshrl.u32 %v3832, 7
      %v3834 = vsub.s32 %v3831, %v3833
      %v3835 = vrot.slane %v3828, %v3834
      %v3836 = vcombine.high %v3715, %v3715
      %v3838 = vunpack.c.l.s4 1966171168
      %v3839 = vunpack.c.0.s8 %v3838
      %v3840 = vlaneseq
      %v3841 = vshrl.u32 %v3840, 7
      %v3842 = vsub.s32 %v3839, %v3841
      %v3843 = vrot.slane %v3715, %v3842
      %v3845 = vunpack.c.l.s4 1966171168
      %v3846 = vunpack.c.0.s8 %v3845
      %v3847 = vlaneseq
      %v3848 = vshrl.u32 %v3847, 7
      %v3849 = vsub.s32 %v3846, %v3848
      %v3850 = vrot.slane %v3836, %v3849
      %v3851 = vcombine.high %v3843, %v3843
      %v3852 = vcombine.high %v3850, %v3850
      %v3854 = vunpack.c.l.s4 1966171168
      %v3855 = vunpack.c.0.s8 %v3854
      %v3856 = vlaneseq
      %v3857 = vshrl.u32 %v3856, 7
      %v3858 = vsub.s32 %v3855, %v3857
      %v3859 = vrot.slane %v3843, %v3858
      %v3861 = vunpack.c.l.s4 1966171168
      %v3862 = vunpack.c.0.s8 %v3861
      %v3863 = vlaneseq
      %v3864 = vshrl.u32 %v3863, 7
      %v3865 = vsub.s32 %v3862, %v3864
      %v3866 = vrot.slane %v3850, %v3865
      %v3868 = vunpack.c.l.s4 1966171168
      %v3869 = vunpack.c.0.s8 %v3868
      %v3870 = vlaneseq
      %v3871 = vshrl.u32 %v3870, 7
      %v3872 = vsub.s32 %v3869, %v3871
      %v3873 = vrot.slane %v3851, %v3872
      %v3875 = vunpack.c.l.s4 1966171168
      %v3876 = vunpack.c.0.s8 %v3875
      %v3877 = vlaneseq
      %v3878 = vshrl.u32 %v3877, 7
      %v3879 = vsub.s32 %v3876, %v3878
      %v3880 = vrot.slane %v3852, %v3879
      %v3881 = vcombine.high %v3859, %v3859
      %v3882 = vcombine.high %v3866, %v3866
      %v3883 = vcombine.high %v3873, %v3873
      %v3884 = vcombine.high %v3880, %v3880
      %v3885 = vcombine.high %v3716, %v3716
      %v3887 = vunpack.c.l.s4 1966171168
      %v3888 = vunpack.c.0.s8 %v3887
      %v3889 = vlaneseq
      %v3890 = vshrl.u32 %v3889, 7
      %v3891 = vsub.s32 %v3888, %v3890
      %v3892 = vrot.slane %v3716, %v3891
      %v3894 = vunpack.c.l.s4 1966171168
      %v3895 = vunpack.c.0.s8 %v3894
      %v3896 = vlaneseq
      %v3897 = vshrl.u32 %v3896, 7
      %v3898 = vsub.s32 %v3895, %v3897
      %v3899 = vrot.slane %v3885, %v3898
      %v3900 = vcombine.high %v3892, %v3892
      %v3901 = vcombine.high %v3899, %v3899
      %v3903 = vunpack.c.l.s4 1966171168
      %v3904 = vunpack.c.0.s8 %v3903
      %v3905 = vlaneseq
      %v3906 = vshrl.u32 %v3905, 7
      %v3907 = vsub.s32 %v3904, %v3906
      %v3908 = vrot.slane %v3892, %v3907
      %v3910 = vunpack.c.l.s4 1966171168
      %v3911 = vunpack.c.0.s8 %v3910
      %v3912 = vlaneseq
      %v3913 = vshrl.u32 %v3912, 7
      %v3914 = vsub.s32 %v3911, %v3913
      %v3915 = vrot.slane %v3899, %v3914
      %v3917 = vunpack.c.l.s4 1966171168
      %v3918 = vunpack.c.0.s8 %v3917
      %v3919 = vlaneseq
      %v3920 = vshrl.u32 %v3919, 7
      %v3921 = vsub.s32 %v3918, %v3920
      %v3922 = vrot.slane %v3900, %v3921
      %v3924 = vunpack.c.l.s4 1966171168
      %v3925 = vunpack.c.0.s8 %v3924
      %v3926 = vlaneseq
      %v3927 = vshrl.u32 %v3926, 7
      %v3928 = vsub.s32 %v3925, %v3927
      %v3929 = vrot.slane %v3901, %v3928
      %v3930 = vcombine.high %v3908, %v3908
      %v3931 = vcombine.high %v3915, %v3915
      %v3932 = vcombine.high %v3922, %v3922
      %v3933 = vcombine.high %v3929, %v3929
      %v3935 = vunpack.c.l.s4 1966171168
      %v3936 = vunpack.c.0.s8 %v3935
      %v3937 = vlaneseq
      %v3938 = vshrl.u32 %v3937, 7
      %v3939 = vsub.s32 %v3936, %v3938
      %v3940 = vrot.slane %v3717, %v3939
      %v3942 = vunpack.c.l.s4 1966171168
      %v3943 = vunpack.c.0.s8 %v3942
      %v3944 = vlaneseq
      %v3945 = vshrl.u32 %v3944, 7
      %v3946 = vsub.s32 %v3943, %v3945
      %v3947 = vrot.slane %v3940, %v3946
      %v3982 = vld [vmem:[%s612] sm:$0x1]
      %v3983 = vld [vmem:[%s615] sm:$0x1]
      %v3984 = vcombine.low %v3747, %v3761
      %v3985 = vcombine.low %v3769, %v3771
      %v3986 = vcombine.low %v3754, %v3768
      %v3987 = vcombine.low %v3770, %v3772
      %v3989 = vunpack.c.l.s4 1966171168
      %v3990 = vunpack.c.0.s8 %v3989
      %v3991 = vlaneseq
      %v3992 = vshrl.u32 %v3991, 7
      %v3993 = vsub.s32 %v3990, %v3992
      %v3994 = vrot.slane %v3984, %v3993
      %v3996 = vunpack.c.l.s4 1966171168
      %v3997 = vunpack.c.0.s8 %v3996
      %v3998 = vlaneseq
      %v3999 = vshrl.u32 %v3998, 7
      %v4000 = vsub.s32 %v3997, %v3999
      %v4001 = vrot.slane %v3985, %v4000
      %v4003 = vunpack.c.l.s4 1966171168
      %v4004 = vunpack.c.0.s8 %v4003
      %v4005 = vlaneseq
      %v4006 = vshrl.u32 %v4005, 7
      %v4007 = vsub.s32 %v4004, %v4006
      %v4008 = vrot.slane %v3986, %v4007
      %v4010 = vunpack.c.l.s4 1966171168
      %v4011 = vunpack.c.0.s8 %v4010
      %v4012 = vlaneseq
      %v4013 = vshrl.u32 %v4012, 7
      %v4014 = vsub.s32 %v4011, %v4013
      %v4015 = vrot.slane %v3987, %v4014
      %v4016 = vcombine.low %v3994, %v4001
      %v4017 = vcombine.low %v4008, %v4015
      %v4019 = vunpack.c.l.s4 1966171168
      %v4020 = vunpack.c.0.s8 %v4019
      %v4021 = vlaneseq
      %v4022 = vshrl.u32 %v4021, 7
      %v4023 = vsub.s32 %v4020, %v4022
      %v4024 = vrot.slane %v4016, %v4023
      %v4026 = vunpack.c.l.s4 1966171168
      %v4027 = vunpack.c.0.s8 %v4026
      %v4028 = vlaneseq
      %v4029 = vshrl.u32 %v4028, 7
      %v4030 = vsub.s32 %v4027, %v4029
      %v4031 = vrot.slane %v4017, %v4030
      %v4032 = vcombine.low %v4024, %v4031
      %v4033 = vcombine.low %v3796, %v3810
      %v4034 = vcombine.low %v3818, %v3820
      %v4035 = vcombine.low %v3803, %v3817
      %v4036 = vcombine.low %v3819, %v3821
      %v4038 = vunpack.c.l.s4 1966171168
      %v4039 = vunpack.c.0.s8 %v4038
      %v4040 = vlaneseq
      %v4041 = vshrl.u32 %v4040, 7
      %v4042 = vsub.s32 %v4039, %v4041
      %v4043 = vrot.slane %v4033, %v4042
      %v4045 = vunpack.c.l.s4 1966171168
      %v4046 = vunpack.c.0.s8 %v4045
      %v4047 = vlaneseq
      %v4048 = vshrl.u32 %v4047, 7
      %v4049 = vsub.s32 %v4046, %v4048
      %v4050 = vrot.slane %v4034, %v4049
      %v4052 = vunpack.c.l.s4 1966171168
      %v4053 = vunpack.c.0.s8 %v4052
      %v4054 = vlaneseq
      %v4055 = vshrl.u32 %v4054, 7
      %v4056 = vsub.s32 %v4053, %v4055
      %v4057 = vrot.slane %v4035, %v4056
      %v4059 = vunpack.c.l.s4 1966171168
      %v4060 = vunpack.c.0.s8 %v4059
      %v4061 = vlaneseq
      %v4062 = vshrl.u32 %v4061, 7
      %v4063 = vsub.s32 %v4060, %v4062
      %v4064 = vrot.slane %v4036, %v4063
      %v4065 = vcombine.low %v4043, %v4050
      %v4066 = vcombine.low %v4057, %v4064
      %v4068 = vunpack.c.l.s4 1966171168
      %v4069 = vunpack.c.0.s8 %v4068
      %v4070 = vlaneseq
      %v4071 = vshrl.u32 %v4070, 7
      %v4072 = vsub.s32 %v4069, %v4071
      %v4073 = vrot.slane %v4065, %v4072
      %v4075 = vunpack.c.l.s4 1966171168
      %v4076 = vunpack.c.0.s8 %v4075
      %v4077 = vlaneseq
      %v4078 = vshrl.u32 %v4077, 7
      %v4079 = vsub.s32 %v4076, %v4078
      %v4080 = vrot.slane %v4066, %v4079
      %v4081 = vcombine.low %v4073, %v4080
      %v4082 = vcombine.low %v3835, %v3859
      %v4083 = vcombine.low %v3873, %v3881
      %v4084 = vcombine.low %v3883, %v3866
      %v4085 = vcombine.low %v3880, %v3882
      %v4087 = vunpack.c.l.s4 1966171168
      %v4088 = vunpack.c.0.s8 %v4087
      %v4089 = vlaneseq
      %v4090 = vshrl.u32 %v4089, 7
      %v4091 = vsub.s32 %v4088, %v4090
      %v4092 = vrot.slane %v4082, %v4091
      %v4094 = vunpack.c.l.s4 1966171168
      %v4095 = vunpack.c.0.s8 %v4094
      %v4096 = vlaneseq
      %v4097 = vshrl.u32 %v4096, 7
      %v4098 = vsub.s32 %v4095, %v4097
      %v4099 = vrot.slane %v4083, %v4098
      %v4101 = vunpack.c.l.s4 1966171168
      %v4102 = vunpack.c.0.s8 %v4101
      %v4103 = vlaneseq
      %v4104 = vshrl.u32 %v4103, 7
      %v4105 = vsub.s32 %v4102, %v4104
      %v4106 = vrot.slane %v4084, %v4105
      %v4108 = vunpack.c.l.s4 1966171168
      %v4109 = vunpack.c.0.s8 %v4108
      %v4110 = vlaneseq
      %v4111 = vshrl.u32 %v4110, 7
      %v4112 = vsub.s32 %v4109, %v4111
      %v4113 = vrot.slane %v4085, %v4112
      %v4114 = vcombine.low %v4092, %v4099
      %v4115 = vcombine.low %v4106, %v4113
      %v4117 = vunpack.c.l.s4 1966171168
      %v4118 = vunpack.c.0.s8 %v4117
      %v4119 = vlaneseq
      %v4120 = vshrl.u32 %v4119, 7
      %v4121 = vsub.s32 %v4118, %v4120
      %v4122 = vrot.slane %v4114, %v4121
      %v4124 = vunpack.c.l.s4 1966171168
      %v4125 = vunpack.c.0.s8 %v4124
      %v4126 = vlaneseq
      %v4127 = vshrl.u32 %v4126, 7
      %v4128 = vsub.s32 %v4125, %v4127
      %v4129 = vrot.slane %v4115, %v4128
      %v4130 = vcombine.low %v4122, %v4129
      %v4131 = vcombine.low %v3884, %v3908
      %v4132 = vcombine.low %v3922, %v3930
      %v4133 = vcombine.low %v3932, %v3915
      %v4134 = vcombine.low %v3929, %v3931
      %v4136 = vunpack.c.l.s4 1966171168
      %v4137 = vunpack.c.0.s8 %v4136
      %v4138 = vlaneseq
      %v4139 = vshrl.u32 %v4138, 7
      %v4140 = vsub.s32 %v4137, %v4139
      %v4141 = vrot.slane %v4131, %v4140
      %v4143 = vunpack.c.l.s4 1966171168
      %v4144 = vunpack.c.0.s8 %v4143
      %v4145 = vlaneseq
      %v4146 = vshrl.u32 %v4145, 7
      %v4147 = vsub.s32 %v4144, %v4146
      %v4148 = vrot.slane %v4132, %v4147
      %v4150 = vunpack.c.l.s4 1966171168
      %v4151 = vunpack.c.0.s8 %v4150
      %v4152 = vlaneseq
      %v4153 = vshrl.u32 %v4152, 7
      %v4154 = vsub.s32 %v4151, %v4153
      %v4155 = vrot.slane %v4133, %v4154
      %v4157 = vunpack.c.l.s4 1966171168
      %v4158 = vunpack.c.0.s8 %v4157
      %v4159 = vlaneseq
      %v4160 = vshrl.u32 %v4159, 7
      %v4161 = vsub.s32 %v4158, %v4160
      %v4162 = vrot.slane %v4134, %v4161
      %v4163 = vcombine.low %v4141, %v4148
      %v4164 = vcombine.low %v4155, %v4162
      %v4166 = vunpack.c.l.s4 1966171168
      %v4167 = vunpack.c.0.s8 %v4166
      %v4168 = vlaneseq
      %v4169 = vshrl.u32 %v4168, 7
      %v4170 = vsub.s32 %v4167, %v4169
      %v4171 = vrot.slane %v4163, %v4170
      %v4173 = vunpack.c.l.s4 1966171168
      %v4174 = vunpack.c.0.s8 %v4173
      %v4175 = vlaneseq
      %v4176 = vshrl.u32 %v4175, 7
      %v4177 = vsub.s32 %v4174, %v4176
      %v4178 = vrot.slane %v4164, %v4177
      %v4179 = vcombine.low %v4171, %v4178
      %v4180 = vcombine.low %v3933, %v3947
      %v4182 = vunpack.c.l.s4 1966171168
      %v4183 = vunpack.c.0.s8 %v4182
      %v4184 = vlaneseq
      %v4185 = vshrl.u32 %v4184, 7
      %v4186 = vsub.s32 %v4183, %v4185
      %v4187 = vrot.slane %v4180, %v4186
      %v4189 = vunpack.c.l.s4 1966171168
      %v4190 = vunpack.c.0.s8 %v4189
      %v4191 = vlaneseq
      %v4192 = vshrl.u32 %v4191, 7
      %v4193 = vsub.s32 %v4190, %v4192
      %v4194 = vrot.slane %v4187, %v4193
      %v4200 = vsel %vm1274, %v4032, 0.0
      %4201 = vadd.xlane.f32.xlu0 %v4200
      %v4202 = vpop.xlane.xlu0 %4201
      %v4203 = vsel %vm1274, %v4081, 0.0
      %4204 = vadd.xlane.f32.xlu0 %v4203
      %v4205 = vpop.xlane.xlu0 %4204
      %v4206 = vsel %vm1274, %v4130, 0.0
      %4207 = vadd.xlane.f32.xlu0 %v4206
      %v4208 = vpop.xlane.xlu0 %4207
      %v4209 = vsel %vm1274, %v4179, 0.0
      %4210 = vadd.xlane.f32.xlu0 %v4209
      %v4211 = vpop.xlane.xlu0 %4210
      %v4212 = vsel %vm1287, %v4194, 0.0
      %4213 = vadd.xlane.f32.xlu0 %v4212
      %v4214 = vpop.xlane.xlu0 %4213
      %v4215 = vmul.f32 %v4202, %v1291
      %v4216 = vmul.f32 %v4205, %v1291
      %v4217 = vmul.f32 %v4208, %v1291
      %v4218 = vmul.f32 %v4211, %v1291
      %v4219 = vmul.f32 %v4214, %v1291
      %v4225 = vlaneseq
      %v4226 = vshrl.u32 %v4225, 7
      %v4227 = vsub.s32 0, %v4226
      %v4228 = vrot.slane %v4215, %v4227
      %v4229 = vlaneseq
      %v4230 = vshrl.u32 %v4229, 7
      %v4231 = vsub.s32 1, %v4230
      %v4232 = vrot.slane %v4215, %v4231
      %v4233 = vlaneseq
      %v4234 = vshrl.u32 %v4233, 7
      %v4235 = vsub.s32 2, %v4234
      %v4236 = vrot.slane %v4215, %v4235
      %v4237 = vlaneseq
      %v4238 = vshrl.u32 %v4237, 7
      %v4239 = vsub.s32 3, %v4238
      %v4240 = vrot.slane %v4215, %v4239
      %v4241 = vlaneseq
      %v4242 = vshrl.u32 %v4241, 7
      %v4243 = vsub.s32 4, %v4242
      %v4244 = vrot.slane %v4215, %v4243
      %v4245 = vlaneseq
      %v4246 = vshrl.u32 %v4245, 7
      %v4247 = vsub.s32 5, %v4246
      %v4248 = vrot.slane %v4215, %v4247
      %v4249 = vlaneseq
      %v4250 = vshrl.u32 %v4249, 7
      %v4251 = vsub.s32 6, %v4250
      %v4252 = vrot.slane %v4215, %v4251
      %v4253 = vlaneseq
      %v4254 = vshrl.u32 %v4253, 7
      %v4255 = vsub.s32 7, %v4254
      %v4256 = vrot.slane %v4215, %v4255
      %v4257 = vlaneseq
      %v4258 = vshrl.u32 %v4257, 7
      %v4259 = vsub.s32 0, %v4258
      %v4260 = vrot.slane %v4216, %v4259
      %v4261 = vlaneseq
      %v4262 = vshrl.u32 %v4261, 7
      %v4263 = vsub.s32 1, %v4262
      %v4264 = vrot.slane %v4216, %v4263
      %v4265 = vlaneseq
      %v4266 = vshrl.u32 %v4265, 7
      %v4267 = vsub.s32 2, %v4266
      %v4268 = vrot.slane %v4216, %v4267
      %v4269 = vlaneseq
      %v4270 = vshrl.u32 %v4269, 7
      %v4271 = vsub.s32 3, %v4270
      %v4272 = vrot.slane %v4216, %v4271
      %v4273 = vlaneseq
      %v4274 = vshrl.u32 %v4273, 7
      %v4275 = vsub.s32 4, %v4274
      %v4276 = vrot.slane %v4216, %v4275
      %v4277 = vlaneseq
      %v4278 = vshrl.u32 %v4277, 7
      %v4279 = vsub.s32 5, %v4278
      %v4280 = vrot.slane %v4216, %v4279
      %v4281 = vlaneseq
      %v4282 = vshrl.u32 %v4281, 7
      %v4283 = vsub.s32 6, %v4282
      %v4284 = vrot.slane %v4216, %v4283
      %v4285 = vlaneseq
      %v4286 = vshrl.u32 %v4285, 7
      %v4287 = vsub.s32 7, %v4286
      %v4288 = vrot.slane %v4216, %v4287
      %v4289 = vlaneseq
      %v4290 = vshrl.u32 %v4289, 7
      %v4291 = vsub.s32 0, %v4290
      %v4292 = vrot.slane %v4217, %v4291
      %v4293 = vlaneseq
      %v4294 = vshrl.u32 %v4293, 7
      %v4295 = vsub.s32 1, %v4294
      %v4296 = vrot.slane %v4217, %v4295
      %v4297 = vlaneseq
      %v4298 = vshrl.u32 %v4297, 7
      %v4299 = vsub.s32 2, %v4298
      %v4300 = vrot.slane %v4217, %v4299
      %v4301 = vlaneseq
      %v4302 = vshrl.u32 %v4301, 7
      %v4303 = vsub.s32 3, %v4302
      %v4304 = vrot.slane %v4217, %v4303
      %v4305 = vlaneseq
      %v4306 = vshrl.u32 %v4305, 7
      %v4307 = vsub.s32 4, %v4306
      %v4308 = vrot.slane %v4217, %v4307
      %v4309 = vlaneseq
      %v4310 = vshrl.u32 %v4309, 7
      %v4311 = vsub.s32 5, %v4310
      %v4312 = vrot.slane %v4217, %v4311
      %v4313 = vlaneseq
      %v4314 = vshrl.u32 %v4313, 7
      %v4315 = vsub.s32 6, %v4314
      %v4316 = vrot.slane %v4217, %v4315
      %v4317 = vlaneseq
      %v4318 = vshrl.u32 %v4317, 7
      %v4319 = vsub.s32 7, %v4318
      %v4320 = vrot.slane %v4217, %v4319
      %v4321 = vlaneseq
      %v4322 = vshrl.u32 %v4321, 7
      %v4323 = vsub.s32 0, %v4322
      %v4324 = vrot.slane %v4218, %v4323
      %v4325 = vlaneseq
      %v4326 = vshrl.u32 %v4325, 7
      %v4327 = vsub.s32 1, %v4326
      %v4328 = vrot.slane %v4218, %v4327
      %v4329 = vlaneseq
      %v4330 = vshrl.u32 %v4329, 7
      %v4331 = vsub.s32 2, %v4330
      %v4332 = vrot.slane %v4218, %v4331
      %v4333 = vlaneseq
      %v4334 = vshrl.u32 %v4333, 7
      %v4335 = vsub.s32 3, %v4334
      %v4336 = vrot.slane %v4218, %v4335
      %v4337 = vlaneseq
      %v4338 = vshrl.u32 %v4337, 7
      %v4339 = vsub.s32 4, %v4338
      %v4340 = vrot.slane %v4218, %v4339
      %v4341 = vlaneseq
      %v4342 = vshrl.u32 %v4341, 7
      %v4343 = vsub.s32 5, %v4342
      %v4344 = vrot.slane %v4218, %v4343
      %v4345 = vlaneseq
      %v4346 = vshrl.u32 %v4345, 7
      %v4347 = vsub.s32 6, %v4346
      %v4348 = vrot.slane %v4218, %v4347
      %v4349 = vlaneseq
      %v4350 = vshrl.u32 %v4349, 7
      %v4351 = vsub.s32 7, %v4350
      %v4352 = vrot.slane %v4218, %v4351
      %v4353 = vlaneseq
      %v4354 = vshrl.u32 %v4353, 7
      %v4355 = vsub.s32 0, %v4354
      %v4356 = vrot.slane %v4219, %v4355
      %v4357 = vlaneseq
      %v4358 = vshrl.u32 %v4357, 7
      %v4359 = vsub.s32 1, %v4358
      %v4360 = vrot.slane %v4219, %v4359
      %v4395 = vsub.f32 %v3747, %v4228
      %v4396 = vsub.f32 %v3761, %v4232
      %v4397 = vsub.f32 %v3769, %v4236
      %v4398 = vsub.f32 %v3771, %v4240
      %v4399 = vsub.f32 %v3754, %v4244
      %v4400 = vsub.f32 %v3768, %v4248
      %v4401 = vsub.f32 %v3770, %v4252
      %v4402 = vsub.f32 %v3772, %v4256
      %v4403 = vsub.f32 %v3796, %v4260
      %v4404 = vsub.f32 %v3810, %v4264
      %v4405 = vsub.f32 %v3818, %v4268
      %v4406 = vsub.f32 %v3820, %v4272
      %v4407 = vsub.f32 %v3803, %v4276
      %v4408 = vsub.f32 %v3817, %v4280
      %v4409 = vsub.f32 %v3819, %v4284
      %v4410 = vsub.f32 %v3821, %v4288
      %v4411 = vsub.f32 %v3835, %v4292
      %v4412 = vsub.f32 %v3859, %v4296
      %v4413 = vsub.f32 %v3873, %v4300
      %v4414 = vsub.f32 %v3881, %v4304
      %v4415 = vsub.f32 %v3883, %v4308
      %v4416 = vsub.f32 %v3866, %v4312
      %v4417 = vsub.f32 %v3880, %v4316
      %v4418 = vsub.f32 %v3882, %v4320
      %v4419 = vsub.f32 %v3884, %v4324
      %v4420 = vsub.f32 %v3908, %v4328
      %v4421 = vsub.f32 %v3922, %v4332
      %v4422 = vsub.f32 %v3930, %v4336
      %v4423 = vsub.f32 %v3932, %v4340
      %v4424 = vsub.f32 %v3915, %v4344
      %v4425 = vsub.f32 %v3929, %v4348
      %v4426 = vsub.f32 %v3931, %v4352
      %v4427 = vsub.f32 %v3933, %v4356
      %v4428 = vsub.f32 %v3947, %v4360
      %v4429 = vmul.f32 %v4395, %v4395
      %v4430 = vmul.f32 %v4396, %v4396
      %v4431 = vmul.f32 %v4397, %v4397
      %v4432 = vmul.f32 %v4398, %v4398
      %v4433 = vmul.f32 %v4399, %v4399
      %v4434 = vmul.f32 %v4400, %v4400
      %v4435 = vmul.f32 %v4401, %v4401
      %v4436 = vmul.f32 %v4402, %v4402
      %v4437 = vmul.f32 %v4403, %v4403
      %v4438 = vmul.f32 %v4404, %v4404
      %v4439 = vmul.f32 %v4405, %v4405
      %v4440 = vmul.f32 %v4406, %v4406
      %v4441 = vmul.f32 %v4407, %v4407
      %v4442 = vmul.f32 %v4408, %v4408
      %v4443 = vmul.f32 %v4409, %v4409
      %v4444 = vmul.f32 %v4410, %v4410
      %v4445 = vmul.f32 %v4411, %v4411
      %v4446 = vmul.f32 %v4412, %v4412
      %v4447 = vmul.f32 %v4413, %v4413
      %v4448 = vmul.f32 %v4414, %v4414
      %v4449 = vmul.f32 %v4415, %v4415
      %v4450 = vmul.f32 %v4416, %v4416
      %v4451 = vmul.f32 %v4417, %v4417
      %v4452 = vmul.f32 %v4418, %v4418
      %v4453 = vmul.f32 %v4419, %v4419
      %v4454 = vmul.f32 %v4420, %v4420
      %v4455 = vmul.f32 %v4421, %v4421
      %v4456 = vmul.f32 %v4422, %v4422
      %v4457 = vmul.f32 %v4423, %v4423
      %v4458 = vmul.f32 %v4424, %v4424
      %v4459 = vmul.f32 %v4425, %v4425
      %v4460 = vmul.f32 %v4426, %v4426
      %v4461 = vmul.f32 %v4427, %v4427
      %v4462 = vmul.f32 %v4428, %v4428
      %v4497 = vcombine.low %v4429, %v4430
      %v4498 = vcombine.low %v4431, %v4432
      %v4499 = vcombine.low %v4433, %v4434
      %v4500 = vcombine.low %v4435, %v4436
      %v4502 = vunpack.c.l.s4 1966171168
      %v4503 = vunpack.c.0.s8 %v4502
      %v4504 = vlaneseq
      %v4505 = vshrl.u32 %v4504, 7
      %v4506 = vsub.s32 %v4503, %v4505
      %v4507 = vrot.slane %v4497, %v4506
      %v4509 = vunpack.c.l.s4 1966171168
      %v4510 = vunpack.c.0.s8 %v4509
      %v4511 = vlaneseq
      %v4512 = vshrl.u32 %v4511, 7
      %v4513 = vsub.s32 %v4510, %v4512
      %v4514 = vrot.slane %v4498, %v4513
      %v4516 = vunpack.c.l.s4 1966171168
      %v4517 = vunpack.c.0.s8 %v4516
      %v4518 = vlaneseq
      %v4519 = vshrl.u32 %v4518, 7
      %v4520 = vsub.s32 %v4517, %v4519
      %v4521 = vrot.slane %v4499, %v4520
      %v4523 = vunpack.c.l.s4 1966171168
      %v4524 = vunpack.c.0.s8 %v4523
      %v4525 = vlaneseq
      %v4526 = vshrl.u32 %v4525, 7
      %v4527 = vsub.s32 %v4524, %v4526
      %v4528 = vrot.slane %v4500, %v4527
      %v4529 = vcombine.low %v4507, %v4514
      %v4530 = vcombine.low %v4521, %v4528
      %v4532 = vunpack.c.l.s4 1966171168
      %v4533 = vunpack.c.0.s8 %v4532
      %v4534 = vlaneseq
      %v4535 = vshrl.u32 %v4534, 7
      %v4536 = vsub.s32 %v4533, %v4535
      %v4537 = vrot.slane %v4529, %v4536
      %v4539 = vunpack.c.l.s4 1966171168
      %v4540 = vunpack.c.0.s8 %v4539
      %v4541 = vlaneseq
      %v4542 = vshrl.u32 %v4541, 7
      %v4543 = vsub.s32 %v4540, %v4542
      %v4544 = vrot.slane %v4530, %v4543
      %v4545 = vcombine.low %v4537, %v4544
      %v4546 = vcombine.low %v4437, %v4438
      %v4547 = vcombine.low %v4439, %v4440
      %v4548 = vcombine.low %v4441, %v4442
      %v4549 = vcombine.low %v4443, %v4444
      %v4551 = vunpack.c.l.s4 1966171168
      %v4552 = vunpack.c.0.s8 %v4551
      %v4553 = vlaneseq
      %v4554 = vshrl.u32 %v4553, 7
      %v4555 = vsub.s32 %v4552, %v4554
      %v4556 = vrot.slane %v4546, %v4555
      %v4558 = vunpack.c.l.s4 1966171168
      %v4559 = vunpack.c.0.s8 %v4558
      %v4560 = vlaneseq
      %v4561 = vshrl.u32 %v4560, 7
      %v4562 = vsub.s32 %v4559, %v4561
      %v4563 = vrot.slane %v4547, %v4562
      %v4565 = vunpack.c.l.s4 1966171168
      %v4566 = vunpack.c.0.s8 %v4565
      %v4567 = vlaneseq
      %v4568 = vshrl.u32 %v4567, 7
      %v4569 = vsub.s32 %v4566, %v4568
      %v4570 = vrot.slane %v4548, %v4569
      %v4572 = vunpack.c.l.s4 1966171168
      %v4573 = vunpack.c.0.s8 %v4572
      %v4574 = vlaneseq
      %v4575 = vshrl.u32 %v4574, 7
      %v4576 = vsub.s32 %v4573, %v4575
      %v4577 = vrot.slane %v4549, %v4576
      %v4578 = vcombine.low %v4556, %v4563
      %v4579 = vcombine.low %v4570, %v4577
      %v4581 = vunpack.c.l.s4 1966171168
      %v4582 = vunpack.c.0.s8 %v4581
      %v4583 = vlaneseq
      %v4584 = vshrl.u32 %v4583, 7
      %v4585 = vsub.s32 %v4582, %v4584
      %v4586 = vrot.slane %v4578, %v4585
      %v4588 = vunpack.c.l.s4 1966171168
      %v4589 = vunpack.c.0.s8 %v4588
      %v4590 = vlaneseq
      %v4591 = vshrl.u32 %v4590, 7
      %v4592 = vsub.s32 %v4589, %v4591
      %v4593 = vrot.slane %v4579, %v4592
      %v4594 = vcombine.low %v4586, %v4593
      %v4595 = vcombine.low %v4445, %v4446
      %v4596 = vcombine.low %v4447, %v4448
      %v4597 = vcombine.low %v4449, %v4450
      %v4598 = vcombine.low %v4451, %v4452
      %v4600 = vunpack.c.l.s4 1966171168
      %v4601 = vunpack.c.0.s8 %v4600
      %v4602 = vlaneseq
      %v4603 = vshrl.u32 %v4602, 7
      %v4604 = vsub.s32 %v4601, %v4603
      %v4605 = vrot.slane %v4595, %v4604
      %v4607 = vunpack.c.l.s4 1966171168
      %v4608 = vunpack.c.0.s8 %v4607
      %v4609 = vlaneseq
      %v4610 = vshrl.u32 %v4609, 7
      %v4611 = vsub.s32 %v4608, %v4610
      %v4612 = vrot.slane %v4596, %v4611
      %v4614 = vunpack.c.l.s4 1966171168
      %v4615 = vunpack.c.0.s8 %v4614
      %v4616 = vlaneseq
      %v4617 = vshrl.u32 %v4616, 7
      %v4618 = vsub.s32 %v4615, %v4617
      %v4619 = vrot.slane %v4597, %v4618
      %v4621 = vunpack.c.l.s4 1966171168
      %v4622 = vunpack.c.0.s8 %v4621
      %v4623 = vlaneseq
      %v4624 = vshrl.u32 %v4623, 7
      %v4625 = vsub.s32 %v4622, %v4624
      %v4626 = vrot.slane %v4598, %v4625
      %v4627 = vcombine.low %v4605, %v4612
      %v4628 = vcombine.low %v4619, %v4626
      %v4630 = vunpack.c.l.s4 1966171168
      %v4631 = vunpack.c.0.s8 %v4630
      %v4632 = vlaneseq
      %v4633 = vshrl.u32 %v4632, 7
      %v4634 = vsub.s32 %v4631, %v4633
      %v4635 = vrot.slane %v4627, %v4634
      %v4637 = vunpack.c.l.s4 1966171168
      %v4638 = vunpack.c.0.s8 %v4637
      %v4639 = vlaneseq
      %v4640 = vshrl.u32 %v4639, 7
      %v4641 = vsub.s32 %v4638, %v4640
      %v4642 = vrot.slane %v4628, %v4641
      %v4643 = vcombine.low %v4635, %v4642
      %v4644 = vcombine.low %v4453, %v4454
      %v4645 = vcombine.low %v4455, %v4456
      %v4646 = vcombine.low %v4457, %v4458
      %v4647 = vcombine.low %v4459, %v4460
      %v4649 = vunpack.c.l.s4 1966171168
      %v4650 = vunpack.c.0.s8 %v4649
      %v4651 = vlaneseq
      %v4652 = vshrl.u32 %v4651, 7
      %v4653 = vsub.s32 %v4650, %v4652
      %v4654 = vrot.slane %v4644, %v4653
      %v4656 = vunpack.c.l.s4 1966171168
      %v4657 = vunpack.c.0.s8 %v4656
      %v4658 = vlaneseq
      %v4659 = vshrl.u32 %v4658, 7
      %v4660 = vsub.s32 %v4657, %v4659
      %v4661 = vrot.slane %v4645, %v4660
      %v4663 = vunpack.c.l.s4 1966171168
      %v4664 = vunpack.c.0.s8 %v4663
      %v4665 = vlaneseq
      %v4666 = vshrl.u32 %v4665, 7
      %v4667 = vsub.s32 %v4664, %v4666
      %v4668 = vrot.slane %v4646, %v4667
      %v4670 = vunpack.c.l.s4 1966171168
      %v4671 = vunpack.c.0.s8 %v4670
      %v4672 = vlaneseq
      %v4673 = vshrl.u32 %v4672, 7
      %v4674 = vsub.s32 %v4671, %v4673
      %v4675 = vrot.slane %v4647, %v4674
      %v4676 = vcombine.low %v4654, %v4661
      %v4677 = vcombine.low %v4668, %v4675
      %v4679 = vunpack.c.l.s4 1966171168
      %v4680 = vunpack.c.0.s8 %v4679
      %v4681 = vlaneseq
      %v4682 = vshrl.u32 %v4681, 7
      %v4683 = vsub.s32 %v4680, %v4682
      %v4684 = vrot.slane %v4676, %v4683
      %v4686 = vunpack.c.l.s4 1966171168
      %v4687 = vunpack.c.0.s8 %v4686
      %v4688 = vlaneseq
      %v4689 = vshrl.u32 %v4688, 7
      %v4690 = vsub.s32 %v4687, %v4689
      %v4691 = vrot.slane %v4677, %v4690
      %v4692 = vcombine.low %v4684, %v4691
      %v4693 = vcombine.low %v4461, %v4462
      %v4695 = vunpack.c.l.s4 1966171168
      %v4696 = vunpack.c.0.s8 %v4695
      %v4697 = vlaneseq
      %v4698 = vshrl.u32 %v4697, 7
      %v4699 = vsub.s32 %v4696, %v4698
      %v4700 = vrot.slane %v4693, %v4699
      %v4702 = vunpack.c.l.s4 1966171168
      %v4703 = vunpack.c.0.s8 %v4702
      %v4704 = vlaneseq
      %v4705 = vshrl.u32 %v4704, 7
      %v4706 = vsub.s32 %v4703, %v4705
      %v4707 = vrot.slane %v4700, %v4706
      %v4713 = vsel %vm1274, %v4545, 0.0
      %4714 = vadd.xlane.f32.xlu0 %v4713
      %v4715 = vpop.xlane.xlu0 %4714
      %v4716 = vsel %vm1274, %v4594, 0.0
      %4717 = vadd.xlane.f32.xlu0 %v4716
      %v4718 = vpop.xlane.xlu0 %4717
      %v4719 = vsel %vm1274, %v4643, 0.0
      %4720 = vadd.xlane.f32.xlu0 %v4719
      %v4721 = vpop.xlane.xlu0 %4720
      %v4722 = vsel %vm1274, %v4692, 0.0
      %4723 = vadd.xlane.f32.xlu0 %v4722
      %v4724 = vpop.xlane.xlu0 %4723
      %v4725 = vsel %vm1287, %v4707, 0.0
      %4726 = vadd.xlane.f32.xlu0 %v4725
      %v4727 = vpop.xlane.xlu0 %4726
      %v4728 = vmul.f32 %v4715, %v1291
      %v4729 = vmul.f32 %v4718, %v1291
      %v4730 = vmul.f32 %v4721, %v1291
      %v4731 = vmul.f32 %v4724, %v1291
      %v4732 = vmul.f32 %v4727, %v1291
      %v4733 = vadd.f32 %v4728, 1e-05
      %v4734 = vadd.f32 %v4729, 1e-05
      %v4735 = vadd.f32 %v4730, 1e-05
      %v4736 = vadd.f32 %v4731, 1e-05
      %v4737 = vadd.f32 %v4732, 1e-05
      %v4738 = vrsqrt.pop %v4733
      %v4739 = vrsqrt.pop %v4734
      %v4740 = vrsqrt.pop %v4735
      %v4741 = vrsqrt.pop %v4736
      %v4742 = vrsqrt.pop %v4737
      %v4748 = vlaneseq
      %v4749 = vshrl.u32 %v4748, 7
      %v4750 = vsub.s32 0, %v4749
      %v4751 = vrot.slane %v4738, %v4750
      %v4752 = vlaneseq
      %v4753 = vshrl.u32 %v4752, 7
      %v4754 = vsub.s32 1, %v4753
      %v4755 = vrot.slane %v4738, %v4754
      %v4756 = vlaneseq
      %v4757 = vshrl.u32 %v4756, 7
      %v4758 = vsub.s32 2, %v4757
      %v4759 = vrot.slane %v4738, %v4758
      %v4760 = vlaneseq
      %v4761 = vshrl.u32 %v4760, 7
      %v4762 = vsub.s32 3, %v4761
      %v4763 = vrot.slane %v4738, %v4762
      %v4764 = vlaneseq
      %v4765 = vshrl.u32 %v4764, 7
      %v4766 = vsub.s32 4, %v4765
      %v4767 = vrot.slane %v4738, %v4766
      %v4768 = vlaneseq
      %v4769 = vshrl.u32 %v4768, 7
      %v4770 = vsub.s32 5, %v4769
      %v4771 = vrot.slane %v4738, %v4770
      %v4772 = vlaneseq
      %v4773 = vshrl.u32 %v4772, 7
      %v4774 = vsub.s32 6, %v4773
      %v4775 = vrot.slane %v4738, %v4774
      %v4776 = vlaneseq
      %v4777 = vshrl.u32 %v4776, 7
      %v4778 = vsub.s32 7, %v4777
      %v4779 = vrot.slane %v4738, %v4778
      %v4780 = vlaneseq
      %v4781 = vshrl.u32 %v4780, 7
      %v4782 = vsub.s32 0, %v4781
      %v4783 = vrot.slane %v4739, %v4782
      %v4784 = vlaneseq
      %v4785 = vshrl.u32 %v4784, 7
      %v4786 = vsub.s32 1, %v4785
      %v4787 = vrot.slane %v4739, %v4786
      %v4788 = vlaneseq
      %v4789 = vshrl.u32 %v4788, 7
      %v4790 = vsub.s32 2, %v4789
      %v4791 = vrot.slane %v4739, %v4790
      %v4792 = vlaneseq
      %v4793 = vshrl.u32 %v4792, 7
      %v4794 = vsub.s32 3, %v4793
      %v4795 = vrot.slane %v4739, %v4794
      %v4796 = vlaneseq
      %v4797 = vshrl.u32 %v4796, 7
      %v4798 = vsub.s32 4, %v4797
      %v4799 = vrot.slane %v4739, %v4798
      %v4800 = vlaneseq
      %v4801 = vshrl.u32 %v4800, 7
      %v4802 = vsub.s32 5, %v4801
      %v4803 = vrot.slane %v4739, %v4802
      %v4804 = vlaneseq
      %v4805 = vshrl.u32 %v4804, 7
      %v4806 = vsub.s32 6, %v4805
      %v4807 = vrot.slane %v4739, %v4806
      %v4808 = vlaneseq
      %v4809 = vshrl.u32 %v4808, 7
      %v4810 = vsub.s32 7, %v4809
      %v4811 = vrot.slane %v4739, %v4810
      %v4812 = vlaneseq
      %v4813 = vshrl.u32 %v4812, 7
      %v4814 = vsub.s32 0, %v4813
      %v4815 = vrot.slane %v4740, %v4814
      %v4816 = vlaneseq
      %v4817 = vshrl.u32 %v4816, 7
      %v4818 = vsub.s32 1, %v4817
      %v4819 = vrot.slane %v4740, %v4818
      %v4820 = vlaneseq
      %v4821 = vshrl.u32 %v4820, 7
      %v4822 = vsub.s32 2, %v4821
      %v4823 = vrot.slane %v4740, %v4822
      %v4824 = vlaneseq
      %v4825 = vshrl.u32 %v4824, 7
      %v4826 = vsub.s32 3, %v4825
      %v4827 = vrot.slane %v4740, %v4826
      %v4828 = vlaneseq
      %v4829 = vshrl.u32 %v4828, 7
      %v4830 = vsub.s32 4, %v4829
      %v4831 = vrot.slane %v4740, %v4830
      %v4832 = vlaneseq
      %v4833 = vshrl.u32 %v4832, 7
      %v4834 = vsub.s32 5, %v4833
      %v4835 = vrot.slane %v4740, %v4834
      %v4836 = vlaneseq
      %v4837 = vshrl.u32 %v4836, 7
      %v4838 = vsub.s32 6, %v4837
      %v4839 = vrot.slane %v4740, %v4838
      %v4840 = vlaneseq
      %v4841 = vshrl.u32 %v4840, 7
      %v4842 = vsub.s32 7, %v4841
      %v4843 = vrot.slane %v4740, %v4842
      %v4844 = vlaneseq
      %v4845 = vshrl.u32 %v4844, 7
      %v4846 = vsub.s32 0, %v4845
      %v4847 = vrot.slane %v4741, %v4846
      %v4848 = vlaneseq
      %v4849 = vshrl.u32 %v4848, 7
      %v4850 = vsub.s32 1, %v4849
      %v4851 = vrot.slane %v4741, %v4850
      %v4852 = vlaneseq
      %v4853 = vshrl.u32 %v4852, 7
      %v4854 = vsub.s32 2, %v4853
      %v4855 = vrot.slane %v4741, %v4854
      %v4856 = vlaneseq
      %v4857 = vshrl.u32 %v4856, 7
      %v4858 = vsub.s32 3, %v4857
      %v4859 = vrot.slane %v4741, %v4858
      %v4860 = vlaneseq
      %v4861 = vshrl.u32 %v4860, 7
      %v4862 = vsub.s32 4, %v4861
      %v4863 = vrot.slane %v4741, %v4862
      %v4864 = vlaneseq
      %v4865 = vshrl.u32 %v4864, 7
      %v4866 = vsub.s32 5, %v4865
      %v4867 = vrot.slane %v4741, %v4866
      %v4868 = vlaneseq
      %v4869 = vshrl.u32 %v4868, 7
      %v4870 = vsub.s32 6, %v4869
      %v4871 = vrot.slane %v4741, %v4870
      %v4872 = vlaneseq
      %v4873 = vshrl.u32 %v4872, 7
      %v4874 = vsub.s32 7, %v4873
      %v4875 = vrot.slane %v4741, %v4874
      %v4876 = vlaneseq
      %v4877 = vshrl.u32 %v4876, 7
      %v4878 = vsub.s32 0, %v4877
      %v4879 = vrot.slane %v4742, %v4878
      %v4880 = vlaneseq
      %v4881 = vshrl.u32 %v4880, 7
      %v4882 = vsub.s32 1, %v4881
      %v4883 = vrot.slane %v4742, %v4882
      %v4918 = vmul.f32 %v4395, %v4751
      %v4919 = vmul.f32 %v4396, %v4755
      %v4920 = vmul.f32 %v4397, %v4759
      %v4921 = vmul.f32 %v4398, %v4763
      %v4922 = vmul.f32 %v4399, %v4767
      %v4923 = vmul.f32 %v4400, %v4771
      %v4924 = vmul.f32 %v4401, %v4775
      %v4925 = vmul.f32 %v4402, %v4779
      %v4926 = vmul.f32 %v4403, %v4783
      %v4927 = vmul.f32 %v4404, %v4787
      %v4928 = vmul.f32 %v4405, %v4791
      %v4929 = vmul.f32 %v4406, %v4795
      %v4930 = vmul.f32 %v4407, %v4799
      %v4931 = vmul.f32 %v4408, %v4803
      %v4932 = vmul.f32 %v4409, %v4807
      %v4933 = vmul.f32 %v4410, %v4811
      %v4934 = vmul.f32 %v4411, %v4815
      %v4935 = vmul.f32 %v4412, %v4819
      %v4936 = vmul.f32 %v4413, %v4823
      %v4937 = vmul.f32 %v4414, %v4827
      %v4938 = vmul.f32 %v4415, %v4831
      %v4939 = vmul.f32 %v4416, %v4835
      %v4940 = vmul.f32 %v4417, %v4839
      %v4941 = vmul.f32 %v4418, %v4843
      %v4942 = vmul.f32 %v4419, %v4847
      %v4943 = vmul.f32 %v4420, %v4851
      %v4944 = vmul.f32 %v4421, %v4855
      %v4945 = vmul.f32 %v4422, %v4859
      %v4946 = vmul.f32 %v4423, %v4863
      %v4947 = vmul.f32 %v4424, %v4867
      %v4948 = vmul.f32 %v4425, %v4871
      %v4949 = vmul.f32 %v4426, %v4875
      %v4950 = vmul.f32 %v4427, %v4879
      %v4951 = vmul.f32 %v4428, %v4883
      %v4953 = vlaneseq
      %v4954 = vshrl.u32 %v4953, 7
      %v4955 = vsub.s32 0, %v4954
      %v4956 = vrot.slane %v3982, %v4955
      %v4957 = vcombine.high %v4956, %v4956
      %v4959 = vunpack.c.l.s4 1966171168
      %v4960 = vunpack.c.0.s8 %v4959
      %v4961 = vlaneseq
      %v4962 = vshrl.u32 %v4961, 7
      %v4963 = vsub.s32 %v4960, %v4962
      %v4964 = vrot.slane %v4956, %v4963
      %v4966 = vunpack.c.l.s4 1966171168
      %v4967 = vunpack.c.0.s8 %v4966
      %v4968 = vlaneseq
      %v4969 = vshrl.u32 %v4968, 7
      %v4970 = vsub.s32 %v4967, %v4969
      %v4971 = vrot.slane %v4957, %v4970
      %v4972 = vcombine.high %v4964, %v4964
      %v4973 = vcombine.high %v4971, %v4971
      %v4975 = vunpack.c.l.s4 1966171168
      %v4976 = vunpack.c.0.s8 %v4975
      %v4977 = vlaneseq
      %v4978 = vshrl.u32 %v4977, 7
      %v4979 = vsub.s32 %v4976, %v4978
      %v4980 = vrot.slane %v4964, %v4979
      %v4982 = vunpack.c.l.s4 1966171168
      %v4983 = vunpack.c.0.s8 %v4982
      %v4984 = vlaneseq
      %v4985 = vshrl.u32 %v4984, 7
      %v4986 = vsub.s32 %v4983, %v4985
      %v4987 = vrot.slane %v4971, %v4986
      %v4989 = vunpack.c.l.s4 1966171168
      %v4990 = vunpack.c.0.s8 %v4989
      %v4991 = vlaneseq
      %v4992 = vshrl.u32 %v4991, 7
      %v4993 = vsub.s32 %v4990, %v4992
      %v4994 = vrot.slane %v4972, %v4993
      %v4996 = vunpack.c.l.s4 1966171168
      %v4997 = vunpack.c.0.s8 %v4996
      %v4998 = vlaneseq
      %v4999 = vshrl.u32 %v4998, 7
      %v5000 = vsub.s32 %v4997, %v4999
      %v5001 = vrot.slane %v4973, %v5000
      %v5002 = vcombine.high %v4980, %v4980
      %v5003 = vcombine.high %v4987, %v4987
      %v5004 = vcombine.high %v4994, %v4994
      %v5005 = vcombine.high %v5001, %v5001
      %v5014 = vmul.f32 %v4918, %v4980
      %v5015 = vmul.f32 %v4919, %v4994
      %v5016 = vmul.f32 %v4920, %v5002
      %v5017 = vmul.f32 %v4921, %v5004
      %v5018 = vmul.f32 %v4922, %v4987
      %v5019 = vmul.f32 %v4923, %v5001
      %v5020 = vmul.f32 %v4924, %v5003
      %v5021 = vmul.f32 %v4925, %v5005
      %v5022 = vmul.f32 %v4926, %v4980
      %v5023 = vmul.f32 %v4927, %v4994
      %v5024 = vmul.f32 %v4928, %v5002
      %v5025 = vmul.f32 %v4929, %v5004
      %v5026 = vmul.f32 %v4930, %v4987
      %v5027 = vmul.f32 %v4931, %v5001
      %v5028 = vmul.f32 %v4932, %v5003
      %v5029 = vmul.f32 %v4933, %v5005
      %v5030 = vmul.f32 %v4934, %v4980
      %v5031 = vmul.f32 %v4935, %v4994
      %v5032 = vmul.f32 %v4936, %v5002
      %v5033 = vmul.f32 %v4937, %v5004
      %v5034 = vmul.f32 %v4938, %v4987
      %v5035 = vmul.f32 %v4939, %v5001
      %v5036 = vmul.f32 %v4940, %v5003
      %v5037 = vmul.f32 %v4941, %v5005
      %v5038 = vmul.f32 %v4942, %v4980
      %v5039 = vmul.f32 %v4943, %v4994
      %v5040 = vmul.f32 %v4944, %v5002
      %v5041 = vmul.f32 %v4945, %v5004
      %v5042 = vmul.f32 %v4946, %v4987
      %v5043 = vmul.f32 %v4947, %v5001
      %v5044 = vmul.f32 %v4948, %v5003
      %v5045 = vmul.f32 %v4949, %v5005
      %v5046 = vmul.f32 %v4950, %v4980
      %v5047 = vmul.f32 %v4951, %v4994
      %v5049 = vlaneseq
      %v5050 = vshrl.u32 %v5049, 7
      %v5051 = vsub.s32 0, %v5050
      %v5052 = vrot.slane %v3983, %v5051
      %v5053 = vcombine.high %v5052, %v5052
      %v5055 = vunpack.c.l.s4 1966171168
      %v5056 = vunpack.c.0.s8 %v5055
      %v5057 = vlaneseq
      %v5058 = vshrl.u32 %v5057, 7
      %v5059 = vsub.s32 %v5056, %v5058
      %v5060 = vrot.slane %v5052, %v5059
      %v5062 = vunpack.c.l.s4 1966171168
      %v5063 = vunpack.c.0.s8 %v5062
      %v5064 = vlaneseq
      %v5065 = vshrl.u32 %v5064, 7
      %v5066 = vsub.s32 %v5063, %v5065
      %v5067 = vrot.slane %v5053, %v5066
      %v5068 = vcombine.high %v5060, %v5060
      %v5069 = vcombine.high %v5067, %v5067
      %v5071 = vunpack.c.l.s4 1966171168
      %v5072 = vunpack.c.0.s8 %v5071
      %v5073 = vlaneseq
      %v5074 = vshrl.u32 %v5073, 7
      %v5075 = vsub.s32 %v5072, %v5074
      %v5076 = vrot.slane %v5060, %v5075
      %v5078 = vunpack.c.l.s4 1966171168
      %v5079 = vunpack.c.0.s8 %v5078
      %v5080 = vlaneseq
      %v5081 = vshrl.u32 %v5080, 7
      %v5082 = vsub.s32 %v5079, %v5081
      %v5083 = vrot.slane %v5067, %v5082
      %v5085 = vunpack.c.l.s4 1966171168
      %v5086 = vunpack.c.0.s8 %v5085
      %v5087 = vlaneseq
      %v5088 = vshrl.u32 %v5087, 7
      %v5089 = vsub.s32 %v5086, %v5088
      %v5090 = vrot.slane %v5068, %v5089
      %v5092 = vunpack.c.l.s4 1966171168
      %v5093 = vunpack.c.0.s8 %v5092
      %v5094 = vlaneseq
      %v5095 = vshrl.u32 %v5094, 7
      %v5096 = vsub.s32 %v5093, %v5095
      %v5097 = vrot.slane %v5069, %v5096
      %v5098 = vcombine.high %v5076, %v5076
      %v5099 = vcombine.high %v5083, %v5083
      %v5100 = vcombine.high %v5090, %v5090
      %v5101 = vcombine.high %v5097, %v5097
      %v5110 = vadd.f32 %v5014, %v5076
      %v5111 = vadd.f32 %v5015, %v5090
      %v5112 = vadd.f32 %v5016, %v5098
      %v5113 = vadd.f32 %v5017, %v5100
      %v5114 = vadd.f32 %v5018, %v5083
      %v5115 = vadd.f32 %v5019, %v5097
      %v5116 = vadd.f32 %v5020, %v5099
      %v5117 = vadd.f32 %v5021, %v5101
      %v5118 = vadd.f32 %v5022, %v5076
      %v5119 = vadd.f32 %v5023, %v5090
      %v5120 = vadd.f32 %v5024, %v5098
      %v5121 = vadd.f32 %v5025, %v5100
      %v5122 = vadd.f32 %v5026, %v5083
      %v5123 = vadd.f32 %v5027, %v5097
      %v5124 = vadd.f32 %v5028, %v5099
      %v5125 = vadd.f32 %v5029, %v5101
      %v5126 = vadd.f32 %v5030, %v5076
      %v5127 = vadd.f32 %v5031, %v5090
      %v5128 = vadd.f32 %v5032, %v5098
      %v5129 = vadd.f32 %v5033, %v5100
      %v5130 = vadd.f32 %v5034, %v5083
      %v5131 = vadd.f32 %v5035, %v5097
      %v5132 = vadd.f32 %v5036, %v5099
      %v5133 = vadd.f32 %v5037, %v5101
      %v5134 = vadd.f32 %v5038, %v5076
      %v5135 = vadd.f32 %v5039, %v5090
      %v5136 = vadd.f32 %v5040, %v5098
      %v5137 = vadd.f32 %v5041, %v5100
      %v5138 = vadd.f32 %v5042, %v5083
      %v5139 = vadd.f32 %v5043, %v5097
      %v5140 = vadd.f32 %v5044, %v5099
      %v5141 = vadd.f32 %v5045, %v5101
      %v5142 = vadd.f32 %v5046, %v5076
      %v5143 = vadd.f32 %v5047, %v5090
      %v5144 = vld [vmem:[%s619] sm:$0xf]
      %v5179 = vcombine.low %v5110, %v5111
      %v5180 = vcombine.low %v5112, %v5113
      %v5181 = vcombine.low %v5114, %v5115
      %v5182 = vcombine.low %v5116, %v5117
      %v5184 = vunpack.c.l.s4 1966171168
      %v5185 = vunpack.c.0.s8 %v5184
      %v5186 = vlaneseq
      %v5187 = vshrl.u32 %v5186, 7
      %v5188 = vsub.s32 %v5185, %v5187
      %v5189 = vrot.slane %v5179, %v5188
      %v5191 = vunpack.c.l.s4 1966171168
      %v5192 = vunpack.c.0.s8 %v5191
      %v5193 = vlaneseq
      %v5194 = vshrl.u32 %v5193, 7
      %v5195 = vsub.s32 %v5192, %v5194
      %v5196 = vrot.slane %v5180, %v5195
      %v5198 = vunpack.c.l.s4 1966171168
      %v5199 = vunpack.c.0.s8 %v5198
      %v5200 = vlaneseq
      %v5201 = vshrl.u32 %v5200, 7
      %v5202 = vsub.s32 %v5199, %v5201
      %v5203 = vrot.slane %v5181, %v5202
      %v5205 = vunpack.c.l.s4 1966171168
      %v5206 = vunpack.c.0.s8 %v5205
      %v5207 = vlaneseq
      %v5208 = vshrl.u32 %v5207, 7
      %v5209 = vsub.s32 %v5206, %v5208
      %v5210 = vrot.slane %v5182, %v5209
      %v5211 = vcombine.low %v5189, %v5196
      %v5212 = vcombine.low %v5203, %v5210
      %v5214 = vunpack.c.l.s4 1966171168
      %v5215 = vunpack.c.0.s8 %v5214
      %v5216 = vlaneseq
      %v5217 = vshrl.u32 %v5216, 7
      %v5218 = vsub.s32 %v5215, %v5217
      %v5219 = vrot.slane %v5211, %v5218
      %v5221 = vunpack.c.l.s4 1966171168
      %v5222 = vunpack.c.0.s8 %v5221
      %v5223 = vlaneseq
      %v5224 = vshrl.u32 %v5223, 7
      %v5225 = vsub.s32 %v5222, %v5224
      %v5226 = vrot.slane %v5212, %v5225
      %v5227 = vcombine.low %v5219, %v5226
      %v5228 = vcombine.low %v5118, %v5119
      %v5229 = vcombine.low %v5120, %v5121
      %v5230 = vcombine.low %v5122, %v5123
      %v5231 = vcombine.low %v5124, %v5125
      %v5233 = vunpack.c.l.s4 1966171168
      %v5234 = vunpack.c.0.s8 %v5233
      %v5235 = vlaneseq
      %v5236 = vshrl.u32 %v5235, 7
      %v5237 = vsub.s32 %v5234, %v5236
      %v5238 = vrot.slane %v5228, %v5237
      %v5240 = vunpack.c.l.s4 1966171168
      %v5241 = vunpack.c.0.s8 %v5240
      %v5242 = vlaneseq
      %v5243 = vshrl.u32 %v5242, 7
      %v5244 = vsub.s32 %v5241, %v5243
      %v5245 = vrot.slane %v5229, %v5244
      %v5247 = vunpack.c.l.s4 1966171168
      %v5248 = vunpack.c.0.s8 %v5247
      %v5249 = vlaneseq
      %v5250 = vshrl.u32 %v5249, 7
      %v5251 = vsub.s32 %v5248, %v5250
      %v5252 = vrot.slane %v5230, %v5251
      %v5254 = vunpack.c.l.s4 1966171168
      %v5255 = vunpack.c.0.s8 %v5254
      %v5256 = vlaneseq
      %v5257 = vshrl.u32 %v5256, 7
      %v5258 = vsub.s32 %v5255, %v5257
      %v5259 = vrot.slane %v5231, %v5258
      %v5260 = vcombine.low %v5238, %v5245
      %v5261 = vcombine.low %v5252, %v5259
      %v5263 = vunpack.c.l.s4 1966171168
      %v5264 = vunpack.c.0.s8 %v5263
      %v5265 = vlaneseq
      %v5266 = vshrl.u32 %v5265, 7
      %v5267 = vsub.s32 %v5264, %v5266
      %v5268 = vrot.slane %v5260, %v5267
      %v5270 = vunpack.c.l.s4 1966171168
      %v5271 = vunpack.c.0.s8 %v5270
      %v5272 = vlaneseq
      %v5273 = vshrl.u32 %v5272, 7
      %v5274 = vsub.s32 %v5271, %v5273
      %v5275 = vrot.slane %v5261, %v5274
      %v5276 = vcombine.low %v5268, %v5275
      %v5277 = vcombine.low %v5126, %v5127
      %v5278 = vcombine.low %v5128, %v5129
      %v5279 = vcombine.low %v5130, %v5131
      %v5280 = vcombine.low %v5132, %v5133
      %v5282 = vunpack.c.l.s4 1966171168
      %v5283 = vunpack.c.0.s8 %v5282
      %v5284 = vlaneseq
      %v5285 = vshrl.u32 %v5284, 7
      %v5286 = vsub.s32 %v5283, %v5285
      %v5287 = vrot.slane %v5277, %v5286
      %v5289 = vunpack.c.l.s4 1966171168
      %v5290 = vunpack.c.0.s8 %v5289
      %v5291 = vlaneseq
      %v5292 = vshrl.u32 %v5291, 7
      %v5293 = vsub.s32 %v5290, %v5292
      %v5294 = vrot.slane %v5278, %v5293
      %v5296 = vunpack.c.l.s4 1966171168
      %v5297 = vunpack.c.0.s8 %v5296
      %v5298 = vlaneseq
      %v5299 = vshrl.u32 %v5298, 7
      %v5300 = vsub.s32 %v5297, %v5299
      %v5301 = vrot.slane %v5279, %v5300
      %v5303 = vunpack.c.l.s4 1966171168
      %v5304 = vunpack.c.0.s8 %v5303
      %v5305 = vlaneseq
      %v5306 = vshrl.u32 %v5305, 7
      %v5307 = vsub.s32 %v5304, %v5306
      %v5308 = vrot.slane %v5280, %v5307
      %v5309 = vcombine.low %v5287, %v5294
      %v5310 = vcombine.low %v5301, %v5308
      %v5312 = vunpack.c.l.s4 1966171168
      %v5313 = vunpack.c.0.s8 %v5312
      %v5314 = vlaneseq
      %v5315 = vshrl.u32 %v5314, 7
      %v5316 = vsub.s32 %v5313, %v5315
      %v5317 = vrot.slane %v5309, %v5316
      %v5319 = vunpack.c.l.s4 1966171168
      %v5320 = vunpack.c.0.s8 %v5319
      %v5321 = vlaneseq
      %v5322 = vshrl.u32 %v5321, 7
      %v5323 = vsub.s32 %v5320, %v5322
      %v5324 = vrot.slane %v5310, %v5323
      %v5325 = vcombine.low %v5317, %v5324
      %v5326 = vcombine.low %v5134, %v5135
      %v5327 = vcombine.low %v5136, %v5137
      %v5328 = vcombine.low %v5138, %v5139
      %v5329 = vcombine.low %v5140, %v5141
      %v5331 = vunpack.c.l.s4 1966171168
      %v5332 = vunpack.c.0.s8 %v5331
      %v5333 = vlaneseq
      %v5334 = vshrl.u32 %v5333, 7
      %v5335 = vsub.s32 %v5332, %v5334
      %v5336 = vrot.slane %v5326, %v5335
      %v5338 = vunpack.c.l.s4 1966171168
      %v5339 = vunpack.c.0.s8 %v5338
      %v5340 = vlaneseq
      %v5341 = vshrl.u32 %v5340, 7
      %v5342 = vsub.s32 %v5339, %v5341
      %v5343 = vrot.slane %v5327, %v5342
      %v5345 = vunpack.c.l.s4 1966171168
      %v5346 = vunpack.c.0.s8 %v5345
      %v5347 = vlaneseq
      %v5348 = vshrl.u32 %v5347, 7
      %v5349 = vsub.s32 %v5346, %v5348
      %v5350 = vrot.slane %v5328, %v5349
      %v5352 = vunpack.c.l.s4 1966171168
      %v5353 = vunpack.c.0.s8 %v5352
      %v5354 = vlaneseq
      %v5355 = vshrl.u32 %v5354, 7
      %v5356 = vsub.s32 %v5353, %v5355
      %v5357 = vrot.slane %v5329, %v5356
      %v5358 = vcombine.low %v5336, %v5343
      %v5359 = vcombine.low %v5350, %v5357
      %v5361 = vunpack.c.l.s4 1966171168
      %v5362 = vunpack.c.0.s8 %v5361
      %v5363 = vlaneseq
      %v5364 = vshrl.u32 %v5363, 7
      %v5365 = vsub.s32 %v5362, %v5364
      %v5366 = vrot.slane %v5358, %v5365
      %v5368 = vunpack.c.l.s4 1966171168
      %v5369 = vunpack.c.0.s8 %v5368
      %v5370 = vlaneseq
      %v5371 = vshrl.u32 %v5370, 7
      %v5372 = vsub.s32 %v5369, %v5371
      %v5373 = vrot.slane %v5359, %v5372
      %v5374 = vcombine.low %v5366, %v5373
      %v5375 = vcombine.low %v5142, %v5143
      %v5377 = vunpack.c.l.s4 1966171168
      %v5378 = vunpack.c.0.s8 %v5377
      %v5379 = vlaneseq
      %v5380 = vshrl.u32 %v5379, 7
      %v5381 = vsub.s32 %v5378, %v5380
      %v5382 = vrot.slane %v5375, %v5381
      %v5384 = vunpack.c.l.s4 1966171168
      %v5385 = vunpack.c.0.s8 %v5384
      %v5386 = vlaneseq
      %v5387 = vshrl.u32 %v5386, 7
      %v5388 = vsub.s32 %v5385, %v5387
      %v5389 = vrot.slane %v5382, %v5388
      %v5395 = vpack.c.bf16 %v5276, %v5227
      %v5396 = vpack.c.bf16 %v5374, %v5325
      %v5397 = vpack.c.bf16 %v5389, %v5389
      %v5398 = vld [vmem:[%s622] sm:$0x1]
      %v5400 = vlaneseq
      %v5401 = vshrl.u32 %v5400, 7
      %v5402 = vsub.s32 0, %v5401
      %v5403 = vrot.slane %v5398, %v5402
      %v5406 = vsel %vm1274, %v5395, 0
      %v5409 = vsel %vm1274, %v5396, 0
      %v5412 = vsel %vm1274, %v5397, 0
      %v5415 = vsel %vm2491, %v5144, 0
      %5417 = vmatprep.subr.bf16.mxu0 0
      %5418 = vmatpush1.bf16.msra.mxu0 0
      %5419 = vmatprep.subr.bf16.mxu0 0
      %5420 = vmatpush1.bf16.msra.mxu0 0
      %5421 = vmatprep.subr.bf16.mxu0 0
      %5422 = vmatpush1.bf16.msra.mxu0 0
      %5423 = vmatprep.subr.bf16.mxu0 0
      %5424 = vmatpush1.bf16.msra.mxu0 0
      %5425 = vmatprep.subr.bf16.mxu0 0
      %5426 = vmatpush1.bf16.msra.mxu0 0
      %5427 = vmatprep.subr.bf16.mxu0 0
      %5428 = vmatpush1.bf16.msra.mxu0 0
      %5429 = vmatprep.subr.bf16.mxu0 0
      %5430 = vmatpush1.bf16.msra.mxu0 0
      %5431 = vmatprep.subr.bf16.mxu0 0
      %5432 = vmatpush1.bf16.msra.mxu0 %v5415
      %5433 = vmatprep.subr.bf16.mxu0 0
      %5434 = vmatpush2.bf16.msra.mxu0 0
      %5435 = vmatprep.subr.bf16.mxu0 0
      %5436 = vmatpush2.bf16.msra.mxu0 0
      %5437 = vmatprep.subr.bf16.mxu0 0
      %5438 = vmatpush2.bf16.msra.mxu0 0
      %5439 = vmatprep.subr.bf16.mxu0 0
      %5440 = vmatpush2.bf16.msra.mxu0 0
      %5441 = vmatprep.subr.bf16.mxu0 0
      %5442 = vmatpush2.bf16.msra.mxu0 0
      %5443 = vmatprep.subr.bf16.mxu0 0
      %5444 = vmatpush2.bf16.msra.mxu0 0
      %5445 = vmatprep.subr.bf16.mxu0 0
      %5446 = vmatpush2.bf16.msra.mxu0 0
      %5447 = vmatprep.subr.bf16.mxu0 0
      %5448 = vmatpush2.bf16.msra.mxu0 0
      %5449 = vmatprep.mubr.bf16.mxu0 0
      %5450 = vmatmul.mubr.bf16.gmra.mxu0 %v5406
      %v5451 = vpop.f32.mrf.mxu0
      %v5452 = vadd.f32 %v5403, %v5451
      %v5453 = vpop.f32.mrf.mxu0
      %v5454 = vpop.f32.mrf.mxu0
      %v5455 = vadd.f32 %v5403, %v5454
      %v5456 = vpop.f32.mrf.mxu0
      %5457 = vmatprep.mubr.bf16.mxu0 0
      %5458 = vmatmul.mubr.bf16.gmra.mxu0 %v5409
      %v5459 = vpop.f32.mrf.mxu0
      %v5460 = vadd.f32 %v5403, %v5459
      %v5461 = vpop.f32.mrf.mxu0
      %v5462 = vpop.f32.mrf.mxu0
      %v5463 = vadd.f32 %v5403, %v5462
      %v5464 = vpop.f32.mrf.mxu0
      %5465 = vmatprep.mubr.bf16.mxu0 0
      %5466 = vmatmul.mubr.bf16.gmra.mxu0 %v5412
      %v5467 = vpop.f32.mrf.mxu0
      %v5468 = vadd.f32 %v5403, %v5467
      %v5469 = vpop.f32.mrf.mxu0
      %v5470 = vpop.f32.mrf.mxu0
      %v5471 = vpop.f32.mrf.mxu0
      %5472 = vdwg.mxu0
      %v5473 = vmul.f32 %v5452, 0.5
      %v5474 = vmul.f32 %v5455, 0.5
      %v5475 = vmul.f32 %v5460, 0.5
      %v5476 = vmul.f32 %v5463, 0.5
      %v5477 = vmul.f32 %v5468, 0.5
      %v5478 = vmul.f32 %v5452, 0.70710677
      %v5479 = vmul.f32 %v5455, 0.70710677
      %v5480 = vmul.f32 %v5460, 0.70710677
      %v5481 = vmul.f32 %v5463, 0.70710677
      %v5482 = vmul.f32 %v5468, 0.70710677
      %v5483 = verf.f32.pop %v5478
      %v5484 = verf.f32.pop %v5479
      %v5485 = verf.f32.pop %v5480
      %v5486 = verf.f32.pop %v5481
      %v5487 = verf.f32.pop %v5482
      %v5488 = vadd.f32 %v5483, 1.0
      %v5489 = vadd.f32 %v5484, 1.0
      %v5490 = vadd.f32 %v5485, 1.0
      %v5491 = vadd.f32 %v5486, 1.0
      %v5492 = vadd.f32 %v5487, 1.0
      %v5493 = vmul.f32 %v5473, %v5488
      %v5494 = vmul.f32 %v5474, %v5489
      %v5495 = vmul.f32 %v5475, %v5490
      %v5496 = vmul.f32 %v5476, %v5491
      %v5497 = vmul.f32 %v5477, %v5492
      %v5498 = vld [vmem:[%s627] sm:$0xf]
      %v5499 = vld [vmem:[%s627 + $0x4] sm:$0xf]
      %v5500 = vld [vmem:[%s627 + $0x8] sm:$0xf]
      %v5501 = vld [vmem:[%s627 + $0xc] sm:$0xf]
      %v5502 = vpack.c.bf16 %v5494, %v5493
      %v5503 = vpack.c.bf16 %v5496, %v5495
      %v5504 = vpack.c.bf16 %v5497, %v5497
      %v5505 = vld [vmem:[%s630] sm:$0x1]
      %v5507 = vlaneseq
      %v5508 = vshrl.u32 %v5507, 7
      %v5509 = vsub.s32 0, %v5508
      %v5510 = vrot.slane %v5505, %v5509
      %v5516 = vunpack.c.l.b16 %v5498
      %v5517 = vunpack.c.l.b16 %v5499
      %v5518 = vunpack.c.l.b16 %v5500
      %v5519 = vunpack.c.l.b16 %v5501
      %v5520 = vpack.c.b16 %v5517, %v5516
      %v5521 = vpack.c.b16 %v5519, %v5518
      %vm5524 = vcmask 261120
      %v5526 = vsel %vm5524, %v5502, 0
      %v5529 = vsel %vm5524, %v5503, 0
      %v5532 = vsel %vm5524, %v5504, 0
      %5534 = vmatprep.subr.bf16.mxu0 0
      %5535 = vmatpush1.bf16.msra.mxu0 0
      %5536 = vmatprep.subr.bf16.mxu0 0
      %5537 = vmatpush1.bf16.msra.mxu0 0
      %5538 = vmatprep.subr.bf16.mxu0 0
      %5539 = vmatpush1.bf16.msra.mxu0 0
      %5540 = vmatprep.subr.bf16.mxu0 0
      %5541 = vmatpush1.bf16.msra.mxu0 0
      %5542 = vmatprep.subr.bf16.mxu0 0
      %5543 = vmatpush1.bf16.msra.mxu0 0
      %5544 = vmatprep.subr.bf16.mxu0 0
      %5545 = vmatpush1.bf16.msra.mxu0 0
      %5546 = vmatprep.subr.bf16.mxu0 0
      %5547 = vmatpush1.bf16.msra.mxu0 %v5521
      %5548 = vmatprep.subr.bf16.mxu0 0
      %5549 = vmatpush1.bf16.msra.mxu0 %v5520
      %5550 = vmatprep.subr.bf16.mxu0 0
      %5551 = vmatpush2.bf16.msra.mxu0 0
      %5552 = vmatprep.subr.bf16.mxu0 0
      %5553 = vmatpush2.bf16.msra.mxu0 0
      %5554 = vmatprep.subr.bf16.mxu0 0
      %5555 = vmatpush2.bf16.msra.mxu0 0
      %5556 = vmatprep.subr.bf16.mxu0 0
      %5557 = vmatpush2.bf16.msra.mxu0 0
      %5558 = vmatprep.subr.bf16.mxu0 0
      %5559 = vmatpush2.bf16.msra.mxu0 0
      %5560 = vmatprep.subr.bf16.mxu0 0
      %5561 = vmatpush2.bf16.msra.mxu0 0
      %5562 = vmatprep.subr.bf16.mxu0 0
      %5563 = vmatpush2.bf16.msra.mxu0 0
      %5564 = vmatprep.subr.bf16.mxu0 0
      %5565 = vmatpush2.bf16.msra.mxu0 0
      %5566 = vmatprep.mubr.bf16.mxu0 0
      %5567 = vmatmul.mubr.bf16.gmra.mxu0 %v5526
      %v5568 = vpop.f32.mrf.mxu0
      %v5569 = vadd.f32 %v5510, %v5568
      %v5570 = vpop.f32.mrf.mxu0
      %v5571 = vpop.f32.mrf.mxu0
      %v5572 = vadd.f32 %v5510, %v5571
      %v5573 = vpop.f32.mrf.mxu0
      %5574 = vmatprep.mubr.bf16.mxu0 0
      %5575 = vmatmul.mubr.bf16.gmra.mxu0 %v5529
      %v5576 = vpop.f32.mrf.mxu0
      %v5577 = vadd.f32 %v5510, %v5576
      %v5578 = vpop.f32.mrf.mxu0
      %v5579 = vpop.f32.mrf.mxu0
      %v5580 = vadd.f32 %v5510, %v5579
      %v5581 = vpop.f32.mrf.mxu0
      %5582 = vmatprep.mubr.bf16.mxu0 0
      %5583 = vmatmul.mubr.bf16.gmra.mxu0 %v5532
      %v5584 = vpop.f32.mrf.mxu0
      %v5585 = vadd.f32 %v5510, %v5584
      %v5586 = vpop.f32.mrf.mxu0
      %v5587 = vpop.f32.mrf.mxu0
      %v5588 = vpop.f32.mrf.mxu0
      %5589 = vdwg.mxu0
      %v5595 = vcombine.high %v5569, %v5569
      %v5597 = vunpack.c.l.s4 1966171168
      %v5598 = vunpack.c.0.s8 %v5597
      %v5599 = vlaneseq
      %v5600 = vshrl.u32 %v5599, 7
      %v5601 = vsub.s32 %v5598, %v5600
      %v5602 = vrot.slane %v5569, %v5601
      %v5604 = vunpack.c.l.s4 1966171168
      %v5605 = vunpack.c.0.s8 %v5604
      %v5606 = vlaneseq
      %v5607 = vshrl.u32 %v5606, 7
      %v5608 = vsub.s32 %v5605, %v5607
      %v5609 = vrot.slane %v5595, %v5608
      %v5610 = vcombine.high %v5602, %v5602
      %v5611 = vcombine.high %v5609, %v5609
      %v5613 = vunpack.c.l.s4 1966171168
      %v5614 = vunpack.c.0.s8 %v5613
      %v5615 = vlaneseq
      %v5616 = vshrl.u32 %v5615, 7
      %v5617 = vsub.s32 %v5614, %v5616
      %v5618 = vrot.slane %v5602, %v5617
      %v5620 = vunpack.c.l.s4 1966171168
      %v5621 = vunpack.c.0.s8 %v5620
      %v5622 = vlaneseq
      %v5623 = vshrl.u32 %v5622, 7
      %v5624 = vsub.s32 %v5621, %v5623
      %v5625 = vrot.slane %v5609, %v5624
      %v5627 = vunpack.c.l.s4 1966171168
      %v5628 = vunpack.c.0.s8 %v5627
      %v5629 = vlaneseq
      %v5630 = vshrl.u32 %v5629, 7
      %v5631 = vsub.s32 %v5628, %v5630
      %v5632 = vrot.slane %v5610, %v5631
      %v5634 = vunpack.c.l.s4 1966171168
      %v5635 = vunpack.c.0.s8 %v5634
      %v5636 = vlaneseq
      %v5637 = vshrl.u32 %v5636, 7
      %v5638 = vsub.s32 %v5635, %v5637
      %v5639 = vrot.slane %v5611, %v5638
      %v5640 = vcombine.high %v5618, %v5618
      %v5641 = vcombine.high %v5625, %v5625
      %v5642 = vcombine.high %v5632, %v5632
      %v5643 = vcombine.high %v5639, %v5639
      %v5644 = vcombine.high %v5572, %v5572
      %v5646 = vunpack.c.l.s4 1966171168
      %v5647 = vunpack.c.0.s8 %v5646
      %v5648 = vlaneseq
      %v5649 = vshrl.u32 %v5648, 7
      %v5650 = vsub.s32 %v5647, %v5649
      %v5651 = vrot.slane %v5572, %v5650
      %v5653 = vunpack.c.l.s4 1966171168
      %v5654 = vunpack.c.0.s8 %v5653
      %v5655 = vlaneseq
      %v5656 = vshrl.u32 %v5655, 7
      %v5657 = vsub.s32 %v5654, %v5656
      %v5658 = vrot.slane %v5644, %v5657
      %v5659 = vcombine.high %v5651, %v5651
      %v5660 = vcombine.high %v5658, %v5658
      %v5662 = vunpack.c.l.s4 1966171168
      %v5663 = vunpack.c.0.s8 %v5662
      %v5664 = vlaneseq
      %v5665 = vshrl.u32 %v5664, 7
      %v5666 = vsub.s32 %v5663, %v5665
      %v5667 = vrot.slane %v5651, %v5666
      %v5669 = vunpack.c.l.s4 1966171168
      %v5670 = vunpack.c.0.s8 %v5669
      %v5671 = vlaneseq
      %v5672 = vshrl.u32 %v5671, 7
      %v5673 = vsub.s32 %v5670, %v5672
      %v5674 = vrot.slane %v5658, %v5673
      %v5676 = vunpack.c.l.s4 1966171168
      %v5677 = vunpack.c.0.s8 %v5676
      %v5678 = vlaneseq
      %v5679 = vshrl.u32 %v5678, 7
      %v5680 = vsub.s32 %v5677, %v5679
      %v5681 = vrot.slane %v5659, %v5680
      %v5683 = vunpack.c.l.s4 1966171168
      %v5684 = vunpack.c.0.s8 %v5683
      %v5685 = vlaneseq
      %v5686 = vshrl.u32 %v5685, 7
      %v5687 = vsub.s32 %v5684, %v5686
      %v5688 = vrot.slane %v5660, %v5687
      %v5689 = vcombine.high %v5667, %v5667
      %v5690 = vcombine.high %v5674, %v5674
      %v5691 = vcombine.high %v5681, %v5681
      %v5692 = vcombine.high %v5688, %v5688
      %v5693 = vcombine.high %v5577, %v5577
      %v5695 = vunpack.c.l.s4 1966171168
      %v5696 = vunpack.c.0.s8 %v5695
      %v5697 = vlaneseq
      %v5698 = vshrl.u32 %v5697, 7
      %v5699 = vsub.s32 %v5696, %v5698
      %v5700 = vrot.slane %v5577, %v5699
      %v5702 = vunpack.c.l.s4 1966171168
      %v5703 = vunpack.c.0.s8 %v5702
      %v5704 = vlaneseq
      %v5705 = vshrl.u32 %v5704, 7
      %v5706 = vsub.s32 %v5703, %v5705
      %v5707 = vrot.slane %v5693, %v5706
      %v5708 = vcombine.high %v5700, %v5700
      %v5709 = vcombine.high %v5707, %v5707
      %v5711 = vunpack.c.l.s4 1966171168
      %v5712 = vunpack.c.0.s8 %v5711
      %v5713 = vlaneseq
      %v5714 = vshrl.u32 %v5713, 7
      %v5715 = vsub.s32 %v5712, %v5714
      %v5716 = vrot.slane %v5700, %v5715
      %v5718 = vunpack.c.l.s4 1966171168
      %v5719 = vunpack.c.0.s8 %v5718
      %v5720 = vlaneseq
      %v5721 = vshrl.u32 %v5720, 7
      %v5722 = vsub.s32 %v5719, %v5721
      %v5723 = vrot.slane %v5707, %v5722
      %v5725 = vunpack.c.l.s4 1966171168
      %v5726 = vunpack.c.0.s8 %v5725
      %v5727 = vlaneseq
      %v5728 = vshrl.u32 %v5727, 7
      %v5729 = vsub.s32 %v5726, %v5728
      %v5730 = vrot.slane %v5708, %v5729
      %v5732 = vunpack.c.l.s4 1966171168
      %v5733 = vunpack.c.0.s8 %v5732
      %v5734 = vlaneseq
      %v5735 = vshrl.u32 %v5734, 7
      %v5736 = vsub.s32 %v5733, %v5735
      %v5737 = vrot.slane %v5709, %v5736
      %v5738 = vcombine.high %v5716, %v5716
      %v5739 = vcombine.high %v5723, %v5723
      %v5740 = vcombine.high %v5730, %v5730
      %v5741 = vcombine.high %v5737, %v5737
      %v5742 = vcombine.high %v5580, %v5580
      %v5744 = vunpack.c.l.s4 1966171168
      %v5745 = vunpack.c.0.s8 %v5744
      %v5746 = vlaneseq
      %v5747 = vshrl.u32 %v5746, 7
      %v5748 = vsub.s32 %v5745, %v5747
      %v5749 = vrot.slane %v5580, %v5748
      %v5751 = vunpack.c.l.s4 1966171168
      %v5752 = vunpack.c.0.s8 %v5751
      %v5753 = vlaneseq
      %v5754 = vshrl.u32 %v5753, 7
      %v5755 = vsub.s32 %v5752, %v5754
      %v5756 = vrot.slane %v5742, %v5755
      %v5757 = vcombine.high %v5749, %v5749
      %v5758 = vcombine.high %v5756, %v5756
      %v5760 = vunpack.c.l.s4 1966171168
      %v5761 = vunpack.c.0.s8 %v5760
      %v5762 = vlaneseq
      %v5763 = vshrl.u32 %v5762, 7
      %v5764 = vsub.s32 %v5761, %v5763
      %v5765 = vrot.slane %v5749, %v5764
      %v5767 = vunpack.c.l.s4 1966171168
      %v5768 = vunpack.c.0.s8 %v5767
      %v5769 = vlaneseq
      %v5770 = vshrl.u32 %v5769, 7
      %v5771 = vsub.s32 %v5768, %v5770
      %v5772 = vrot.slane %v5756, %v5771
      %v5774 = vunpack.c.l.s4 1966171168
      %v5775 = vunpack.c.0.s8 %v5774
      %v5776 = vlaneseq
      %v5777 = vshrl.u32 %v5776, 7
      %v5778 = vsub.s32 %v5775, %v5777
      %v5779 = vrot.slane %v5757, %v5778
      %v5781 = vunpack.c.l.s4 1966171168
      %v5782 = vunpack.c.0.s8 %v5781
      %v5783 = vlaneseq
      %v5784 = vshrl.u32 %v5783, 7
      %v5785 = vsub.s32 %v5782, %v5784
      %v5786 = vrot.slane %v5758, %v5785
      %v5787 = vcombine.high %v5765, %v5765
      %v5788 = vcombine.high %v5772, %v5772
      %v5789 = vcombine.high %v5779, %v5779
      %v5790 = vcombine.high %v5786, %v5786
      %v5792 = vunpack.c.l.s4 1966171168
      %v5793 = vunpack.c.0.s8 %v5792
      %v5794 = vlaneseq
      %v5795 = vshrl.u32 %v5794, 7
      %v5796 = vsub.s32 %v5793, %v5795
      %v5797 = vrot.slane %v5585, %v5796
      %v5798 = vcombine.high %v5797, %v5797
      %v5800 = vunpack.c.l.s4 1966171168
      %v5801 = vunpack.c.0.s8 %v5800
      %v5802 = vlaneseq
      %v5803 = vshrl.u32 %v5802, 7
      %v5804 = vsub.s32 %v5801, %v5803
      %v5805 = vrot.slane %v5797, %v5804
      %v5807 = vunpack.c.l.s4 1966171168
      %v5808 = vunpack.c.0.s8 %v5807
      %v5809 = vlaneseq
      %v5810 = vshrl.u32 %v5809, 7
      %v5811 = vsub.s32 %v5808, %v5810
      %v5812 = vrot.slane %v5798, %v5811
      %v5813 = vcombine.low %v5618, %v5632
      %v5814 = vcombine.low %v5640, %v5642
      %v5815 = vcombine.low %v5625, %v5639
      %v5816 = vcombine.low %v5641, %v5643
      %v5818 = vunpack.c.l.s4 1966171168
      %v5819 = vunpack.c.0.s8 %v5818
      %v5820 = vlaneseq
      %v5821 = vshrl.u32 %v5820, 7
      %v5822 = vsub.s32 %v5819, %v5821
      %v5823 = vrot.slane %v5813, %v5822
      %v5825 = vunpack.c.l.s4 1966171168
      %v5826 = vunpack.c.0.s8 %v5825
      %v5827 = vlaneseq
      %v5828 = vshrl.u32 %v5827, 7
      %v5829 = vsub.s32 %v5826, %v5828
      %v5830 = vrot.slane %v5814, %v5829
      %v5832 = vunpack.c.l.s4 1966171168
      %v5833 = vunpack.c.0.s8 %v5832
      %v5834 = vlaneseq
      %v5835 = vshrl.u32 %v5834, 7
      %v5836 = vsub.s32 %v5833, %v5835
      %v5837 = vrot.slane %v5815, %v5836
      %v5839 = vunpack.c.l.s4 1966171168
      %v5840 = vunpack.c.0.s8 %v5839
      %v5841 = vlaneseq
      %v5842 = vshrl.u32 %v5841, 7
      %v5843 = vsub.s32 %v5840, %v5842
      %v5844 = vrot.slane %v5816, %v5843
      %v5845 = vcombine.low %v5823, %v5830
      %v5846 = vcombine.low %v5837, %v5844
      %v5848 = vunpack.c.l.s4 1966171168
      %v5849 = vunpack.c.0.s8 %v5848
      %v5850 = vlaneseq
      %v5851 = vshrl.u32 %v5850, 7
      %v5852 = vsub.s32 %v5849, %v5851
      %v5853 = vrot.slane %v5845, %v5852
      %v5855 = vunpack.c.l.s4 1966171168
      %v5856 = vunpack.c.0.s8 %v5855
      %v5857 = vlaneseq
      %v5858 = vshrl.u32 %v5857, 7
      %v5859 = vsub.s32 %v5856, %v5858
      %v5860 = vrot.slane %v5846, %v5859
      %v5861 = vcombine.low %v5853, %v5860
      %v5862 = vcombine.low %v5667, %v5681
      %v5863 = vcombine.low %v5689, %v5691
      %v5864 = vcombine.low %v5674, %v5688
      %v5865 = vcombine.low %v5690, %v5692
      %v5867 = vunpack.c.l.s4 1966171168
      %v5868 = vunpack.c.0.s8 %v5867
      %v5869 = vlaneseq
      %v5870 = vshrl.u32 %v5869, 7
      %v5871 = vsub.s32 %v5868, %v5870
      %v5872 = vrot.slane %v5862, %v5871
      %v5874 = vunpack.c.l.s4 1966171168
      %v5875 = vunpack.c.0.s8 %v5874
      %v5876 = vlaneseq
      %v5877 = vshrl.u32 %v5876, 7
      %v5878 = vsub.s32 %v5875, %v5877
      %v5879 = vrot.slane %v5863, %v5878
      %v5881 = vunpack.c.l.s4 1966171168
      %v5882 = vunpack.c.0.s8 %v5881
      %v5883 = vlaneseq
      %v5884 = vshrl.u32 %v5883, 7
      %v5885 = vsub.s32 %v5882, %v5884
      %v5886 = vrot.slane %v5864, %v5885
      %v5888 = vunpack.c.l.s4 1966171168
      %v5889 = vunpack.c.0.s8 %v5888
      %v5890 = vlaneseq
      %v5891 = vshrl.u32 %v5890, 7
      %v5892 = vsub.s32 %v5889, %v5891
      %v5893 = vrot.slane %v5865, %v5892
      %v5894 = vcombine.low %v5872, %v5879
      %v5895 = vcombine.low %v5886, %v5893
      %v5897 = vunpack.c.l.s4 1966171168
      %v5898 = vunpack.c.0.s8 %v5897
      %v5899 = vlaneseq
      %v5900 = vshrl.u32 %v5899, 7
      %v5901 = vsub.s32 %v5898, %v5900
      %v5902 = vrot.slane %v5894, %v5901
      %v5904 = vunpack.c.l.s4 1966171168
      %v5905 = vunpack.c.0.s8 %v5904
      %v5906 = vlaneseq
      %v5907 = vshrl.u32 %v5906, 7
      %v5908 = vsub.s32 %v5905, %v5907
      %v5909 = vrot.slane %v5895, %v5908
      %v5910 = vcombine.low %v5902, %v5909
      %v5912 = vunpack.c.l.s4 1966171168
      %v5913 = vunpack.c.0.s8 %v5912
      %v5914 = vlaneseq
      %v5915 = vshrl.u32 %v5914, 7
      %v5916 = vsub.s32 %v5913, %v5915
      %v5917 = vrot.slane %v5716, %v5916
      %v5919 = vunpack.c.l.s4 1966171168
      %v5920 = vunpack.c.0.s8 %v5919
      %v5921 = vlaneseq
      %v5922 = vshrl.u32 %v5921, 7
      %v5923 = vsub.s32 %v5920, %v5922
      %v5924 = vrot.slane %v5917, %v5923
      %v5925 = vcombine.low %v5730, %v5738
      %v5926 = vcombine.low %v5740, %v5723
      %v5927 = vcombine.low %v5737, %v5739
      %v5928 = vcombine.low %v5741, %v5765
      %v5930 = vunpack.c.l.s4 1966171168
      %v5931 = vunpack.c.0.s8 %v5930
      %v5932 = vlaneseq
      %v5933 = vshrl.u32 %v5932, 7
      %v5934 = vsub.s32 %v5931, %v5933
      %v5935 = vrot.slane %v5925, %v5934
      %v5937 = vunpack.c.l.s4 1966171168
      %v5938 = vunpack.c.0.s8 %v5937
      %v5939 = vlaneseq
      %v5940 = vshrl.u32 %v5939, 7
      %v5941 = vsub.s32 %v5938, %v5940
      %v5942 = vrot.slane %v5926, %v5941
      %v5944 = vunpack.c.l.s4 1966171168
      %v5945 = vunpack.c.0.s8 %v5944
      %v5946 = vlaneseq
      %v5947 = vshrl.u32 %v5946, 7
      %v5948 = vsub.s32 %v5945, %v5947
      %v5949 = vrot.slane %v5927, %v5948
      %v5951 = vunpack.c.l.s4 1966171168
      %v5952 = vunpack.c.0.s8 %v5951
      %v5953 = vlaneseq
      %v5954 = vshrl.u32 %v5953, 7
      %v5955 = vsub.s32 %v5952, %v5954
      %v5956 = vrot.slane %v5928, %v5955
      %v5957 = vcombine.low %v5935, %v5942
      %v5958 = vcombine.low %v5949, %v5956
      %v5960 = vunpack.c.l.s4 1966171168
      %v5961 = vunpack.c.0.s8 %v5960
      %v5962 = vlaneseq
      %v5963 = vshrl.u32 %v5962, 7
      %v5964 = vsub.s32 %v5961, %v5963
      %v5965 = vrot.slane %v5957, %v5964
      %v5967 = vunpack.c.l.s4 1966171168
      %v5968 = vunpack.c.0.s8 %v5967
      %v5969 = vlaneseq
      %v5970 = vshrl.u32 %v5969, 7
      %v5971 = vsub.s32 %v5968, %v5970
      %v5972 = vrot.slane %v5958, %v5971
      %v5973 = vcombine.low %v5965, %v5972
      %v5974 = vcombine.low %v5779, %v5787
      %v5975 = vcombine.low %v5789, %v5772
      %v5976 = vcombine.low %v5786, %v5788
      %v5977 = vcombine.low %v5790, %v5805
      %v5979 = vunpack.c.l.s4 1966171168
      %v5980 = vunpack.c.0.s8 %v5979
      %v5981 = vlaneseq
      %v5982 = vshrl.u32 %v5981, 7
      %v5983 = vsub.s32 %v5980, %v5982
      %v5984 = vrot.slane %v5974, %v5983
      %v5986 = vunpack.c.l.s4 1966171168
      %v5987 = vunpack.c.0.s8 %v5986
      %v5988 = vlaneseq
      %v5989 = vshrl.u32 %v5988, 7
      %v5990 = vsub.s32 %v5987, %v5989
      %v5991 = vrot.slane %v5975, %v5990
      %v5993 = vunpack.c.l.s4 1966171168
      %v5994 = vunpack.c.0.s8 %v5993
      %v5995 = vlaneseq
      %v5996 = vshrl.u32 %v5995, 7
      %v5997 = vsub.s32 %v5994, %v5996
      %v5998 = vrot.slane %v5976, %v5997
      %v6000 = vunpack.c.l.s4 1966171168
      %v6001 = vunpack.c.0.s8 %v6000
      %v6002 = vlaneseq
      %v6003 = vshrl.u32 %v6002, 7
      %v6004 = vsub.s32 %v6001, %v6003
      %v6005 = vrot.slane %v5977, %v6004
      %v6006 = vcombine.low %v5984, %v5991
      %v6007 = vcombine.low %v5998, %v6005
      %v6009 = vunpack.c.l.s4 1966171168
      %v6010 = vunpack.c.0.s8 %v6009
      %v6011 = vlaneseq
      %v6012 = vshrl.u32 %v6011, 7
      %v6013 = vsub.s32 %v6010, %v6012
      %v6014 = vrot.slane %v6006, %v6013
      %v6016 = vunpack.c.l.s4 1966171168
      %v6017 = vunpack.c.0.s8 %v6016
      %v6018 = vlaneseq
      %v6019 = vshrl.u32 %v6018, 7
      %v6020 = vsub.s32 %v6017, %v6019
      %v6021 = vrot.slane %v6007, %v6020
      %v6022 = vcombine.low %v6014, %v6021
      %v6024 = vunpack.c.l.s4 1966171168
      %v6025 = vunpack.c.0.s8 %v6024
      %v6026 = vlaneseq
      %v6027 = vshrl.u32 %v6026, 7
      %v6028 = vsub.s32 %v6025, %v6027
      %v6029 = vrot.slane %v5812, %v6028
      %v6031 = vunpack.c.l.s4 1966171168
      %v6032 = vunpack.c.0.s8 %v6031
      %v6033 = vlaneseq
      %v6034 = vshrl.u32 %v6033, 7
      %v6035 = vsub.s32 %v6032, %v6034
      %v6036 = vrot.slane %v6029, %v6035
      %v6043 = vadd.f32 %v3712, %v5861
      %v6044 = vadd.f32 %v3713, %v5910
      %v6045 = vadd.f32 %v3714, %v5924
      %v6046 = vadd.f32 %v3715, %v5973
      %v6047 = vadd.f32 %v3716, %v6022
      %v6048 = vadd.f32 %v3717, %v6036
      %6049 = vst.msk [vmem:[#allocation2] sm:$0xff] %vm1274, %v6043
      %6050 = vst.msk [vmem:[#allocation2 + $0x8] sm:$0xff] %vm1274, %v6044
      %vm6051 = vcmask 57344
      %6052 = vst.msk [vmem:[#allocation2 + $0x10] sm:$0x1] %vm6051, %v6045
      %6053 = vst.msk [vmem:[#allocation2 + $0x18] sm:$0xff] %vm1274, %v6046
      %6054 = vst.msk [vmem:[#allocation2 + $0x20] sm:$0xff] %vm1274, %v6047
      %6055 = vst.msk [vmem:[#allocation2 + $0x28] sm:$0x1] %vm6051, %v6048
      %v6058 = vrot.slane %v6046, 7
      %vm6059 = vcmask 1041409
      %v6060 = vsel %vm6059, %v6058, %v6043
      %6062 = vst.msk [vmem:[%s634] sm:$0x3] %vm1287, %v6060
      %p6063 = scmp.lt.s32.totalorder %s29, 0
      %s6064 = scalar_select %p6063, %s29, 0
      %s6065 = smul.addr %s6064, 2
      %s6066 = scalar_lea.vmem %s14, %s6065
      // Predicated region
      $region81: #{hybrid_forward.2} parent=75 // pred_check
        %p6067 = pneg %p404
      $region82: #{hybrid_forward.2} parent=75 // pred_check_branch
        %6069 = sbr.rel (%p6067) target = $region84
      $region83: #{hybrid_forward.2} parent=75 // pred_region
        _
      $region84: #{hybrid_forward.2} parent=75 // pred_fallthru
        _
      // Predicated region
      $region85: #{hybrid_forward.2} parent=75 // pred_check
        %p6070 = pneg %p404
      $region86: #{hybrid_forward.2} parent=75 // pred_check_branch
        %6072 = sbr.rel (%p6070) target = $region88
      $region87: #{hybrid_forward.2} parent=75 // pred_region
        %p6073 = scmp.lt.s32.totalorder %s29, 0
        %s6074 = scalar_select %p6073, %s29, 0
        %s6075 = smul.addr %s6074, 2
        %s6076 = scalar_lea.vmem %s14, %s6075
      $region88: #{hybrid_forward.2} parent=75 // pred_fallthru
        _
    $region76: #{hybrid_forward.2} parent=5 // pred_fallthru
      _
    %p6077 = scmp.le.s32.totalorder 2, %s20
    // Predicated region
    $region89: #{hybrid_forward.2} parent=5 // pred_check
      %p6078 = pneg %p6077
    $region90: #{hybrid_forward.2} parent=5 // pred_check_branch
      %6080 = sbr.rel (%p6078) target = $region92
    $region91: #{hybrid_forward.2} parent=5 // pred_region
      %s6081 = ssub.s32 %s20, 2
    $region92: #{hybrid_forward.2} parent=5 // pred_fallthru
      _
  $region6: #{hybrid_forward.2} parent=0 // loop_footer
    %s24 = sadd.s32 1, %s20
  $region7: #{hybrid_forward.2} parent=0 // loop_footer_branch
    %19 = sbr.rel target = $region3
  $region8: #{hybrid_forward.2} parent=0 // loop_exit
    _

// kernel: hybrid_forward.3
$region0: #{hybrid_forward.3}
  #allocation0 [shape = 'u32[]', space=smem, size = 0x4, offset = 0x4, fixed_abs, tag = 'smem constant byte address 0x4 - core index']
  #allocation1 [shape = 'u32[144,128]{1,0:T(1,128)}', space=vmem, size = 0x12000, scoped, tag = 'internal scratch']
  %s0 = inlined_call_operand.vmem [shape: f32[2,1024], index: 0, kind: input, shape index: {}]
  %s1 = inlined_call_operand.vmem [shape: f32[2,50], index: 1, kind: input, shape index: {}]
  %s2 = inlined_call_operand.vmem [shape: f32[2,8], index: 2, kind: input, shape index: {}]
  %s3 = inlined_call_operand.vmem [shape: bf16[1024,400], index: 3, kind: input, shape index: {}]
  %s4 = inlined_call_operand.vmem [shape: f32[1,400], index: 4, kind: input, shape index: {}]
  %s5 = inlined_call_operand.vmem [shape: bf16[400,100], index: 5, kind: input, shape index: {}]
  %s6 = inlined_call_operand.vmem [shape: f32[1,100], index: 6, kind: input, shape index: {}]
  %s7 = inlined_call_operand.vmem [shape: bf16[50,400], index: 7, kind: input, shape index: {}]
  %s8 = inlined_call_operand.vmem [shape: f32[1,400], index: 8, kind: input, shape index: {}]
  %s9 = inlined_call_operand.vmem [shape: bf16[400,1024], index: 9, kind: input, shape index: {}]
  %s10 = inlined_call_operand.vmem [shape: f32[1,1024], index: 10, kind: input, shape index: {}]
  %s11 = inlined_call_operand.vmem [shape: bf16[8,128], index: 11, kind: input, shape index: {}]
  %s12 = inlined_call_operand.vmem [shape: bf16[50,128], index: 12, kind: input, shape index: {}]
  %s13 = inlined_call_operand.vmem [shape: f32[1,128], index: 13, kind: input, shape index: {}]
  %s14 = inlined_call_operand.vmem [shape: bf16[128,2], index: 14, kind: input, shape index: {}]
  %s15 = inlined_call_operand.vmem [shape: f32[1,2], index: 15, kind: input, shape index: {}]
  %s16 = inlined_call_operand.vmem [shape: f32[2,102], index: 16, kind: output, shape index: {0}]
  %s17 = inlined_call_operand.hbm [shape: f32[2,1024], index: 17, kind: output, shape index: {1}]
  %18 = xla_tuple %s16, %s17
  %s19 = sld [smem:[#allocation0]]
  $region82: #{hybrid_forward.3} parent=0
    _
  %s21 = ssub.s32 1, %s19
  %s22 = scalar_select 0, %s21, %s19
  $region1: #{hybrid_forward.3} parent=0
    #allocation2 [shape = 'u8[8192]{0}', space=vmem, size = 0x2000, scoped, tag = 'output window, operand 1, single buffered']
    #allocation3 [shape = 's32[1]{0}', space=sflag, size = 0x4, scoped, tag = 'scoped memory for hybrid_forward.3']
    %23 = vsyncpa [#allocation3], 0
    // Predicated region
    $region2: #{hybrid_forward.3} parent=1 // pred_check
      _
    $region3: #{hybrid_forward.3} parent=1 // pred_check_branch
      %25 = sbr.rel (0) target = $region5
    $region4: #{hybrid_forward.3} parent=1 // pred_region
      _
    $region5: #{hybrid_forward.3} parent=1 // pred_fallthru
      _
    // Predicated region
    $region6: #{hybrid_forward.3} parent=1 // pred_check
      _
    $region7: #{hybrid_forward.3} parent=1 // pred_check_branch
      %27 = sbr.rel (0) target = $region9
    $region8: #{hybrid_forward.3} parent=1 // pred_region
      _
    $region9: #{hybrid_forward.3} parent=1 // pred_fallthru
      _
    // Predicated region
    $region10: #{hybrid_forward.3} parent=1 // pred_check
      _
    $region11: #{hybrid_forward.3} parent=1 // pred_check_branch
      %29 = sbr.rel (0) target = $region13
    $region12: #{hybrid_forward.3} parent=1 // pred_region
      _
    $region13: #{hybrid_forward.3} parent=1 // pred_fallthru
      _
    // Predicated region
    $region14: #{hybrid_forward.3} parent=1 // pred_check
      _
    $region15: #{hybrid_forward.3} parent=1 // pred_check_branch
      %31 = sbr.rel (0) target = $region17
    $region16: #{hybrid_forward.3} parent=1 // pred_region
      _
    $region17: #{hybrid_forward.3} parent=1 // pred_fallthru
      _
    // Predicated region
    $region18: #{hybrid_forward.3} parent=1 // pred_check
      _
    $region19: #{hybrid_forward.3} parent=1 // pred_check_branch
      %33 = sbr.rel (0) target = $region21
    $region20: #{hybrid_forward.3} parent=1 // pred_region
      _
    $region21: #{hybrid_forward.3} parent=1 // pred_fallthru
      _
    // Predicated region
    $region22: #{hybrid_forward.3} parent=1 // pred_check
      _
    $region23: #{hybrid_forward.3} parent=1 // pred_check_branch
      %35 = sbr.rel (0) target = $region25
    $region24: #{hybrid_forward.3} parent=1 // pred_region
      _
    $region25: #{hybrid_forward.3} parent=1 // pred_fallthru
      _
    // Predicated region
    $region26: #{hybrid_forward.3} parent=1 // pred_check
      _
    $region27: #{hybrid_forward.3} parent=1 // pred_check_branch
      %37 = sbr.rel (0) target = $region29
    $region28: #{hybrid_forward.3} parent=1 // pred_region
      _
    $region29: #{hybrid_forward.3} parent=1 // pred_fallthru
      _
    // Predicated region
    $region30: #{hybrid_forward.3} parent=1 // pred_check
      _
    $region31: #{hybrid_forward.3} parent=1 // pred_check_branch
      %39 = sbr.rel (0) target = $region33
    $region32: #{hybrid_forward.3} parent=1 // pred_region
      _
    $region33: #{hybrid_forward.3} parent=1 // pred_fallthru
      _
    // Predicated region
    $region34: #{hybrid_forward.3} parent=1 // pred_check
      _
    $region35: #{hybrid_forward.3} parent=1 // pred_check_branch
      %41 = sbr.rel (0) target = $region37
    $region36: #{hybrid_forward.3} parent=1 // pred_region
      _
    $region37: #{hybrid_forward.3} parent=1 // pred_fallthru
      _
    // Predicated region
    $region38: #{hybrid_forward.3} parent=1 // pred_check
      _
    $region39: #{hybrid_forward.3} parent=1 // pred_check_branch
      %43 = sbr.rel (0) target = $region41
    $region40: #{hybrid_forward.3} parent=1 // pred_region
      _
    $region41: #{hybrid_forward.3} parent=1 // pred_fallthru
      _
    // Predicated region
    $region42: #{hybrid_forward.3} parent=1 // pred_check
      _
    $region43: #{hybrid_forward.3} parent=1 // pred_check_branch
      %45 = sbr.rel (0) target = $region45
    $region44: #{hybrid_forward.3} parent=1 // pred_region
      _
    $region45: #{hybrid_forward.3} parent=1 // pred_fallthru
      _
    // Predicated region
    $region46: #{hybrid_forward.3} parent=1 // pred_check
      _
    $region47: #{hybrid_forward.3} parent=1 // pred_check_branch
      %47 = sbr.rel (0) target = $region49
    $region48: #{hybrid_forward.3} parent=1 // pred_region
      _
    $region49: #{hybrid_forward.3} parent=1 // pred_fallthru
      _
    // Predicated region
    $region50: #{hybrid_forward.3} parent=1 // pred_check
      _
    $region51: #{hybrid_forward.3} parent=1 // pred_check_branch
      %49 = sbr.rel (0) target = $region53
    $region52: #{hybrid_forward.3} parent=1 // pred_region
      _
    $region53: #{hybrid_forward.3} parent=1 // pred_fallthru
      _
    // Predicated region
    $region54: #{hybrid_forward.3} parent=1 // pred_check
      _
    $region55: #{hybrid_forward.3} parent=1 // pred_check_branch
      %51 = sbr.rel (0) target = $region57
    $region56: #{hybrid_forward.3} parent=1 // pred_region
      _
    $region57: #{hybrid_forward.3} parent=1 // pred_fallthru
      _
    // Predicated region
    $region58: #{hybrid_forward.3} parent=1 // pred_check
      _
    $region59: #{hybrid_forward.3} parent=1 // pred_check_branch
      %53 = sbr.rel (0) target = $region61
    $region60: #{hybrid_forward.3} parent=1 // pred_region
      _
    $region61: #{hybrid_forward.3} parent=1 // pred_fallthru
      _
    // Predicated region
    $region62: #{hybrid_forward.3} parent=1 // pred_check
      _
    $region63: #{hybrid_forward.3} parent=1 // pred_check_branch
      %55 = sbr.rel (0) target = $region65
    $region64: #{hybrid_forward.3} parent=1 // pred_region
      _
    $region65: #{hybrid_forward.3} parent=1 // pred_fallthru
      _
    %v57 = vld [vmem:[%s0] sm:$0xff]
    %v58 = vld [vmem:[%s0 + $0x8] sm:$0xff]
    %v59 = vld [vmem:[%s3] sm:$0xff]
    %v60 = vld [vmem:[%s3 + $0x8] sm:$0xff]
    %v61 = vld [vmem:[%s3 + $0x10] sm:$0xff]
    %v62 = vld [vmem:[%s3 + $0x18] sm:$0xff]
    %v63 = vld [vmem:[%s3 + $0x20] sm:$0xff]
    %v64 = vld [vmem:[%s3 + $0x28] sm:$0xff]
    %v65 = vld [vmem:[%s3 + $0x30] sm:$0xff]
    %v66 = vld [vmem:[%s3 + $0x38] sm:$0xff]
    %v67 = vld [vmem:[%s3 + $0x40] sm:$0xff]
    %v68 = vld [vmem:[%s3 + $0x48] sm:$0xff]
    %v69 = vld [vmem:[%s3 + $0x50] sm:$0xff]
    %v70 = vld [vmem:[%s3 + $0x58] sm:$0xff]
    %v71 = vld [vmem:[%s3 + $0x60] sm:$0xff]
    %v72 = vld [vmem:[%s3 + $0x68] sm:$0xff]
    %v73 = vld [vmem:[%s3 + $0x70] sm:$0xff]
    %v74 = vld [vmem:[%s3 + $0x78] sm:$0xff]
    %v75 = vld [vmem:[%s3 + $0x80] sm:$0xff]
    %v76 = vld [vmem:[%s3 + $0x88] sm:$0xff]
    %v77 = vld [vmem:[%s3 + $0x90] sm:$0xff]
    %v78 = vld [vmem:[%s3 + $0x98] sm:$0xff]
    %v79 = vld [vmem:[%s3 + $0xa0] sm:$0xff]
    %v80 = vld [vmem:[%s3 + $0xa8] sm:$0xff]
    %v81 = vld [vmem:[%s3 + $0xb0] sm:$0xff]
    %v82 = vld [vmem:[%s3 + $0xb8] sm:$0xff]
    %v83 = vld [vmem:[%s3 + $0xc0] sm:$0xff]
    %v84 = vld [vmem:[%s3 + $0xc8] sm:$0xff]
    %v85 = vld [vmem:[%s3 + $0xd0] sm:$0xff]
    %v86 = vld [vmem:[%s3 + $0xd8] sm:$0xff]
    %v87 = vld [vmem:[%s3 + $0xe0] sm:$0xff]
    %v88 = vld [vmem:[%s3 + $0xe8] sm:$0xff]
    %v89 = vld [vmem:[%s3 + $0xf0] sm:$0xff]
    %v90 = vld [vmem:[%s3 + $0xf8] sm:$0xff]
    %v91 = vld [vmem:[%s3 + $0x100] sm:$0xff]
    %v92 = vld [vmem:[%s3 + $0x108] sm:$0xff]
    %v93 = vld [vmem:[%s3 + $0x110] sm:$0xff]
    %v94 = vld [vmem:[%s3 + $0x118] sm:$0xff]
    %v95 = vld [vmem:[%s3 + $0x120] sm:$0xff]
    %v96 = vld [vmem:[%s3 + $0x128] sm:$0xff]
    %v97 = vld [vmem:[%s3 + $0x130] sm:$0xff]
    %v98 = vld [vmem:[%s3 + $0x138] sm:$0xff]
    %v99 = vld [vmem:[%s3 + $0x140] sm:$0xff]
    %v100 = vld [vmem:[%s3 + $0x148] sm:$0xff]
    %v101 = vld [vmem:[%s3 + $0x150] sm:$0xff]
    %v102 = vld [vmem:[%s3 + $0x158] sm:$0xff]
    %v103 = vld [vmem:[%s3 + $0x160] sm:$0xff]
    %v104 = vld [vmem:[%s3 + $0x168] sm:$0xff]
    %v105 = vld [vmem:[%s3 + $0x170] sm:$0xff]
    %v106 = vld [vmem:[%s3 + $0x178] sm:$0xff]
    %v107 = vld [vmem:[%s3 + $0x180] sm:$0xff]
    %v108 = vld [vmem:[%s3 + $0x188] sm:$0xff]
    %v109 = vld [vmem:[%s3 + $0x190] sm:$0xff]
    %v110 = vld [vmem:[%s3 + $0x198] sm:$0xff]
    %v111 = vld [vmem:[%s3 + $0x1a0] sm:$0xff]
    %v112 = vld [vmem:[%s3 + $0x1a8] sm:$0xff]
    %v113 = vld [vmem:[%s3 + $0x1b0] sm:$0xff]
    %v114 = vld [vmem:[%s3 + $0x1b8] sm:$0xff]
    %v115 = vld [vmem:[%s3 + $0x1c0] sm:$0xff]
    %v116 = vld [vmem:[%s3 + $0x1c8] sm:$0xff]
    %v117 = vld [vmem:[%s3 + $0x1d0] sm:$0xff]
    %v118 = vld [vmem:[%s3 + $0x1d8] sm:$0xff]
    %v119 = vld [vmem:[%s3 + $0x1e0] sm:$0xff]
    %v120 = vld [vmem:[%s3 + $0x1e8] sm:$0xff]
    %v121 = vld [vmem:[%s3 + $0x1f0] sm:$0xff]
    %v122 = vld [vmem:[%s3 + $0x1f8] sm:$0xff]
    %v123 = vld [vmem:[%s3 + $0x200] sm:$0xff]
    %v124 = vld [vmem:[%s3 + $0x208] sm:$0xff]
    %v125 = vld [vmem:[%s3 + $0x210] sm:$0xff]
    %v126 = vld [vmem:[%s3 + $0x218] sm:$0xff]
    %v127 = vld [vmem:[%s3 + $0x220] sm:$0xff]
    %v128 = vld [vmem:[%s3 + $0x228] sm:$0xff]
    %v129 = vld [vmem:[%s3 + $0x230] sm:$0xff]
    %v130 = vld [vmem:[%s3 + $0x238] sm:$0xff]
    %v131 = vld [vmem:[%s3 + $0x240] sm:$0xff]
    %v132 = vld [vmem:[%s3 + $0x248] sm:$0xff]
    %v133 = vld [vmem:[%s3 + $0x250] sm:$0xff]
    %v134 = vld [vmem:[%s3 + $0x258] sm:$0xff]
    %v135 = vld [vmem:[%s3 + $0x260] sm:$0xff]
    %v136 = vld [vmem:[%s3 + $0x268] sm:$0xff]
    %v137 = vld [vmem:[%s3 + $0x270] sm:$0xff]
    %v138 = vld [vmem:[%s3 + $0x278] sm:$0xff]
    %v139 = vld [vmem:[%s3 + $0x280] sm:$0xff]
    %v140 = vld [vmem:[%s3 + $0x288] sm:$0xff]
    %v141 = vld [vmem:[%s3 + $0x290] sm:$0xff]
    %v142 = vld [vmem:[%s3 + $0x298] sm:$0xff]
    %v143 = vld [vmem:[%s3 + $0x2a0] sm:$0xff]
    %v144 = vld [vmem:[%s3 + $0x2a8] sm:$0xff]
    %v145 = vld [vmem:[%s3 + $0x2b0] sm:$0xff]
    %v146 = vld [vmem:[%s3 + $0x2b8] sm:$0xff]
    %v147 = vld [vmem:[%s3 + $0x2c0] sm:$0xff]
    %v148 = vld [vmem:[%s3 + $0x2c8] sm:$0xff]
    %v149 = vld [vmem:[%s3 + $0x2d0] sm:$0xff]
    %v150 = vld [vmem:[%s3 + $0x2d8] sm:$0xff]
    %v151 = vld [vmem:[%s3 + $0x2e0] sm:$0xff]
    %v152 = vld [vmem:[%s3 + $0x2e8] sm:$0xff]
    %v153 = vld [vmem:[%s3 + $0x2f0] sm:$0xff]
    %v154 = vld [vmem:[%s3 + $0x2f8] sm:$0xff]
    %v155 = vld [vmem:[%s3 + $0x300] sm:$0xff]
    %v156 = vld [vmem:[%s3 + $0x308] sm:$0xff]
    %v157 = vld [vmem:[%s3 + $0x310] sm:$0xff]
    %v158 = vld [vmem:[%s3 + $0x318] sm:$0xff]
    %v159 = vld [vmem:[%s3 + $0x320] sm:$0xff]
    %v160 = vld [vmem:[%s3 + $0x328] sm:$0xff]
    %v161 = vld [vmem:[%s3 + $0x330] sm:$0xff]
    %v162 = vld [vmem:[%s3 + $0x338] sm:$0xff]
    %v163 = vld [vmem:[%s3 + $0x340] sm:$0xff]
    %v164 = vld [vmem:[%s3 + $0x348] sm:$0xff]
    %v165 = vld [vmem:[%s3 + $0x350] sm:$0xff]
    %v166 = vld [vmem:[%s3 + $0x358] sm:$0xff]
    %v167 = vld [vmem:[%s3 + $0x360] sm:$0xff]
    %v168 = vld [vmem:[%s3 + $0x368] sm:$0xff]
    %v169 = vld [vmem:[%s3 + $0x370] sm:$0xff]
    %v170 = vld [vmem:[%s3 + $0x378] sm:$0xff]
    %v171 = vld [vmem:[%s3 + $0x380] sm:$0xff]
    %v172 = vld [vmem:[%s3 + $0x388] sm:$0xff]
    %v173 = vld [vmem:[%s3 + $0x390] sm:$0xff]
    %v174 = vld [vmem:[%s3 + $0x398] sm:$0xff]
    %v175 = vld [vmem:[%s3 + $0x3a0] sm:$0xff]
    %v176 = vld [vmem:[%s3 + $0x3a8] sm:$0xff]
    %v177 = vld [vmem:[%s3 + $0x3b0] sm:$0xff]
    %v178 = vld [vmem:[%s3 + $0x3b8] sm:$0xff]
    %v179 = vld [vmem:[%s3 + $0x3c0] sm:$0xff]
    %v180 = vld [vmem:[%s3 + $0x3c8] sm:$0xff]
    %v181 = vld [vmem:[%s3 + $0x3d0] sm:$0xff]
    %v182 = vld [vmem:[%s3 + $0x3d8] sm:$0xff]
    %v183 = vld [vmem:[%s3 + $0x3e0] sm:$0xff]
    %v184 = vld [vmem:[%s3 + $0x3e8] sm:$0xff]
    %v185 = vld [vmem:[%s3 + $0x3f0] sm:$0xff]
    %v186 = vld [vmem:[%s3 + $0x3f8] sm:$0xff]
    %v187 = vld [vmem:[%s3 + $0x400] sm:$0xff]
    %v188 = vld [vmem:[%s3 + $0x408] sm:$0xff]
    %v189 = vld [vmem:[%s3 + $0x410] sm:$0xff]
    %v190 = vld [vmem:[%s3 + $0x418] sm:$0xff]
    %v191 = vld [vmem:[%s3 + $0x420] sm:$0xff]
    %v192 = vld [vmem:[%s3 + $0x428] sm:$0xff]
    %v193 = vld [vmem:[%s3 + $0x430] sm:$0xff]
    %v194 = vld [vmem:[%s3 + $0x438] sm:$0xff]
    %v195 = vld [vmem:[%s3 + $0x440] sm:$0xff]
    %v196 = vld [vmem:[%s3 + $0x448] sm:$0xff]
    %v197 = vld [vmem:[%s3 + $0x450] sm:$0xff]
    %v198 = vld [vmem:[%s3 + $0x458] sm:$0xff]
    %v199 = vld [vmem:[%s3 + $0x460] sm:$0xff]
    %v200 = vld [vmem:[%s3 + $0x468] sm:$0xff]
    %v201 = vld [vmem:[%s3 + $0x470] sm:$0xff]
    %v202 = vld [vmem:[%s3 + $0x478] sm:$0xff]
    %v203 = vld [vmem:[%s3 + $0x480] sm:$0xff]
    %v204 = vld [vmem:[%s3 + $0x488] sm:$0xff]
    %v205 = vld [vmem:[%s3 + $0x490] sm:$0xff]
    %v206 = vld [vmem:[%s3 + $0x498] sm:$0xff]
    %v207 = vld [vmem:[%s3 + $0x4a0] sm:$0xff]
    %v208 = vld [vmem:[%s3 + $0x4a8] sm:$0xff]
    %v209 = vld [vmem:[%s3 + $0x4b0] sm:$0xff]
    %v210 = vld [vmem:[%s3 + $0x4b8] sm:$0xff]
    %v211 = vld [vmem:[%s3 + $0x4c0] sm:$0xff]
    %v212 = vld [vmem:[%s3 + $0x4c8] sm:$0xff]
    %v213 = vld [vmem:[%s3 + $0x4d0] sm:$0xff]
    %v214 = vld [vmem:[%s3 + $0x4d8] sm:$0xff]
    %v215 = vld [vmem:[%s3 + $0x4e0] sm:$0xff]
    %v216 = vld [vmem:[%s3 + $0x4e8] sm:$0xff]
    %v217 = vld [vmem:[%s3 + $0x4f0] sm:$0xff]
    %v218 = vld [vmem:[%s3 + $0x4f8] sm:$0xff]
    %v219 = vld [vmem:[%s3 + $0x500] sm:$0xff]
    %v220 = vld [vmem:[%s3 + $0x508] sm:$0xff]
    %v221 = vld [vmem:[%s3 + $0x510] sm:$0xff]
    %v222 = vld [vmem:[%s3 + $0x518] sm:$0xff]
    %v223 = vld [vmem:[%s3 + $0x520] sm:$0xff]
    %v224 = vld [vmem:[%s3 + $0x528] sm:$0xff]
    %v225 = vld [vmem:[%s3 + $0x530] sm:$0xff]
    %v226 = vld [vmem:[%s3 + $0x538] sm:$0xff]
    %v227 = vld [vmem:[%s3 + $0x540] sm:$0xff]
    %v228 = vld [vmem:[%s3 + $0x548] sm:$0xff]
    %v229 = vld [vmem:[%s3 + $0x550] sm:$0xff]
    %v230 = vld [vmem:[%s3 + $0x558] sm:$0xff]
    %v231 = vld [vmem:[%s3 + $0x560] sm:$0xff]
    %v232 = vld [vmem:[%s3 + $0x568] sm:$0xff]
    %v233 = vld [vmem:[%s3 + $0x570] sm:$0xff]
    %v234 = vld [vmem:[%s3 + $0x578] sm:$0xff]
    %v235 = vld [vmem:[%s3 + $0x580] sm:$0xff]
    %v236 = vld [vmem:[%s3 + $0x588] sm:$0xff]
    %v237 = vld [vmem:[%s3 + $0x590] sm:$0xff]
    %v238 = vld [vmem:[%s3 + $0x598] sm:$0xff]
    %v239 = vld [vmem:[%s3 + $0x5a0] sm:$0xff]
    %v240 = vld [vmem:[%s3 + $0x5a8] sm:$0xff]
    %v241 = vld [vmem:[%s3 + $0x5b0] sm:$0xff]
    %v242 = vld [vmem:[%s3 + $0x5b8] sm:$0xff]
    %v243 = vld [vmem:[%s3 + $0x5c0] sm:$0xff]
    %v244 = vld [vmem:[%s3 + $0x5c8] sm:$0xff]
    %v245 = vld [vmem:[%s3 + $0x5d0] sm:$0xff]
    %v246 = vld [vmem:[%s3 + $0x5d8] sm:$0xff]
    %v247 = vld [vmem:[%s3 + $0x5e0] sm:$0xff]
    %v248 = vld [vmem:[%s3 + $0x5e8] sm:$0xff]
    %v249 = vld [vmem:[%s3 + $0x5f0] sm:$0xff]
    %v250 = vld [vmem:[%s3 + $0x5f8] sm:$0xff]
    %v251 = vld [vmem:[%s3 + $0x600] sm:$0xff]
    %v252 = vld [vmem:[%s3 + $0x608] sm:$0xff]
    %v253 = vld [vmem:[%s3 + $0x610] sm:$0xff]
    %v254 = vld [vmem:[%s3 + $0x618] sm:$0xff]
    %v255 = vld [vmem:[%s3 + $0x620] sm:$0xff]
    %v256 = vld [vmem:[%s3 + $0x628] sm:$0xff]
    %v257 = vld [vmem:[%s3 + $0x630] sm:$0xff]
    %v258 = vld [vmem:[%s3 + $0x638] sm:$0xff]
    %v259 = vld [vmem:[%s3 + $0x640] sm:$0xff]
    %v260 = vld [vmem:[%s3 + $0x648] sm:$0xff]
    %v261 = vld [vmem:[%s3 + $0x650] sm:$0xff]
    %v262 = vld [vmem:[%s3 + $0x658] sm:$0xff]
    %v263 = vld [vmem:[%s3 + $0x660] sm:$0xff]
    %v264 = vld [vmem:[%s3 + $0x668] sm:$0xff]
    %v265 = vld [vmem:[%s3 + $0x670] sm:$0xff]
    %v266 = vld [vmem:[%s3 + $0x678] sm:$0xff]
    %v267 = vld [vmem:[%s3 + $0x680] sm:$0xff]
    %v268 = vld [vmem:[%s3 + $0x688] sm:$0xff]
    %v269 = vld [vmem:[%s3 + $0x690] sm:$0xff]
    %v270 = vld [vmem:[%s3 + $0x698] sm:$0xff]
    %v271 = vld [vmem:[%s3 + $0x6a0] sm:$0xff]
    %v272 = vld [vmem:[%s3 + $0x6a8] sm:$0xff]
    %v273 = vld [vmem:[%s3 + $0x6b0] sm:$0xff]
    %v274 = vld [vmem:[%s3 + $0x6b8] sm:$0xff]
    %v275 = vld [vmem:[%s3 + $0x6c0] sm:$0xff]
    %v276 = vld [vmem:[%s3 + $0x6c8] sm:$0xff]
    %v277 = vld [vmem:[%s3 + $0x6d0] sm:$0xff]
    %v278 = vld [vmem:[%s3 + $0x6d8] sm:$0xff]
    %v279 = vld [vmem:[%s3 + $0x6e0] sm:$0xff]
    %v280 = vld [vmem:[%s3 + $0x6e8] sm:$0xff]
    %v281 = vld [vmem:[%s3 + $0x6f0] sm:$0xff]
    %v282 = vld [vmem:[%s3 + $0x6f8] sm:$0xff]
    %v283 = vld [vmem:[%s3 + $0x700] sm:$0xff]
    %v284 = vld [vmem:[%s3 + $0x708] sm:$0xff]
    %v285 = vld [vmem:[%s3 + $0x710] sm:$0xff]
    %v286 = vld [vmem:[%s3 + $0x718] sm:$0xff]
    %v287 = vld [vmem:[%s3 + $0x720] sm:$0xff]
    %v288 = vld [vmem:[%s3 + $0x728] sm:$0xff]
    %v289 = vld [vmem:[%s3 + $0x730] sm:$0xff]
    %v290 = vld [vmem:[%s3 + $0x738] sm:$0xff]
    %v291 = vld [vmem:[%s3 + $0x740] sm:$0xff]
    %v292 = vld [vmem:[%s3 + $0x748] sm:$0xff]
    %v293 = vld [vmem:[%s3 + $0x750] sm:$0xff]
    %v294 = vld [vmem:[%s3 + $0x758] sm:$0xff]
    %v295 = vld [vmem:[%s3 + $0x760] sm:$0xff]
    %v296 = vld [vmem:[%s3 + $0x768] sm:$0xff]
    %v297 = vld [vmem:[%s3 + $0x770] sm:$0xff]
    %v298 = vld [vmem:[%s3 + $0x778] sm:$0xff]
    %v299 = vld [vmem:[%s3 + $0x780] sm:$0xff]
    %v300 = vld [vmem:[%s3 + $0x788] sm:$0xff]
    %v301 = vld [vmem:[%s3 + $0x790] sm:$0xff]
    %v302 = vld [vmem:[%s3 + $0x798] sm:$0xff]
    %v303 = vld [vmem:[%s3 + $0x7a0] sm:$0xff]
    %v304 = vld [vmem:[%s3 + $0x7a8] sm:$0xff]
    %v305 = vld [vmem:[%s3 + $0x7b0] sm:$0xff]
    %v306 = vld [vmem:[%s3 + $0x7b8] sm:$0xff]
    %v307 = vld [vmem:[%s3 + $0x7c0] sm:$0xff]
    %v308 = vld [vmem:[%s3 + $0x7c8] sm:$0xff]
    %v309 = vld [vmem:[%s3 + $0x7d0] sm:$0xff]
    %v310 = vld [vmem:[%s3 + $0x7d8] sm:$0xff]
    %v311 = vld [vmem:[%s3 + $0x7e0] sm:$0xff]
    %v312 = vld [vmem:[%s3 + $0x7e8] sm:$0xff]
    %v313 = vld [vmem:[%s3 + $0x7f0] sm:$0xff]
    %v314 = vld [vmem:[%s3 + $0x7f8] sm:$0xff]
    %v317 = vcombine.high %v57, %v57
    %v319 = vunpack.c.l.s4 1983009808
    %v320 = vunpack.c.0.s8 %v319
    %v321 = vlaneseq
    %v322 = vshrl.u32 %v321, 7
    %v323 = vsub.s32 %v320, %v322
    %v324 = vrot.slane %v57, %v323
    %v326 = vunpack.c.l.s4 1983009808
    %v327 = vunpack.c.0.s8 %v326
    %v328 = vlaneseq
    %v329 = vshrl.u32 %v328, 7
    %v330 = vsub.s32 %v327, %v329
    %v331 = vrot.slane %v317, %v330
    %v332 = vcombine.high %v324, %v324
    %v333 = vcombine.high %v331, %v331
    %v334 = vcombine.high %v58, %v58
    %v336 = vunpack.c.l.s4 1983009808
    %v337 = vunpack.c.0.s8 %v336
    %v338 = vlaneseq
    %v339 = vshrl.u32 %v338, 7
    %v340 = vsub.s32 %v337, %v339
    %v341 = vrot.slane %v58, %v340
    %v343 = vunpack.c.l.s4 1983009808
    %v344 = vunpack.c.0.s8 %v343
    %v345 = vlaneseq
    %v346 = vshrl.u32 %v345, 7
    %v347 = vsub.s32 %v344, %v346
    %v348 = vrot.slane %v334, %v347
    %v349 = vcombine.high %v341, %v341
    %v350 = vcombine.high %v348, %v348
    %v359 = vpack.c.bf16 %v324, %v324
    %v360 = vpack.c.bf16 %v332, %v332
    %v361 = vpack.c.bf16 %v331, %v331
    %v362 = vpack.c.bf16 %v333, %v333
    %v363 = vpack.c.bf16 %v341, %v341
    %v364 = vpack.c.bf16 %v349, %v349
    %v365 = vpack.c.bf16 %v348, %v348
    %v366 = vpack.c.bf16 %v350, %v350
    %v367 = vld [vmem:[%s4] sm:$0xf]
    %v369 = vlaneseq
    %v370 = vshrl.u32 %v369, 7
    %v371 = vsub.s32 0, %v370
    %v372 = vrot.slane %v367, %v371
    %v373 = vlaneseq
    %v374 = vshrl.u32 %v373, 7
    %v375 = vsub.s32 1, %v374
    %v376 = vrot.slane %v367, %v375
    %v377 = vlaneseq
    %v378 = vshrl.u32 %v377, 7
    %v379 = vsub.s32 2, %v378
    %v380 = vrot.slane %v367, %v379
    %v381 = vlaneseq
    %v382 = vshrl.u32 %v381, 7
    %v383 = vsub.s32 3, %v382
    %v384 = vrot.slane %v367, %v383
    %v645 = vunpack.c.l.b16 %v59
    %v646 = vunpack.c.h.b16 %v59
    %v647 = vunpack.c.l.b16 %v60
    %v648 = vunpack.c.h.b16 %v60
    %v649 = vunpack.c.l.b16 %v61
    %v650 = vunpack.c.h.b16 %v61
    %v651 = vunpack.c.l.b16 %v62
    %v652 = vunpack.c.h.b16 %v62
    %v653 = vunpack.c.l.b16 %v63
    %v654 = vunpack.c.h.b16 %v63
    %v655 = vunpack.c.l.b16 %v64
    %v656 = vunpack.c.h.b16 %v64
    %v657 = vunpack.c.l.b16 %v65
    %v658 = vunpack.c.h.b16 %v65
    %v659 = vunpack.c.l.b16 %v66
    %v660 = vunpack.c.h.b16 %v66
    %v661 = vunpack.c.l.b16 %v67
    %v662 = vunpack.c.h.b16 %v67
    %v663 = vunpack.c.l.b16 %v68
    %v664 = vunpack.c.h.b16 %v68
    %v665 = vunpack.c.l.b16 %v69
    %v666 = vunpack.c.h.b16 %v69
    %v667 = vunpack.c.l.b16 %v70
    %v668 = vunpack.c.h.b16 %v70
    %v669 = vunpack.c.l.b16 %v71
    %v670 = vunpack.c.h.b16 %v71
    %v671 = vunpack.c.l.b16 %v72
    %v672 = vunpack.c.h.b16 %v72
    %v673 = vunpack.c.l.b16 %v73
    %v674 = vunpack.c.h.b16 %v73
    %v675 = vunpack.c.l.b16 %v74
    %v676 = vunpack.c.h.b16 %v74
    %v677 = vunpack.c.l.b16 %v75
    %v678 = vunpack.c.h.b16 %v75
    %v679 = vunpack.c.l.b16 %v76
    %v680 = vunpack.c.h.b16 %v76
    %v681 = vunpack.c.l.b16 %v77
    %v682 = vunpack.c.h.b16 %v77
    %v683 = vunpack.c.l.b16 %v78
    %v684 = vunpack.c.h.b16 %v78
    %v685 = vunpack.c.l.b16 %v79
    %v686 = vunpack.c.h.b16 %v79
    %v687 = vunpack.c.l.b16 %v80
    %v688 = vunpack.c.h.b16 %v80
    %v689 = vunpack.c.l.b16 %v81
    %v690 = vunpack.c.h.b16 %v81
    %v691 = vunpack.c.l.b16 %v82
    %v692 = vunpack.c.h.b16 %v82
    %v693 = vunpack.c.l.b16 %v83
    %v694 = vunpack.c.h.b16 %v83
    %v695 = vunpack.c.l.b16 %v84
    %v696 = vunpack.c.h.b16 %v84
    %v697 = vunpack.c.l.b16 %v85
    %v698 = vunpack.c.h.b16 %v85
    %v699 = vunpack.c.l.b16 %v86
    %v700 = vunpack.c.h.b16 %v86
    %v701 = vunpack.c.l.b16 %v87
    %v702 = vunpack.c.h.b16 %v87
    %v703 = vunpack.c.l.b16 %v88
    %v704 = vunpack.c.h.b16 %v88
    %v705 = vunpack.c.l.b16 %v89
    %v706 = vunpack.c.h.b16 %v89
    %v707 = vunpack.c.l.b16 %v90
    %v708 = vunpack.c.h.b16 %v90
    %v709 = vunpack.c.l.b16 %v91
    %v710 = vunpack.c.h.b16 %v91
    %v711 = vunpack.c.l.b16 %v92
    %v712 = vunpack.c.h.b16 %v92
    %v713 = vunpack.c.l.b16 %v93
    %v714 = vunpack.c.h.b16 %v93
    %v715 = vunpack.c.l.b16 %v94
    %v716 = vunpack.c.h.b16 %v94
    %v717 = vunpack.c.l.b16 %v95
    %v718 = vunpack.c.h.b16 %v95
    %v719 = vunpack.c.l.b16 %v96
    %v720 = vunpack.c.h.b16 %v96
    %v721 = vunpack.c.l.b16 %v97
    %v722 = vunpack.c.h.b16 %v97
    %v723 = vunpack.c.l.b16 %v98
    %v724 = vunpack.c.h.b16 %v98
    %v725 = vunpack.c.l.b16 %v99
    %v726 = vunpack.c.h.b16 %v99
    %v727 = vunpack.c.l.b16 %v100
    %v728 = vunpack.c.h.b16 %v100
    %v729 = vunpack.c.l.b16 %v101
    %v730 = vunpack.c.h.b16 %v101
    %v731 = vunpack.c.l.b16 %v102
    %v732 = vunpack.c.h.b16 %v102
    %v733 = vunpack.c.l.b16 %v103
    %v734 = vunpack.c.h.b16 %v103
    %v735 = vunpack.c.l.b16 %v104
    %v736 = vunpack.c.h.b16 %v104
    %v737 = vunpack.c.l.b16 %v105
    %v738 = vunpack.c.h.b16 %v105
    %v739 = vunpack.c.l.b16 %v106
    %v740 = vunpack.c.h.b16 %v106
    %v741 = vunpack.c.l.b16 %v107
    %v742 = vunpack.c.h.b16 %v107
    %v743 = vunpack.c.l.b16 %v108
    %v744 = vunpack.c.h.b16 %v108
    %v745 = vunpack.c.l.b16 %v109
    %v746 = vunpack.c.h.b16 %v109
    %v747 = vunpack.c.l.b16 %v110
    %v748 = vunpack.c.h.b16 %v110
    %v749 = vunpack.c.l.b16 %v111
    %v750 = vunpack.c.h.b16 %v111
    %v751 = vunpack.c.l.b16 %v112
    %v752 = vunpack.c.h.b16 %v112
    %v753 = vunpack.c.l.b16 %v113
    %v754 = vunpack.c.h.b16 %v113
    %v755 = vunpack.c.l.b16 %v114
    %v756 = vunpack.c.h.b16 %v114
    %v757 = vunpack.c.l.b16 %v115
    %v758 = vunpack.c.h.b16 %v115
    %v759 = vunpack.c.l.b16 %v116
    %v760 = vunpack.c.h.b16 %v116
    %v761 = vunpack.c.l.b16 %v117
    %v762 = vunpack.c.h.b16 %v117
    %v763 = vunpack.c.l.b16 %v118
    %v764 = vunpack.c.h.b16 %v118
    %v765 = vunpack.c.l.b16 %v119
    %v766 = vunpack.c.h.b16 %v119
    %v767 = vunpack.c.l.b16 %v120
    %v768 = vunpack.c.h.b16 %v120
    %v769 = vunpack.c.l.b16 %v121
    %v770 = vunpack.c.h.b16 %v121
    %v771 = vunpack.c.l.b16 %v122
    %v772 = vunpack.c.h.b16 %v122
    %v773 = vunpack.c.l.b16 %v123
    %v774 = vunpack.c.h.b16 %v123
    %v775 = vunpack.c.l.b16 %v124
    %v776 = vunpack.c.h.b16 %v124
    %v777 = vunpack.c.l.b16 %v125
    %v778 = vunpack.c.h.b16 %v125
    %v779 = vunpack.c.l.b16 %v126
    %v780 = vunpack.c.h.b16 %v126
    %v781 = vunpack.c.l.b16 %v127
    %v782 = vunpack.c.h.b16 %v127
    %v783 = vunpack.c.l.b16 %v128
    %v784 = vunpack.c.h.b16 %v128
    %v785 = vunpack.c.l.b16 %v129
    %v786 = vunpack.c.h.b16 %v129
    %v787 = vunpack.c.l.b16 %v130
    %v788 = vunpack.c.h.b16 %v130
    %v789 = vunpack.c.l.b16 %v131
    %v790 = vunpack.c.h.b16 %v131
    %v791 = vunpack.c.l.b16 %v132
    %v792 = vunpack.c.h.b16 %v132
    %v793 = vunpack.c.l.b16 %v133
    %v794 = vunpack.c.h.b16 %v133
    %v795 = vunpack.c.l.b16 %v134
    %v796 = vunpack.c.h.b16 %v134
    %v797 = vunpack.c.l.b16 %v135
    %v798 = vunpack.c.h.b16 %v135
    %v799 = vunpack.c.l.b16 %v136
    %v800 = vunpack.c.h.b16 %v136
    %v801 = vunpack.c.l.b16 %v137
    %v802 = vunpack.c.h.b16 %v137
    %v803 = vunpack.c.l.b16 %v138
    %v804 = vunpack.c.h.b16 %v138
    %v805 = vunpack.c.l.b16 %v139
    %v806 = vunpack.c.h.b16 %v139
    %v807 = vunpack.c.l.b16 %v140
    %v808 = vunpack.c.h.b16 %v140
    %v809 = vunpack.c.l.b16 %v141
    %v810 = vunpack.c.h.b16 %v141
    %v811 = vunpack.c.l.b16 %v142
    %v812 = vunpack.c.h.b16 %v142
    %v813 = vunpack.c.l.b16 %v143
    %v814 = vunpack.c.h.b16 %v143
    %v815 = vunpack.c.l.b16 %v144
    %v816 = vunpack.c.h.b16 %v144
    %v817 = vunpack.c.l.b16 %v145
    %v818 = vunpack.c.h.b16 %v145
    %v819 = vunpack.c.l.b16 %v146
    %v820 = vunpack.c.h.b16 %v146
    %v821 = vunpack.c.l.b16 %v147
    %v822 = vunpack.c.h.b16 %v147
    %v823 = vunpack.c.l.b16 %v148
    %v824 = vunpack.c.h.b16 %v148
    %v825 = vunpack.c.l.b16 %v149
    %v826 = vunpack.c.h.b16 %v149
    %v827 = vunpack.c.l.b16 %v150
    %v828 = vunpack.c.h.b16 %v150
    %v829 = vunpack.c.l.b16 %v151
    %v830 = vunpack.c.h.b16 %v151
    %v831 = vunpack.c.l.b16 %v152
    %v832 = vunpack.c.h.b16 %v152
    %v833 = vunpack.c.l.b16 %v153
    %v834 = vunpack.c.h.b16 %v153
    %v835 = vunpack.c.l.b16 %v154
    %v836 = vunpack.c.h.b16 %v154
    %v837 = vunpack.c.l.b16 %v155
    %v838 = vunpack.c.h.b16 %v155
    %v839 = vunpack.c.l.b16 %v156
    %v840 = vunpack.c.h.b16 %v156
    %v841 = vunpack.c.l.b16 %v157
    %v842 = vunpack.c.h.b16 %v157
    %v843 = vunpack.c.l.b16 %v158
    %v844 = vunpack.c.h.b16 %v158
    %v845 = vunpack.c.l.b16 %v159
    %v846 = vunpack.c.h.b16 %v159
    %v847 = vunpack.c.l.b16 %v160
    %v848 = vunpack.c.h.b16 %v160
    %v849 = vunpack.c.l.b16 %v161
    %v850 = vunpack.c.h.b16 %v161
    %v851 = vunpack.c.l.b16 %v162
    %v852 = vunpack.c.h.b16 %v162
    %v853 = vunpack.c.l.b16 %v163
    %v854 = vunpack.c.h.b16 %v163
    %v855 = vunpack.c.l.b16 %v164
    %v856 = vunpack.c.h.b16 %v164
    %v857 = vunpack.c.l.b16 %v165
    %v858 = vunpack.c.h.b16 %v165
    %v859 = vunpack.c.l.b16 %v166
    %v860 = vunpack.c.h.b16 %v166
    %v861 = vunpack.c.l.b16 %v167
    %v862 = vunpack.c.h.b16 %v167
    %v863 = vunpack.c.l.b16 %v168
    %v864 = vunpack.c.h.b16 %v168
    %v865 = vunpack.c.l.b16 %v169
    %v866 = vunpack.c.h.b16 %v169
    %v867 = vunpack.c.l.b16 %v170
    %v868 = vunpack.c.h.b16 %v170
    %v869 = vunpack.c.l.b16 %v171
    %v870 = vunpack.c.h.b16 %v171
    %v871 = vunpack.c.l.b16 %v172
    %v872 = vunpack.c.h.b16 %v172
    %v873 = vunpack.c.l.b16 %v173
    %v874 = vunpack.c.h.b16 %v173
    %v875 = vunpack.c.l.b16 %v174
    %v876 = vunpack.c.h.b16 %v174
    %v877 = vunpack.c.l.b16 %v175
    %v878 = vunpack.c.h.b16 %v175
    %v879 = vunpack.c.l.b16 %v176
    %v880 = vunpack.c.h.b16 %v176
    %v881 = vunpack.c.l.b16 %v177
    %v882 = vunpack.c.h.b16 %v177
    %v883 = vunpack.c.l.b16 %v178
    %v884 = vunpack.c.h.b16 %v178
    %v885 = vunpack.c.l.b16 %v179
    %v886 = vunpack.c.h.b16 %v179
    %v887 = vunpack.c.l.b16 %v180
    %v888 = vunpack.c.h.b16 %v180
    %v889 = vunpack.c.l.b16 %v181
    %v890 = vunpack.c.h.b16 %v181
    %v891 = vunpack.c.l.b16 %v182
    %v892 = vunpack.c.h.b16 %v182
    %v893 = vunpack.c.l.b16 %v183
    %v894 = vunpack.c.h.b16 %v183
    %v895 = vunpack.c.l.b16 %v184
    %v896 = vunpack.c.h.b16 %v184
    %v897 = vunpack.c.l.b16 %v185
    %v898 = vunpack.c.h.b16 %v185
    %v899 = vunpack.c.l.b16 %v186
    %v900 = vunpack.c.h.b16 %v186
    %v901 = vunpack.c.l.b16 %v187
    %v902 = vunpack.c.h.b16 %v187
    %v903 = vunpack.c.l.b16 %v188
    %v904 = vunpack.c.h.b16 %v188
    %v905 = vunpack.c.l.b16 %v189
    %v906 = vunpack.c.h.b16 %v189
    %v907 = vunpack.c.l.b16 %v190
    %v908 = vunpack.c.h.b16 %v190
    %v909 = vunpack.c.l.b16 %v191
    %v910 = vunpack.c.h.b16 %v191
    %v911 = vunpack.c.l.b16 %v192
    %v912 = vunpack.c.h.b16 %v192
    %v913 = vunpack.c.l.b16 %v193
    %v914 = vunpack.c.h.b16 %v193
    %v915 = vunpack.c.l.b16 %v194
    %v916 = vunpack.c.h.b16 %v194
    %v917 = vunpack.c.l.b16 %v195
    %v918 = vunpack.c.h.b16 %v195
    %v919 = vunpack.c.l.b16 %v196
    %v920 = vunpack.c.h.b16 %v196
    %v921 = vunpack.c.l.b16 %v197
    %v922 = vunpack.c.h.b16 %v197
    %v923 = vunpack.c.l.b16 %v198
    %v924 = vunpack.c.h.b16 %v198
    %v925 = vunpack.c.l.b16 %v199
    %v926 = vunpack.c.h.b16 %v199
    %v927 = vunpack.c.l.b16 %v200
    %v928 = vunpack.c.h.b16 %v200
    %v929 = vunpack.c.l.b16 %v201
    %v930 = vunpack.c.h.b16 %v201
    %v931 = vunpack.c.l.b16 %v202
    %v932 = vunpack.c.h.b16 %v202
    %v933 = vunpack.c.l.b16 %v203
    %v934 = vunpack.c.h.b16 %v203
    %v935 = vunpack.c.l.b16 %v204
    %v936 = vunpack.c.h.b16 %v204
    %v937 = vunpack.c.l.b16 %v205
    %v938 = vunpack.c.h.b16 %v205
    %v939 = vunpack.c.l.b16 %v206
    %v940 = vunpack.c.h.b16 %v206
    %v941 = vunpack.c.l.b16 %v207
    %v942 = vunpack.c.h.b16 %v207
    %v943 = vunpack.c.l.b16 %v208
    %v944 = vunpack.c.h.b16 %v208
    %v945 = vunpack.c.l.b16 %v209
    %v946 = vunpack.c.h.b16 %v209
    %v947 = vunpack.c.l.b16 %v210
    %v948 = vunpack.c.h.b16 %v210
    %v949 = vunpack.c.l.b16 %v211
    %v950 = vunpack.c.h.b16 %v211
    %v951 = vunpack.c.l.b16 %v212
    %v952 = vunpack.c.h.b16 %v212
    %v953 = vunpack.c.l.b16 %v213
    %v954 = vunpack.c.h.b16 %v213
    %v955 = vunpack.c.l.b16 %v214
    %v956 = vunpack.c.h.b16 %v214
    %v957 = vunpack.c.l.b16 %v215
    %v958 = vunpack.c.h.b16 %v215
    %v959 = vunpack.c.l.b16 %v216
    %v960 = vunpack.c.h.b16 %v216
    %v961 = vunpack.c.l.b16 %v217
    %v962 = vunpack.c.h.b16 %v217
    %v963 = vunpack.c.l.b16 %v218
    %v964 = vunpack.c.h.b16 %v218
    %v965 = vunpack.c.l.b16 %v219
    %v966 = vunpack.c.h.b16 %v219
    %v967 = vunpack.c.l.b16 %v220
    %v968 = vunpack.c.h.b16 %v220
    %v969 = vunpack.c.l.b16 %v221
    %v970 = vunpack.c.h.b16 %v221
    %v971 = vunpack.c.l.b16 %v222
    %v972 = vunpack.c.h.b16 %v222
    %v973 = vunpack.c.l.b16 %v223
    %v974 = vunpack.c.h.b16 %v223
    %v975 = vunpack.c.l.b16 %v224
    %v976 = vunpack.c.h.b16 %v224
    %v977 = vunpack.c.l.b16 %v225
    %v978 = vunpack.c.h.b16 %v225
    %v979 = vunpack.c.l.b16 %v226
    %v980 = vunpack.c.h.b16 %v226
    %v981 = vunpack.c.l.b16 %v227
    %v982 = vunpack.c.h.b16 %v227
    %v983 = vunpack.c.l.b16 %v228
    %v984 = vunpack.c.h.b16 %v228
    %v985 = vunpack.c.l.b16 %v229
    %v986 = vunpack.c.h.b16 %v229
    %v987 = vunpack.c.l.b16 %v230
    %v988 = vunpack.c.h.b16 %v230
    %v989 = vunpack.c.l.b16 %v231
    %v990 = vunpack.c.h.b16 %v231
    %v991 = vunpack.c.l.b16 %v232
    %v992 = vunpack.c.h.b16 %v232
    %v993 = vunpack.c.l.b16 %v233
    %v994 = vunpack.c.h.b16 %v233
    %v995 = vunpack.c.l.b16 %v234
    %v996 = vunpack.c.h.b16 %v234
    %v997 = vunpack.c.l.b16 %v235
    %v998 = vunpack.c.h.b16 %v235
    %v999 = vunpack.c.l.b16 %v236
    %v1000 = vunpack.c.h.b16 %v236
    %v1001 = vunpack.c.l.b16 %v237
    %v1002 = vunpack.c.h.b16 %v237
    %v1003 = vunpack.c.l.b16 %v238
    %v1004 = vunpack.c.h.b16 %v238
    %v1005 = vunpack.c.l.b16 %v239
    %v1006 = vunpack.c.h.b16 %v239
    %v1007 = vunpack.c.l.b16 %v240
    %v1008 = vunpack.c.h.b16 %v240
    %v1009 = vunpack.c.l.b16 %v241
    %v1010 = vunpack.c.h.b16 %v241
    %v1011 = vunpack.c.l.b16 %v242
    %v1012 = vunpack.c.h.b16 %v242
    %v1013 = vunpack.c.l.b16 %v243
    %v1014 = vunpack.c.h.b16 %v243
    %v1015 = vunpack.c.l.b16 %v244
    %v1016 = vunpack.c.h.b16 %v244
    %v1017 = vunpack.c.l.b16 %v245
    %v1018 = vunpack.c.h.b16 %v245
    %v1019 = vunpack.c.l.b16 %v246
    %v1020 = vunpack.c.h.b16 %v246
    %v1021 = vunpack.c.l.b16 %v247
    %v1022 = vunpack.c.h.b16 %v247
    %v1023 = vunpack.c.l.b16 %v248
    %v1024 = vunpack.c.h.b16 %v248
    %v1025 = vunpack.c.l.b16 %v249
    %v1026 = vunpack.c.h.b16 %v249
    %v1027 = vunpack.c.l.b16 %v250
    %v1028 = vunpack.c.h.b16 %v250
    %v1029 = vunpack.c.l.b16 %v251
    %v1030 = vunpack.c.h.b16 %v251
    %v1031 = vunpack.c.l.b16 %v252
    %v1032 = vunpack.c.h.b16 %v252
    %v1033 = vunpack.c.l.b16 %v253
    %v1034 = vunpack.c.h.b16 %v253
    %v1035 = vunpack.c.l.b16 %v254
    %v1036 = vunpack.c.h.b16 %v254
    %v1037 = vunpack.c.l.b16 %v255
    %v1038 = vunpack.c.h.b16 %v255
    %v1039 = vunpack.c.l.b16 %v256
    %v1040 = vunpack.c.h.b16 %v256
    %v1041 = vunpack.c.l.b16 %v257
    %v1042 = vunpack.c.h.b16 %v257
    %v1043 = vunpack.c.l.b16 %v258
    %v1044 = vunpack.c.h.b16 %v258
    %v1045 = vunpack.c.l.b16 %v259
    %v1046 = vunpack.c.h.b16 %v259
    %v1047 = vunpack.c.l.b16 %v260
    %v1048 = vunpack.c.h.b16 %v260
    %v1049 = vunpack.c.l.b16 %v261
    %v1050 = vunpack.c.h.b16 %v261
    %v1051 = vunpack.c.l.b16 %v262
    %v1052 = vunpack.c.h.b16 %v262
    %v1053 = vunpack.c.l.b16 %v263
    %v1054 = vunpack.c.h.b16 %v263
    %v1055 = vunpack.c.l.b16 %v264
    %v1056 = vunpack.c.h.b16 %v264
    %v1057 = vunpack.c.l.b16 %v265
    %v1058 = vunpack.c.h.b16 %v265
    %v1059 = vunpack.c.l.b16 %v266
    %v1060 = vunpack.c.h.b16 %v266
    %v1061 = vunpack.c.l.b16 %v267
    %v1062 = vunpack.c.h.b16 %v267
    %v1063 = vunpack.c.l.b16 %v268
    %v1064 = vunpack.c.h.b16 %v268
    %v1065 = vunpack.c.l.b16 %v269
    %v1066 = vunpack.c.h.b16 %v269
    %v1067 = vunpack.c.l.b16 %v270
    %v1068 = vunpack.c.h.b16 %v270
    %v1069 = vunpack.c.l.b16 %v271
    %v1070 = vunpack.c.h.b16 %v271
    %v1071 = vunpack.c.l.b16 %v272
    %v1072 = vunpack.c.h.b16 %v272
    %v1073 = vunpack.c.l.b16 %v273
    %v1074 = vunpack.c.h.b16 %v273
    %v1075 = vunpack.c.l.b16 %v274
    %v1076 = vunpack.c.h.b16 %v274
    %v1077 = vunpack.c.l.b16 %v275
    %v1078 = vunpack.c.h.b16 %v275
    %v1079 = vunpack.c.l.b16 %v276
    %v1080 = vunpack.c.h.b16 %v276
    %v1081 = vunpack.c.l.b16 %v277
    %v1082 = vunpack.c.h.b16 %v277
    %v1083 = vunpack.c.l.b16 %v278
    %v1084 = vunpack.c.h.b16 %v278
    %v1085 = vunpack.c.l.b16 %v279
    %v1086 = vunpack.c.h.b16 %v279
    %v1087 = vunpack.c.l.b16 %v280
    %v1088 = vunpack.c.h.b16 %v280
    %v1089 = vunpack.c.l.b16 %v281
    %v1090 = vunpack.c.h.b16 %v281
    %v1091 = vunpack.c.l.b16 %v282
    %v1092 = vunpack.c.h.b16 %v282
    %v1093 = vunpack.c.l.b16 %v283
    %v1094 = vunpack.c.h.b16 %v283
    %v1095 = vunpack.c.l.b16 %v284
    %v1096 = vunpack.c.h.b16 %v284
    %v1097 = vunpack.c.l.b16 %v285
    %v1098 = vunpack.c.h.b16 %v285
    %v1099 = vunpack.c.l.b16 %v286
    %v1100 = vunpack.c.h.b16 %v286
    %v1101 = vunpack.c.l.b16 %v287
    %v1102 = vunpack.c.h.b16 %v287
    %v1103 = vunpack.c.l.b16 %v288
    %v1104 = vunpack.c.h.b16 %v288
    %v1105 = vunpack.c.l.b16 %v289
    %v1106 = vunpack.c.h.b16 %v289
    %v1107 = vunpack.c.l.b16 %v290
    %v1108 = vunpack.c.h.b16 %v290
    %v1109 = vunpack.c.l.b16 %v291
    %v1110 = vunpack.c.h.b16 %v291
    %v1111 = vunpack.c.l.b16 %v292
    %v1112 = vunpack.c.h.b16 %v292
    %v1113 = vunpack.c.l.b16 %v293
    %v1114 = vunpack.c.h.b16 %v293
    %v1115 = vunpack.c.l.b16 %v294
    %v1116 = vunpack.c.h.b16 %v294
    %v1117 = vunpack.c.l.b16 %v295
    %v1118 = vunpack.c.h.b16 %v295
    %v1119 = vunpack.c.l.b16 %v296
    %v1120 = vunpack.c.h.b16 %v296
    %v1121 = vunpack.c.l.b16 %v297
    %v1122 = vunpack.c.h.b16 %v297
    %v1123 = vunpack.c.l.b16 %v298
    %v1124 = vunpack.c.h.b16 %v298
    %v1125 = vunpack.c.l.b16 %v299
    %v1126 = vunpack.c.h.b16 %v299
    %v1127 = vunpack.c.l.b16 %v300
    %v1128 = vunpack.c.h.b16 %v300
    %v1129 = vunpack.c.l.b16 %v301
    %v1130 = vunpack.c.h.b16 %v301
    %v1131 = vunpack.c.l.b16 %v302
    %v1132 = vunpack.c.h.b16 %v302
    %v1133 = vunpack.c.l.b16 %v303
    %v1134 = vunpack.c.h.b16 %v303
    %v1135 = vunpack.c.l.b16 %v304
    %v1136 = vunpack.c.h.b16 %v304
    %v1137 = vunpack.c.l.b16 %v305
    %v1138 = vunpack.c.h.b16 %v305
    %v1139 = vunpack.c.l.b16 %v306
    %v1140 = vunpack.c.h.b16 %v306
    %v1141 = vunpack.c.l.b16 %v307
    %v1142 = vunpack.c.h.b16 %v307
    %v1143 = vunpack.c.l.b16 %v308
    %v1144 = vunpack.c.h.b16 %v308
    %v1145 = vunpack.c.l.b16 %v309
    %v1146 = vunpack.c.h.b16 %v309
    %v1147 = vunpack.c.l.b16 %v310
    %v1148 = vunpack.c.h.b16 %v310
    %v1149 = vunpack.c.l.b16 %v311
    %v1150 = vunpack.c.h.b16 %v311
    %v1151 = vunpack.c.l.b16 %v312
    %v1152 = vunpack.c.h.b16 %v312
    %v1153 = vunpack.c.l.b16 %v313
    %v1154 = vunpack.c.h.b16 %v313
    %v1155 = vunpack.c.l.b16 %v314
    %v1156 = vunpack.c.h.b16 %v314
    %v1157 = vpack.c.b16 %v649, %v645
    %v1158 = vpack.c.b16 %v650, %v646
    %v1159 = vpack.c.b16 %v651, %v647
    %v1160 = vpack.c.b16 %v652, %v648
    %v1161 = vpack.c.b16 %v657, %v653
    %v1162 = vpack.c.b16 %v658, %v654
    %v1163 = vpack.c.b16 %v659, %v655
    %v1164 = vpack.c.b16 %v660, %v656
    %v1165 = vpack.c.b16 %v665, %v661
    %v1166 = vpack.c.b16 %v666, %v662
    %v1167 = vpack.c.b16 %v667, %v663
    %v1168 = vpack.c.b16 %v668, %v664
    %v1169 = vpack.c.b16 %v673, %v669
    %v1170 = vpack.c.b16 %v674, %v670
    %v1171 = vpack.c.b16 %v675, %v671
    %v1172 = vpack.c.b16 %v676, %v672
    %v1173 = vpack.c.b16 %v681, %v677
    %v1174 = vpack.c.b16 %v682, %v678
    %v1175 = vpack.c.b16 %v683, %v679
    %v1176 = vpack.c.b16 %v684, %v680
    %v1177 = vpack.c.b16 %v689, %v685
    %v1178 = vpack.c.b16 %v690, %v686
    %v1179 = vpack.c.b16 %v691, %v687
    %v1180 = vpack.c.b16 %v692, %v688
    %v1181 = vpack.c.b16 %v697, %v693
    %v1182 = vpack.c.b16 %v698, %v694
    %v1183 = vpack.c.b16 %v699, %v695
    %v1184 = vpack.c.b16 %v700, %v696
    %v1185 = vpack.c.b16 %v705, %v701
    %v1186 = vpack.c.b16 %v706, %v702
    %v1187 = vpack.c.b16 %v707, %v703
    %v1188 = vpack.c.b16 %v708, %v704
    %v1189 = vpack.c.b16 %v713, %v709
    %v1190 = vpack.c.b16 %v714, %v710
    %v1191 = vpack.c.b16 %v715, %v711
    %v1192 = vpack.c.b16 %v716, %v712
    %v1193 = vpack.c.b16 %v721, %v717
    %v1194 = vpack.c.b16 %v722, %v718
    %v1195 = vpack.c.b16 %v723, %v719
    %v1196 = vpack.c.b16 %v724, %v720
    %v1197 = vpack.c.b16 %v729, %v725
    %v1198 = vpack.c.b16 %v730, %v726
    %v1199 = vpack.c.b16 %v731, %v727
    %v1200 = vpack.c.b16 %v732, %v728
    %v1201 = vpack.c.b16 %v737, %v733
    %v1202 = vpack.c.b16 %v738, %v734
    %v1203 = vpack.c.b16 %v739, %v735
    %v1204 = vpack.c.b16 %v740, %v736
    %v1205 = vpack.c.b16 %v745, %v741
    %v1206 = vpack.c.b16 %v746, %v742
    %v1207 = vpack.c.b16 %v747, %v743
    %v1208 = vpack.c.b16 %v748, %v744
    %v1209 = vpack.c.b16 %v753, %v749
    %v1210 = vpack.c.b16 %v754, %v750
    %v1211 = vpack.c.b16 %v755, %v751
    %v1212 = vpack.c.b16 %v756, %v752
    %v1213 = vpack.c.b16 %v761, %v757
    %v1214 = vpack.c.b16 %v762, %v758
    %v1215 = vpack.c.b16 %v763, %v759
    %v1216 = vpack.c.b16 %v764, %v760
    %v1217 = vpack.c.b16 %v769, %v765
    %v1218 = vpack.c.b16 %v770, %v766
    %v1219 = vpack.c.b16 %v771, %v767
    %v1220 = vpack.c.b16 %v772, %v768
    %v1221 = vpack.c.b16 %v777, %v773
    %v1222 = vpack.c.b16 %v778, %v774
    %v1223 = vpack.c.b16 %v779, %v775
    %v1224 = vpack.c.b16 %v780, %v776
    %v1225 = vpack.c.b16 %v785, %v781
    %v1226 = vpack.c.b16 %v786, %v782
    %v1227 = vpack.c.b16 %v787, %v783
    %v1228 = vpack.c.b16 %v788, %v784
    %v1229 = vpack.c.b16 %v793, %v789
    %v1230 = vpack.c.b16 %v794, %v790
    %v1231 = vpack.c.b16 %v795, %v791
    %v1232 = vpack.c.b16 %v796, %v792
    %v1233 = vpack.c.b16 %v801, %v797
    %v1234 = vpack.c.b16 %v802, %v798
    %v1235 = vpack.c.b16 %v803, %v799
    %v1236 = vpack.c.b16 %v804, %v800
    %v1237 = vpack.c.b16 %v809, %v805
    %v1238 = vpack.c.b16 %v810, %v806
    %v1239 = vpack.c.b16 %v811, %v807
    %v1240 = vpack.c.b16 %v812, %v808
    %v1241 = vpack.c.b16 %v817, %v813
    %v1242 = vpack.c.b16 %v818, %v814
    %v1243 = vpack.c.b16 %v819, %v815
    %v1244 = vpack.c.b16 %v820, %v816
    %v1245 = vpack.c.b16 %v825, %v821
    %v1246 = vpack.c.b16 %v826, %v822
    %v1247 = vpack.c.b16 %v827, %v823
    %v1248 = vpack.c.b16 %v828, %v824
    %v1249 = vpack.c.b16 %v833, %v829
    %v1250 = vpack.c.b16 %v834, %v830
    %v1251 = vpack.c.b16 %v835, %v831
    %v1252 = vpack.c.b16 %v836, %v832
    %v1253 = vpack.c.b16 %v841, %v837
    %v1254 = vpack.c.b16 %v842, %v838
    %v1255 = vpack.c.b16 %v843, %v839
    %v1256 = vpack.c.b16 %v844, %v840
    %v1257 = vpack.c.b16 %v849, %v845
    %v1258 = vpack.c.b16 %v850, %v846
    %v1259 = vpack.c.b16 %v851, %v847
    %v1260 = vpack.c.b16 %v852, %v848
    %v1261 = vpack.c.b16 %v857, %v853
    %v1262 = vpack.c.b16 %v858, %v854
    %v1263 = vpack.c.b16 %v859, %v855
    %v1264 = vpack.c.b16 %v860, %v856
    %v1265 = vpack.c.b16 %v865, %v861
    %v1266 = vpack.c.b16 %v866, %v862
    %v1267 = vpack.c.b16 %v867, %v863
    %v1268 = vpack.c.b16 %v868, %v864
    %v1269 = vpack.c.b16 %v873, %v869
    %v1270 = vpack.c.b16 %v874, %v870
    %v1271 = vpack.c.b16 %v875, %v871
    %v1272 = vpack.c.b16 %v876, %v872
    %v1273 = vpack.c.b16 %v881, %v877
    %v1274 = vpack.c.b16 %v882, %v878
    %v1275 = vpack.c.b16 %v883, %v879
    %v1276 = vpack.c.b16 %v884, %v880
    %v1277 = vpack.c.b16 %v889, %v885
    %v1278 = vpack.c.b16 %v890, %v886
    %v1279 = vpack.c.b16 %v891, %v887
    %v1280 = vpack.c.b16 %v892, %v888
    %v1281 = vpack.c.b16 %v897, %v893
    %v1282 = vpack.c.b16 %v898, %v894
    %v1283 = vpack.c.b16 %v899, %v895
    %v1284 = vpack.c.b16 %v900, %v896
    %v1285 = vpack.c.b16 %v905, %v901
    %v1286 = vpack.c.b16 %v906, %v902
    %v1287 = vpack.c.b16 %v907, %v903
    %v1288 = vpack.c.b16 %v908, %v904
    %v1289 = vpack.c.b16 %v913, %v909
    %v1290 = vpack.c.b16 %v914, %v910
    %v1291 = vpack.c.b16 %v915, %v911
    %v1292 = vpack.c.b16 %v916, %v912
    %v1293 = vpack.c.b16 %v921, %v917
    %v1294 = vpack.c.b16 %v922, %v918
    %v1295 = vpack.c.b16 %v923, %v919
    %v1296 = vpack.c.b16 %v924, %v920
    %v1297 = vpack.c.b16 %v929, %v925
    %v1298 = vpack.c.b16 %v930, %v926
    %v1299 = vpack.c.b16 %v931, %v927
    %v1300 = vpack.c.b16 %v932, %v928
    %v1301 = vpack.c.b16 %v937, %v933
    %v1302 = vpack.c.b16 %v938, %v934
    %v1303 = vpack.c.b16 %v939, %v935
    %v1304 = vpack.c.b16 %v940, %v936
    %v1305 = vpack.c.b16 %v945, %v941
    %v1306 = vpack.c.b16 %v946, %v942
    %v1307 = vpack.c.b16 %v947, %v943
    %v1308 = vpack.c.b16 %v948, %v944
    %v1309 = vpack.c.b16 %v953, %v949
    %v1310 = vpack.c.b16 %v954, %v950
    %v1311 = vpack.c.b16 %v955, %v951
    %v1312 = vpack.c.b16 %v956, %v952
    %v1313 = vpack.c.b16 %v961, %v957
    %v1314 = vpack.c.b16 %v962, %v958
    %v1315 = vpack.c.b16 %v963, %v959
    %v1316 = vpack.c.b16 %v964, %v960
    %v1317 = vpack.c.b16 %v969, %v965
    %v1318 = vpack.c.b16 %v970, %v966
    %v1319 = vpack.c.b16 %v971, %v967
    %v1320 = vpack.c.b16 %v972, %v968
    %v1321 = vpack.c.b16 %v977, %v973
    %v1322 = vpack.c.b16 %v978, %v974
    %v1323 = vpack.c.b16 %v979, %v975
    %v1324 = vpack.c.b16 %v980, %v976
    %v1325 = vpack.c.b16 %v985, %v981
    %v1326 = vpack.c.b16 %v986, %v982
    %v1327 = vpack.c.b16 %v987, %v983
    %v1328 = vpack.c.b16 %v988, %v984
    %v1329 = vpack.c.b16 %v993, %v989
    %v1330 = vpack.c.b16 %v994, %v990
    %v1331 = vpack.c.b16 %v995, %v991
    %v1332 = vpack.c.b16 %v996, %v992
    %v1333 = vpack.c.b16 %v1001, %v997
    %v1334 = vpack.c.b16 %v1002, %v998
    %v1335 = vpack.c.b16 %v1003, %v999
    %v1336 = vpack.c.b16 %v1004, %v1000
    %v1337 = vpack.c.b16 %v1009, %v1005
    %v1338 = vpack.c.b16 %v1010, %v1006
    %v1339 = vpack.c.b16 %v1011, %v1007
    %v1340 = vpack.c.b16 %v1012, %v1008
    %v1341 = vpack.c.b16 %v1017, %v1013
    %v1342 = vpack.c.b16 %v1018, %v1014
    %v1343 = vpack.c.b16 %v1019, %v1015
    %v1344 = vpack.c.b16 %v1020, %v1016
    %v1345 = vpack.c.b16 %v1025, %v1021
    %v1346 = vpack.c.b16 %v1026, %v1022
    %v1347 = vpack.c.b16 %v1027, %v1023
    %v1348 = vpack.c.b16 %v1028, %v1024
    %v1349 = vpack.c.b16 %v1033, %v1029
    %v1350 = vpack.c.b16 %v1034, %v1030
    %v1351 = vpack.c.b16 %v1035, %v1031
    %v1352 = vpack.c.b16 %v1036, %v1032
    %v1353 = vpack.c.b16 %v1041, %v1037
    %v1354 = vpack.c.b16 %v1042, %v1038
    %v1355 = vpack.c.b16 %v1043, %v1039
    %v1356 = vpack.c.b16 %v1044, %v1040
    %v1357 = vpack.c.b16 %v1049, %v1045
    %v1358 = vpack.c.b16 %v1050, %v1046
    %v1359 = vpack.c.b16 %v1051, %v1047
    %v1360 = vpack.c.b16 %v1052, %v1048
    %v1361 = vpack.c.b16 %v1057, %v1053
    %v1362 = vpack.c.b16 %v1058, %v1054
    %v1363 = vpack.c.b16 %v1059, %v1055
    %v1364 = vpack.c.b16 %v1060, %v1056
    %v1365 = vpack.c.b16 %v1065, %v1061
    %v1366 = vpack.c.b16 %v1066, %v1062
    %v1367 = vpack.c.b16 %v1067, %v1063
    %v1368 = vpack.c.b16 %v1068, %v1064
    %v1369 = vpack.c.b16 %v1073, %v1069
    %v1370 = vpack.c.b16 %v1074, %v1070
    %v1371 = vpack.c.b16 %v1075, %v1071
    %v1372 = vpack.c.b16 %v1076, %v1072
    %v1373 = vpack.c.b16 %v1081, %v1077
    %v1374 = vpack.c.b16 %v1082, %v1078
    %v1375 = vpack.c.b16 %v1083, %v1079
    %v1376 = vpack.c.b16 %v1084, %v1080
    %v1377 = vpack.c.b16 %v1089, %v1085
    %v1378 = vpack.c.b16 %v1090, %v1086
    %v1379 = vpack.c.b16 %v1091, %v1087
    %v1380 = vpack.c.b16 %v1092, %v1088
    %v1381 = vpack.c.b16 %v1097, %v1093
    %v1382 = vpack.c.b16 %v1098, %v1094
    %v1383 = vpack.c.b16 %v1099, %v1095
    %v1384 = vpack.c.b16 %v1100, %v1096
    %v1385 = vpack.c.b16 %v1105, %v1101
    %v1386 = vpack.c.b16 %v1106, %v1102
    %v1387 = vpack.c.b16 %v1107, %v1103
    %v1388 = vpack.c.b16 %v1108, %v1104
    %v1389 = vpack.c.b16 %v1113, %v1109
    %v1390 = vpack.c.b16 %v1114, %v1110
    %v1391 = vpack.c.b16 %v1115, %v1111
    %v1392 = vpack.c.b16 %v1116, %v1112
    %v1393 = vpack.c.b16 %v1121, %v1117
    %v1394 = vpack.c.b16 %v1122, %v1118
    %v1395 = vpack.c.b16 %v1123, %v1119
    %v1396 = vpack.c.b16 %v1124, %v1120
    %v1397 = vpack.c.b16 %v1129, %v1125
    %v1398 = vpack.c.b16 %v1130, %v1126
    %v1399 = vpack.c.b16 %v1131, %v1127
    %v1400 = vpack.c.b16 %v1132, %v1128
    %v1401 = vpack.c.b16 %v1137, %v1133
    %v1402 = vpack.c.b16 %v1138, %v1134
    %v1403 = vpack.c.b16 %v1139, %v1135
    %v1404 = vpack.c.b16 %v1140, %v1136
    %v1405 = vpack.c.b16 %v1145, %v1141
    %v1406 = vpack.c.b16 %v1146, %v1142
    %v1407 = vpack.c.b16 %v1147, %v1143
    %v1408 = vpack.c.b16 %v1148, %v1144
    %v1409 = vpack.c.b16 %v1153, %v1149
    %v1410 = vpack.c.b16 %v1154, %v1150
    %v1411 = vpack.c.b16 %v1155, %v1151
    %v1412 = vpack.c.b16 %v1156, %v1152
    %1669 = vmatprep.subr.bf16.mxu0 %v1186
    %1670 = vmatpush1.bf16.msra.mxu0 %v1185
    %1671 = vmatprep.subr.bf16.mxu0 %v1182
    %1672 = vmatpush1.bf16.msra.mxu0 %v1181
    %1673 = vmatprep.subr.bf16.mxu0 %v1178
    %1674 = vmatpush1.bf16.msra.mxu0 %v1177
    %1675 = vmatprep.subr.bf16.mxu0 %v1174
    %1676 = vmatpush1.bf16.msra.mxu0 %v1173
    %1677 = vmatprep.subr.bf16.mxu0 %v1170
    %1678 = vmatpush1.bf16.msra.mxu0 %v1169
    %1679 = vmatprep.subr.bf16.mxu0 %v1166
    %1680 = vmatpush1.bf16.msra.mxu0 %v1165
    %1681 = vmatprep.subr.bf16.mxu0 %v1162
    %1682 = vmatpush1.bf16.msra.mxu0 %v1161
    %1683 = vmatprep.subr.bf16.mxu0 %v1158
    %1684 = vmatpush1.bf16.msra.mxu0 %v1157
    %1685 = vmatprep.subr.bf16.mxu0 %v1218
    %1686 = vmatpush2.bf16.msra.mxu0 %v1217
    %1687 = vmatprep.subr.bf16.mxu0 %v1214
    %1688 = vmatpush2.bf16.msra.mxu0 %v1213
    %1689 = vmatprep.subr.bf16.mxu0 %v1210
    %1690 = vmatpush2.bf16.msra.mxu0 %v1209
    %1691 = vmatprep.subr.bf16.mxu0 %v1206
    %1692 = vmatpush2.bf16.msra.mxu0 %v1205
    %1693 = vmatprep.subr.bf16.mxu0 %v1202
    %1694 = vmatpush2.bf16.msra.mxu0 %v1201
    %1695 = vmatprep.subr.bf16.mxu0 %v1198
    %1696 = vmatpush2.bf16.msra.mxu0 %v1197
    %1697 = vmatprep.subr.bf16.mxu0 %v1194
    %1698 = vmatpush2.bf16.msra.mxu0 %v1193
    %1699 = vmatprep.subr.bf16.mxu0 %v1190
    %1700 = vmatpush2.bf16.msra.mxu0 %v1189
    %1701 = vmatprep.mubr.bf16.mxu0 %v360
    %1702 = vmatmul.mubr.bf16.gmra.mxu0 %v359
    %v1703 = vpop.f32.mrf.mxu0
    %v1704 = vadd.f32 %v372, %v1703
    %v1705 = vpop.f32.mrf.mxu0
    %v1706 = vadd.f32 %v376, %v1705
    %v1707 = vpop.f32.mrf.mxu0
    %v1708 = vpop.f32.mrf.mxu0
    %1709 = vdwg.mxu0
    %1710 = vmatprep.subr.bf16.mxu0 %v1250
    %1711 = vmatpush1.bf16.msra.mxu0 %v1249
    %1712 = vmatprep.subr.bf16.mxu0 %v1246
    %1713 = vmatpush1.bf16.msra.mxu0 %v1245
    %1714 = vmatprep.subr.bf16.mxu0 %v1242
    %1715 = vmatpush1.bf16.msra.mxu0 %v1241
    %1716 = vmatprep.subr.bf16.mxu0 %v1238
    %1717 = vmatpush1.bf16.msra.mxu0 %v1237
    %1718 = vmatprep.subr.bf16.mxu0 %v1234
    %1719 = vmatpush1.bf16.msra.mxu0 %v1233
    %1720 = vmatprep.subr.bf16.mxu0 %v1230
    %1721 = vmatpush1.bf16.msra.mxu0 %v1229
    %1722 = vmatprep.subr.bf16.mxu0 %v1226
    %1723 = vmatpush1.bf16.msra.mxu0 %v1225
    %1724 = vmatprep.subr.bf16.mxu0 %v1222
    %1725 = vmatpush1.bf16.msra.mxu0 %v1221
    %1726 = vmatprep.subr.bf16.mxu0 %v1282
    %1727 = vmatpush2.bf16.msra.mxu0 %v1281
    %1728 = vmatprep.subr.bf16.mxu0 %v1278
    %1729 = vmatpush2.bf16.msra.mxu0 %v1277
    %1730 = vmatprep.subr.bf16.mxu0 %v1274
    %1731 = vmatpush2.bf16.msra.mxu0 %v1273
    %1732 = vmatprep.subr.bf16.mxu0 %v1270
    %1733 = vmatpush2.bf16.msra.mxu0 %v1269
    %1734 = vmatprep.subr.bf16.mxu0 %v1266
    %1735 = vmatpush2.bf16.msra.mxu0 %v1265
    %1736 = vmatprep.subr.bf16.mxu0 %v1262
    %1737 = vmatpush2.bf16.msra.mxu0 %v1261
    %1738 = vmatprep.subr.bf16.mxu0 %v1258
    %1739 = vmatpush2.bf16.msra.mxu0 %v1257
    %1740 = vmatprep.subr.bf16.mxu0 %v1254
    %1741 = vmatpush2.bf16.msra.mxu0 %v1253
    %1742 = vmatprep.mubr.bf16.mxu0 %v362
    %1743 = vmatmul.mubr.bf16.gmra.mxu0 %v361
    %v1744 = vpop.f32.mrf.mxu0
    %v1745 = vadd.f32 %v1704, %v1744
    %v1746 = vpop.f32.mrf.mxu0
    %v1747 = vadd.f32 %v1706, %v1746
    %v1748 = vpop.f32.mrf.mxu0
    %v1749 = vpop.f32.mrf.mxu0
    %1750 = vdwg.mxu0
    %1751 = vmatprep.subr.bf16.mxu0 %v1314
    %1752 = vmatpush1.bf16.msra.mxu0 %v1313
    %1753 = vmatprep.subr.bf16.mxu0 %v1310
    %1754 = vmatpush1.bf16.msra.mxu0 %v1309
    %1755 = vmatprep.subr.bf16.mxu0 %v1306
    %1756 = vmatpush1.bf16.msra.mxu0 %v1305
    %1757 = vmatprep.subr.bf16.mxu0 %v1302
    %1758 = vmatpush1.bf16.msra.mxu0 %v1301
    %1759 = vmatprep.subr.bf16.mxu0 %v1298
    %1760 = vmatpush1.bf16.msra.mxu0 %v1297
    %1761 = vmatprep.subr.bf16.mxu0 %v1294
    %1762 = vmatpush1.bf16.msra.mxu0 %v1293
    %1763 = vmatprep.subr.bf16.mxu0 %v1290
    %1764 = vmatpush1.bf16.msra.mxu0 %v1289
    %1765 = vmatprep.subr.bf16.mxu0 %v1286
    %1766 = vmatpush1.bf16.msra.mxu0 %v1285
    %1767 = vmatprep.subr.bf16.mxu0 %v1346
    %1768 = vmatpush2.bf16.msra.mxu0 %v1345
    %1769 = vmatprep.subr.bf16.mxu0 %v1342
    %1770 = vmatpush2.bf16.msra.mxu0 %v1341
    %1771 = vmatprep.subr.bf16.mxu0 %v1338
    %1772 = vmatpush2.bf16.msra.mxu0 %v1337
    %1773 = vmatprep.subr.bf16.mxu0 %v1334
    %1774 = vmatpush2.bf16.msra.mxu0 %v1333
    %1775 = vmatprep.subr.bf16.mxu0 %v1330
    %1776 = vmatpush2.bf16.msra.mxu0 %v1329
    %1777 = vmatprep.subr.bf16.mxu0 %v1326
    %1778 = vmatpush2.bf16.msra.mxu0 %v1325
    %1779 = vmatprep.subr.bf16.mxu0 %v1322
    %1780 = vmatpush2.bf16.msra.mxu0 %v1321
    %1781 = vmatprep.subr.bf16.mxu0 %v1318
    %1782 = vmatpush2.bf16.msra.mxu0 %v1317
    %1783 = vmatprep.mubr.bf16.mxu0 %v364
    %1784 = vmatmul.mubr.bf16.gmra.mxu0 %v363
    %v1785 = vpop.f32.mrf.mxu0
    %v1786 = vadd.f32 %v1745, %v1785
    %v1787 = vpop.f32.mrf.mxu0
    %v1788 = vadd.f32 %v1747, %v1787
    %v1789 = vpop.f32.mrf.mxu0
    %v1790 = vpop.f32.mrf.mxu0
    %1791 = vdwg.mxu0
    %1792 = vmatprep.subr.bf16.mxu0 %v1378
    %1793 = vmatpush1.bf16.msra.mxu0 %v1377
    %1794 = vmatprep.subr.bf16.mxu0 %v1374
    %1795 = vmatpush1.bf16.msra.mxu0 %v1373
    %1796 = vmatprep.subr.bf16.mxu0 %v1370
    %1797 = vmatpush1.bf16.msra.mxu0 %v1369
    %1798 = vmatprep.subr.bf16.mxu0 %v1366
    %1799 = vmatpush1.bf16.msra.mxu0 %v1365
    %1800 = vmatprep.subr.bf16.mxu0 %v1362
    %1801 = vmatpush1.bf16.msra.mxu0 %v1361
    %1802 = vmatprep.subr.bf16.mxu0 %v1358
    %1803 = vmatpush1.bf16.msra.mxu0 %v1357
    %1804 = vmatprep.subr.bf16.mxu0 %v1354
    %1805 = vmatpush1.bf16.msra.mxu0 %v1353
    %1806 = vmatprep.subr.bf16.mxu0 %v1350
    %1807 = vmatpush1.bf16.msra.mxu0 %v1349
    %1808 = vmatprep.subr.bf16.mxu0 %v1410
    %1809 = vmatpush2.bf16.msra.mxu0 %v1409
    %1810 = vmatprep.subr.bf16.mxu0 %v1406
    %1811 = vmatpush2.bf16.msra.mxu0 %v1405
    %1812 = vmatprep.subr.bf16.mxu0 %v1402
    %1813 = vmatpush2.bf16.msra.mxu0 %v1401
    %1814 = vmatprep.subr.bf16.mxu0 %v1398
    %1815 = vmatpush2.bf16.msra.mxu0 %v1397
    %1816 = vmatprep.subr.bf16.mxu0 %v1394
    %1817 = vmatpush2.bf16.msra.mxu0 %v1393
    %1818 = vmatprep.subr.bf16.mxu0 %v1390
    %1819 = vmatpush2.bf16.msra.mxu0 %v1389
    %1820 = vmatprep.subr.bf16.mxu0 %v1386
    %1821 = vmatpush2.bf16.msra.mxu0 %v1385
    %1822 = vmatprep.subr.bf16.mxu0 %v1382
    %1823 = vmatpush2.bf16.msra.mxu0 %v1381
    %1824 = vmatprep.mubr.bf16.mxu0 %v366
    %1825 = vmatmul.mubr.bf16.gmra.mxu0 %v365
    %v1826 = vpop.f32.mrf.mxu0
    %v1827 = vadd.f32 %v1786, %v1826
    %v1828 = vpop.f32.mrf.mxu0
    %v1829 = vadd.f32 %v1788, %v1828
    %v1830 = vpop.f32.mrf.mxu0
    %v1831 = vpop.f32.mrf.mxu0
    %1832 = vdwg.mxu0
    %1833 = vmatprep.subr.bf16.mxu0 %v1188
    %1834 = vmatpush1.bf16.msra.mxu0 %v1187
    %1835 = vmatprep.subr.bf16.mxu0 %v1184
    %1836 = vmatpush1.bf16.msra.mxu0 %v1183
    %1837 = vmatprep.subr.bf16.mxu0 %v1180
    %1838 = vmatpush1.bf16.msra.mxu0 %v1179
    %1839 = vmatprep.subr.bf16.mxu0 %v1176
    %1840 = vmatpush1.bf16.msra.mxu0 %v1175
    %1841 = vmatprep.subr.bf16.mxu0 %v1172
    %1842 = vmatpush1.bf16.msra.mxu0 %v1171
    %1843 = vmatprep.subr.bf16.mxu0 %v1168
    %1844 = vmatpush1.bf16.msra.mxu0 %v1167
    %1845 = vmatprep.subr.bf16.mxu0 %v1164
    %1846 = vmatpush1.bf16.msra.mxu0 %v1163
    %1847 = vmatprep.subr.bf16.mxu0 %v1160
    %1848 = vmatpush1.bf16.msra.mxu0 %v1159
    %1849 = vmatprep.subr.bf16.mxu0 %v1220
    %1850 = vmatpush2.bf16.msra.mxu0 %v1219
    %1851 = vmatprep.subr.bf16.mxu0 %v1216
    %1852 = vmatpush2.bf16.msra.mxu0 %v1215
    %1853 = vmatprep.subr.bf16.mxu0 %v1212
    %1854 = vmatpush2.bf16.msra.mxu0 %v1211
    %1855 = vmatprep.subr.bf16.mxu0 %v1208
    %1856 = vmatpush2.bf16.msra.mxu0 %v1207
    %1857 = vmatprep.subr.bf16.mxu0 %v1204
    %1858 = vmatpush2.bf16.msra.mxu0 %v1203
    %1859 = vmatprep.subr.bf16.mxu0 %v1200
    %1860 = vmatpush2.bf16.msra.mxu0 %v1199
    %1861 = vmatprep.subr.bf16.mxu0 %v1196
    %1862 = vmatpush2.bf16.msra.mxu0 %v1195
    %1863 = vmatprep.subr.bf16.mxu0 %v1192
    %1864 = vmatpush2.bf16.msra.mxu0 %v1191
    %1865 = vmatprep.mubr.bf16.mxu0 %v360
    %1866 = vmatmul.mubr.bf16.gmra.mxu0 %v359
    %v1867 = vpop.f32.mrf.mxu0
    %v1868 = vadd.f32 %v380, %v1867
    %v1869 = vpop.f32.mrf.mxu0
    %v1870 = vadd.f32 %v384, %v1869
    %v1871 = vpop.f32.mrf.mxu0
    %v1872 = vpop.f32.mrf.mxu0
    %1873 = vdwg.mxu0
    %1874 = vmatprep.subr.bf16.mxu0 %v1252
    %1875 = vmatpush1.bf16.msra.mxu0 %v1251
    %1876 = vmatprep.subr.bf16.mxu0 %v1248
    %1877 = vmatpush1.bf16.msra.mxu0 %v1247
    %1878 = vmatprep.subr.bf16.mxu0 %v1244
    %1879 = vmatpush1.bf16.msra.mxu0 %v1243
    %1880 = vmatprep.subr.bf16.mxu0 %v1240
    %1881 = vmatpush1.bf16.msra.mxu0 %v1239
    %1882 = vmatprep.subr.bf16.mxu0 %v1236
    %1883 = vmatpush1.bf16.msra.mxu0 %v1235
    %1884 = vmatprep.subr.bf16.mxu0 %v1232
    %1885 = vmatpush1.bf16.msra.mxu0 %v1231
    %1886 = vmatprep.subr.bf16.mxu0 %v1228
    %1887 = vmatpush1.bf16.msra.mxu0 %v1227
    %1888 = vmatprep.subr.bf16.mxu0 %v1224
    %1889 = vmatpush1.bf16.msra.mxu0 %v1223
    %1890 = vmatprep.subr.bf16.mxu0 %v1284
    %1891 = vmatpush2.bf16.msra.mxu0 %v1283
    %1892 = vmatprep.subr.bf16.mxu0 %v1280
    %1893 = vmatpush2.bf16.msra.mxu0 %v1279
    %1894 = vmatprep.subr.bf16.mxu0 %v1276
    %1895 = vmatpush2.bf16.msra.mxu0 %v1275
    %1896 = vmatprep.subr.bf16.mxu0 %v1272
    %1897 = vmatpush2.bf16.msra.mxu0 %v1271
    %1898 = vmatprep.subr.bf16.mxu0 %v1268
    %1899 = vmatpush2.bf16.msra.mxu0 %v1267
    %1900 = vmatprep.subr.bf16.mxu0 %v1264
    %1901 = vmatpush2.bf16.msra.mxu0 %v1263
    %1902 = vmatprep.subr.bf16.mxu0 %v1260
    %1903 = vmatpush2.bf16.msra.mxu0 %v1259
    %1904 = vmatprep.subr.bf16.mxu0 %v1256
    %1905 = vmatpush2.bf16.msra.mxu0 %v1255
    %1906 = vmatprep.mubr.bf16.mxu0 %v362
    %1907 = vmatmul.mubr.bf16.gmra.mxu0 %v361
    %v1908 = vpop.f32.mrf.mxu0
    %v1909 = vadd.f32 %v1868, %v1908
    %v1910 = vpop.f32.mrf.mxu0
    %v1911 = vadd.f32 %v1870, %v1910
    %v1912 = vpop.f32.mrf.mxu0
    %v1913 = vpop.f32.mrf.mxu0
    %1914 = vdwg.mxu0
    %1915 = vmatprep.subr.bf16.mxu0 %v1316
    %1916 = vmatpush1.bf16.msra.mxu0 %v1315
    %1917 = vmatprep.subr.bf16.mxu0 %v1312
    %1918 = vmatpush1.bf16.msra.mxu0 %v1311
    %1919 = vmatprep.subr.bf16.mxu0 %v1308
    %1920 = vmatpush1.bf16.msra.mxu0 %v1307
    %1921 = vmatprep.subr.bf16.mxu0 %v1304
    %1922 = vmatpush1.bf16.msra.mxu0 %v1303
    %1923 = vmatprep.subr.bf16.mxu0 %v1300
    %1924 = vmatpush1.bf16.msra.mxu0 %v1299
    %1925 = vmatprep.subr.bf16.mxu0 %v1296
    %1926 = vmatpush1.bf16.msra.mxu0 %v1295
    %1927 = vmatprep.subr.bf16.mxu0 %v1292
    %1928 = vmatpush1.bf16.msra.mxu0 %v1291
    %1929 = vmatprep.subr.bf16.mxu0 %v1288
    %1930 = vmatpush1.bf16.msra.mxu0 %v1287
    %1931 = vmatprep.subr.bf16.mxu0 %v1348
    %1932 = vmatpush2.bf16.msra.mxu0 %v1347
    %1933 = vmatprep.subr.bf16.mxu0 %v1344
    %1934 = vmatpush2.bf16.msra.mxu0 %v1343
    %1935 = vmatprep.subr.bf16.mxu0 %v1340
    %1936 = vmatpush2.bf16.msra.mxu0 %v1339
    %1937 = vmatprep.subr.bf16.mxu0 %v1336
    %1938 = vmatpush2.bf16.msra.mxu0 %v1335
    %1939 = vmatprep.subr.bf16.mxu0 %v1332
    %1940 = vmatpush2.bf16.msra.mxu0 %v1331
    %1941 = vmatprep.subr.bf16.mxu0 %v1328
    %1942 = vmatpush2.bf16.msra.mxu0 %v1327
    %1943 = vmatprep.subr.bf16.mxu0 %v1324
    %1944 = vmatpush2.bf16.msra.mxu0 %v1323
    %1945 = vmatprep.subr.bf16.mxu0 %v1320
    %1946 = vmatpush2.bf16.msra.mxu0 %v1319
    %1947 = vmatprep.mubr.bf16.mxu0 %v364
    %1948 = vmatmul.mubr.bf16.gmra.mxu0 %v363
    %v1949 = vpop.f32.mrf.mxu0
    %v1950 = vadd.f32 %v1909, %v1949
    %v1951 = vpop.f32.mrf.mxu0
    %v1952 = vadd.f32 %v1911, %v1951
    %v1953 = vpop.f32.mrf.mxu0
    %v1954 = vpop.f32.mrf.mxu0
    %1955 = vdwg.mxu0
    %1956 = vmatprep.subr.bf16.mxu0 %v1380
    %1957 = vmatpush1.bf16.msra.mxu0 %v1379
    %1958 = vmatprep.subr.bf16.mxu0 %v1376
    %1959 = vmatpush1.bf16.msra.mxu0 %v1375
    %1960 = vmatprep.subr.bf16.mxu0 %v1372
    %1961 = vmatpush1.bf16.msra.mxu0 %v1371
    %1962 = vmatprep.subr.bf16.mxu0 %v1368
    %1963 = vmatpush1.bf16.msra.mxu0 %v1367
    %1964 = vmatprep.subr.bf16.mxu0 %v1364
    %1965 = vmatpush1.bf16.msra.mxu0 %v1363
    %1966 = vmatprep.subr.bf16.mxu0 %v1360
    %1967 = vmatpush1.bf16.msra.mxu0 %v1359
    %1968 = vmatprep.subr.bf16.mxu0 %v1356
    %1969 = vmatpush1.bf16.msra.mxu0 %v1355
    %1970 = vmatprep.subr.bf16.mxu0 %v1352
    %1971 = vmatpush1.bf16.msra.mxu0 %v1351
    %1972 = vmatprep.subr.bf16.mxu0 %v1412
    %1973 = vmatpush2.bf16.msra.mxu0 %v1411
    %1974 = vmatprep.subr.bf16.mxu0 %v1408
    %1975 = vmatpush2.bf16.msra.mxu0 %v1407
    %1976 = vmatprep.subr.bf16.mxu0 %v1404
    %1977 = vmatpush2.bf16.msra.mxu0 %v1403
    %1978 = vmatprep.subr.bf16.mxu0 %v1400
    %1979 = vmatpush2.bf16.msra.mxu0 %v1399
    %1980 = vmatprep.subr.bf16.mxu0 %v1396
    %1981 = vmatpush2.bf16.msra.mxu0 %v1395
    %1982 = vmatprep.subr.bf16.mxu0 %v1392
    %1983 = vmatpush2.bf16.msra.mxu0 %v1391
    %1984 = vmatprep.subr.bf16.mxu0 %v1388
    %1985 = vmatpush2.bf16.msra.mxu0 %v1387
    %1986 = vmatprep.subr.bf16.mxu0 %v1384
    %1987 = vmatpush2.bf16.msra.mxu0 %v1383
    %1988 = vmatprep.mubr.bf16.mxu0 %v366
    %1989 = vmatmul.mubr.bf16.gmra.mxu0 %v365
    %v1990 = vpop.f32.mrf.mxu0
    %v1991 = vadd.f32 %v1950, %v1990
    %v1992 = vpop.f32.mrf.mxu0
    %v1993 = vadd.f32 %v1952, %v1992
    %v1994 = vpop.f32.mrf.mxu0
    %v1995 = vpop.f32.mrf.mxu0
    %1996 = vdwg.mxu0
    %v1997 = vmax.f32 %v1827, 0.0
    %v1998 = vmax.f32 %v1829, 0.0
    %v1999 = vmax.f32 %v1991, 0.0
    %v2000 = vmax.f32 %v1993, 0.0
    %v2001 = vld [vmem:[%s5] sm:$0xf]
    %v2002 = vld [vmem:[%s5 + $0x4] sm:$0xf]
    %v2003 = vld [vmem:[%s5 + $0x8] sm:$0xf]
    %v2004 = vld [vmem:[%s5 + $0xc] sm:$0xf]
    %v2005 = vld [vmem:[%s5 + $0x10] sm:$0xf]
    %v2006 = vld [vmem:[%s5 + $0x14] sm:$0xf]
    %v2007 = vld [vmem:[%s5 + $0x18] sm:$0xf]
    %v2008 = vld [vmem:[%s5 + $0x1c] sm:$0xf]
    %v2009 = vld [vmem:[%s5 + $0x20] sm:$0xf]
    %v2010 = vld [vmem:[%s5 + $0x24] sm:$0xf]
    %v2011 = vld [vmem:[%s5 + $0x28] sm:$0xf]
    %v2012 = vld [vmem:[%s5 + $0x2c] sm:$0xf]
    %v2013 = vld [vmem:[%s5 + $0x30] sm:$0xf]
    %v2014 = vld [vmem:[%s5 + $0x34] sm:$0xf]
    %v2015 = vld [vmem:[%s5 + $0x38] sm:$0xf]
    %v2016 = vld [vmem:[%s5 + $0x3c] sm:$0xf]
    %v2017 = vld [vmem:[%s5 + $0x40] sm:$0xf]
    %v2018 = vld [vmem:[%s5 + $0x44] sm:$0xf]
    %v2019 = vld [vmem:[%s5 + $0x48] sm:$0xf]
    %v2020 = vld [vmem:[%s5 + $0x4c] sm:$0xf]
    %v2021 = vld [vmem:[%s5 + $0x50] sm:$0xf]
    %v2022 = vld [vmem:[%s5 + $0x54] sm:$0xf]
    %v2023 = vld [vmem:[%s5 + $0x58] sm:$0xf]
    %v2024 = vld [vmem:[%s5 + $0x5c] sm:$0xf]
    %v2025 = vld [vmem:[%s5 + $0x60] sm:$0xf]
    %v2026 = vld [vmem:[%s5 + $0x64] sm:$0xf]
    %v2027 = vld [vmem:[%s5 + $0x68] sm:$0xf]
    %v2028 = vld [vmem:[%s5 + $0x6c] sm:$0xf]
    %v2029 = vld [vmem:[%s5 + $0x70] sm:$0xf]
    %v2030 = vld [vmem:[%s5 + $0x74] sm:$0xf]
    %v2031 = vld [vmem:[%s5 + $0x78] sm:$0xf]
    %v2032 = vld [vmem:[%s5 + $0x7c] sm:$0xf]
    %v2033 = vld [vmem:[%s5 + $0x80] sm:$0xf]
    %v2034 = vld [vmem:[%s5 + $0x84] sm:$0xf]
    %v2035 = vld [vmem:[%s5 + $0x88] sm:$0xf]
    %v2036 = vld [vmem:[%s5 + $0x8c] sm:$0xf]
    %v2037 = vld [vmem:[%s5 + $0x90] sm:$0xf]
    %v2038 = vld [vmem:[%s5 + $0x94] sm:$0xf]
    %v2039 = vld [vmem:[%s5 + $0x98] sm:$0xf]
    %v2040 = vld [vmem:[%s5 + $0x9c] sm:$0xf]
    %v2041 = vld [vmem:[%s5 + $0xa0] sm:$0xf]
    %v2042 = vld [vmem:[%s5 + $0xa4] sm:$0xf]
    %v2043 = vld [vmem:[%s5 + $0xa8] sm:$0xf]
    %v2044 = vld [vmem:[%s5 + $0xac] sm:$0xf]
    %v2045 = vld [vmem:[%s5 + $0xb0] sm:$0xf]
    %v2046 = vld [vmem:[%s5 + $0xb4] sm:$0xf]
    %v2047 = vld [vmem:[%s5 + $0xb8] sm:$0xf]
    %v2048 = vld [vmem:[%s5 + $0xbc] sm:$0xf]
    %v2049 = vld [vmem:[%s5 + $0xc0] sm:$0xf]
    %v2050 = vld [vmem:[%s5 + $0xc4] sm:$0xf]
    %v2051 = vpack.c.bf16 %v1997, %v1997
    %v2052 = vpack.c.bf16 %v1998, %v1998
    %v2053 = vpack.c.bf16 %v1999, %v1999
    %v2054 = vpack.c.bf16 %v2000, %v2000
    %v2055 = vld [vmem:[%s6] sm:$0x1]
    %v2057 = vlaneseq
    %v2058 = vshrl.u32 %v2057, 7
    %v2059 = vsub.s32 0, %v2058
    %v2060 = vrot.slane %v2055, %v2059
    %v2112 = vunpack.c.l.b16 %v2001
    %v2113 = vunpack.c.l.b16 %v2002
    %v2114 = vunpack.c.l.b16 %v2003
    %v2115 = vunpack.c.l.b16 %v2004
    %v2116 = vunpack.c.l.b16 %v2005
    %v2117 = vunpack.c.l.b16 %v2006
    %v2118 = vunpack.c.l.b16 %v2007
    %v2119 = vunpack.c.l.b16 %v2008
    %v2120 = vunpack.c.l.b16 %v2009
    %v2121 = vunpack.c.l.b16 %v2010
    %v2122 = vunpack.c.l.b16 %v2011
    %v2123 = vunpack.c.l.b16 %v2012
    %v2124 = vunpack.c.l.b16 %v2013
    %v2125 = vunpack.c.l.b16 %v2014
    %v2126 = vunpack.c.l.b16 %v2015
    %v2127 = vunpack.c.l.b16 %v2016
    %v2128 = vunpack.c.l.b16 %v2017
    %v2129 = vunpack.c.l.b16 %v2018
    %v2130 = vunpack.c.l.b16 %v2019
    %v2131 = vunpack.c.l.b16 %v2020
    %v2132 = vunpack.c.l.b16 %v2021
    %v2133 = vunpack.c.l.b16 %v2022
    %v2134 = vunpack.c.l.b16 %v2023
    %v2135 = vunpack.c.l.b16 %v2024
    %v2136 = vunpack.c.l.b16 %v2025
    %v2137 = vunpack.c.l.b16 %v2026
    %v2138 = vunpack.c.l.b16 %v2027
    %v2139 = vunpack.c.l.b16 %v2028
    %v2140 = vunpack.c.l.b16 %v2029
    %v2141 = vunpack.c.l.b16 %v2030
    %v2142 = vunpack.c.l.b16 %v2031
    %v2143 = vunpack.c.l.b16 %v2032
    %v2144 = vunpack.c.l.b16 %v2033
    %v2145 = vunpack.c.l.b16 %v2034
    %v2146 = vunpack.c.l.b16 %v2035
    %v2147 = vunpack.c.l.b16 %v2036
    %v2148 = vunpack.c.l.b16 %v2037
    %v2149 = vunpack.c.l.b16 %v2038
    %v2150 = vunpack.c.l.b16 %v2039
    %v2151 = vunpack.c.l.b16 %v2040
    %v2152 = vunpack.c.l.b16 %v2041
    %v2153 = vunpack.c.l.b16 %v2042
    %v2154 = vunpack.c.l.b16 %v2043
    %v2155 = vunpack.c.l.b16 %v2044
    %v2156 = vunpack.c.l.b16 %v2045
    %v2157 = vunpack.c.l.b16 %v2046
    %v2158 = vunpack.c.l.b16 %v2047
    %v2159 = vunpack.c.l.b16 %v2048
    %v2160 = vunpack.c.l.b16 %v2049
    %v2161 = vunpack.c.l.b16 %v2050
    %v2162 = vpack.c.b16 %v2113, %v2112
    %v2163 = vpack.c.b16 %v2115, %v2114
    %v2164 = vpack.c.b16 %v2117, %v2116
    %v2165 = vpack.c.b16 %v2119, %v2118
    %v2166 = vpack.c.b16 %v2121, %v2120
    %v2167 = vpack.c.b16 %v2123, %v2122
    %v2168 = vpack.c.b16 %v2125, %v2124
    %v2169 = vpack.c.b16 %v2127, %v2126
    %v2170 = vpack.c.b16 %v2129, %v2128
    %v2171 = vpack.c.b16 %v2131, %v2130
    %v2172 = vpack.c.b16 %v2133, %v2132
    %v2173 = vpack.c.b16 %v2135, %v2134
    %v2174 = vpack.c.b16 %v2137, %v2136
    %v2175 = vpack.c.b16 %v2139, %v2138
    %v2176 = vpack.c.b16 %v2141, %v2140
    %v2177 = vpack.c.b16 %v2143, %v2142
    %v2178 = vpack.c.b16 %v2145, %v2144
    %v2179 = vpack.c.b16 %v2147, %v2146
    %v2180 = vpack.c.b16 %v2149, %v2148
    %v2181 = vpack.c.b16 %v2151, %v2150
    %v2182 = vpack.c.b16 %v2153, %v2152
    %v2183 = vpack.c.b16 %v2155, %v2154
    %v2184 = vpack.c.b16 %v2157, %v2156
    %v2185 = vpack.c.b16 %v2159, %v2158
    %v2186 = vpack.c.b16 %v2161, %v2160
    %vm2212 = vcmask 130048
    %v2214 = vsel %vm2212, %v2054, 0
    %2216 = vmatprep.subr.bf16.mxu0 0
    %2217 = vmatpush1.bf16.msra.mxu0 %v2169
    %2218 = vmatprep.subr.bf16.mxu0 0
    %2219 = vmatpush1.bf16.msra.mxu0 %v2168
    %2220 = vmatprep.subr.bf16.mxu0 0
    %2221 = vmatpush1.bf16.msra.mxu0 %v2167
    %2222 = vmatprep.subr.bf16.mxu0 0
    %2223 = vmatpush1.bf16.msra.mxu0 %v2166
    %2224 = vmatprep.subr.bf16.mxu0 0
    %2225 = vmatpush1.bf16.msra.mxu0 %v2165
    %2226 = vmatprep.subr.bf16.mxu0 0
    %2227 = vmatpush1.bf16.msra.mxu0 %v2164
    %2228 = vmatprep.subr.bf16.mxu0 0
    %2229 = vmatpush1.bf16.msra.mxu0 %v2163
    %2230 = vmatprep.subr.bf16.mxu0 0
    %2231 = vmatpush1.bf16.msra.mxu0 %v2162
    %2232 = vmatprep.subr.bf16.mxu0 0
    %2233 = vmatpush2.bf16.msra.mxu0 %v2177
    %2234 = vmatprep.subr.bf16.mxu0 0
    %2235 = vmatpush2.bf16.msra.mxu0 %v2176
    %2236 = vmatprep.subr.bf16.mxu0 0
    %2237 = vmatpush2.bf16.msra.mxu0 %v2175
    %2238 = vmatprep.subr.bf16.mxu0 0
    %2239 = vmatpush2.bf16.msra.mxu0 %v2174
    %2240 = vmatprep.subr.bf16.mxu0 0
    %2241 = vmatpush2.bf16.msra.mxu0 %v2173
    %2242 = vmatprep.subr.bf16.mxu0 0
    %2243 = vmatpush2.bf16.msra.mxu0 %v2172
    %2244 = vmatprep.subr.bf16.mxu0 0
    %2245 = vmatpush2.bf16.msra.mxu0 %v2171
    %2246 = vmatprep.subr.bf16.mxu0 0
    %2247 = vmatpush2.bf16.msra.mxu0 %v2170
    %2248 = vmatprep.mubr.bf16.mxu0 %v2052
    %2249 = vmatmul.mubr.bf16.gmra.mxu0 %v2051
    %v2250 = vpop.f32.mrf.mxu0
    %v2251 = vadd.f32 %v2060, %v2250
    %v2252 = vpop.f32.mrf.mxu0
    %v2253 = vpop.f32.mrf.mxu0
    %v2254 = vpop.f32.mrf.mxu0
    %2255 = vdwg.mxu0
    %2256 = vmatprep.subr.bf16.mxu0 0
    %2257 = vmatpush1.bf16.msra.mxu0 %v2185
    %2258 = vmatprep.subr.bf16.mxu0 0
    %2259 = vmatpush1.bf16.msra.mxu0 %v2184
    %2260 = vmatprep.subr.bf16.mxu0 0
    %2261 = vmatpush1.bf16.msra.mxu0 %v2183
    %2262 = vmatprep.subr.bf16.mxu0 0
    %2263 = vmatpush1.bf16.msra.mxu0 %v2182
    %2264 = vmatprep.subr.bf16.mxu0 0
    %2265 = vmatpush1.bf16.msra.mxu0 %v2181
    %2266 = vmatprep.subr.bf16.mxu0 0
    %2267 = vmatpush1.bf16.msra.mxu0 %v2180
    %2268 = vmatprep.subr.bf16.mxu0 0
    %2269 = vmatpush1.bf16.msra.mxu0 %v2179
    %2270 = vmatprep.subr.bf16.mxu0 0
    %2271 = vmatpush1.bf16.msra.mxu0 %v2178
    %2272 = vmatprep.subr.bf16.mxu0 0
    %2273 = vmatpush2.bf16.msra.mxu0 0
    %2274 = vmatprep.subr.bf16.mxu0 0
    %2275 = vmatpush2.bf16.msra.mxu0 0
    %2276 = vmatprep.subr.bf16.mxu0 0
    %2277 = vmatpush2.bf16.msra.mxu0 0
    %2278 = vmatprep.subr.bf16.mxu0 0
    %2279 = vmatpush2.bf16.msra.mxu0 0
    %2280 = vmatprep.subr.bf16.mxu0 0
    %2281 = vmatpush2.bf16.msra.mxu0 0
    %2282 = vmatprep.subr.bf16.mxu0 0
    %2283 = vmatpush2.bf16.msra.mxu0 0
    %2284 = vmatprep.subr.bf16.mxu0 0
    %2285 = vmatpush2.bf16.msra.mxu0 0
    %2286 = vmatprep.subr.bf16.mxu0 0
    %2287 = vmatpush2.bf16.msra.mxu0 %v2186
    %2288 = vmatprep.mubr.bf16.mxu0 %v2214
    %2289 = vmatmul.mubr.bf16.gmra.mxu0 %v2053
    %v2290 = vpop.f32.mrf.mxu0
    %v2291 = vadd.f32 %v2251, %v2290
    %v2292 = vpop.f32.mrf.mxu0
    %v2293 = vpop.f32.mrf.mxu0
    %v2294 = vpop.f32.mrf.mxu0
    %2295 = vdwg.mxu0
    %v2296 = vld [vmem:[%s1] sm:$0x3]
    %v2297 = vmul.f32 %v2291, 0.5
    %v2298 = vmul.f32 %v2297, 1.442695
    %v2299 = vpow.pop %v2298
    %2301 = vrot.lane.b32.xlu0 %v2299, 78
    %v2302 = vpop.permute.xlu0 %2301
    %v2304 = vmul.f32 %v2296, %v2302
    %v2305 = vadd.f32 %v2291, %v2304
    %v2306 = vld [vmem:[%s7] sm:$0xff]
    %v2307 = vld [vmem:[%s7 + $0x8] sm:$0xff]
    %v2308 = vld [vmem:[%s7 + $0x10] sm:$0xff]
    %v2309 = vld [vmem:[%s7 + $0x18] sm:$0xff]
    %v2310 = vld [vmem:[%s7 + $0x20] sm:$0xff]
    %v2311 = vld [vmem:[%s7 + $0x28] sm:$0xff]
    %v2312 = vld [vmem:[%s7 + $0x30] sm:$0xff]
    %v2313 = vld [vmem:[%s7 + $0x38] sm:$0xff]
    %v2314 = vld [vmem:[%s7 + $0x40] sm:$0xff]
    %v2315 = vld [vmem:[%s7 + $0x48] sm:$0xff]
    %v2316 = vld [vmem:[%s7 + $0x50] sm:$0xff]
    %v2317 = vld [vmem:[%s7 + $0x58] sm:$0xff]
    %v2318 = vld [vmem:[%s7 + $0x60] sm:$0x11]
    %v2319 = vld [vmem:[%s7 + $0x68] sm:$0x11]
    %v2320 = vpack.c.bf16 %v2305, %v2305
    %v2321 = vld [vmem:[%s8] sm:$0xf]
    %v2323 = vlaneseq
    %v2324 = vshrl.u32 %v2323, 7
    %v2325 = vsub.s32 0, %v2324
    %v2326 = vrot.slane %v2321, %v2325
    %v2327 = vlaneseq
    %v2328 = vshrl.u32 %v2327, 7
    %v2329 = vsub.s32 1, %v2328
    %v2330 = vrot.slane %v2321, %v2329
    %v2331 = vlaneseq
    %v2332 = vshrl.u32 %v2331, 7
    %v2333 = vsub.s32 2, %v2332
    %v2334 = vrot.slane %v2321, %v2333
    %v2335 = vlaneseq
    %v2336 = vshrl.u32 %v2335, 7
    %v2337 = vsub.s32 3, %v2336
    %v2338 = vrot.slane %v2321, %v2337
    %v2357 = vunpack.c.l.b16 %v2306
    %v2358 = vunpack.c.h.b16 %v2306
    %v2359 = vunpack.c.l.b16 %v2307
    %v2360 = vunpack.c.h.b16 %v2307
    %v2361 = vunpack.c.l.b16 %v2308
    %v2362 = vunpack.c.h.b16 %v2308
    %v2363 = vunpack.c.l.b16 %v2309
    %v2364 = vunpack.c.h.b16 %v2309
    %v2365 = vunpack.c.l.b16 %v2310
    %v2366 = vunpack.c.h.b16 %v2310
    %v2367 = vunpack.c.l.b16 %v2311
    %v2368 = vunpack.c.h.b16 %v2311
    %v2369 = vunpack.c.l.b16 %v2312
    %v2370 = vunpack.c.h.b16 %v2312
    %v2371 = vunpack.c.l.b16 %v2313
    %v2372 = vunpack.c.h.b16 %v2313
    %v2373 = vunpack.c.l.b16 %v2314
    %v2374 = vunpack.c.h.b16 %v2314
    %v2375 = vunpack.c.l.b16 %v2315
    %v2376 = vunpack.c.h.b16 %v2315
    %v2377 = vunpack.c.l.b16 %v2316
    %v2378 = vunpack.c.h.b16 %v2316
    %v2379 = vunpack.c.l.b16 %v2317
    %v2380 = vunpack.c.h.b16 %v2317
    %v2381 = vunpack.c.l.b16 %v2318
    %v2382 = vunpack.c.h.b16 %v2318
    %v2383 = vunpack.c.l.b16 %v2319
    %v2384 = vunpack.c.h.b16 %v2319
    %v2385 = vpack.c.b16 %v2361, %v2357
    %v2386 = vpack.c.b16 %v2362, %v2358
    %v2387 = vpack.c.b16 %v2363, %v2359
    %v2388 = vpack.c.b16 %v2364, %v2360
    %v2389 = vpack.c.b16 %v2369, %v2365
    %v2390 = vpack.c.b16 %v2370, %v2366
    %v2391 = vpack.c.b16 %v2371, %v2367
    %v2392 = vpack.c.b16 %v2372, %v2368
    %v2393 = vpack.c.b16 %v2377, %v2373
    %v2394 = vpack.c.b16 %v2378, %v2374
    %v2395 = vpack.c.b16 %v2379, %v2375
    %v2396 = vpack.c.b16 %v2380, %v2376
    %v2397 = vpack.c.b16 %v2381, %v2381
    %v2398 = vpack.c.b16 %v2382, %v2382
    %v2399 = vpack.c.b16 %v2383, %v2383
    %v2400 = vpack.c.b16 %v2384, %v2384
    %vm2413 = vcmask 408576
    %v2415 = vsel %vm2413, %v2320, 0
    %vm2417 = vcmask 1040384
    %v2419 = vsel %vm2417, %v2397, 0
    %v2422 = vsel %vm2417, %v2398, 0
    %v2425 = vsel %vm2417, %v2399, 0
    %v2428 = vsel %vm2417, %v2400, 0
    %2430 = vmatprep.subr.bf16.mxu0 0
    %2431 = vmatpush1.bf16.msra.mxu0 0
    %2432 = vmatprep.subr.bf16.mxu0 0
    %2433 = vmatpush1.bf16.msra.mxu0 0
    %2434 = vmatprep.subr.bf16.mxu0 0
    %2435 = vmatpush1.bf16.msra.mxu0 0
    %2436 = vmatprep.subr.bf16.mxu0 0
    %2437 = vmatpush1.bf16.msra.mxu0 0
    %2438 = vmatprep.subr.bf16.mxu0 %v2422
    %2439 = vmatpush1.bf16.msra.mxu0 %v2419
    %2440 = vmatprep.subr.bf16.mxu0 %v2394
    %2441 = vmatpush1.bf16.msra.mxu0 %v2393
    %2442 = vmatprep.subr.bf16.mxu0 %v2390
    %2443 = vmatpush1.bf16.msra.mxu0 %v2389
    %2444 = vmatprep.subr.bf16.mxu0 %v2386
    %2445 = vmatpush1.bf16.msra.mxu0 %v2385
    %2446 = vmatprep.subr.bf16.mxu0 0
    %2447 = vmatpush2.bf16.msra.mxu0 0
    %2448 = vmatprep.subr.bf16.mxu0 0
    %2449 = vmatpush2.bf16.msra.mxu0 0
    %2450 = vmatprep.subr.bf16.mxu0 0
    %2451 = vmatpush2.bf16.msra.mxu0 0
    %2452 = vmatprep.subr.bf16.mxu0 0
    %2453 = vmatpush2.bf16.msra.mxu0 0
    %2454 = vmatprep.subr.bf16.mxu0 0
    %2455 = vmatpush2.bf16.msra.mxu0 0
    %2456 = vmatprep.subr.bf16.mxu0 0
    %2457 = vmatpush2.bf16.msra.mxu0 0
    %2458 = vmatprep.subr.bf16.mxu0 0
    %2459 = vmatpush2.bf16.msra.mxu0 0
    %2460 = vmatprep.subr.bf16.mxu0 0
    %2461 = vmatpush2.bf16.msra.mxu0 0
    %2462 = vmatprep.mubr.bf16.mxu0 0
    %2463 = vmatmul.mubr.bf16.gmra.mxu0 %v2415
    %v2464 = vpop.f32.mrf.mxu0
    %v2465 = vadd.f32 %v2326, %v2464
    %v2466 = vpop.f32.mrf.mxu0
    %v2467 = vadd.f32 %v2330, %v2466
    %v2468 = vpop.f32.mrf.mxu0
    %v2469 = vpop.f32.mrf.mxu0
    %2470 = vdwg.mxu0
    %2471 = vmatprep.subr.bf16.mxu0 0
    %2472 = vmatpush1.bf16.msra.mxu0 0
    %2473 = vmatprep.subr.bf16.mxu0 0
    %2474 = vmatpush1.bf16.msra.mxu0 0
    %2475 = vmatprep.subr.bf16.mxu0 0
    %2476 = vmatpush1.bf16.msra.mxu0 0
    %2477 = vmatprep.subr.bf16.mxu0 0
    %2478 = vmatpush1.bf16.msra.mxu0 0
    %2479 = vmatprep.subr.bf16.mxu0 %v2428
    %2480 = vmatpush1.bf16.msra.mxu0 %v2425
    %2481 = vmatprep.subr.bf16.mxu0 %v2396
    %2482 = vmatpush1.bf16.msra.mxu0 %v2395
    %2483 = vmatprep.subr.bf16.mxu0 %v2392
    %2484 = vmatpush1.bf16.msra.mxu0 %v2391
    %2485 = vmatprep.subr.bf16.mxu0 %v2388
    %2486 = vmatpush1.bf16.msra.mxu0 %v2387
    %2487 = vmatprep.subr.bf16.mxu0 0
    %2488 = vmatpush2.bf16.msra.mxu0 0
    %2489 = vmatprep.subr.bf16.mxu0 0
    %2490 = vmatpush2.bf16.msra.mxu0 0
    %2491 = vmatprep.subr.bf16.mxu0 0
    %2492 = vmatpush2.bf16.msra.mxu0 0
    %2493 = vmatprep.subr.bf16.mxu0 0
    %2494 = vmatpush2.bf16.msra.mxu0 0
    %2495 = vmatprep.subr.bf16.mxu0 0
    %2496 = vmatpush2.bf16.msra.mxu0 0
    %2497 = vmatprep.subr.bf16.mxu0 0
    %2498 = vmatpush2.bf16.msra.mxu0 0
    %2499 = vmatprep.subr.bf16.mxu0 0
    %2500 = vmatpush2.bf16.msra.mxu0 0
    %2501 = vmatprep.subr.bf16.mxu0 0
    %2502 = vmatpush2.bf16.msra.mxu0 0
    %2503 = vmatprep.mubr.bf16.mxu0 0
    %2504 = vmatmul.mubr.bf16.gmra.mxu0 %v2415
    %v2505 = vpop.f32.mrf.mxu0
    %v2506 = vadd.f32 %v2334, %v2505
    %v2507 = vpop.f32.mrf.mxu0
    %v2508 = vadd.f32 %v2338, %v2507
    %v2509 = vpop.f32.mrf.mxu0
    %v2510 = vpop.f32.mrf.mxu0
    %2511 = vdwg.mxu0
    %v2512 = vmax.f32 %v2465, 0.0
    %v2513 = vmax.f32 %v2467, 0.0
    %v2514 = vmax.f32 %v2506, 0.0
    %v2515 = vmax.f32 %v2508, 0.0
    %v2516 = vld [vmem:[%s9] sm:$0xff]
    %v2517 = vld [vmem:[%s9 + $0x8] sm:$0xff]
    %v2518 = vld [vmem:[%s9 + $0x10] sm:$0xff]
    %v2519 = vld [vmem:[%s9 + $0x18] sm:$0xff]
    %v2520 = vld [vmem:[%s9 + $0x20] sm:$0xff]
    %v2521 = vld [vmem:[%s9 + $0x28] sm:$0xff]
    %v2522 = vld [vmem:[%s9 + $0x30] sm:$0xff]
    %v2523 = vld [vmem:[%s9 + $0x38] sm:$0xff]
    %v2524 = vld [vmem:[%s9 + $0x40] sm:$0xff]
    %v2525 = vld [vmem:[%s9 + $0x48] sm:$0xff]
    %v2526 = vld [vmem:[%s9 + $0x50] sm:$0xff]
    %v2527 = vld [vmem:[%s9 + $0x58] sm:$0xff]
    %v2528 = vld [vmem:[%s9 + $0x60] sm:$0xff]
    %v2529 = vld [vmem:[%s9 + $0x68] sm:$0xff]
    %v2530 = vld [vmem:[%s9 + $0x70] sm:$0xff]
    %v2531 = vld [vmem:[%s9 + $0x78] sm:$0xff]
    %v2532 = vld [vmem:[%s9 + $0x80] sm:$0xff]
    %v2533 = vld [vmem:[%s9 + $0x88] sm:$0xff]
    %v2534 = vld [vmem:[%s9 + $0x90] sm:$0xff]
    %v2535 = vld [vmem:[%s9 + $0x98] sm:$0xff]
    %v2536 = vld [vmem:[%s9 + $0xa0] sm:$0xff]
    %v2537 = vld [vmem:[%s9 + $0xa8] sm:$0xff]
    %v2538 = vld [vmem:[%s9 + $0xb0] sm:$0xff]
    %v2539 = vld [vmem:[%s9 + $0xb8] sm:$0xff]
    %v2540 = vld [vmem:[%s9 + $0xc0] sm:$0xff]
    %v2541 = vld [vmem:[%s9 + $0xc8] sm:$0xff]
    %v2542 = vld [vmem:[%s9 + $0xd0] sm:$0xff]
    %v2543 = vld [vmem:[%s9 + $0xd8] sm:$0xff]
    %v2544 = vld [vmem:[%s9 + $0xe0] sm:$0xff]
    %v2545 = vld [vmem:[%s9 + $0xe8] sm:$0xff]
    %v2546 = vld [vmem:[%s9 + $0xf0] sm:$0xff]
    %v2547 = vld [vmem:[%s9 + $0xf8] sm:$0xff]
    %v2548 = vld [vmem:[%s9 + $0x100] sm:$0xff]
    %v2549 = vld [vmem:[%s9 + $0x108] sm:$0xff]
    %v2550 = vld [vmem:[%s9 + $0x110] sm:$0xff]
    %v2551 = vld [vmem:[%s9 + $0x118] sm:$0xff]
    %v2552 = vld [vmem:[%s9 + $0x120] sm:$0xff]
    %v2553 = vld [vmem:[%s9 + $0x128] sm:$0xff]
    %v2554 = vld [vmem:[%s9 + $0x130] sm:$0xff]
    %v2555 = vld [vmem:[%s9 + $0x138] sm:$0xff]
    %v2556 = vld [vmem:[%s9 + $0x140] sm:$0xff]
    %v2557 = vld [vmem:[%s9 + $0x148] sm:$0xff]
    %v2558 = vld [vmem:[%s9 + $0x150] sm:$0xff]
    %v2559 = vld [vmem:[%s9 + $0x158] sm:$0xff]
    %v2560 = vld [vmem:[%s9 + $0x160] sm:$0xff]
    %v2561 = vld [vmem:[%s9 + $0x168] sm:$0xff]
    %v2562 = vld [vmem:[%s9 + $0x170] sm:$0xff]
    %v2563 = vld [vmem:[%s9 + $0x178] sm:$0xff]
    %v2564 = vld [vmem:[%s9 + $0x180] sm:$0xff]
    %v2565 = vld [vmem:[%s9 + $0x188] sm:$0xff]
    %v2566 = vld [vmem:[%s9 + $0x190] sm:$0xff]
    %v2567 = vld [vmem:[%s9 + $0x198] sm:$0xff]
    %v2568 = vld [vmem:[%s9 + $0x1a0] sm:$0xff]
    %v2569 = vld [vmem:[%s9 + $0x1a8] sm:$0xff]
    %v2570 = vld [vmem:[%s9 + $0x1b0] sm:$0xff]
    %v2571 = vld [vmem:[%s9 + $0x1b8] sm:$0xff]
    %v2572 = vld [vmem:[%s9 + $0x1c0] sm:$0xff]
    %v2573 = vld [vmem:[%s9 + $0x1c8] sm:$0xff]
    %v2574 = vld [vmem:[%s9 + $0x1d0] sm:$0xff]
    %v2575 = vld [vmem:[%s9 + $0x1d8] sm:$0xff]
    %v2576 = vld [vmem:[%s9 + $0x1e0] sm:$0xff]
    %v2577 = vld [vmem:[%s9 + $0x1e8] sm:$0xff]
    %v2578 = vld [vmem:[%s9 + $0x1f0] sm:$0xff]
    %v2579 = vld [vmem:[%s9 + $0x1f8] sm:$0xff]
    %v2580 = vld [vmem:[%s9 + $0x200] sm:$0xff]
    %v2581 = vld [vmem:[%s9 + $0x208] sm:$0xff]
    %v2582 = vld [vmem:[%s9 + $0x210] sm:$0xff]
    %v2583 = vld [vmem:[%s9 + $0x218] sm:$0xff]
    %v2584 = vld [vmem:[%s9 + $0x220] sm:$0xff]
    %v2585 = vld [vmem:[%s9 + $0x228] sm:$0xff]
    %v2586 = vld [vmem:[%s9 + $0x230] sm:$0xff]
    %v2587 = vld [vmem:[%s9 + $0x238] sm:$0xff]
    %v2588 = vld [vmem:[%s9 + $0x240] sm:$0xff]
    %v2589 = vld [vmem:[%s9 + $0x248] sm:$0xff]
    %v2590 = vld [vmem:[%s9 + $0x250] sm:$0xff]
    %v2591 = vld [vmem:[%s9 + $0x258] sm:$0xff]
    %v2592 = vld [vmem:[%s9 + $0x260] sm:$0xff]
    %v2593 = vld [vmem:[%s9 + $0x268] sm:$0xff]
    %v2594 = vld [vmem:[%s9 + $0x270] sm:$0xff]
    %v2595 = vld [vmem:[%s9 + $0x278] sm:$0xff]
    %v2596 = vld [vmem:[%s9 + $0x280] sm:$0xff]
    %v2597 = vld [vmem:[%s9 + $0x288] sm:$0xff]
    %v2598 = vld [vmem:[%s9 + $0x290] sm:$0xff]
    %v2599 = vld [vmem:[%s9 + $0x298] sm:$0xff]
    %v2600 = vld [vmem:[%s9 + $0x2a0] sm:$0xff]
    %v2601 = vld [vmem:[%s9 + $0x2a8] sm:$0xff]
    %v2602 = vld [vmem:[%s9 + $0x2b0] sm:$0xff]
    %v2603 = vld [vmem:[%s9 + $0x2b8] sm:$0xff]
    %v2604 = vld [vmem:[%s9 + $0x2c0] sm:$0xff]
    %v2605 = vld [vmem:[%s9 + $0x2c8] sm:$0xff]
    %v2606 = vld [vmem:[%s9 + $0x2d0] sm:$0xff]
    %v2607 = vld [vmem:[%s9 + $0x2d8] sm:$0xff]
    %v2608 = vld [vmem:[%s9 + $0x2e0] sm:$0xff]
    %v2609 = vld [vmem:[%s9 + $0x2e8] sm:$0xff]
    %v2610 = vld [vmem:[%s9 + $0x2f0] sm:$0xff]
    %v2611 = vld [vmem:[%s9 + $0x2f8] sm:$0xff]
    %v2612 = vld [vmem:[%s9 + $0x300] sm:$0xff]
    %v2613 = vld [vmem:[%s9 + $0x308] sm:$0xff]
    %v2614 = vld [vmem:[%s9 + $0x310] sm:$0xff]
    %v2615 = vld [vmem:[%s9 + $0x318] sm:$0xff]
    %v2616 = vld [vmem:[%s9 + $0x320] sm:$0xff]
    %v2617 = vld [vmem:[%s9 + $0x328] sm:$0xff]
    %v2618 = vld [vmem:[%s9 + $0x330] sm:$0xff]
    %v2619 = vld [vmem:[%s9 + $0x338] sm:$0xff]
    %v2620 = vld [vmem:[%s9 + $0x340] sm:$0xff]
    %v2621 = vld [vmem:[%s9 + $0x348] sm:$0xff]
    %v2622 = vld [vmem:[%s9 + $0x350] sm:$0xff]
    %v2623 = vld [vmem:[%s9 + $0x358] sm:$0xff]
    %v2624 = vld [vmem:[%s9 + $0x360] sm:$0xff]
    %v2625 = vld [vmem:[%s9 + $0x368] sm:$0xff]
    %v2626 = vld [vmem:[%s9 + $0x370] sm:$0xff]
    %v2627 = vld [vmem:[%s9 + $0x378] sm:$0xff]
    %v2628 = vld [vmem:[%s9 + $0x380] sm:$0xff]
    %v2629 = vld [vmem:[%s9 + $0x388] sm:$0xff]
    %v2630 = vld [vmem:[%s9 + $0x390] sm:$0xff]
    %v2631 = vld [vmem:[%s9 + $0x398] sm:$0xff]
    %v2632 = vld [vmem:[%s9 + $0x3a0] sm:$0xff]
    %v2633 = vld [vmem:[%s9 + $0x3a8] sm:$0xff]
    %v2634 = vld [vmem:[%s9 + $0x3b0] sm:$0xff]
    %v2635 = vld [vmem:[%s9 + $0x3b8] sm:$0xff]
    %v2636 = vld [vmem:[%s9 + $0x3c0] sm:$0xff]
    %v2637 = vld [vmem:[%s9 + $0x3c8] sm:$0xff]
    %v2638 = vld [vmem:[%s9 + $0x3d0] sm:$0xff]
    %v2639 = vld [vmem:[%s9 + $0x3d8] sm:$0xff]
    %v2640 = vld [vmem:[%s9 + $0x3e0] sm:$0xff]
    %v2641 = vld [vmem:[%s9 + $0x3e8] sm:$0xff]
    %v2642 = vld [vmem:[%s9 + $0x3f0] sm:$0xff]
    %v2643 = vld [vmem:[%s9 + $0x3f8] sm:$0xff]
    %v2644 = vld [vmem:[%s9 + $0x400] sm:$0xff]
    %v2645 = vld [vmem:[%s9 + $0x408] sm:$0xff]
    %v2646 = vld [vmem:[%s9 + $0x410] sm:$0xff]
    %v2647 = vld [vmem:[%s9 + $0x418] sm:$0xff]
    %v2648 = vld [vmem:[%s9 + $0x420] sm:$0xff]
    %v2649 = vld [vmem:[%s9 + $0x428] sm:$0xff]
    %v2650 = vld [vmem:[%s9 + $0x430] sm:$0xff]
    %v2651 = vld [vmem:[%s9 + $0x438] sm:$0xff]
    %v2652 = vld [vmem:[%s9 + $0x440] sm:$0xff]
    %v2653 = vld [vmem:[%s9 + $0x448] sm:$0xff]
    %v2654 = vld [vmem:[%s9 + $0x450] sm:$0xff]
    %v2655 = vld [vmem:[%s9 + $0x458] sm:$0xff]
    %v2656 = vld [vmem:[%s9 + $0x460] sm:$0xff]
    %v2657 = vld [vmem:[%s9 + $0x468] sm:$0xff]
    %v2658 = vld [vmem:[%s9 + $0x470] sm:$0xff]
    %v2659 = vld [vmem:[%s9 + $0x478] sm:$0xff]
    %v2660 = vld [vmem:[%s9 + $0x480] sm:$0xff]
    %v2661 = vld [vmem:[%s9 + $0x488] sm:$0xff]
    %v2662 = vld [vmem:[%s9 + $0x490] sm:$0xff]
    %v2663 = vld [vmem:[%s9 + $0x498] sm:$0xff]
    %v2664 = vld [vmem:[%s9 + $0x4a0] sm:$0xff]
    %v2665 = vld [vmem:[%s9 + $0x4a8] sm:$0xff]
    %v2666 = vld [vmem:[%s9 + $0x4b0] sm:$0xff]
    %v2667 = vld [vmem:[%s9 + $0x4b8] sm:$0xff]
    %v2668 = vld [vmem:[%s9 + $0x4c0] sm:$0xff]
    %v2669 = vld [vmem:[%s9 + $0x4c8] sm:$0xff]
    %v2670 = vld [vmem:[%s9 + $0x4d0] sm:$0xff]
    %v2671 = vld [vmem:[%s9 + $0x4d8] sm:$0xff]
    %v2672 = vld [vmem:[%s9 + $0x4e0] sm:$0xff]
    %v2673 = vld [vmem:[%s9 + $0x4e8] sm:$0xff]
    %v2674 = vld [vmem:[%s9 + $0x4f0] sm:$0xff]
    %v2675 = vld [vmem:[%s9 + $0x4f8] sm:$0xff]
    %v2676 = vld [vmem:[%s9 + $0x500] sm:$0xff]
    %v2677 = vld [vmem:[%s9 + $0x508] sm:$0xff]
    %v2678 = vld [vmem:[%s9 + $0x510] sm:$0xff]
    %v2679 = vld [vmem:[%s9 + $0x518] sm:$0xff]
    %v2680 = vld [vmem:[%s9 + $0x520] sm:$0xff]
    %v2681 = vld [vmem:[%s9 + $0x528] sm:$0xff]
    %v2682 = vld [vmem:[%s9 + $0x530] sm:$0xff]
    %v2683 = vld [vmem:[%s9 + $0x538] sm:$0xff]
    %v2684 = vld [vmem:[%s9 + $0x540] sm:$0xff]
    %v2685 = vld [vmem:[%s9 + $0x548] sm:$0xff]
    %v2686 = vld [vmem:[%s9 + $0x550] sm:$0xff]
    %v2687 = vld [vmem:[%s9 + $0x558] sm:$0xff]
    %v2688 = vld [vmem:[%s9 + $0x560] sm:$0xff]
    %v2689 = vld [vmem:[%s9 + $0x568] sm:$0xff]
    %v2690 = vld [vmem:[%s9 + $0x570] sm:$0xff]
    %v2691 = vld [vmem:[%s9 + $0x578] sm:$0xff]
    %v2692 = vld [vmem:[%s9 + $0x580] sm:$0xff]
    %v2693 = vld [vmem:[%s9 + $0x588] sm:$0xff]
    %v2694 = vld [vmem:[%s9 + $0x590] sm:$0xff]
    %v2695 = vld [vmem:[%s9 + $0x598] sm:$0xff]
    %v2696 = vld [vmem:[%s9 + $0x5a0] sm:$0xff]
    %v2697 = vld [vmem:[%s9 + $0x5a8] sm:$0xff]
    %v2698 = vld [vmem:[%s9 + $0x5b0] sm:$0xff]
    %v2699 = vld [vmem:[%s9 + $0x5b8] sm:$0xff]
    %v2700 = vld [vmem:[%s9 + $0x5c0] sm:$0xff]
    %v2701 = vld [vmem:[%s9 + $0x5c8] sm:$0xff]
    %v2702 = vld [vmem:[%s9 + $0x5d0] sm:$0xff]
    %v2703 = vld [vmem:[%s9 + $0x5d8] sm:$0xff]
    %v2704 = vld [vmem:[%s9 + $0x5e0] sm:$0xff]
    %v2705 = vld [vmem:[%s9 + $0x5e8] sm:$0xff]
    %v2706 = vld [vmem:[%s9 + $0x5f0] sm:$0xff]
    %v2707 = vld [vmem:[%s9 + $0x5f8] sm:$0xff]
    %v2708 = vld [vmem:[%s9 + $0x600] sm:$0xff]
    %v2709 = vld [vmem:[%s9 + $0x608] sm:$0xff]
    %v2710 = vld [vmem:[%s9 + $0x610] sm:$0xff]
    %v2711 = vld [vmem:[%s9 + $0x618] sm:$0xff]
    %v2712 = vld [vmem:[%s9 + $0x620] sm:$0xff]
    %v2713 = vld [vmem:[%s9 + $0x628] sm:$0xff]
    %v2714 = vld [vmem:[%s9 + $0x630] sm:$0xff]
    %v2715 = vld [vmem:[%s9 + $0x638] sm:$0xff]
    %v2716 = vpack.c.bf16 %v2512, %v2512
    %v2717 = vpack.c.bf16 %v2513, %v2513
    %v2718 = vpack.c.bf16 %v2514, %v2514
    %v2719 = vpack.c.bf16 %v2515, %v2515
    %v2720 = vld [vmem:[%s10] sm:$0xff]
    %v2722 = vlaneseq
    %v2723 = vshrl.u32 %v2722, 7
    %v2724 = vsub.s32 0, %v2723
    %v2725 = vrot.slane %v2720, %v2724
    %v2726 = vlaneseq
    %v2727 = vshrl.u32 %v2726, 7
    %v2728 = vsub.s32 1, %v2727
    %v2729 = vrot.slane %v2720, %v2728
    %v2730 = vlaneseq
    %v2731 = vshrl.u32 %v2730, 7
    %v2732 = vsub.s32 2, %v2731
    %v2733 = vrot.slane %v2720, %v2732
    %v2734 = vlaneseq
    %v2735 = vshrl.u32 %v2734, 7
    %v2736 = vsub.s32 3, %v2735
    %v2737 = vrot.slane %v2720, %v2736
    %v2738 = vlaneseq
    %v2739 = vshrl.u32 %v2738, 7
    %v2740 = vsub.s32 4, %v2739
    %v2741 = vrot.slane %v2720, %v2740
    %v2742 = vlaneseq
    %v2743 = vshrl.u32 %v2742, 7
    %v2744 = vsub.s32 5, %v2743
    %v2745 = vrot.slane %v2720, %v2744
    %v2746 = vlaneseq
    %v2747 = vshrl.u32 %v2746, 7
    %v2748 = vsub.s32 6, %v2747
    %v2749 = vrot.slane %v2720, %v2748
    %v2750 = vlaneseq
    %v2751 = vshrl.u32 %v2750, 7
    %v2752 = vsub.s32 7, %v2751
    %v2753 = vrot.slane %v2720, %v2752
    %v2962 = vunpack.c.l.b16 %v2516
    %v2963 = vunpack.c.h.b16 %v2516
    %v2964 = vunpack.c.l.b16 %v2517
    %v2965 = vunpack.c.h.b16 %v2517
    %v2966 = vunpack.c.l.b16 %v2518
    %v2967 = vunpack.c.h.b16 %v2518
    %v2968 = vunpack.c.l.b16 %v2519
    %v2969 = vunpack.c.h.b16 %v2519
    %v2970 = vunpack.c.l.b16 %v2520
    %v2971 = vunpack.c.h.b16 %v2520
    %v2972 = vunpack.c.l.b16 %v2521
    %v2973 = vunpack.c.h.b16 %v2521
    %v2974 = vunpack.c.l.b16 %v2522
    %v2975 = vunpack.c.h.b16 %v2522
    %v2976 = vunpack.c.l.b16 %v2523
    %v2977 = vunpack.c.h.b16 %v2523
    %v2978 = vunpack.c.l.b16 %v2524
    %v2979 = vunpack.c.h.b16 %v2524
    %v2980 = vunpack.c.l.b16 %v2525
    %v2981 = vunpack.c.h.b16 %v2525
    %v2982 = vunpack.c.l.b16 %v2526
    %v2983 = vunpack.c.h.b16 %v2526
    %v2984 = vunpack.c.l.b16 %v2527
    %v2985 = vunpack.c.h.b16 %v2527
    %v2986 = vunpack.c.l.b16 %v2528
    %v2987 = vunpack.c.h.b16 %v2528
    %v2988 = vunpack.c.l.b16 %v2529
    %v2989 = vunpack.c.h.b16 %v2529
    %v2990 = vunpack.c.l.b16 %v2530
    %v2991 = vunpack.c.h.b16 %v2530
    %v2992 = vunpack.c.l.b16 %v2531
    %v2993 = vunpack.c.h.b16 %v2531
    %v2994 = vunpack.c.l.b16 %v2532
    %v2995 = vunpack.c.h.b16 %v2532
    %v2996 = vunpack.c.l.b16 %v2533
    %v2997 = vunpack.c.h.b16 %v2533
    %v2998 = vunpack.c.l.b16 %v2534
    %v2999 = vunpack.c.h.b16 %v2534
    %v3000 = vunpack.c.l.b16 %v2535
    %v3001 = vunpack.c.h.b16 %v2535
    %v3002 = vunpack.c.l.b16 %v2536
    %v3003 = vunpack.c.h.b16 %v2536
    %v3004 = vunpack.c.l.b16 %v2537
    %v3005 = vunpack.c.h.b16 %v2537
    %v3006 = vunpack.c.l.b16 %v2538
    %v3007 = vunpack.c.h.b16 %v2538
    %v3008 = vunpack.c.l.b16 %v2539
    %v3009 = vunpack.c.h.b16 %v2539
    %v3010 = vunpack.c.l.b16 %v2540
    %v3011 = vunpack.c.h.b16 %v2540
    %v3012 = vunpack.c.l.b16 %v2541
    %v3013 = vunpack.c.h.b16 %v2541
    %v3014 = vunpack.c.l.b16 %v2542
    %v3015 = vunpack.c.h.b16 %v2542
    %v3016 = vunpack.c.l.b16 %v2543
    %v3017 = vunpack.c.h.b16 %v2543
    %v3018 = vunpack.c.l.b16 %v2544
    %v3019 = vunpack.c.h.b16 %v2544
    %v3020 = vunpack.c.l.b16 %v2545
    %v3021 = vunpack.c.h.b16 %v2545
    %v3022 = vunpack.c.l.b16 %v2546
    %v3023 = vunpack.c.h.b16 %v2546
    %v3024 = vunpack.c.l.b16 %v2547
    %v3025 = vunpack.c.h.b16 %v2547
    %v3026 = vunpack.c.l.b16 %v2548
    %v3027 = vunpack.c.h.b16 %v2548
    %v3028 = vunpack.c.l.b16 %v2549
    %v3029 = vunpack.c.h.b16 %v2549
    %v3030 = vunpack.c.l.b16 %v2550
    %v3031 = vunpack.c.h.b16 %v2550
    %v3032 = vunpack.c.l.b16 %v2551
    %v3033 = vunpack.c.h.b16 %v2551
    %v3034 = vunpack.c.l.b16 %v2552
    %v3035 = vunpack.c.h.b16 %v2552
    %v3036 = vunpack.c.l.b16 %v2553
    %v3037 = vunpack.c.h.b16 %v2553
    %v3038 = vunpack.c.l.b16 %v2554
    %v3039 = vunpack.c.h.b16 %v2554
    %v3040 = vunpack.c.l.b16 %v2555
    %v3041 = vunpack.c.h.b16 %v2555
    %v3042 = vunpack.c.l.b16 %v2556
    %v3043 = vunpack.c.h.b16 %v2556
    %v3044 = vunpack.c.l.b16 %v2557
    %v3045 = vunpack.c.h.b16 %v2557
    %v3046 = vunpack.c.l.b16 %v2558
    %v3047 = vunpack.c.h.b16 %v2558
    %v3048 = vunpack.c.l.b16 %v2559
    %v3049 = vunpack.c.h.b16 %v2559
    %v3050 = vunpack.c.l.b16 %v2560
    %v3051 = vunpack.c.h.b16 %v2560
    %v3052 = vunpack.c.l.b16 %v2561
    %v3053 = vunpack.c.h.b16 %v2561
    %v3054 = vunpack.c.l.b16 %v2562
    %v3055 = vunpack.c.h.b16 %v2562
    %v3056 = vunpack.c.l.b16 %v2563
    %v3057 = vunpack.c.h.b16 %v2563
    %v3058 = vunpack.c.l.b16 %v2564
    %v3059 = vunpack.c.h.b16 %v2564
    %v3060 = vunpack.c.l.b16 %v2565
    %v3061 = vunpack.c.h.b16 %v2565
    %v3062 = vunpack.c.l.b16 %v2566
    %v3063 = vunpack.c.h.b16 %v2566
    %v3064 = vunpack.c.l.b16 %v2567
    %v3065 = vunpack.c.h.b16 %v2567
    %v3066 = vunpack.c.l.b16 %v2568
    %v3067 = vunpack.c.h.b16 %v2568
    %v3068 = vunpack.c.l.b16 %v2569
    %v3069 = vunpack.c.h.b16 %v2569
    %v3070 = vunpack.c.l.b16 %v2570
    %v3071 = vunpack.c.h.b16 %v2570
    %v3072 = vunpack.c.l.b16 %v2571
    %v3073 = vunpack.c.h.b16 %v2571
    %v3074 = vunpack.c.l.b16 %v2572
    %v3075 = vunpack.c.h.b16 %v2572
    %v3076 = vunpack.c.l.b16 %v2573
    %v3077 = vunpack.c.h.b16 %v2573
    %v3078 = vunpack.c.l.b16 %v2574
    %v3079 = vunpack.c.h.b16 %v2574
    %v3080 = vunpack.c.l.b16 %v2575
    %v3081 = vunpack.c.h.b16 %v2575
    %v3082 = vunpack.c.l.b16 %v2576
    %v3083 = vunpack.c.h.b16 %v2576
    %v3084 = vunpack.c.l.b16 %v2577
    %v3085 = vunpack.c.h.b16 %v2577
    %v3086 = vunpack.c.l.b16 %v2578
    %v3087 = vunpack.c.h.b16 %v2578
    %v3088 = vunpack.c.l.b16 %v2579
    %v3089 = vunpack.c.h.b16 %v2579
    %v3090 = vunpack.c.l.b16 %v2580
    %v3091 = vunpack.c.h.b16 %v2580
    %v3092 = vunpack.c.l.b16 %v2581
    %v3093 = vunpack.c.h.b16 %v2581
    %v3094 = vunpack.c.l.b16 %v2582
    %v3095 = vunpack.c.h.b16 %v2582
    %v3096 = vunpack.c.l.b16 %v2583
    %v3097 = vunpack.c.h.b16 %v2583
    %v3098 = vunpack.c.l.b16 %v2584
    %v3099 = vunpack.c.h.b16 %v2584
    %v3100 = vunpack.c.l.b16 %v2585
    %v3101 = vunpack.c.h.b16 %v2585
    %v3102 = vunpack.c.l.b16 %v2586
    %v3103 = vunpack.c.h.b16 %v2586
    %v3104 = vunpack.c.l.b16 %v2587
    %v3105 = vunpack.c.h.b16 %v2587
    %v3106 = vunpack.c.l.b16 %v2588
    %v3107 = vunpack.c.h.b16 %v2588
    %v3108 = vunpack.c.l.b16 %v2589
    %v3109 = vunpack.c.h.b16 %v2589
    %v3110 = vunpack.c.l.b16 %v2590
    %v3111 = vunpack.c.h.b16 %v2590
    %v3112 = vunpack.c.l.b16 %v2591
    %v3113 = vunpack.c.h.b16 %v2591
    %v3114 = vunpack.c.l.b16 %v2592
    %v3115 = vunpack.c.h.b16 %v2592
    %v3116 = vunpack.c.l.b16 %v2593
    %v3117 = vunpack.c.h.b16 %v2593
    %v3118 = vunpack.c.l.b16 %v2594
    %v3119 = vunpack.c.h.b16 %v2594
    %v3120 = vunpack.c.l.b16 %v2595
    %v3121 = vunpack.c.h.b16 %v2595
    %v3122 = vunpack.c.l.b16 %v2596
    %v3123 = vunpack.c.h.b16 %v2596
    %v3124 = vunpack.c.l.b16 %v2597
    %v3125 = vunpack.c.h.b16 %v2597
    %v3126 = vunpack.c.l.b16 %v2598
    %v3127 = vunpack.c.h.b16 %v2598
    %v3128 = vunpack.c.l.b16 %v2599
    %v3129 = vunpack.c.h.b16 %v2599
    %v3130 = vunpack.c.l.b16 %v2600
    %v3131 = vunpack.c.h.b16 %v2600
    %v3132 = vunpack.c.l.b16 %v2601
    %v3133 = vunpack.c.h.b16 %v2601
    %v3134 = vunpack.c.l.b16 %v2602
    %v3135 = vunpack.c.h.b16 %v2602
    %v3136 = vunpack.c.l.b16 %v2603
    %v3137 = vunpack.c.h.b16 %v2603
    %v3138 = vunpack.c.l.b16 %v2604
    %v3139 = vunpack.c.h.b16 %v2604
    %v3140 = vunpack.c.l.b16 %v2605
    %v3141 = vunpack.c.h.b16 %v2605
    %v3142 = vunpack.c.l.b16 %v2606
    %v3143 = vunpack.c.h.b16 %v2606
    %v3144 = vunpack.c.l.b16 %v2607
    %v3145 = vunpack.c.h.b16 %v2607
    %v3146 = vunpack.c.l.b16 %v2608
    %v3147 = vunpack.c.h.b16 %v2608
    %v3148 = vunpack.c.l.b16 %v2609
    %v3149 = vunpack.c.h.b16 %v2609
    %v3150 = vunpack.c.l.b16 %v2610
    %v3151 = vunpack.c.h.b16 %v2610
    %v3152 = vunpack.c.l.b16 %v2611
    %v3153 = vunpack.c.h.b16 %v2611
    %v3154 = vunpack.c.l.b16 %v2612
    %v3155 = vunpack.c.h.b16 %v2612
    %v3156 = vunpack.c.l.b16 %v2613
    %v3157 = vunpack.c.h.b16 %v2613
    %v3158 = vunpack.c.l.b16 %v2614
    %v3159 = vunpack.c.h.b16 %v2614
    %v3160 = vunpack.c.l.b16 %v2615
    %v3161 = vunpack.c.h.b16 %v2615
    %v3162 = vunpack.c.l.b16 %v2616
    %v3163 = vunpack.c.h.b16 %v2616
    %v3164 = vunpack.c.l.b16 %v2617
    %v3165 = vunpack.c.h.b16 %v2617
    %v3166 = vunpack.c.l.b16 %v2618
    %v3167 = vunpack.c.h.b16 %v2618
    %v3168 = vunpack.c.l.b16 %v2619
    %v3169 = vunpack.c.h.b16 %v2619
    %v3170 = vunpack.c.l.b16 %v2620
    %v3171 = vunpack.c.h.b16 %v2620
    %v3172 = vunpack.c.l.b16 %v2621
    %v3173 = vunpack.c.h.b16 %v2621
    %v3174 = vunpack.c.l.b16 %v2622
    %v3175 = vunpack.c.h.b16 %v2622
    %v3176 = vunpack.c.l.b16 %v2623
    %v3177 = vunpack.c.h.b16 %v2623
    %v3178 = vunpack.c.l.b16 %v2624
    %v3179 = vunpack.c.h.b16 %v2624
    %v3180 = vunpack.c.l.b16 %v2625
    %v3181 = vunpack.c.h.b16 %v2625
    %v3182 = vunpack.c.l.b16 %v2626
    %v3183 = vunpack.c.h.b16 %v2626
    %v3184 = vunpack.c.l.b16 %v2627
    %v3185 = vunpack.c.h.b16 %v2627
    %v3186 = vunpack.c.l.b16 %v2628
    %v3187 = vunpack.c.h.b16 %v2628
    %v3188 = vunpack.c.l.b16 %v2629
    %v3189 = vunpack.c.h.b16 %v2629
    %v3190 = vunpack.c.l.b16 %v2630
    %v3191 = vunpack.c.h.b16 %v2630
    %v3192 = vunpack.c.l.b16 %v2631
    %v3193 = vunpack.c.h.b16 %v2631
    %v3194 = vunpack.c.l.b16 %v2632
    %v3195 = vunpack.c.h.b16 %v2632
    %v3196 = vunpack.c.l.b16 %v2633
    %v3197 = vunpack.c.h.b16 %v2633
    %v3198 = vunpack.c.l.b16 %v2634
    %v3199 = vunpack.c.h.b16 %v2634
    %v3200 = vunpack.c.l.b16 %v2635
    %v3201 = vunpack.c.h.b16 %v2635
    %v3202 = vunpack.c.l.b16 %v2636
    %v3203 = vunpack.c.h.b16 %v2636
    %v3204 = vunpack.c.l.b16 %v2637
    %v3205 = vunpack.c.h.b16 %v2637
    %v3206 = vunpack.c.l.b16 %v2638
    %v3207 = vunpack.c.h.b16 %v2638
    %v3208 = vunpack.c.l.b16 %v2639
    %v3209 = vunpack.c.h.b16 %v2639
    %v3210 = vunpack.c.l.b16 %v2640
    %v3211 = vunpack.c.h.b16 %v2640
    %v3212 = vunpack.c.l.b16 %v2641
    %v3213 = vunpack.c.h.b16 %v2641
    %v3214 = vunpack.c.l.b16 %v2642
    %v3215 = vunpack.c.h.b16 %v2642
    %v3216 = vunpack.c.l.b16 %v2643
    %v3217 = vunpack.c.h.b16 %v2643
    %v3218 = vunpack.c.l.b16 %v2644
    %v3219 = vunpack.c.h.b16 %v2644
    %v3220 = vunpack.c.l.b16 %v2645
    %v3221 = vunpack.c.h.b16 %v2645
    %v3222 = vunpack.c.l.b16 %v2646
    %v3223 = vunpack.c.h.b16 %v2646
    %v3224 = vunpack.c.l.b16 %v2647
    %v3225 = vunpack.c.h.b16 %v2647
    %v3226 = vunpack.c.l.b16 %v2648
    %v3227 = vunpack.c.h.b16 %v2648
    %v3228 = vunpack.c.l.b16 %v2649
    %v3229 = vunpack.c.h.b16 %v2649
    %v3230 = vunpack.c.l.b16 %v2650
    %v3231 = vunpack.c.h.b16 %v2650
    %v3232 = vunpack.c.l.b16 %v2651
    %v3233 = vunpack.c.h.b16 %v2651
    %v3234 = vunpack.c.l.b16 %v2652
    %v3235 = vunpack.c.h.b16 %v2652
    %v3236 = vunpack.c.l.b16 %v2653
    %v3237 = vunpack.c.h.b16 %v2653
    %v3238 = vunpack.c.l.b16 %v2654
    %v3239 = vunpack.c.h.b16 %v2654
    %v3240 = vunpack.c.l.b16 %v2655
    %v3241 = vunpack.c.h.b16 %v2655
    %v3242 = vunpack.c.l.b16 %v2656
    %v3243 = vunpack.c.h.b16 %v2656
    %v3244 = vunpack.c.l.b16 %v2657
    %v3245 = vunpack.c.h.b16 %v2657
    %v3246 = vunpack.c.l.b16 %v2658
    %v3247 = vunpack.c.h.b16 %v2658
    %v3248 = vunpack.c.l.b16 %v2659
    %v3249 = vunpack.c.h.b16 %v2659
    %v3250 = vunpack.c.l.b16 %v2660
    %v3251 = vunpack.c.h.b16 %v2660
    %v3252 = vunpack.c.l.b16 %v2661
    %v3253 = vunpack.c.h.b16 %v2661
    %v3254 = vunpack.c.l.b16 %v2662
    %v3255 = vunpack.c.h.b16 %v2662
    %v3256 = vunpack.c.l.b16 %v2663
    %v3257 = vunpack.c.h.b16 %v2663
    %v3258 = vunpack.c.l.b16 %v2664
    %v3259 = vunpack.c.h.b16 %v2664
    %v3260 = vunpack.c.l.b16 %v2665
    %v3261 = vunpack.c.h.b16 %v2665
    %v3262 = vunpack.c.l.b16 %v2666
    %v3263 = vunpack.c.h.b16 %v2666
    %v3264 = vunpack.c.l.b16 %v2667
    %v3265 = vunpack.c.h.b16 %v2667
    %v3266 = vunpack.c.l.b16 %v2668
    %v3267 = vunpack.c.h.b16 %v2668
    %v3268 = vunpack.c.l.b16 %v2669
    %v3269 = vunpack.c.h.b16 %v2669
    %v3270 = vunpack.c.l.b16 %v2670
    %v3271 = vunpack.c.h.b16 %v2670
    %v3272 = vunpack.c.l.b16 %v2671
    %v3273 = vunpack.c.h.b16 %v2671
    %v3274 = vunpack.c.l.b16 %v2672
    %v3275 = vunpack.c.h.b16 %v2672
    %v3276 = vunpack.c.l.b16 %v2673
    %v3277 = vunpack.c.h.b16 %v2673
    %v3278 = vunpack.c.l.b16 %v2674
    %v3279 = vunpack.c.h.b16 %v2674
    %v3280 = vunpack.c.l.b16 %v2675
    %v3281 = vunpack.c.h.b16 %v2675
    %v3282 = vunpack.c.l.b16 %v2676
    %v3283 = vunpack.c.h.b16 %v2676
    %v3284 = vunpack.c.l.b16 %v2677
    %v3285 = vunpack.c.h.b16 %v2677
    %v3286 = vunpack.c.l.b16 %v2678
    %v3287 = vunpack.c.h.b16 %v2678
    %v3288 = vunpack.c.l.b16 %v2679
    %v3289 = vunpack.c.h.b16 %v2679
    %v3290 = vunpack.c.l.b16 %v2680
    %v3291 = vunpack.c.h.b16 %v2680
    %v3292 = vunpack.c.l.b16 %v2681
    %v3293 = vunpack.c.h.b16 %v2681
    %v3294 = vunpack.c.l.b16 %v2682
    %v3295 = vunpack.c.h.b16 %v2682
    %v3296 = vunpack.c.l.b16 %v2683
    %v3297 = vunpack.c.h.b16 %v2683
    %v3298 = vunpack.c.l.b16 %v2684
    %v3299 = vunpack.c.h.b16 %v2684
    %v3300 = vunpack.c.l.b16 %v2685
    %v3301 = vunpack.c.h.b16 %v2685
    %v3302 = vunpack.c.l.b16 %v2686
    %v3303 = vunpack.c.h.b16 %v2686
    %v3304 = vunpack.c.l.b16 %v2687
    %v3305 = vunpack.c.h.b16 %v2687
    %v3306 = vunpack.c.l.b16 %v2688
    %v3307 = vunpack.c.h.b16 %v2688
    %v3308 = vunpack.c.l.b16 %v2689
    %v3309 = vunpack.c.h.b16 %v2689
    %v3310 = vunpack.c.l.b16 %v2690
    %v3311 = vunpack.c.h.b16 %v2690
    %v3312 = vunpack.c.l.b16 %v2691
    %v3313 = vunpack.c.h.b16 %v2691
    %v3314 = vunpack.c.l.b16 %v2692
    %v3315 = vunpack.c.h.b16 %v2692
    %v3316 = vunpack.c.l.b16 %v2693
    %v3317 = vunpack.c.h.b16 %v2693
    %v3318 = vunpack.c.l.b16 %v2694
    %v3319 = vunpack.c.h.b16 %v2694
    %v3320 = vunpack.c.l.b16 %v2695
    %v3321 = vunpack.c.h.b16 %v2695
    %v3322 = vunpack.c.l.b16 %v2696
    %v3323 = vunpack.c.h.b16 %v2696
    %v3324 = vunpack.c.l.b16 %v2697
    %v3325 = vunpack.c.h.b16 %v2697
    %v3326 = vunpack.c.l.b16 %v2698
    %v3327 = vunpack.c.h.b16 %v2698
    %v3328 = vunpack.c.l.b16 %v2699
    %v3329 = vunpack.c.h.b16 %v2699
    %v3330 = vunpack.c.l.b16 %v2700
    %v3331 = vunpack.c.h.b16 %v2700
    %v3332 = vunpack.c.l.b16 %v2701
    %v3333 = vunpack.c.h.b16 %v2701
    %v3334 = vunpack.c.l.b16 %v2702
    %v3335 = vunpack.c.h.b16 %v2702
    %v3336 = vunpack.c.l.b16 %v2703
    %v3337 = vunpack.c.h.b16 %v2703
    %v3338 = vunpack.c.l.b16 %v2704
    %v3339 = vunpack.c.h.b16 %v2704
    %v3340 = vunpack.c.l.b16 %v2705
    %v3341 = vunpack.c.h.b16 %v2705
    %v3342 = vunpack.c.l.b16 %v2706
    %v3343 = vunpack.c.h.b16 %v2706
    %v3344 = vunpack.c.l.b16 %v2707
    %v3345 = vunpack.c.h.b16 %v2707
    %v3346 = vunpack.c.l.b16 %v2708
    %v3347 = vunpack.c.h.b16 %v2708
    %v3348 = vunpack.c.l.b16 %v2709
    %v3349 = vunpack.c.h.b16 %v2709
    %v3350 = vunpack.c.l.b16 %v2710
    %v3351 = vunpack.c.h.b16 %v2710
    %v3352 = vunpack.c.l.b16 %v2711
    %v3353 = vunpack.c.h.b16 %v2711
    %v3354 = vunpack.c.l.b16 %v2712
    %v3355 = vunpack.c.h.b16 %v2712
    %v3356 = vunpack.c.l.b16 %v2713
    %v3357 = vunpack.c.h.b16 %v2713
    %v3358 = vunpack.c.l.b16 %v2714
    %v3359 = vunpack.c.h.b16 %v2714
    %v3360 = vunpack.c.l.b16 %v2715
    %v3361 = vunpack.c.h.b16 %v2715
    %v3362 = vpack.c.b16 %v2970, %v2962
    %v3363 = vpack.c.b16 %v2971, %v2963
    %v3364 = vpack.c.b16 %v2972, %v2964
    %v3365 = vpack.c.b16 %v2973, %v2965
    %v3366 = vpack.c.b16 %v2974, %v2966
    %v3367 = vpack.c.b16 %v2975, %v2967
    %v3368 = vpack.c.b16 %v2976, %v2968
    %v3369 = vpack.c.b16 %v2977, %v2969
    %v3370 = vpack.c.b16 %v2986, %v2978
    %v3371 = vpack.c.b16 %v2987, %v2979
    %v3372 = vpack.c.b16 %v2988, %v2980
    %v3373 = vpack.c.b16 %v2989, %v2981
    %v3374 = vpack.c.b16 %v2990, %v2982
    %v3375 = vpack.c.b16 %v2991, %v2983
    %v3376 = vpack.c.b16 %v2992, %v2984
    %v3377 = vpack.c.b16 %v2993, %v2985
    %v3378 = vpack.c.b16 %v3002, %v2994
    %v3379 = vpack.c.b16 %v3003, %v2995
    %v3380 = vpack.c.b16 %v3004, %v2996
    %v3381 = vpack.c.b16 %v3005, %v2997
    %v3382 = vpack.c.b16 %v3006, %v2998
    %v3383 = vpack.c.b16 %v3007, %v2999
    %v3384 = vpack.c.b16 %v3008, %v3000
    %v3385 = vpack.c.b16 %v3009, %v3001
    %v3386 = vpack.c.b16 %v3018, %v3010
    %v3387 = vpack.c.b16 %v3019, %v3011
    %v3388 = vpack.c.b16 %v3020, %v3012
    %v3389 = vpack.c.b16 %v3021, %v3013
    %v3390 = vpack.c.b16 %v3022, %v3014
    %v3391 = vpack.c.b16 %v3023, %v3015
    %v3392 = vpack.c.b16 %v3024, %v3016
    %v3393 = vpack.c.b16 %v3025, %v3017
    %v3394 = vpack.c.b16 %v3034, %v3026
    %v3395 = vpack.c.b16 %v3035, %v3027
    %v3396 = vpack.c.b16 %v3036, %v3028
    %v3397 = vpack.c.b16 %v3037, %v3029
    %v3398 = vpack.c.b16 %v3038, %v3030
    %v3399 = vpack.c.b16 %v3039, %v3031
    %v3400 = vpack.c.b16 %v3040, %v3032
    %v3401 = vpack.c.b16 %v3041, %v3033
    %v3402 = vpack.c.b16 %v3050, %v3042
    %v3403 = vpack.c.b16 %v3051, %v3043
    %v3404 = vpack.c.b16 %v3052, %v3044
    %v3405 = vpack.c.b16 %v3053, %v3045
    %v3406 = vpack.c.b16 %v3054, %v3046
    %v3407 = vpack.c.b16 %v3055, %v3047
    %v3408 = vpack.c.b16 %v3056, %v3048
    %v3409 = vpack.c.b16 %v3057, %v3049
    %v3410 = vpack.c.b16 %v3066, %v3058
    %v3411 = vpack.c.b16 %v3067, %v3059
    %v3412 = vpack.c.b16 %v3068, %v3060
    %v3413 = vpack.c.b16 %v3069, %v3061
    %v3414 = vpack.c.b16 %v3070, %v3062
    %v3415 = vpack.c.b16 %v3071, %v3063
    %v3416 = vpack.c.b16 %v3072, %v3064
    %v3417 = vpack.c.b16 %v3073, %v3065
    %v3418 = vpack.c.b16 %v3082, %v3074
    %v3419 = vpack.c.b16 %v3083, %v3075
    %v3420 = vpack.c.b16 %v3084, %v3076
    %v3421 = vpack.c.b16 %v3085, %v3077
    %v3422 = vpack.c.b16 %v3086, %v3078
    %v3423 = vpack.c.b16 %v3087, %v3079
    %v3424 = vpack.c.b16 %v3088, %v3080
    %v3425 = vpack.c.b16 %v3089, %v3081
    %v3426 = vpack.c.b16 %v3098, %v3090
    %v3427 = vpack.c.b16 %v3099, %v3091
    %v3428 = vpack.c.b16 %v3100, %v3092
    %v3429 = vpack.c.b16 %v3101, %v3093
    %v3430 = vpack.c.b16 %v3102, %v3094
    %v3431 = vpack.c.b16 %v3103, %v3095
    %v3432 = vpack.c.b16 %v3104, %v3096
    %v3433 = vpack.c.b16 %v3105, %v3097
    %v3434 = vpack.c.b16 %v3114, %v3106
    %v3435 = vpack.c.b16 %v3115, %v3107
    %v3436 = vpack.c.b16 %v3116, %v3108
    %v3437 = vpack.c.b16 %v3117, %v3109
    %v3438 = vpack.c.b16 %v3118, %v3110
    %v3439 = vpack.c.b16 %v3119, %v3111
    %v3440 = vpack.c.b16 %v3120, %v3112
    %v3441 = vpack.c.b16 %v3121, %v3113
    %v3442 = vpack.c.b16 %v3130, %v3122
    %v3443 = vpack.c.b16 %v3131, %v3123
    %v3444 = vpack.c.b16 %v3132, %v3124
    %v3445 = vpack.c.b16 %v3133, %v3125
    %v3446 = vpack.c.b16 %v3134, %v3126
    %v3447 = vpack.c.b16 %v3135, %v3127
    %v3448 = vpack.c.b16 %v3136, %v3128
    %v3449 = vpack.c.b16 %v3137, %v3129
    %v3450 = vpack.c.b16 %v3146, %v3138
    %v3451 = vpack.c.b16 %v3147, %v3139
    %v3452 = vpack.c.b16 %v3148, %v3140
    %v3453 = vpack.c.b16 %v3149, %v3141
    %v3454 = vpack.c.b16 %v3150, %v3142
    %v3455 = vpack.c.b16 %v3151, %v3143
    %v3456 = vpack.c.b16 %v3152, %v3144
    %v3457 = vpack.c.b16 %v3153, %v3145
    %v3458 = vpack.c.b16 %v3162, %v3154
    %v3459 = vpack.c.b16 %v3163, %v3155
    %v3460 = vpack.c.b16 %v3164, %v3156
    %v3461 = vpack.c.b16 %v3165, %v3157
    %v3462 = vpack.c.b16 %v3166, %v3158
    %v3463 = vpack.c.b16 %v3167, %v3159
    %v3464 = vpack.c.b16 %v3168, %v3160
    %v3465 = vpack.c.b16 %v3169, %v3161
    %v3466 = vpack.c.b16 %v3178, %v3170
    %v3467 = vpack.c.b16 %v3179, %v3171
    %v3468 = vpack.c.b16 %v3180, %v3172
    %v3469 = vpack.c.b16 %v3181, %v3173
    %v3470 = vpack.c.b16 %v3182, %v3174
    %v3471 = vpack.c.b16 %v3183, %v3175
    %v3472 = vpack.c.b16 %v3184, %v3176
    %v3473 = vpack.c.b16 %v3185, %v3177
    %v3474 = vpack.c.b16 %v3194, %v3186
    %v3475 = vpack.c.b16 %v3195, %v3187
    %v3476 = vpack.c.b16 %v3196, %v3188
    %v3477 = vpack.c.b16 %v3197, %v3189
    %v3478 = vpack.c.b16 %v3198, %v3190
    %v3479 = vpack.c.b16 %v3199, %v3191
    %v3480 = vpack.c.b16 %v3200, %v3192
    %v3481 = vpack.c.b16 %v3201, %v3193
    %v3482 = vpack.c.b16 %v3210, %v3202
    %v3483 = vpack.c.b16 %v3211, %v3203
    %v3484 = vpack.c.b16 %v3212, %v3204
    %v3485 = vpack.c.b16 %v3213, %v3205
    %v3486 = vpack.c.b16 %v3214, %v3206
    %v3487 = vpack.c.b16 %v3215, %v3207
    %v3488 = vpack.c.b16 %v3216, %v3208
    %v3489 = vpack.c.b16 %v3217, %v3209
    %v3490 = vpack.c.b16 %v3226, %v3218
    %v3491 = vpack.c.b16 %v3227, %v3219
    %v3492 = vpack.c.b16 %v3228, %v3220
    %v3493 = vpack.c.b16 %v3229, %v3221
    %v3494 = vpack.c.b16 %v3230, %v3222
    %v3495 = vpack.c.b16 %v3231, %v3223
    %v3496 = vpack.c.b16 %v3232, %v3224
    %v3497 = vpack.c.b16 %v3233, %v3225
    %v3498 = vpack.c.b16 %v3242, %v3234
    %v3499 = vpack.c.b16 %v3243, %v3235
    %v3500 = vpack.c.b16 %v3244, %v3236
    %v3501 = vpack.c.b16 %v3245, %v3237
    %v3502 = vpack.c.b16 %v3246, %v3238
    %v3503 = vpack.c.b16 %v3247, %v3239
    %v3504 = vpack.c.b16 %v3248, %v3240
    %v3505 = vpack.c.b16 %v3249, %v3241
    %v3506 = vpack.c.b16 %v3258, %v3250
    %v3507 = vpack.c.b16 %v3259, %v3251
    %v3508 = vpack.c.b16 %v3260, %v3252
    %v3509 = vpack.c.b16 %v3261, %v3253
    %v3510 = vpack.c.b16 %v3262, %v3254
    %v3511 = vpack.c.b16 %v3263, %v3255
    %v3512 = vpack.c.b16 %v3264, %v3256
    %v3513 = vpack.c.b16 %v3265, %v3257
    %v3514 = vpack.c.b16 %v3274, %v3266
    %v3515 = vpack.c.b16 %v3275, %v3267
    %v3516 = vpack.c.b16 %v3276, %v3268
    %v3517 = vpack.c.b16 %v3277, %v3269
    %v3518 = vpack.c.b16 %v3278, %v3270
    %v3519 = vpack.c.b16 %v3279, %v3271
    %v3520 = vpack.c.b16 %v3280, %v3272
    %v3521 = vpack.c.b16 %v3281, %v3273
    %v3522 = vpack.c.b16 %v3290, %v3282
    %v3523 = vpack.c.b16 %v3291, %v3283
    %v3524 = vpack.c.b16 %v3292, %v3284
    %v3525 = vpack.c.b16 %v3293, %v3285
    %v3526 = vpack.c.b16 %v3294, %v3286
    %v3527 = vpack.c.b16 %v3295, %v3287
    %v3528 = vpack.c.b16 %v3296, %v3288
    %v3529 = vpack.c.b16 %v3297, %v3289
    %v3530 = vpack.c.b16 %v3306, %v3298
    %v3531 = vpack.c.b16 %v3307, %v3299
    %v3532 = vpack.c.b16 %v3308, %v3300
    %v3533 = vpack.c.b16 %v3309, %v3301
    %v3534 = vpack.c.b16 %v3310, %v3302
    %v3535 = vpack.c.b16 %v3311, %v3303
    %v3536 = vpack.c.b16 %v3312, %v3304
    %v3537 = vpack.c.b16 %v3313, %v3305
    %v3538 = vpack.c.b16 %v3322, %v3314
    %v3539 = vpack.c.b16 %v3323, %v3315
    %v3540 = vpack.c.b16 %v3324, %v3316
    %v3541 = vpack.c.b16 %v3325, %v3317
    %v3542 = vpack.c.b16 %v3326, %v3318
    %v3543 = vpack.c.b16 %v3327, %v3319
    %v3544 = vpack.c.b16 %v3328, %v3320
    %v3545 = vpack.c.b16 %v3329, %v3321
    %v3546 = vpack.c.b16 %v3338, %v3330
    %v3547 = vpack.c.b16 %v3339, %v3331
    %v3548 = vpack.c.b16 %v3340, %v3332
    %v3549 = vpack.c.b16 %v3341, %v3333
    %v3550 = vpack.c.b16 %v3342, %v3334
    %v3551 = vpack.c.b16 %v3343, %v3335
    %v3552 = vpack.c.b16 %v3344, %v3336
    %v3553 = vpack.c.b16 %v3345, %v3337
    %v3554 = vpack.c.b16 %v3354, %v3346
    %v3555 = vpack.c.b16 %v3355, %v3347
    %v3556 = vpack.c.b16 %v3356, %v3348
    %v3557 = vpack.c.b16 %v3357, %v3349
    %v3558 = vpack.c.b16 %v3358, %v3350
    %v3559 = vpack.c.b16 %v3359, %v3351
    %v3560 = vpack.c.b16 %v3360, %v3352
    %v3561 = vpack.c.b16 %v3361, %v3353
    %v3763 = vsel %vm2212, %v2719, 0
    %3765 = vmatprep.subr.bf16.mxu0 %v3419
    %3766 = vmatpush1.bf16.msra.mxu0 %v3418
    %3767 = vmatprep.subr.bf16.mxu0 %v3411
    %3768 = vmatpush1.bf16.msra.mxu0 %v3410
    %3769 = vmatprep.subr.bf16.mxu0 %v3403
    %3770 = vmatpush1.bf16.msra.mxu0 %v3402
    %3771 = vmatprep.subr.bf16.mxu0 %v3395
    %3772 = vmatpush1.bf16.msra.mxu0 %v3394
    %3773 = vmatprep.subr.bf16.mxu0 %v3387
    %3774 = vmatpush1.bf16.msra.mxu0 %v3386
    %3775 = vmatprep.subr.bf16.mxu0 %v3379
    %3776 = vmatpush1.bf16.msra.mxu0 %v3378
    %3777 = vmatprep.subr.bf16.mxu0 %v3371
    %3778 = vmatpush1.bf16.msra.mxu0 %v3370
    %3779 = vmatprep.subr.bf16.mxu0 %v3363
    %3780 = vmatpush1.bf16.msra.mxu0 %v3362
    %3781 = vmatprep.subr.bf16.mxu0 %v3483
    %3782 = vmatpush2.bf16.msra.mxu0 %v3482
    %3783 = vmatprep.subr.bf16.mxu0 %v3475
    %3784 = vmatpush2.bf16.msra.mxu0 %v3474
    %3785 = vmatprep.subr.bf16.mxu0 %v3467
    %3786 = vmatpush2.bf16.msra.mxu0 %v3466
    %3787 = vmatprep.subr.bf16.mxu0 %v3459
    %3788 = vmatpush2.bf16.msra.mxu0 %v3458
    %3789 = vmatprep.subr.bf16.mxu0 %v3451
    %3790 = vmatpush2.bf16.msra.mxu0 %v3450
    %3791 = vmatprep.subr.bf16.mxu0 %v3443
    %3792 = vmatpush2.bf16.msra.mxu0 %v3442
    %3793 = vmatprep.subr.bf16.mxu0 %v3435
    %3794 = vmatpush2.bf16.msra.mxu0 %v3434
    %3795 = vmatprep.subr.bf16.mxu0 %v3427
    %3796 = vmatpush2.bf16.msra.mxu0 %v3426
    %3797 = vmatprep.mubr.bf16.mxu0 %v2717
    %3798 = vmatmul.mubr.bf16.gmra.mxu0 %v2716
    %v3799 = vpop.f32.mrf.mxu0
    %v3800 = vadd.f32 %v2725, %v3799
    %v3801 = vpop.f32.mrf.mxu0
    %v3802 = vadd.f32 %v2729, %v3801
    %v3803 = vpop.f32.mrf.mxu0
    %v3804 = vpop.f32.mrf.mxu0
    %3805 = vdwg.mxu0
    %3806 = vmatprep.subr.bf16.mxu0 %v3547
    %3807 = vmatpush1.bf16.msra.mxu0 %v3546
    %3808 = vmatprep.subr.bf16.mxu0 %v3539
    %3809 = vmatpush1.bf16.msra.mxu0 %v3538
    %3810 = vmatprep.subr.bf16.mxu0 %v3531
    %3811 = vmatpush1.bf16.msra.mxu0 %v3530
    %3812 = vmatprep.subr.bf16.mxu0 %v3523
    %3813 = vmatpush1.bf16.msra.mxu0 %v3522
    %3814 = vmatprep.subr.bf16.mxu0 %v3515
    %3815 = vmatpush1.bf16.msra.mxu0 %v3514
    %3816 = vmatprep.subr.bf16.mxu0 %v3507
    %3817 = vmatpush1.bf16.msra.mxu0 %v3506
    %3818 = vmatprep.subr.bf16.mxu0 %v3499
    %3819 = vmatpush1.bf16.msra.mxu0 %v3498
    %3820 = vmatprep.subr.bf16.mxu0 %v3491
    %3821 = vmatpush1.bf16.msra.mxu0 %v3490
    %3822 = vmatprep.subr.bf16.mxu0 0
    %3823 = vmatpush2.bf16.msra.mxu0 0
    %3824 = vmatprep.subr.bf16.mxu0 0
    %3825 = vmatpush2.bf16.msra.mxu0 0
    %3826 = vmatprep.subr.bf16.mxu0 0
    %3827 = vmatpush2.bf16.msra.mxu0 0
    %3828 = vmatprep.subr.bf16.mxu0 0
    %3829 = vmatpush2.bf16.msra.mxu0 0
    %3830 = vmatprep.subr.bf16.mxu0 0
    %3831 = vmatpush2.bf16.msra.mxu0 0
    %3832 = vmatprep.subr.bf16.mxu0 0
    %3833 = vmatpush2.bf16.msra.mxu0 0
    %3834 = vmatprep.subr.bf16.mxu0 0
    %3835 = vmatpush2.bf16.msra.mxu0 0
    %3836 = vmatprep.subr.bf16.mxu0 %v3555
    %3837 = vmatpush2.bf16.msra.mxu0 %v3554
    %3838 = vmatprep.mubr.bf16.mxu0 %v3763
    %3839 = vmatmul.mubr.bf16.gmra.mxu0 %v2718
    %v3840 = vpop.f32.mrf.mxu0
    %v3841 = vadd.f32 %v3800, %v3840
    %v3842 = vpop.f32.mrf.mxu0
    %v3843 = vadd.f32 %v3802, %v3842
    %v3844 = vpop.f32.mrf.mxu0
    %v3845 = vpop.f32.mrf.mxu0
    %3846 = vdwg.mxu0
    %3847 = vmatprep.subr.bf16.mxu0 %v3421
    %3848 = vmatpush1.bf16.msra.mxu0 %v3420
    %3849 = vmatprep.subr.bf16.mxu0 %v3413
    %3850 = vmatpush1.bf16.msra.mxu0 %v3412
    %3851 = vmatprep.subr.bf16.mxu0 %v3405
    %3852 = vmatpush1.bf16.msra.mxu0 %v3404
    %3853 = vmatprep.subr.bf16.mxu0 %v3397
    %3854 = vmatpush1.bf16.msra.mxu0 %v3396
    %3855 = vmatprep.subr.bf16.mxu0 %v3389
    %3856 = vmatpush1.bf16.msra.mxu0 %v3388
    %3857 = vmatprep.subr.bf16.mxu0 %v3381
    %3858 = vmatpush1.bf16.msra.mxu0 %v3380
    %3859 = vmatprep.subr.bf16.mxu0 %v3373
    %3860 = vmatpush1.bf16.msra.mxu0 %v3372
    %3861 = vmatprep.subr.bf16.mxu0 %v3365
    %3862 = vmatpush1.bf16.msra.mxu0 %v3364
    %3863 = vmatprep.subr.bf16.mxu0 %v3485
    %3864 = vmatpush2.bf16.msra.mxu0 %v3484
    %3865 = vmatprep.subr.bf16.mxu0 %v3477
    %3866 = vmatpush2.bf16.msra.mxu0 %v3476
    %3867 = vmatprep.subr.bf16.mxu0 %v3469
    %3868 = vmatpush2.bf16.msra.mxu0 %v3468
    %3869 = vmatprep.subr.bf16.mxu0 %v3461
    %3870 = vmatpush2.bf16.msra.mxu0 %v3460
    %3871 = vmatprep.subr.bf16.mxu0 %v3453
    %3872 = vmatpush2.bf16.msra.mxu0 %v3452
    %3873 = vmatprep.subr.bf16.mxu0 %v3445
    %3874 = vmatpush2.bf16.msra.mxu0 %v3444
    %3875 = vmatprep.subr.bf16.mxu0 %v3437
    %3876 = vmatpush2.bf16.msra.mxu0 %v3436
    %3877 = vmatprep.subr.bf16.mxu0 %v3429
    %3878 = vmatpush2.bf16.msra.mxu0 %v3428
    %3879 = vmatprep.mubr.bf16.mxu0 %v2717
    %3880 = vmatmul.mubr.bf16.gmra.mxu0 %v2716
    %v3881 = vpop.f32.mrf.mxu0
    %v3882 = vadd.f32 %v2733, %v3881
    %v3883 = vpop.f32.mrf.mxu0
    %v3884 = vadd.f32 %v2737, %v3883
    %v3885 = vpop.f32.mrf.mxu0
    %v3886 = vpop.f32.mrf.mxu0
    %3887 = vdwg.mxu0
    %3888 = vmatprep.subr.bf16.mxu0 %v3549
    %3889 = vmatpush1.bf16.msra.mxu0 %v3548
    %3890 = vmatprep.subr.bf16.mxu0 %v3541
    %3891 = vmatpush1.bf16.msra.mxu0 %v3540
    %3892 = vmatprep.subr.bf16.mxu0 %v3533
    %3893 = vmatpush1.bf16.msra.mxu0 %v3532
    %3894 = vmatprep.subr.bf16.mxu0 %v3525
    %3895 = vmatpush1.bf16.msra.mxu0 %v3524
    %3896 = vmatprep.subr.bf16.mxu0 %v3517
    %3897 = vmatpush1.bf16.msra.mxu0 %v3516
    %3898 = vmatprep.subr.bf16.mxu0 %v3509
    %3899 = vmatpush1.bf16.msra.mxu0 %v3508
    %3900 = vmatprep.subr.bf16.mxu0 %v3501
    %3901 = vmatpush1.bf16.msra.mxu0 %v3500
    %3902 = vmatprep.subr.bf16.mxu0 %v3493
    %3903 = vmatpush1.bf16.msra.mxu0 %v3492
    %3904 = vmatprep.subr.bf16.mxu0 0
    %3905 = vmatpush2.bf16.msra.mxu0 0
    %3906 = vmatprep.subr.bf16.mxu0 0
    %3907 = vmatpush2.bf16.msra.mxu0 0
    %3908 = vmatprep.subr.bf16.mxu0 0
    %3909 = vmatpush2.bf16.msra.mxu0 0
    %3910 = vmatprep.subr.bf16.mxu0 0
    %3911 = vmatpush2.bf16.msra.mxu0 0
    %3912 = vmatprep.subr.bf16.mxu0 0
    %3913 = vmatpush2.bf16.msra.mxu0 0
    %3914 = vmatprep.subr.bf16.mxu0 0
    %3915 = vmatpush2.bf16.msra.mxu0 0
    %3916 = vmatprep.subr.bf16.mxu0 0
    %3917 = vmatpush2.bf16.msra.mxu0 0
    %3918 = vmatprep.subr.bf16.mxu0 %v3557
    %3919 = vmatpush2.bf16.msra.mxu0 %v3556
    %3920 = vmatprep.mubr.bf16.mxu0 %v3763
    %3921 = vmatmul.mubr.bf16.gmra.mxu0 %v2718
    %v3922 = vpop.f32.mrf.mxu0
    %v3923 = vadd.f32 %v3882, %v3922
    %v3924 = vpop.f32.mrf.mxu0
    %v3925 = vadd.f32 %v3884, %v3924
    %v3926 = vpop.f32.mrf.mxu0
    %v3927 = vpop.f32.mrf.mxu0
    %3928 = vdwg.mxu0
    %3929 = vmatprep.subr.bf16.mxu0 %v3423
    %3930 = vmatpush1.bf16.msra.mxu0 %v3422
    %3931 = vmatprep.subr.bf16.mxu0 %v3415
    %3932 = vmatpush1.bf16.msra.mxu0 %v3414
    %3933 = vmatprep.subr.bf16.mxu0 %v3407
    %3934 = vmatpush1.bf16.msra.mxu0 %v3406
    %3935 = vmatprep.subr.bf16.mxu0 %v3399
    %3936 = vmatpush1.bf16.msra.mxu0 %v3398
    %3937 = vmatprep.subr.bf16.mxu0 %v3391
    %3938 = vmatpush1.bf16.msra.mxu0 %v3390
    %3939 = vmatprep.subr.bf16.mxu0 %v3383
    %3940 = vmatpush1.bf16.msra.mxu0 %v3382
    %3941 = vmatprep.subr.bf16.mxu0 %v3375
    %3942 = vmatpush1.bf16.msra.mxu0 %v3374
    %3943 = vmatprep.subr.bf16.mxu0 %v3367
    %3944 = vmatpush1.bf16.msra.mxu0 %v3366
    %3945 = vmatprep.subr.bf16.mxu0 %v3487
    %3946 = vmatpush2.bf16.msra.mxu0 %v3486
    %3947 = vmatprep.subr.bf16.mxu0 %v3479
    %3948 = vmatpush2.bf16.msra.mxu0 %v3478
    %3949 = vmatprep.subr.bf16.mxu0 %v3471
    %3950 = vmatpush2.bf16.msra.mxu0 %v3470
    %3951 = vmatprep.subr.bf16.mxu0 %v3463
    %3952 = vmatpush2.bf16.msra.mxu0 %v3462
    %3953 = vmatprep.subr.bf16.mxu0 %v3455
    %3954 = vmatpush2.bf16.msra.mxu0 %v3454
    %3955 = vmatprep.subr.bf16.mxu0 %v3447
    %3956 = vmatpush2.bf16.msra.mxu0 %v3446
    %3957 = vmatprep.subr.bf16.mxu0 %v3439
    %3958 = vmatpush2.bf16.msra.mxu0 %v3438
    %3959 = vmatprep.subr.bf16.mxu0 %v3431
    %3960 = vmatpush2.bf16.msra.mxu0 %v3430
    %3961 = vmatprep.mubr.bf16.mxu0 %v2717
    %3962 = vmatmul.mubr.bf16.gmra.mxu0 %v2716
    %v3963 = vpop.f32.mrf.mxu0
    %v3964 = vadd.f32 %v2741, %v3963
    %v3965 = vpop.f32.mrf.mxu0
    %v3966 = vadd.f32 %v2745, %v3965
    %v3967 = vpop.f32.mrf.mxu0
    %v3968 = vpop.f32.mrf.mxu0
    %3969 = vdwg.mxu0
    %3970 = vmatprep.subr.bf16.mxu0 %v3551
    %3971 = vmatpush1.bf16.msra.mxu0 %v3550
    %3972 = vmatprep.subr.bf16.mxu0 %v3543
    %3973 = vmatpush1.bf16.msra.mxu0 %v3542
    %3974 = vmatprep.subr.bf16.mxu0 %v3535
    %3975 = vmatpush1.bf16.msra.mxu0 %v3534
    %3976 = vmatprep.subr.bf16.mxu0 %v3527
    %3977 = vmatpush1.bf16.msra.mxu0 %v3526
    %3978 = vmatprep.subr.bf16.mxu0 %v3519
    %3979 = vmatpush1.bf16.msra.mxu0 %v3518
    %3980 = vmatprep.subr.bf16.mxu0 %v3511
    %3981 = vmatpush1.bf16.msra.mxu0 %v3510
    %3982 = vmatprep.subr.bf16.mxu0 %v3503
    %3983 = vmatpush1.bf16.msra.mxu0 %v3502
    %3984 = vmatprep.subr.bf16.mxu0 %v3495
    %3985 = vmatpush1.bf16.msra.mxu0 %v3494
    %3986 = vmatprep.subr.bf16.mxu0 0
    %3987 = vmatpush2.bf16.msra.mxu0 0
    %3988 = vmatprep.subr.bf16.mxu0 0
    %3989 = vmatpush2.bf16.msra.mxu0 0
    %3990 = vmatprep.subr.bf16.mxu0 0
    %3991 = vmatpush2.bf16.msra.mxu0 0
    %3992 = vmatprep.subr.bf16.mxu0 0
    %3993 = vmatpush2.bf16.msra.mxu0 0
    %3994 = vmatprep.subr.bf16.mxu0 0
    %3995 = vmatpush2.bf16.msra.mxu0 0
    %3996 = vmatprep.subr.bf16.mxu0 0
    %3997 = vmatpush2.bf16.msra.mxu0 0
    %3998 = vmatprep.subr.bf16.mxu0 0
    %3999 = vmatpush2.bf16.msra.mxu0 0
    %4000 = vmatprep.subr.bf16.mxu0 %v3559
    %4001 = vmatpush2.bf16.msra.mxu0 %v3558
    %4002 = vmatprep.mubr.bf16.mxu0 %v3763
    %4003 = vmatmul.mubr.bf16.gmra.mxu0 %v2718
    %v4004 = vpop.f32.mrf.mxu0
    %v4005 = vadd.f32 %v3964, %v4004
    %v4006 = vpop.f32.mrf.mxu0
    %v4007 = vadd.f32 %v3966, %v4006
    %v4008 = vpop.f32.mrf.mxu0
    %v4009 = vpop.f32.mrf.mxu0
    %4010 = vdwg.mxu0
    %4011 = vmatprep.subr.bf16.mxu0 %v3425
    %4012 = vmatpush1.bf16.msra.mxu0 %v3424
    %4013 = vmatprep.subr.bf16.mxu0 %v3417
    %4014 = vmatpush1.bf16.msra.mxu0 %v3416
    %4015 = vmatprep.subr.bf16.mxu0 %v3409
    %4016 = vmatpush1.bf16.msra.mxu0 %v3408
    %4017 = vmatprep.subr.bf16.mxu0 %v3401
    %4018 = vmatpush1.bf16.msra.mxu0 %v3400
    %4019 = vmatprep.subr.bf16.mxu0 %v3393
    %4020 = vmatpush1.bf16.msra.mxu0 %v3392
    %4021 = vmatprep.subr.bf16.mxu0 %v3385
    %4022 = vmatpush1.bf16.msra.mxu0 %v3384
    %4023 = vmatprep.subr.bf16.mxu0 %v3377
    %4024 = vmatpush1.bf16.msra.mxu0 %v3376
    %4025 = vmatprep.subr.bf16.mxu0 %v3369
    %4026 = vmatpush1.bf16.msra.mxu0 %v3368
    %4027 = vmatprep.subr.bf16.mxu0 %v3489
    %4028 = vmatpush2.bf16.msra.mxu0 %v3488
    %4029 = vmatprep.subr.bf16.mxu0 %v3481
    %4030 = vmatpush2.bf16.msra.mxu0 %v3480
    %4031 = vmatprep.subr.bf16.mxu0 %v3473
    %4032 = vmatpush2.bf16.msra.mxu0 %v3472
    %4033 = vmatprep.subr.bf16.mxu0 %v3465
    %4034 = vmatpush2.bf16.msra.mxu0 %v3464
    %4035 = vmatprep.subr.bf16.mxu0 %v3457
    %4036 = vmatpush2.bf16.msra.mxu0 %v3456
    %4037 = vmatprep.subr.bf16.mxu0 %v3449
    %4038 = vmatpush2.bf16.msra.mxu0 %v3448
    %4039 = vmatprep.subr.bf16.mxu0 %v3441
    %4040 = vmatpush2.bf16.msra.mxu0 %v3440
    %4041 = vmatprep.subr.bf16.mxu0 %v3433
    %4042 = vmatpush2.bf16.msra.mxu0 %v3432
    %4043 = vmatprep.mubr.bf16.mxu0 %v2717
    %4044 = vmatmul.mubr.bf16.gmra.mxu0 %v2716
    %v4045 = vpop.f32.mrf.mxu0
    %v4046 = vadd.f32 %v2749, %v4045
    %v4047 = vpop.f32.mrf.mxu0
    %v4048 = vadd.f32 %v2753, %v4047
    %v4049 = vpop.f32.mrf.mxu0
    %v4050 = vpop.f32.mrf.mxu0
    %4051 = vdwg.mxu0
    %4052 = vmatprep.subr.bf16.mxu0 %v3553
    %4053 = vmatpush1.bf16.msra.mxu0 %v3552
    %4054 = vmatprep.subr.bf16.mxu0 %v3545
    %4055 = vmatpush1.bf16.msra.mxu0 %v3544
    %4056 = vmatprep.subr.bf16.mxu0 %v3537
    %4057 = vmatpush1.bf16.msra.mxu0 %v3536
    %4058 = vmatprep.subr.bf16.mxu0 %v3529
    %4059 = vmatpush1.bf16.msra.mxu0 %v3528
    %4060 = vmatprep.subr.bf16.mxu0 %v3521
    %4061 = vmatpush1.bf16.msra.mxu0 %v3520
    %4062 = vmatprep.subr.bf16.mxu0 %v3513
    %4063 = vmatpush1.bf16.msra.mxu0 %v3512
    %4064 = vmatprep.subr.bf16.mxu0 %v3505
    %4065 = vmatpush1.bf16.msra.mxu0 %v3504
    %4066 = vmatprep.subr.bf16.mxu0 %v3497
    %4067 = vmatpush1.bf16.msra.mxu0 %v3496
    %4068 = vmatprep.subr.bf16.mxu0 0
    %4069 = vmatpush2.bf16.msra.mxu0 0
    %4070 = vmatprep.subr.bf16.mxu0 0
    %4071 = vmatpush2.bf16.msra.mxu0 0
    %4072 = vmatprep.subr.bf16.mxu0 0
    %4073 = vmatpush2.bf16.msra.mxu0 0
    %4074 = vmatprep.subr.bf16.mxu0 0
    %4075 = vmatpush2.bf16.msra.mxu0 0
    %4076 = vmatprep.subr.bf16.mxu0 0
    %4077 = vmatpush2.bf16.msra.mxu0 0
    %4078 = vmatprep.subr.bf16.mxu0 0
    %4079 = vmatpush2.bf16.msra.mxu0 0
    %4080 = vmatprep.subr.bf16.mxu0 0
    %4081 = vmatpush2.bf16.msra.mxu0 0
    %4082 = vmatprep.subr.bf16.mxu0 %v3561
    %4083 = vmatpush2.bf16.msra.mxu0 %v3560
    %4084 = vmatprep.mubr.bf16.mxu0 %v3763
    %4085 = vmatmul.mubr.bf16.gmra.mxu0 %v2718
    %v4086 = vpop.f32.mrf.mxu0
    %v4087 = vadd.f32 %v4046, %v4086
    %v4088 = vpop.f32.mrf.mxu0
    %v4089 = vadd.f32 %v4048, %v4088
    %v4090 = vpop.f32.mrf.mxu0
    %v4091 = vpop.f32.mrf.mxu0
    %4092 = vdwg.mxu0
    %v4093 = vxor.u32 %v3841, 2147483648
    %v4094 = vxor.u32 %v3843, 2147483648
    %v4095 = vxor.u32 %v3923, 2147483648
    %v4096 = vxor.u32 %v3925, 2147483648
    %v4097 = vxor.u32 %v4005, 2147483648
    %v4098 = vxor.u32 %v4007, 2147483648
    %v4099 = vxor.u32 %v4087, 2147483648
    %v4100 = vxor.u32 %v4089, 2147483648
    %v4101 = vmul.f32 %v4093, 1.442695
    %v4102 = vpow.pop %v4101
    %v4103 = vmul.f32 %v4094, 1.442695
    %v4104 = vpow.pop %v4103
    %v4105 = vmul.f32 %v4095, 1.442695
    %v4106 = vpow.pop %v4105
    %v4107 = vmul.f32 %v4096, 1.442695
    %v4108 = vpow.pop %v4107
    %v4109 = vmul.f32 %v4097, 1.442695
    %v4110 = vpow.pop %v4109
    %v4111 = vmul.f32 %v4098, 1.442695
    %v4112 = vpow.pop %v4111
    %v4113 = vmul.f32 %v4099, 1.442695
    %v4114 = vpow.pop %v4113
    %v4115 = vmul.f32 %v4100, 1.442695
    %v4116 = vpow.pop %v4115
    %v4117 = vadd.f32 %v4102, 1.0
    %v4118 = vadd.f32 %v4104, 1.0
    %v4119 = vadd.f32 %v4106, 1.0
    %v4120 = vadd.f32 %v4108, 1.0
    %v4121 = vadd.f32 %v4110, 1.0
    %v4122 = vadd.f32 %v4112, 1.0
    %v4123 = vadd.f32 %v4114, 1.0
    %v4124 = vadd.f32 %v4116, 1.0
    %v4125 = vrcp.pop %v4117
    %v4126 = vmul.f32 1.0, %v4125
    %v4127 = vrcp.pop %v4118
    %v4128 = vmul.f32 1.0, %v4127
    %v4129 = vrcp.pop %v4119
    %v4130 = vmul.f32 1.0, %v4129
    %v4131 = vrcp.pop %v4120
    %v4132 = vmul.f32 1.0, %v4131
    %v4133 = vrcp.pop %v4121
    %v4134 = vmul.f32 1.0, %v4133
    %v4135 = vrcp.pop %v4122
    %v4136 = vmul.f32 1.0, %v4135
    %v4137 = vrcp.pop %v4123
    %v4138 = vmul.f32 1.0, %v4137
    %v4139 = vrcp.pop %v4124
    %v4140 = vmul.f32 1.0, %v4139
    %v4141 = vld [vmem:[%s2] sm:$0x3]
    %v4142 = vld [vmem:[%s11] sm:$0xf]
    %v4143 = vpack.c.bf16 %v4141, %v4141
    %v4144 = vld [vmem:[%s12] sm:$0xf]
    %v4145 = vld [vmem:[%s12 + $0x4] sm:$0xf]
    %v4146 = vld [vmem:[%s12 + $0x8] sm:$0xf]
    %v4147 = vld [vmem:[%s12 + $0xc] sm:$0xf]
    %v4148 = vld [vmem:[%s12 + $0x10] sm:$0xf]
    %v4149 = vld [vmem:[%s12 + $0x14] sm:$0xf]
    %v4150 = vld [vmem:[%s12 + $0x18] sm:$0x1]
    %v4158 = vunpack.c.l.b16 %v4144
    %v4159 = vunpack.c.l.b16 %v4145
    %v4160 = vunpack.c.l.b16 %v4146
    %v4161 = vunpack.c.l.b16 %v4147
    %v4162 = vunpack.c.l.b16 %v4148
    %v4163 = vunpack.c.l.b16 %v4149
    %v4164 = vunpack.c.l.b16 %v4150
    %v4165 = vpack.c.b16 %v4159, %v4158
    %v4166 = vpack.c.b16 %v4161, %v4160
    %v4167 = vpack.c.b16 %v4163, %v4162
    %v4168 = vpack.c.b16 %v4164, %v4164
    %v4173 = vsel %vm2417, %v4168, 0
    %4175 = vmatprep.subr.bf16.mxu0 0
    %4176 = vmatpush1.bf16.msra.mxu0 0
    %4177 = vmatprep.subr.bf16.mxu0 0
    %4178 = vmatpush1.bf16.msra.mxu0 0
    %4179 = vmatprep.subr.bf16.mxu0 0
    %4180 = vmatpush1.bf16.msra.mxu0 0
    %4181 = vmatprep.subr.bf16.mxu0 0
    %4182 = vmatpush1.bf16.msra.mxu0 0
    %4183 = vmatprep.subr.bf16.mxu0 0
    %4184 = vmatpush1.bf16.msra.mxu0 %v4173
    %4185 = vmatprep.subr.bf16.mxu0 0
    %4186 = vmatpush1.bf16.msra.mxu0 %v4167
    %4187 = vmatprep.subr.bf16.mxu0 0
    %4188 = vmatpush1.bf16.msra.mxu0 %v4166
    %4189 = vmatprep.subr.bf16.mxu0 0
    %4190 = vmatpush1.bf16.msra.mxu0 %v4165
    %4191 = vmatprep.subr.bf16.mxu0 0
    %4192 = vmatpush2.bf16.msra.mxu0 0
    %4193 = vmatprep.subr.bf16.mxu0 0
    %4194 = vmatpush2.bf16.msra.mxu0 0
    %4195 = vmatprep.subr.bf16.mxu0 0
    %4196 = vmatpush2.bf16.msra.mxu0 0
    %4197 = vmatprep.subr.bf16.mxu0 0
    %4198 = vmatpush2.bf16.msra.mxu0 0
    %4199 = vmatprep.subr.bf16.mxu0 0
    %4200 = vmatpush2.bf16.msra.mxu0 0
    %4201 = vmatprep.subr.bf16.mxu0 0
    %4202 = vmatpush2.bf16.msra.mxu0 0
    %4203 = vmatprep.subr.bf16.mxu0 0
    %4204 = vmatpush2.bf16.msra.mxu0 0
    %4205 = vmatprep.subr.bf16.mxu0 0
    %4206 = vmatpush2.bf16.msra.mxu0 0
    %4207 = vmatprep.mubr.bf16.mxu0 0
    %4208 = vmatmul.mubr.bf16.gmra.mxu0 %v2415
    %v4209 = vpop.f32.mrf.mxu0
    %v4210 = vadd.f32 0.0, %v4209
    %v4211 = vpop.f32.mrf.mxu0
    %v4212 = vpop.f32.mrf.mxu0
    %v4213 = vpop.f32.mrf.mxu0
    %4214 = vdwg.mxu0
    %vm4215 = vcmask 64512
    %v4217 = vsel %vm4215, %v4143, 0
    %vm4219 = vcmask 1043456
    %v4221 = vsel %vm4219, %v4142, 0
    %4223 = vmatprep.subr.bf16.mxu0 0
    %4224 = vmatpush1.bf16.msra.mxu0 0
    %4225 = vmatprep.subr.bf16.mxu0 0
    %4226 = vmatpush1.bf16.msra.mxu0 0
    %4227 = vmatprep.subr.bf16.mxu0 0
    %4228 = vmatpush1.bf16.msra.mxu0 0
    %4229 = vmatprep.subr.bf16.mxu0 0
    %4230 = vmatpush1.bf16.msra.mxu0 0
    %4231 = vmatprep.subr.bf16.mxu0 0
    %4232 = vmatpush1.bf16.msra.mxu0 0
    %4233 = vmatprep.subr.bf16.mxu0 0
    %4234 = vmatpush1.bf16.msra.mxu0 0
    %4235 = vmatprep.subr.bf16.mxu0 0
    %4236 = vmatpush1.bf16.msra.mxu0 0
    %4237 = vmatprep.subr.bf16.mxu0 0
    %4238 = vmatpush1.bf16.msra.mxu0 %v4221
    %4239 = vmatprep.subr.bf16.mxu0 0
    %4240 = vmatpush2.bf16.msra.mxu0 0
    %4241 = vmatprep.subr.bf16.mxu0 0
    %4242 = vmatpush2.bf16.msra.mxu0 0
    %4243 = vmatprep.subr.bf16.mxu0 0
    %4244 = vmatpush2.bf16.msra.mxu0 0
    %4245 = vmatprep.subr.bf16.mxu0 0
    %4246 = vmatpush2.bf16.msra.mxu0 0
    %4247 = vmatprep.subr.bf16.mxu0 0
    %4248 = vmatpush2.bf16.msra.mxu0 0
    %4249 = vmatprep.subr.bf16.mxu0 0
    %4250 = vmatpush2.bf16.msra.mxu0 0
    %4251 = vmatprep.subr.bf16.mxu0 0
    %4252 = vmatpush2.bf16.msra.mxu0 0
    %4253 = vmatprep.subr.bf16.mxu0 0
    %4254 = vmatpush2.bf16.msra.mxu0 0
    %4255 = vmatprep.mubr.bf16.mxu0 0
    %4256 = vmatmul.mubr.bf16.gmra.mxu0 %v4217
    %v4257 = vpop.f32.mrf.mxu0
    %v4258 = vadd.f32 %v4210, %v4257
    %v4259 = vpop.f32.mrf.mxu0
    %v4260 = vpop.f32.mrf.mxu0
    %v4261 = vpop.f32.mrf.mxu0
    %4262 = vdwg.mxu0
    %v4263 = vld [vmem:[%s13] sm:$0x1]
    %v4265 = vlaneseq
    %v4266 = vshrl.u32 %v4265, 7
    %v4267 = vsub.s32 0, %v4266
    %v4268 = vrot.slane %v4263, %v4267
    %v4270 = vadd.f32 %v4258, %v4268
    %v4271 = vmax.f32 %v4270, 0.0
    %v4272 = vld [vmem:[%s14] sm:$0xf]
    %v4273 = vld [vmem:[%s14 + $0x4] sm:$0xf]
    %v4274 = vld [vmem:[%s14 + $0x8] sm:$0xf]
    %v4275 = vld [vmem:[%s14 + $0xc] sm:$0xf]
    %v4276 = vld [vmem:[%s14 + $0x10] sm:$0xf]
    %v4277 = vld [vmem:[%s14 + $0x14] sm:$0xf]
    %v4278 = vld [vmem:[%s14 + $0x18] sm:$0xf]
    %v4279 = vld [vmem:[%s14 + $0x1c] sm:$0xf]
    %v4280 = vld [vmem:[%s14 + $0x20] sm:$0xf]
    %v4281 = vld [vmem:[%s14 + $0x24] sm:$0xf]
    %v4282 = vld [vmem:[%s14 + $0x28] sm:$0xf]
    %v4283 = vld [vmem:[%s14 + $0x2c] sm:$0xf]
    %v4284 = vld [vmem:[%s14 + $0x30] sm:$0xf]
    %v4285 = vld [vmem:[%s14 + $0x34] sm:$0xf]
    %v4286 = vld [vmem:[%s14 + $0x38] sm:$0xf]
    %v4287 = vld [vmem:[%s14 + $0x3c] sm:$0xf]
    %v4288 = vpack.c.bf16 %v4271, %v4271
    %v4289 = vld [vmem:[%s15] sm:$0x1]
    %v4291 = vlaneseq
    %v4292 = vshrl.u32 %v4291, 7
    %v4293 = vsub.s32 0, %v4292
    %v4294 = vrot.slane %v4289, %v4293
    %v4312 = vunpack.c.l.b16 %v4272
    %v4313 = vunpack.c.l.b16 %v4273
    %v4314 = vunpack.c.l.b16 %v4274
    %v4315 = vunpack.c.l.b16 %v4275
    %v4316 = vunpack.c.l.b16 %v4276
    %v4317 = vunpack.c.l.b16 %v4277
    %v4318 = vunpack.c.l.b16 %v4278
    %v4319 = vunpack.c.l.b16 %v4279
    %v4320 = vunpack.c.l.b16 %v4280
    %v4321 = vunpack.c.l.b16 %v4281
    %v4322 = vunpack.c.l.b16 %v4282
    %v4323 = vunpack.c.l.b16 %v4283
    %v4324 = vunpack.c.l.b16 %v4284
    %v4325 = vunpack.c.l.b16 %v4285
    %v4326 = vunpack.c.l.b16 %v4286
    %v4327 = vunpack.c.l.b16 %v4287
    %v4328 = vpack.c.b16 %v4313, %v4312
    %v4329 = vpack.c.b16 %v4315, %v4314
    %v4330 = vpack.c.b16 %v4317, %v4316
    %v4331 = vpack.c.b16 %v4319, %v4318
    %v4332 = vpack.c.b16 %v4321, %v4320
    %v4333 = vpack.c.b16 %v4323, %v4322
    %v4334 = vpack.c.b16 %v4325, %v4324
    %v4335 = vpack.c.b16 %v4327, %v4326
    %4344 = vmatprep.subr.bf16.mxu0 0
    %4345 = vmatpush1.bf16.msra.mxu0 %v4335
    %4346 = vmatprep.subr.bf16.mxu0 0
    %4347 = vmatpush1.bf16.msra.mxu0 %v4334
    %4348 = vmatprep.subr.bf16.mxu0 0
    %4349 = vmatpush1.bf16.msra.mxu0 %v4333
    %4350 = vmatprep.subr.bf16.mxu0 0
    %4351 = vmatpush1.bf16.msra.mxu0 %v4332
    %4352 = vmatprep.subr.bf16.mxu0 0
    %4353 = vmatpush1.bf16.msra.mxu0 %v4331
    %4354 = vmatprep.subr.bf16.mxu0 0
    %4355 = vmatpush1.bf16.msra.mxu0 %v4330
    %4356 = vmatprep.subr.bf16.mxu0 0
    %4357 = vmatpush1.bf16.msra.mxu0 %v4329
    %4358 = vmatprep.subr.bf16.mxu0 0
    %4359 = vmatpush1.bf16.msra.mxu0 %v4328
    %4360 = vmatprep.subr.bf16.mxu0 0
    %4361 = vmatpush2.bf16.msra.mxu0 0
    %4362 = vmatprep.subr.bf16.mxu0 0
    %4363 = vmatpush2.bf16.msra.mxu0 0
    %4364 = vmatprep.subr.bf16.mxu0 0
    %4365 = vmatpush2.bf16.msra.mxu0 0
    %4366 = vmatprep.subr.bf16.mxu0 0
    %4367 = vmatpush2.bf16.msra.mxu0 0
    %4368 = vmatprep.subr.bf16.mxu0 0
    %4369 = vmatpush2.bf16.msra.mxu0 0
    %4370 = vmatprep.subr.bf16.mxu0 0
    %4371 = vmatpush2.bf16.msra.mxu0 0
    %4372 = vmatprep.subr.bf16.mxu0 0
    %4373 = vmatpush2.bf16.msra.mxu0 0
    %4374 = vmatprep.subr.bf16.mxu0 0
    %4375 = vmatpush2.bf16.msra.mxu0 0
    %4376 = vmatprep.mubr.bf16.mxu0 0
    %4377 = vmatmul.mubr.bf16.gmra.mxu0 %v4288
    %v4378 = vpop.f32.mrf.mxu0
    %v4379 = vadd.f32 %v4294, %v4378
    %v4380 = vpop.f32.mrf.mxu0
    %v4381 = vpop.f32.mrf.mxu0
    %v4382 = vpop.f32.mrf.mxu0
    %4383 = vdwg.mxu0
    %4385 = vrot.lane.b32.xlu0 %v4379, 100
    %v4386 = vpop.permute.xlu0 %4385
    %vm4388 = vcmask 818176
    %v4389 = vsel %vm4388, %v2291, %v4386
    %vm4390 = vcmask 828416
    %4391 = vst.msk [vmem:[%s16] sm:$0x3] %vm4390, %v4389
    %v4400 = vcombine.low %v4126, %v4128
    %v4401 = vcombine.low %v4130, %v4132
    %v4403 = vunpack.c.l.s4 1983009808
    %v4404 = vunpack.c.0.s8 %v4403
    %v4405 = vlaneseq
    %v4406 = vshrl.u32 %v4405, 7
    %v4407 = vsub.s32 %v4404, %v4406
    %v4408 = vrot.slane %v4400, %v4407
    %v4410 = vunpack.c.l.s4 1983009808
    %v4411 = vunpack.c.0.s8 %v4410
    %v4412 = vlaneseq
    %v4413 = vshrl.u32 %v4412, 7
    %v4414 = vsub.s32 %v4411, %v4413
    %v4415 = vrot.slane %v4401, %v4414
    %v4416 = vcombine.low %v4408, %v4415
    %v4417 = vcombine.low %v4134, %v4136
    %v4418 = vcombine.low %v4138, %v4140
    %v4420 = vunpack.c.l.s4 1983009808
    %v4421 = vunpack.c.0.s8 %v4420
    %v4422 = vlaneseq
    %v4423 = vshrl.u32 %v4422, 7
    %v4424 = vsub.s32 %v4421, %v4423
    %v4425 = vrot.slane %v4417, %v4424
    %v4427 = vunpack.c.l.s4 1983009808
    %v4428 = vunpack.c.0.s8 %v4427
    %v4429 = vlaneseq
    %v4430 = vshrl.u32 %v4429, 7
    %v4431 = vsub.s32 %v4428, %v4430
    %v4432 = vrot.slane %v4418, %v4431
    %v4433 = vcombine.low %v4425, %v4432
    %4436 = vst [vmem:[#allocation2] sm:$0xff] %v4416
    %4437 = vst [vmem:[#allocation2 + $0x8] sm:$0xff] %v4433
    // Predicated region
    $region66: #{hybrid_forward.3} parent=1 // pred_check
      _
    $region67: #{hybrid_forward.3} parent=1 // pred_check_branch
      %4439 = sbr.rel (0) target = $region69
    $region68: #{hybrid_forward.3} parent=1 // pred_region
      _
    $region69: #{hybrid_forward.3} parent=1 // pred_fallthru
      _
    // Predicated region
    $region70: #{hybrid_forward.3} parent=1 // pred_check
      _
    $region71: #{hybrid_forward.3} parent=1 // pred_check_branch
      %4441 = sbr.rel (0) target = $region73
    $region72: #{hybrid_forward.3} parent=1 // pred_region
      %s4443 = ssub.s32 256, 256
      %4444 = vsyncadd [#allocation3], %s4443
      %s4446 = sshll.u32 [#allocation2], 4
      %s4447 = int_to_ptr.vmem [resolvable:$true] %s4446
      %4449 = dma.vmem_to_hbm [thread:$0]  %s4447, 256, %s17, [#allocation3]
    $region73: #{hybrid_forward.3} parent=1 // pred_fallthru
      _
    // Predicated region
    $region74: #{hybrid_forward.3} parent=1 // pred_check
      _
    $region75: #{hybrid_forward.3} parent=1 // pred_check_branch
      %4451 = sbr.rel (0) target = $region77
    $region76: #{hybrid_forward.3} parent=1 // pred_region
      _
    $region77: #{hybrid_forward.3} parent=1 // pred_fallthru
      _
    // Predicated region
    $region78: #{hybrid_forward.3} parent=1 // pred_check
      _
    $region79: #{hybrid_forward.3} parent=1 // pred_check_branch
      %4453 = sbr.rel (0) target = $region81
    $region80: #{hybrid_forward.3} parent=1 // pred_region
      %4454 = dma.done [#allocation3], 256
    $region81: #{hybrid_forward.3} parent=1 // pred_fallthru
      _
    %4455 = vsyncpa [#allocation3], 1

</llo_original>
